<compile_context>
chip_gen: v7x
topology: tpu7x:2x2x1
jax: 0.10.0
libtpu: 0.0.40
codegen_flags: <defaults>
</compile_context>

<pallas_src>
import numpy as np
import jax
import jax.numpy as jnp
from jax.experimental import pallas as pl
from jax.experimental.pallas import tpu as pltpu

# ---------------------------------------------------------------------------
# Problem sizes (small, consistent with the module)
# ---------------------------------------------------------------------------
B = 2          # batch
T = 8          # sequence length (time)
C = 4          # input channels
H = W = 16     # spatial
K = 3          # conv kernel
F = 16         # conv out channels == RNN input_size
HID = 32       # rnn.hidden_size
OUT = 10       # output_size

HW = H * W          # 256 spatial positions per frame
PK = C * K * K      # 36  (im2col patch width, NOT lane padded)
TB = T * B          # 16  frames
ROWS = TB * HW      # 4096 im2col rows
CHUNK = B * HW      # 512 patch rows per timestep

# Packed parameter buffer: one (PAR_ROWS, 128) f32 array == one DMA.
# All row offsets are multiples of 8 (sublane aligned static slices in-kernel).
PAR_LANES = 128
_W_COL_R = 0      # rows   0..35 , lanes 0..15 : conv weight as (PK, F)
_B_CONV_R = 40    # row   40     , lanes 0..15 : conv bias
_W_IH_R = 48      # rows  48..63 , lanes 0..31 : W_ih^T  (F, HID)
_W_HH_R = 64      # rows  64..95 , lanes 0..31 : W_hh^T  (HID, HID)
_B_RNN_R = 96     # row   96     , lanes 0..31 : b_ih + b_hh
_W_CLS_R = 104    # rows 104..135, lanes 0..9  : W_cls^T (HID, OUT)
_B_CLS_R = 136    # row  136     , lanes 0..9  : classifier bias
PAR_ROWS = 144


# ---------------------------------------------------------------------------
# Fused kernel: per-timestep conv (im2col matmul) + ReLU + mean pool + input
# projection, interleaved with the Elman recurrence; classifier at the end.
# Single grid step; everything stays in VMEM / vregs.
# ---------------------------------------------------------------------------
def crnn_fused_kernel(patch_ref, par_ref, pred_ref):
    # ---- unpack the single packed parameter buffer (static, aligned slices) ----
    w_col = par_ref[_W_COL_R:_W_COL_R + PK, 0:F]        # (36, 16)
    b_conv = par_ref[_B_CONV_R:_B_CONV_R + 1, 0:F]      # (1, 16)
    w_ih = par_ref[_W_IH_R:_W_IH_R + F, 0:HID]          # (16, 32) = W_ih^T
    w_hh = par_ref[_W_HH_R:_W_HH_R + HID, 0:HID]        # (32, 32) = W_hh^T
    b_rnn = par_ref[_B_RNN_R:_B_RNN_R + 1, 0:HID]       # (1, 32)  = b_ih + b_hh
    w_cls = par_ref[_W_CLS_R:_W_CLS_R + HID, 0:OUT]     # (32, 10) = W_cls^T
    b_cls = par_ref[_B_CLS_R:_B_CLS_R + 1, 0:OUT]       # (1, 10)

    # ---- per-timestep mean-pool selector (exact 1/256 weights), built once ----
    col = jax.lax.broadcasted_iota(jnp.int32, (B, CHUNK), 1)
    row = jax.lax.broadcasted_iota(jnp.int32, (B, CHUNK), 0)
    pool = jnp.where((col >= row * HW) & (col < (row + 1) * HW),
                     jnp.float32(1.0 / HW), jnp.float32(0.0))        # (2, 512)

    # ---- conv / pool / projection interleaved with the recurrence over T ----
    # T is a compile-time constant -> fully unrolled single basic block; the
    # per-timestep conv matmuls are independent of h, so they can overlap the
    # serial h @ W_hh + tanh chain of earlier steps.
    h = jnp.zeros((B, HID), jnp.float32)
    for t in range(T):
        rows_t = patch_ref[t * CHUNK:(t + 1) * CHUNK, :]             # (512, 36)
        conv = jnp.dot(rows_t, w_col,
                       preferred_element_type=jnp.float32) + b_conv  # (512, 16)
        relu = jnp.maximum(conv, 0.0)
        feats = jnp.dot(pool, relu,
                        preferred_element_type=jnp.float32)          # (2, 16)
        x_t = jnp.dot(feats, w_ih,
                      preferred_element_type=jnp.float32) + b_rnn    # (2, 32)
        h = jnp.tanh(x_t + jnp.dot(h, w_hh,
                                   preferred_element_type=jnp.float32))

    # ---- classifier on the last hidden state ----
    pred_ref[...] = (jnp.dot(h, w_cls, preferred_element_type=jnp.float32)
                     + b_cls)


# ---------------------------------------------------------------------------
# Wrapper: minimal im2col layout prep, then one pallas_call.
# ---------------------------------------------------------------------------
def im2col(x_nchw):
    """x: [N, C, H, W] -> patches [N*H*W, C*K*K] for conv with padding=1."""
    n = x_nchw.shape[0]
    xp = jnp.pad(x_nchw, ((0, 0), (0, 0), (1, 1), (1, 1)))
    cols = [xp[:, :, ky:ky + H, kx:kx + W]
            for ky in range(K) for kx in range(K)]                   # K*K x [N,C,H,W]
    patches = jnp.stack(cols, axis=2)                                # [N, C, K*K, H, W]
    patches = patches.transpose(0, 3, 4, 1, 2).reshape(n * HW, PK)   # col = c*9 + tap
    return patches


def crnn_forward(x, params):
    """x: [B, T, C, H, W] -> pred [B, OUT] via one fused Pallas kernel."""
    # torch.permute(x, [1,0,2,3,4]) -> [T, B, C, H, W]; one CNN per frame.
    x_t = jnp.transpose(x, (1, 0, 2, 3, 4)).reshape(TB, C, H, W)
    patches = im2col(x_t)                                            # (4096, 36) f32

    cost = pl.CostEstimate(
        flops=(2 * ROWS * PK * F              # conv matmul
               + 2 * T * B * CHUNK * F        # mean-pool matmuls
               + 2 * TB * F * HID             # input projection
               + 2 * T * B * HID * HID        # recurrence
               + 2 * B * HID * OUT),          # classifier
        transcendentals=T * B * HID,          # tanh
        bytes_accessed=4 * (ROWS * PK + PAR_ROWS * PAR_LANES + B * OUT),
    )

    return pl.pallas_call(
        crnn_fused_kernel,
        out_shape=jax.ShapeDtypeStruct((B, OUT), jnp.float32),
        grid_spec=pltpu.PrefetchScalarGridSpec(
            num_scalar_prefetch=0,
            grid=(1,),
            in_specs=[
                pl.BlockSpec((ROWS, PK), lambda i: (0, 0)),          # patches (full)
                pl.BlockSpec((PAR_ROWS, PAR_LANES), lambda i: (0, 0)),  # packed params
            ],
            out_specs=pl.BlockSpec((B, OUT), lambda i: (0, 0)),
        ),
        compiler_params=pltpu.CompilerParams(
            dimension_semantics=("arbitrary",)),
        cost_estimate=cost,
    )(patches, params["packed"])


# ---------------------------------------------------------------------------
# Deterministic parameter init (matching the PyTorch init schemes in spirit)
# ---------------------------------------------------------------------------
def init_params(key):
    ks = jax.random.split(key, 8)
    fan_in_conv = C * K * K
    # kaiming_normal_ on conv weight
    w_conv = jax.random.normal(ks[0], (F, C, K, K), jnp.float32) * np.sqrt(2.0 / fan_in_conv)
    b_conv = jax.random.uniform(ks[1], (1, F), jnp.float32,
                                -1.0 / np.sqrt(fan_in_conv), 1.0 / np.sqrt(fan_in_conv))
    # Elman RNN default uniform(-1/sqrt(HID), 1/sqrt(HID))
    lim = 1.0 / np.sqrt(HID)
    w_ih = jax.random.uniform(ks[2], (HID, F), jnp.float32, -lim, lim)
    w_hh = jax.random.uniform(ks[3], (HID, HID), jnp.float32, -lim, lim)
    b_ih = jax.random.uniform(ks[4], (HID,), jnp.float32, -lim, lim)
    b_hh = jax.random.uniform(ks[5], (HID,), jnp.float32, -lim, lim)
    # xavier_normal_ on classifier weight
    w_cls = jax.random.normal(ks[6], (OUT, HID), jnp.float32) * np.sqrt(2.0 / (HID + OUT))
    b_cls = jax.random.uniform(ks[7], (OUT,), jnp.float32,
                               -1.0 / np.sqrt(HID), 1.0 / np.sqrt(HID))

    w_col = w_conv.reshape(F, PK).T                                  # (PK, F), col = c*9+tap
    b_rnn = (b_ih + b_hh).reshape(1, HID)

    # --- pack all small params into one lane-dense buffer (single DMA) ---
    packed = jnp.zeros((PAR_ROWS, PAR_LANES), jnp.float32)
    packed = packed.at[_W_COL_R:_W_COL_R + PK, 0:F].set(w_col)
    packed = packed.at[_B_CONV_R:_B_CONV_R + 1, 0:F].set(b_conv)
    packed = packed.at[_W_IH_R:_W_IH_R + F, 0:HID].set(w_ih.T)
    packed = packed.at[_W_HH_R:_W_HH_R + HID, 0:HID].set(w_hh.T)
    packed = packed.at[_B_RNN_R:_B_RNN_R + 1, 0:HID].set(b_rnn)
    packed = packed.at[_W_CLS_R:_W_CLS_R + HID, 0:OUT].set(w_cls.T)
    packed = packed.at[_B_CLS_R:_B_CLS_R + 1, 0:OUT].set(b_cls.reshape(1, OUT))

    return {
        "packed": packed,
        # un-packed copies for the pure-JAX reference path
        "w_col": w_col, "b_conv": b_conv,
        "w_ih_t": w_ih.T, "w_hh_t": w_hh.T, "b_rnn": b_rnn,
        "w_cls_t": w_cls.T, "b_cls": b_cls.reshape(1, OUT),
    }


# ---------------------------------------------------------------------------
# Pure-JAX reference (same math, no Pallas) for the correctness check
# ---------------------------------------------------------------------------
def crnn_reference(x, params):
    x_t = jnp.transpose(x, (1, 0, 2, 3, 4)).reshape(TB, C, H, W)
    patches = im2col(x_t).reshape(TB, HW, PK)
    conv = patches @ params["w_col"] + params["b_conv"]              # (TB, HW, F)
    feats = jnp.mean(jnp.maximum(conv, 0.0), axis=1).reshape(T, B, F)

    def step(h, x_step):
        h = jnp.tanh(x_step @ params["w_ih_t"] + h @ params["w_hh_t"] + params["b_rnn"])
        return h, h

    h0 = jnp.zeros((B, HID), jnp.float32)
    h_last, _ = jax.lax.scan(step, h0, feats)
    return h_last @ params["w_cls_t"] + params["b_cls"]


if __name__ == "__main__":
    key = jax.random.PRNGKey(0)
    kx, kp = jax.random.split(key)
    x = jax.random.normal(kx, (B, T, C, H, W), jnp.float32)
    params = init_params(kp)

    pred = jax.block_until_ready(crnn_forward(x, params))
    ref = jax.block_until_ready(crnn_reference(x, params))

    assert pred.shape == (B, OUT)
    np.testing.assert_allclose(np.asarray(pred), np.asarray(ref), atol=1e-4, rtol=1e-4)

    print("KERNEL_OK")
</pallas_src>

<mosaic_0001>
module attributes {stable_mosaic.version = 11 : i64} {
  func.func @crnn_fused_kernel(%arg0: i32, %arg1: memref<4096x36xf32, #tpu.memory_space<vmem>>, %arg2: memref<144x128xf32, #tpu.memory_space<vmem>>, %arg3: memref<2x10xf32, #tpu.memory_space<vmem>>) attributes {dimension_semantics = [#tpu.dimension_semantics<arbitrary>], iteration_bounds = array<i64: 1>, scalar_prefetch = 0 : i64, scratch_operands = 0 : i64, tpu.core_type = #tpu.core_type<tc>, window_params = [{pipeline_mode = #tpu.pipeline_mode<synchronous>, transform_indices = @transform_0, window_bounds = array<i64: 4096, 36>}, {pipeline_mode = #tpu.pipeline_mode<synchronous>, transform_indices = @transform_1, window_bounds = array<i64: 144, 128>}, {pipeline_mode = #tpu.pipeline_mode<synchronous>, transform_indices = @transform_2, window_bounds = array<i64: 2, 10>}]} {
    %c0 = arith.constant 0 : index
    %c0_0 = arith.constant 0 : index
    %0 = vector.load %arg2[%c0, %c0_0] : memref<144x128xf32, #tpu.memory_space<vmem>>, vector<36x16xf32>
    %c40 = arith.constant 40 : index
    %c0_1 = arith.constant 0 : index
    %1 = vector.load %arg2[%c40, %c0_1] : memref<144x128xf32, #tpu.memory_space<vmem>>, vector<1x16xf32>
    %c48 = arith.constant 48 : index
    %c0_2 = arith.constant 0 : index
    %2 = vector.load %arg2[%c48, %c0_2] : memref<144x128xf32, #tpu.memory_space<vmem>>, vector<16x32xf32>
    %c64 = arith.constant 64 : index
    %c0_3 = arith.constant 0 : index
    %3 = vector.load %arg2[%c64, %c0_3] : memref<144x128xf32, #tpu.memory_space<vmem>>, vector<32x32xf32>
    %c96 = arith.constant 96 : index
    %c0_4 = arith.constant 0 : index
    %4 = vector.load %arg2[%c96, %c0_4] : memref<144x128xf32, #tpu.memory_space<vmem>>, vector<1x32xf32>
    %c104 = arith.constant 104 : index
    %c0_5 = arith.constant 0 : index
    %5 = vector.load %arg2[%c104, %c0_5] : memref<144x128xf32, #tpu.memory_space<vmem>>, vector<32x10xf32>
    %c136 = arith.constant 136 : index
    %c0_6 = arith.constant 0 : index
    %6 = vector.load %arg2[%c136, %c0_6] : memref<144x128xf32, #tpu.memory_space<vmem>>, vector<1x10xf32>
    %7 = tpu.iota {dimensions = array<i32: 1>} : vector<2x512xi32>
    %8 = tpu.iota {dimensions = array<i32: 0>} : vector<2x512xi32>
    %c256_i32 = arith.constant 256 : i32
    %9 = vector.broadcast %c256_i32 : i32 to vector<2x512xi32>
    %10 = arith.muli %8, %9 : vector<2x512xi32>
    %11 = arith.cmpi sge, %7, %10 : vector<2x512xi32>
    %c1_i32 = arith.constant 1 : i32
    %12 = vector.broadcast %c1_i32 : i32 to vector<2x512xi32>
    %13 = arith.addi %8, %12 : vector<2x512xi32>
    %c256_i32_7 = arith.constant 256 : i32
    %14 = vector.broadcast %c256_i32_7 : i32 to vector<2x512xi32>
    %15 = arith.muli %13, %14 : vector<2x512xi32>
    %16 = arith.cmpi slt, %7, %15 : vector<2x512xi32>
    %17 = arith.andi %11, %16 : vector<2x512xi1>
    %cst = arith.constant 3.906250e-03 : f32
    %cst_8 = arith.constant 0.000000e+00 : f32
    %18 = vector.broadcast %cst : f32 to vector<2x512xf32>
    %19 = vector.broadcast %cst_8 : f32 to vector<2x512xf32>
    %20 = arith.select %17, %18, %19 : vector<2x512xi1>, vector<2x512xf32>
    %cst_9 = arith.constant 0.000000e+00 : f32
    %21 = vector.broadcast %cst_9 : f32 to vector<2x32xf32>
    %c0_10 = arith.constant 0 : index
    %c0_11 = arith.constant 0 : index
    %22 = vector.load %arg1[%c0_10, %c0_11] : memref<4096x36xf32, #tpu.memory_space<vmem>>, vector<512x36xf32>
    %cst_12 = arith.constant dense<0.000000e+00> : vector<512x16xf32>
    %23 = tpu.matmul %22, %0, %cst_12 {dimension_numbers = #tpu.dot_dimension_numbers<[1], [0], [0], [1], [0, 0, 1, 1], [], []>} : vector<512x36xf32>, vector<36x16xf32>, vector<512x16xf32> -> vector<512x16xf32>
    %24 = vector.broadcast %1 : vector<1x16xf32> to vector<512x16xf32>
    %25 = arith.addf %23, %24 : vector<512x16xf32>
    %cst_13 = arith.constant 0.000000e+00 : f32
    %26 = vector.broadcast %cst_13 : f32 to vector<512x16xf32>
    %27 = arith.maximumf %25, %26 : vector<512x16xf32>
    %cst_14 = arith.constant dense<0.000000e+00> : vector<2x16xf32>
    %28 = tpu.matmul %20, %27, %cst_14 {dimension_numbers = #tpu.dot_dimension_numbers<[1], [0], [0], [1], [0, 0, 1, 1], [], []>} : vector<2x512xf32>, vector<512x16xf32>, vector<2x16xf32> -> vector<2x16xf32>
    %cst_15 = arith.constant dense<0.000000e+00> : vector<2x32xf32>
    %29 = tpu.matmul %28, %2, %cst_15 {dimension_numbers = #tpu.dot_dimension_numbers<[1], [0], [0], [1], [0, 0, 1, 1], [], []>} : vector<2x16xf32>, vector<16x32xf32>, vector<2x32xf32> -> vector<2x32xf32>
    %30 = vector.broadcast %4 : vector<1x32xf32> to vector<2x32xf32>
    %31 = arith.addf %29, %30 : vector<2x32xf32>
    %cst_16 = arith.constant dense<0.000000e+00> : vector<2x32xf32>
    %32 = tpu.matmul %21, %3, %cst_16 {dimension_numbers = #tpu.dot_dimension_numbers<[1], [0], [0], [1], [0, 0, 1, 1], [], []>} : vector<2x32xf32>, vector<32x32xf32>, vector<2x32xf32> -> vector<2x32xf32>
    %33 = arith.addf %31, %32 : vector<2x32xf32>
    %34 = math.tanh %33 : vector<2x32xf32>
    %c512 = arith.constant 512 : index
    %c0_17 = arith.constant 0 : index
    %35 = vector.load %arg1[%c512, %c0_17] : memref<4096x36xf32, #tpu.memory_space<vmem>>, vector<512x36xf32>
    %cst_18 = arith.constant dense<0.000000e+00> : vector<512x16xf32>
    %36 = tpu.matmul %35, %0, %cst_18 {dimension_numbers = #tpu.dot_dimension_numbers<[1], [0], [0], [1], [0, 0, 1, 1], [], []>} : vector<512x36xf32>, vector<36x16xf32>, vector<512x16xf32> -> vector<512x16xf32>
    %37 = vector.broadcast %1 : vector<1x16xf32> to vector<512x16xf32>
    %38 = arith.addf %36, %37 : vector<512x16xf32>
    %cst_19 = arith.constant 0.000000e+00 : f32
    %39 = vector.broadcast %cst_19 : f32 to vector<512x16xf32>
    %40 = arith.maximumf %38, %39 : vector<512x16xf32>
    %cst_20 = arith.constant dense<0.000000e+00> : vector<2x16xf32>
    %41 = tpu.matmul %20, %40, %cst_20 {dimension_numbers = #tpu.dot_dimension_numbers<[1], [0], [0], [1], [0, 0, 1, 1], [], []>} : vector<2x512xf32>, vector<512x16xf32>, vector<2x16xf32> -> vector<2x16xf32>
    %cst_21 = arith.constant dense<0.000000e+00> : vector<2x32xf32>
    %42 = tpu.matmul %41, %2, %cst_21 {dimension_numbers = #tpu.dot_dimension_numbers<[1], [0], [0], [1], [0, 0, 1, 1], [], []>} : vector<2x16xf32>, vector<16x32xf32>, vector<2x32xf32> -> vector<2x32xf32>
    %43 = vector.broadcast %4 : vector<1x32xf32> to vector<2x32xf32>
    %44 = arith.addf %42, %43 : vector<2x32xf32>
    %cst_22 = arith.constant dense<0.000000e+00> : vector<2x32xf32>
    %45 = tpu.matmul %34, %3, %cst_22 {dimension_numbers = #tpu.dot_dimension_numbers<[1], [0], [0], [1], [0, 0, 1, 1], [], []>} : vector<2x32xf32>, vector<32x32xf32>, vector<2x32xf32> -> vector<2x32xf32>
    %46 = arith.addf %44, %45 : vector<2x32xf32>
    %47 = math.tanh %46 : vector<2x32xf32>
    %c1024 = arith.constant 1024 : index
    %c0_23 = arith.constant 0 : index
    %48 = vector.load %arg1[%c1024, %c0_23] : memref<4096x36xf32, #tpu.memory_space<vmem>>, vector<512x36xf32>
    %cst_24 = arith.constant dense<0.000000e+00> : vector<512x16xf32>
    %49 = tpu.matmul %48, %0, %cst_24 {dimension_numbers = #tpu.dot_dimension_numbers<[1], [0], [0], [1], [0, 0, 1, 1], [], []>} : vector<512x36xf32>, vector<36x16xf32>, vector<512x16xf32> -> vector<512x16xf32>
    %50 = vector.broadcast %1 : vector<1x16xf32> to vector<512x16xf32>
    %51 = arith.addf %49, %50 : vector<512x16xf32>
    %cst_25 = arith.constant 0.000000e+00 : f32
    %52 = vector.broadcast %cst_25 : f32 to vector<512x16xf32>
    %53 = arith.maximumf %51, %52 : vector<512x16xf32>
    %cst_26 = arith.constant dense<0.000000e+00> : vector<2x16xf32>
    %54 = tpu.matmul %20, %53, %cst_26 {dimension_numbers = #tpu.dot_dimension_numbers<[1], [0], [0], [1], [0, 0, 1, 1], [], []>} : vector<2x512xf32>, vector<512x16xf32>, vector<2x16xf32> -> vector<2x16xf32>
    %cst_27 = arith.constant dense<0.000000e+00> : vector<2x32xf32>
    %55 = tpu.matmul %54, %2, %cst_27 {dimension_numbers = #tpu.dot_dimension_numbers<[1], [0], [0], [1], [0, 0, 1, 1], [], []>} : vector<2x16xf32>, vector<16x32xf32>, vector<2x32xf32> -> vector<2x32xf32>
    %56 = vector.broadcast %4 : vector<1x32xf32> to vector<2x32xf32>
    %57 = arith.addf %55, %56 : vector<2x32xf32>
    %cst_28 = arith.constant dense<0.000000e+00> : vector<2x32xf32>
    %58 = tpu.matmul %47, %3, %cst_28 {dimension_numbers = #tpu.dot_dimension_numbers<[1], [0], [0], [1], [0, 0, 1, 1], [], []>} : vector<2x32xf32>, vector<32x32xf32>, vector<2x32xf32> -> vector<2x32xf32>
    %59 = arith.addf %57, %58 : vector<2x32xf32>
    %60 = math.tanh %59 : vector<2x32xf32>
    %c1536 = arith.constant 1536 : index
    %c0_29 = arith.constant 0 : index
    %61 = vector.load %arg1[%c1536, %c0_29] : memref<4096x36xf32, #tpu.memory_space<vmem>>, vector<512x36xf32>
    %cst_30 = arith.constant dense<0.000000e+00> : vector<512x16xf32>
    %62 = tpu.matmul %61, %0, %cst_30 {dimension_numbers = #tpu.dot_dimension_numbers<[1], [0], [0], [1], [0, 0, 1, 1], [], []>} : vector<512x36xf32>, vector<36x16xf32>, vector<512x16xf32> -> vector<512x16xf32>
    %63 = vector.broadcast %1 : vector<1x16xf32> to vector<512x16xf32>
    %64 = arith.addf %62, %63 : vector<512x16xf32>
    %cst_31 = arith.constant 0.000000e+00 : f32
    %65 = vector.broadcast %cst_31 : f32 to vector<512x16xf32>
    %66 = arith.maximumf %64, %65 : vector<512x16xf32>
    %cst_32 = arith.constant dense<0.000000e+00> : vector<2x16xf32>
    %67 = tpu.matmul %20, %66, %cst_32 {dimension_numbers = #tpu.dot_dimension_numbers<[1], [0], [0], [1], [0, 0, 1, 1], [], []>} : vector<2x512xf32>, vector<512x16xf32>, vector<2x16xf32> -> vector<2x16xf32>
    %cst_33 = arith.constant dense<0.000000e+00> : vector<2x32xf32>
    %68 = tpu.matmul %67, %2, %cst_33 {dimension_numbers = #tpu.dot_dimension_numbers<[1], [0], [0], [1], [0, 0, 1, 1], [], []>} : vector<2x16xf32>, vector<16x32xf32>, vector<2x32xf32> -> vector<2x32xf32>
    %69 = vector.broadcast %4 : vector<1x32xf32> to vector<2x32xf32>
    %70 = arith.addf %68, %69 : vector<2x32xf32>
    %cst_34 = arith.constant dense<0.000000e+00> : vector<2x32xf32>
    %71 = tpu.matmul %60, %3, %cst_34 {dimension_numbers = #tpu.dot_dimension_numbers<[1], [0], [0], [1], [0, 0, 1, 1], [], []>} : vector<2x32xf32>, vector<32x32xf32>, vector<2x32xf32> -> vector<2x32xf32>
    %72 = arith.addf %70, %71 : vector<2x32xf32>
    %73 = math.tanh %72 : vector<2x32xf32>
    %c2048 = arith.constant 2048 : index
    %c0_35 = arith.constant 0 : index
    %74 = vector.load %arg1[%c2048, %c0_35] : memref<4096x36xf32, #tpu.memory_space<vmem>>, vector<512x36xf32>
    %cst_36 = arith.constant dense<0.000000e+00> : vector<512x16xf32>
    %75 = tpu.matmul %74, %0, %cst_36 {dimension_numbers = #tpu.dot_dimension_numbers<[1], [0], [0], [1], [0, 0, 1, 1], [], []>} : vector<512x36xf32>, vector<36x16xf32>, vector<512x16xf32> -> vector<512x16xf32>
    %76 = vector.broadcast %1 : vector<1x16xf32> to vector<512x16xf32>
    %77 = arith.addf %75, %76 : vector<512x16xf32>
    %cst_37 = arith.constant 0.000000e+00 : f32
    %78 = vector.broadcast %cst_37 : f32 to vector<512x16xf32>
    %79 = arith.maximumf %77, %78 : vector<512x16xf32>
    %cst_38 = arith.constant dense<0.000000e+00> : vector<2x16xf32>
    %80 = tpu.matmul %20, %79, %cst_38 {dimension_numbers = #tpu.dot_dimension_numbers<[1], [0], [0], [1], [0, 0, 1, 1], [], []>} : vector<2x512xf32>, vector<512x16xf32>, vector<2x16xf32> -> vector<2x16xf32>
    %cst_39 = arith.constant dense<0.000000e+00> : vector<2x32xf32>
    %81 = tpu.matmul %80, %2, %cst_39 {dimension_numbers = #tpu.dot_dimension_numbers<[1], [0], [0], [1], [0, 0, 1, 1], [], []>} : vector<2x16xf32>, vector<16x32xf32>, vector<2x32xf32> -> vector<2x32xf32>
    %82 = vector.broadcast %4 : vector<1x32xf32> to vector<2x32xf32>
    %83 = arith.addf %81, %82 : vector<2x32xf32>
    %cst_40 = arith.constant dense<0.000000e+00> : vector<2x32xf32>
    %84 = tpu.matmul %73, %3, %cst_40 {dimension_numbers = #tpu.dot_dimension_numbers<[1], [0], [0], [1], [0, 0, 1, 1], [], []>} : vector<2x32xf32>, vector<32x32xf32>, vector<2x32xf32> -> vector<2x32xf32>
    %85 = arith.addf %83, %84 : vector<2x32xf32>
    %86 = math.tanh %85 : vector<2x32xf32>
    %c2560 = arith.constant 2560 : index
    %c0_41 = arith.constant 0 : index
    %87 = vector.load %arg1[%c2560, %c0_41] : memref<4096x36xf32, #tpu.memory_space<vmem>>, vector<512x36xf32>
    %cst_42 = arith.constant dense<0.000000e+00> : vector<512x16xf32>
    %88 = tpu.matmul %87, %0, %cst_42 {dimension_numbers = #tpu.dot_dimension_numbers<[1], [0], [0], [1], [0, 0, 1, 1], [], []>} : vector<512x36xf32>, vector<36x16xf32>, vector<512x16xf32> -> vector<512x16xf32>
    %89 = vector.broadcast %1 : vector<1x16xf32> to vector<512x16xf32>
    %90 = arith.addf %88, %89 : vector<512x16xf32>
    %cst_43 = arith.constant 0.000000e+00 : f32
    %91 = vector.broadcast %cst_43 : f32 to vector<512x16xf32>
    %92 = arith.maximumf %90, %91 : vector<512x16xf32>
    %cst_44 = arith.constant dense<0.000000e+00> : vector<2x16xf32>
    %93 = tpu.matmul %20, %92, %cst_44 {dimension_numbers = #tpu.dot_dimension_numbers<[1], [0], [0], [1], [0, 0, 1, 1], [], []>} : vector<2x512xf32>, vector<512x16xf32>, vector<2x16xf32> -> vector<2x16xf32>
    %cst_45 = arith.constant dense<0.000000e+00> : vector<2x32xf32>
    %94 = tpu.matmul %93, %2, %cst_45 {dimension_numbers = #tpu.dot_dimension_numbers<[1], [0], [0], [1], [0, 0, 1, 1], [], []>} : vector<2x16xf32>, vector<16x32xf32>, vector<2x32xf32> -> vector<2x32xf32>
    %95 = vector.broadcast %4 : vector<1x32xf32> to vector<2x32xf32>
    %96 = arith.addf %94, %95 : vector<2x32xf32>
    %cst_46 = arith.constant dense<0.000000e+00> : vector<2x32xf32>
    %97 = tpu.matmul %86, %3, %cst_46 {dimension_numbers = #tpu.dot_dimension_numbers<[1], [0], [0], [1], [0, 0, 1, 1], [], []>} : vector<2x32xf32>, vector<32x32xf32>, vector<2x32xf32> -> vector<2x32xf32>
    %98 = arith.addf %96, %97 : vector<2x32xf32>
    %99 = math.tanh %98 : vector<2x32xf32>
    %c3072 = arith.constant 3072 : index
    %c0_47 = arith.constant 0 : index
    %100 = vector.load %arg1[%c3072, %c0_47] : memref<4096x36xf32, #tpu.memory_space<vmem>>, vector<512x36xf32>
    %cst_48 = arith.constant dense<0.000000e+00> : vector<512x16xf32>
    %101 = tpu.matmul %100, %0, %cst_48 {dimension_numbers = #tpu.dot_dimension_numbers<[1], [0], [0], [1], [0, 0, 1, 1], [], []>} : vector<512x36xf32>, vector<36x16xf32>, vector<512x16xf32> -> vector<512x16xf32>
    %102 = vector.broadcast %1 : vector<1x16xf32> to vector<512x16xf32>
    %103 = arith.addf %101, %102 : vector<512x16xf32>
    %cst_49 = arith.constant 0.000000e+00 : f32
    %104 = vector.broadcast %cst_49 : f32 to vector<512x16xf32>
    %105 = arith.maximumf %103, %104 : vector<512x16xf32>
    %cst_50 = arith.constant dense<0.000000e+00> : vector<2x16xf32>
    %106 = tpu.matmul %20, %105, %cst_50 {dimension_numbers = #tpu.dot_dimension_numbers<[1], [0], [0], [1], [0, 0, 1, 1], [], []>} : vector<2x512xf32>, vector<512x16xf32>, vector<2x16xf32> -> vector<2x16xf32>
    %cst_51 = arith.constant dense<0.000000e+00> : vector<2x32xf32>
    %107 = tpu.matmul %106, %2, %cst_51 {dimension_numbers = #tpu.dot_dimension_numbers<[1], [0], [0], [1], [0, 0, 1, 1], [], []>} : vector<2x16xf32>, vector<16x32xf32>, vector<2x32xf32> -> vector<2x32xf32>
    %108 = vector.broadcast %4 : vector<1x32xf32> to vector<2x32xf32>
    %109 = arith.addf %107, %108 : vector<2x32xf32>
    %cst_52 = arith.constant dense<0.000000e+00> : vector<2x32xf32>
    %110 = tpu.matmul %99, %3, %cst_52 {dimension_numbers = #tpu.dot_dimension_numbers<[1], [0], [0], [1], [0, 0, 1, 1], [], []>} : vector<2x32xf32>, vector<32x32xf32>, vector<2x32xf32> -> vector<2x32xf32>
    %111 = arith.addf %109, %110 : vector<2x32xf32>
    %112 = math.tanh %111 : vector<2x32xf32>
    %c3584 = arith.constant 3584 : index
    %c0_53 = arith.constant 0 : index
    %113 = vector.load %arg1[%c3584, %c0_53] : memref<4096x36xf32, #tpu.memory_space<vmem>>, vector<512x36xf32>
    %cst_54 = arith.constant dense<0.000000e+00> : vector<512x16xf32>
    %114 = tpu.matmul %113, %0, %cst_54 {dimension_numbers = #tpu.dot_dimension_numbers<[1], [0], [0], [1], [0, 0, 1, 1], [], []>} : vector<512x36xf32>, vector<36x16xf32>, vector<512x16xf32> -> vector<512x16xf32>
    %115 = vector.broadcast %1 : vector<1x16xf32> to vector<512x16xf32>
    %116 = arith.addf %114, %115 : vector<512x16xf32>
    %cst_55 = arith.constant 0.000000e+00 : f32
    %117 = vector.broadcast %cst_55 : f32 to vector<512x16xf32>
    %118 = arith.maximumf %116, %117 : vector<512x16xf32>
    %cst_56 = arith.constant dense<0.000000e+00> : vector<2x16xf32>
    %119 = tpu.matmul %20, %118, %cst_56 {dimension_numbers = #tpu.dot_dimension_numbers<[1], [0], [0], [1], [0, 0, 1, 1], [], []>} : vector<2x512xf32>, vector<512x16xf32>, vector<2x16xf32> -> vector<2x16xf32>
    %cst_57 = arith.constant dense<0.000000e+00> : vector<2x32xf32>
    %120 = tpu.matmul %119, %2, %cst_57 {dimension_numbers = #tpu.dot_dimension_numbers<[1], [0], [0], [1], [0, 0, 1, 1], [], []>} : vector<2x16xf32>, vector<16x32xf32>, vector<2x32xf32> -> vector<2x32xf32>
    %121 = vector.broadcast %4 : vector<1x32xf32> to vector<2x32xf32>
    %122 = arith.addf %120, %121 : vector<2x32xf32>
    %cst_58 = arith.constant dense<0.000000e+00> : vector<2x32xf32>
    %123 = tpu.matmul %112, %3, %cst_58 {dimension_numbers = #tpu.dot_dimension_numbers<[1], [0], [0], [1], [0, 0, 1, 1], [], []>} : vector<2x32xf32>, vector<32x32xf32>, vector<2x32xf32> -> vector<2x32xf32>
    %124 = arith.addf %122, %123 : vector<2x32xf32>
    %125 = math.tanh %124 : vector<2x32xf32>
    %cst_59 = arith.constant dense<0.000000e+00> : vector<2x10xf32>
    %126 = tpu.matmul %125, %5, %cst_59 {dimension_numbers = #tpu.dot_dimension_numbers<[1], [0], [0], [1], [0, 0, 1, 1], [], []>} : vector<2x32xf32>, vector<32x10xf32>, vector<2x10xf32> -> vector<2x10xf32>
    %127 = vector.broadcast %6 : vector<1x10xf32> to vector<2x10xf32>
    %128 = arith.addf %126, %127 : vector<2x10xf32>
    %c0_60 = arith.constant 0 : index
    %c0_61 = arith.constant 0 : index
    %129 = vector.load %arg3[%c0_60, %c0_61] : memref<2x10xf32, #tpu.memory_space<vmem>>, vector<2x10xf32>
    tpu.vector_store %arg3[%c0_60, %c0_61], %128 {strides = array<i32>} : memref<2x10xf32, #tpu.memory_space<vmem>>, vector<2x10xf32>,
    return
  }
  func.func @transform_0(%arg0: i32) -> (i32, i32) {
    %c0_i32 = arith.constant 0 : i32
    %c0_i32_0 = arith.constant 0 : i32
    %c0_i32_1 = arith.constant 0 : i32
    return %c0_i32, %c0_i32_0 : i32, i32
  }
  func.func @transform_1(%arg0: i32) -> (i32, i32) {
    %c0_i32 = arith.constant 0 : i32
    %c0_i32_0 = arith.constant 0 : i32
    %c0_i32_1 = arith.constant 0 : i32
    return %c0_i32, %c0_i32_0 : i32, i32
  }
  func.func @transform_2(%arg0: i32) -> (i32, i32) {
    %c0_i32 = arith.constant 0 : i32
    %c0_i32_0 = arith.constant 0 : i32
    %c0_i32_1 = arith.constant 0 : i32
    return %c0_i32, %c0_i32_0 : i32, i32
  }
}

</mosaic_0001>

<llo_original>
// kernel: tpu_custom_call.1
$region0: #{tpu_custom_call.1}
  #allocation0 [shape = 'u32[]', space=smem, size = 0x4, offset = 0x4, fixed_abs, tag = 'smem constant byte address 0x4 - core index']
  #allocation1 [shape = 'u32[144,128]{1,0:T(1,128)}', space=vmem, size = 0x12000, scoped, tag = 'internal scratch']
  %s0 = inlined_call_operand.vmem [shape: f32[4096,36], index: 0, kind: input, shape index: {}]
  %s1 = inlined_call_operand.vmem [shape: f32[144,128], index: 1, kind: input, shape index: {}]
  %s2 = inlined_call_operand.hbm [shape: f32[2,10], index: 2, kind: output, shape index: {}]
  %s3 = sld [smem:[#allocation0]]
  $region18: #{tpu_custom_call.1} parent=0
    _
  %s5 = ssub.s32 1, %s3
  %s6 = scalar_select 0, %s5, %s3
  $region1: #{tpu_custom_call.1} parent=0
    #allocation2 [shape = 'u8[1024]{0}', space=vmem, size = 0x400, scoped, tag = 'output window, operand 0, single buffered']
    #allocation3 [shape = 's32[1]{0}', space=sflag, size = 0x4, scoped, tag = 'scoped memory for tpu_custom_call.1']
    %7 = vsyncpa [#allocation3], 0
    // Predicated region
    $region2: #{tpu_custom_call.1} parent=1 // pred_check
      _
    $region3: #{tpu_custom_call.1} parent=1 // pred_check_branch
      %9 = sbr.rel (0) target = $region5
    $region4: #{tpu_custom_call.1} parent=1 // pred_region
      _
    $region5: #{tpu_custom_call.1} parent=1 // pred_fallthru
      _
    // Predicated region
    $region6: #{tpu_custom_call.1} parent=1 // pred_check
      _
    $region7: #{tpu_custom_call.1} parent=1 // pred_check_branch
      %11 = sbr.rel (0) target = $region9
    $region8: #{tpu_custom_call.1} parent=1 // pred_region
      _
    $region9: #{tpu_custom_call.1} parent=1 // pred_fallthru
      _
    %v12 = vld [vmem:[%s1] sm:$0xff]
    %v13 = vld [vmem:[%s1 + $0x8] sm:$0xff]
    %v14 = vld [vmem:[%s1 + $0x10] sm:$0xff]
    %v15 = vld [vmem:[%s1 + $0x18] sm:$0xff]
    %v16 = vld [vmem:[%s1 + $0x20] sm:$0xf]
    %v17 = vld [vmem:[%s1 + $0x28] sm:$0x1]
    %v18 = vld [vmem:[%s1 + $0x30] sm:$0xff]
    %v19 = vld [vmem:[%s1 + $0x38] sm:$0xff]
    %v20 = vld [vmem:[%s1 + $0x40] sm:$0xff]
    %v21 = vld [vmem:[%s1 + $0x48] sm:$0xff]
    %v22 = vld [vmem:[%s1 + $0x50] sm:$0xff]
    %v23 = vld [vmem:[%s1 + $0x58] sm:$0xff]
    %v24 = vld [vmem:[%s1 + $0x60] sm:$0x1]
    %v25 = vld [vmem:[%s1 + $0x68] sm:$0xff]
    %v26 = vld [vmem:[%s1 + $0x70] sm:$0xff]
    %v27 = vld [vmem:[%s1 + $0x78] sm:$0xff]
    %v28 = vld [vmem:[%s1 + $0x80] sm:$0xff]
    %v29 = vld [vmem:[%s1 + $0x88] sm:$0x1]
    %v30 = vlaneseq
    %v31 = vand.u32 %v30, 127
    %v32 = vadd.s32 %v31, 128
    %v33 = vadd.s32 %v31, 256
    %v34 = vadd.s32 %v31, 384
    %v35 = vlaneseq
    %v36 = vshrl.u32 %v35, 7
    %v37 = vmul.u32 %v36, 256
    %vm38 = vcmp.ge.s32.totalorder %v31, %v37
    %vm39 = vcmp.ge.s32.totalorder %v32, %v37
    %vm40 = vcmp.ge.s32.totalorder %v33, %v37
    %vm41 = vcmp.ge.s32.totalorder %v34, %v37
    %v42 = vadd.s32 %v36, 1
    %v43 = vmul.u32 %v42, 256
    %vm44 = vcmp.lt.s32.totalorder %v31, %v43
    %vm45 = vcmp.lt.s32.totalorder %v32, %v43
    %vm46 = vcmp.lt.s32.totalorder %v33, %v43
    %vm47 = vcmp.lt.s32.totalorder %v34, %v43
    %vm48 = vmand %vm38, %vm44
    %vm49 = vmand %vm39, %vm45
    %vm50 = vmand %vm40, %vm46
    %vm51 = vmand %vm41, %vm47
    %v52 = vsel %vm48, 0.00390625, 0.0
    %v53 = vsel %vm49, 0.00390625, 0.0
    %v54 = vsel %vm50, 0.00390625, 0.0
    %v55 = vsel %vm51, 0.00390625, 0.0
    %v56 = vld [vmem:[%s0] sm:$0xff]
    %v57 = vld [vmem:[%s0 + $0x8] sm:$0xff]
    %v58 = vld [vmem:[%s0 + $0x10] sm:$0xff]
    %v59 = vld [vmem:[%s0 + $0x18] sm:$0xff]
    %v60 = vld [vmem:[%s0 + $0x20] sm:$0xff]
    %v61 = vld [vmem:[%s0 + $0x28] sm:$0xff]
    %v62 = vld [vmem:[%s0 + $0x30] sm:$0xff]
    %v63 = vld [vmem:[%s0 + $0x38] sm:$0xff]
    %v64 = vld [vmem:[%s0 + $0x40] sm:$0xff]
    %v65 = vld [vmem:[%s0 + $0x48] sm:$0xff]
    %v66 = vld [vmem:[%s0 + $0x50] sm:$0xff]
    %v67 = vld [vmem:[%s0 + $0x58] sm:$0xff]
    %v68 = vld [vmem:[%s0 + $0x60] sm:$0xff]
    %v69 = vld [vmem:[%s0 + $0x68] sm:$0xff]
    %v70 = vld [vmem:[%s0 + $0x70] sm:$0xff]
    %v71 = vld [vmem:[%s0 + $0x78] sm:$0xff]
    %v72 = vld [vmem:[%s0 + $0x80] sm:$0xff]
    %v73 = vld [vmem:[%s0 + $0x88] sm:$0xff]
    %v74 = vld [vmem:[%s0 + $0x90] sm:$0xff]
    %v75 = vld [vmem:[%s0 + $0x98] sm:$0xff]
    %v76 = vld [vmem:[%s0 + $0xa0] sm:$0xff]
    %v77 = vld [vmem:[%s0 + $0xa8] sm:$0xff]
    %v78 = vld [vmem:[%s0 + $0xb0] sm:$0xff]
    %v79 = vld [vmem:[%s0 + $0xb8] sm:$0xff]
    %v80 = vld [vmem:[%s0 + $0xc0] sm:$0xff]
    %v81 = vld [vmem:[%s0 + $0xc8] sm:$0xff]
    %v82 = vld [vmem:[%s0 + $0xd0] sm:$0xff]
    %v83 = vld [vmem:[%s0 + $0xd8] sm:$0xff]
    %v84 = vld [vmem:[%s0 + $0xe0] sm:$0xff]
    %v85 = vld [vmem:[%s0 + $0xe8] sm:$0xff]
    %v86 = vld [vmem:[%s0 + $0xf0] sm:$0xff]
    %v87 = vld [vmem:[%s0 + $0xf8] sm:$0xff]
    %v88 = vld [vmem:[%s0 + $0x100] sm:$0xff]
    %v89 = vld [vmem:[%s0 + $0x108] sm:$0xff]
    %v90 = vld [vmem:[%s0 + $0x110] sm:$0xff]
    %v91 = vld [vmem:[%s0 + $0x118] sm:$0xff]
    %v92 = vld [vmem:[%s0 + $0x120] sm:$0xff]
    %v93 = vld [vmem:[%s0 + $0x128] sm:$0xff]
    %v94 = vld [vmem:[%s0 + $0x130] sm:$0xff]
    %v95 = vld [vmem:[%s0 + $0x138] sm:$0xff]
    %v96 = vld [vmem:[%s0 + $0x140] sm:$0xff]
    %v97 = vld [vmem:[%s0 + $0x148] sm:$0xff]
    %v98 = vld [vmem:[%s0 + $0x150] sm:$0xff]
    %v99 = vld [vmem:[%s0 + $0x158] sm:$0xff]
    %v100 = vld [vmem:[%s0 + $0x160] sm:$0xff]
    %v101 = vld [vmem:[%s0 + $0x168] sm:$0xff]
    %v102 = vld [vmem:[%s0 + $0x170] sm:$0xff]
    %v103 = vld [vmem:[%s0 + $0x178] sm:$0xff]
    %v104 = vld [vmem:[%s0 + $0x180] sm:$0xff]
    %v105 = vld [vmem:[%s0 + $0x188] sm:$0xff]
    %v106 = vld [vmem:[%s0 + $0x190] sm:$0xff]
    %v107 = vld [vmem:[%s0 + $0x198] sm:$0xff]
    %v108 = vld [vmem:[%s0 + $0x1a0] sm:$0xff]
    %v109 = vld [vmem:[%s0 + $0x1a8] sm:$0xff]
    %v110 = vld [vmem:[%s0 + $0x1b0] sm:$0xff]
    %v111 = vld [vmem:[%s0 + $0x1b8] sm:$0xff]
    %v112 = vld [vmem:[%s0 + $0x1c0] sm:$0xff]
    %v113 = vld [vmem:[%s0 + $0x1c8] sm:$0xff]
    %v114 = vld [vmem:[%s0 + $0x1d0] sm:$0xff]
    %v115 = vld [vmem:[%s0 + $0x1d8] sm:$0xff]
    %v116 = vld [vmem:[%s0 + $0x1e0] sm:$0xff]
    %v117 = vld [vmem:[%s0 + $0x1e8] sm:$0xff]
    %v118 = vld [vmem:[%s0 + $0x1f0] sm:$0xff]
    %v119 = vld [vmem:[%s0 + $0x1f8] sm:$0xff]
    %v120 = vlaneseq
    %v121 = vshrl.u32 %v120, 7
    %v122 = vsub.s32 0, %v121
    %v123 = vrot.slane %v17, %v122
    %vm124 = vcmask 293888
    %v126 = vsel %vm124, %v56, 0
    %v129 = vsel %vm124, %v57, 0
    %v132 = vsel %vm124, %v58, 0
    %v135 = vsel %vm124, %v59, 0
    %v138 = vsel %vm124, %v60, 0
    %v141 = vsel %vm124, %v61, 0
    %v144 = vsel %vm124, %v62, 0
    %v147 = vsel %vm124, %v63, 0
    %v150 = vsel %vm124, %v64, 0
    %v153 = vsel %vm124, %v65, 0
    %v156 = vsel %vm124, %v66, 0
    %v159 = vsel %vm124, %v67, 0
    %v162 = vsel %vm124, %v68, 0
    %v165 = vsel %vm124, %v69, 0
    %v168 = vsel %vm124, %v70, 0
    %v171 = vsel %vm124, %v71, 0
    %v174 = vsel %vm124, %v72, 0
    %v177 = vsel %vm124, %v73, 0
    %v180 = vsel %vm124, %v74, 0
    %v183 = vsel %vm124, %v75, 0
    %v186 = vsel %vm124, %v76, 0
    %v189 = vsel %vm124, %v77, 0
    %v192 = vsel %vm124, %v78, 0
    %v195 = vsel %vm124, %v79, 0
    %v198 = vsel %vm124, %v80, 0
    %v201 = vsel %vm124, %v81, 0
    %v204 = vsel %vm124, %v82, 0
    %v207 = vsel %vm124, %v83, 0
    %v210 = vsel %vm124, %v84, 0
    %v213 = vsel %vm124, %v85, 0
    %v216 = vsel %vm124, %v86, 0
    %v219 = vsel %vm124, %v87, 0
    %v222 = vsel %vm124, %v88, 0
    %v225 = vsel %vm124, %v89, 0
    %v228 = vsel %vm124, %v90, 0
    %v231 = vsel %vm124, %v91, 0
    %v234 = vsel %vm124, %v92, 0
    %v237 = vsel %vm124, %v93, 0
    %v240 = vsel %vm124, %v94, 0
    %v243 = vsel %vm124, %v95, 0
    %v246 = vsel %vm124, %v96, 0
    %v249 = vsel %vm124, %v97, 0
    %v252 = vsel %vm124, %v98, 0
    %v255 = vsel %vm124, %v99, 0
    %v258 = vsel %vm124, %v100, 0
    %v261 = vsel %vm124, %v101, 0
    %v264 = vsel %vm124, %v102, 0
    %v267 = vsel %vm124, %v103, 0
    %v270 = vsel %vm124, %v104, 0
    %v273 = vsel %vm124, %v105, 0
    %v276 = vsel %vm124, %v106, 0
    %v279 = vsel %vm124, %v107, 0
    %v282 = vsel %vm124, %v108, 0
    %v285 = vsel %vm124, %v109, 0
    %v288 = vsel %vm124, %v110, 0
    %v291 = vsel %vm124, %v111, 0
    %v294 = vsel %vm124, %v112, 0
    %v297 = vsel %vm124, %v113, 0
    %v300 = vsel %vm124, %v114, 0
    %v303 = vsel %vm124, %v115, 0
    %v306 = vsel %vm124, %v116, 0
    %v309 = vsel %vm124, %v117, 0
    %v312 = vsel %vm124, %v118, 0
    %v315 = vsel %vm124, %v119, 0
    %vm317 = vcmask 1043456
    %v319 = vsel %vm317, %v16, 0
    %321 = vmatprep.subr.mxu0 0.0
    %322 = vmatpush1.msra.mxu0 %v12
    %323 = vmatprep.subr.mxu0 0.0
    %324 = vmatpush1.msra.mxu0 %v13
    %325 = vmatprep.subr.mxu0 0.0
    %326 = vmatpush1.msra.mxu0 %v14
    %327 = vmatprep.subr.mxu0 0.0
    %328 = vmatpush1.msra.mxu0 %v15
    %329 = vmatprep.subr.mxu0 0.0
    %330 = vmatpush1.msra.mxu0 %v319
    %331 = vmatprep.subr.mxu0 0.0
    %332 = vmatpush1.msra.mxu0 0.0
    %333 = vmatprep.subr.mxu0 0.0
    %334 = vmatpush1.msra.mxu0 0.0
    %335 = vmatprep.subr.mxu0 0.0
    %336 = vmatpush1.msra.mxu0 0.0
    %337 = vmatprep.subr.mxu0 0.0
    %338 = vmatpush1.msra.mxu0 0.0
    %339 = vmatprep.subr.mxu0 0.0
    %340 = vmatpush1.msra.mxu0 0.0
    %341 = vmatprep.subr.mxu0 0.0
    %342 = vmatpush1.msra.mxu0 0.0
    %343 = vmatprep.subr.mxu0 0.0
    %344 = vmatpush1.msra.mxu0 0.0
    %345 = vmatprep.subr.mxu0 0.0
    %346 = vmatpush1.msra.mxu0 0.0
    %347 = vmatprep.subr.mxu0 0.0
    %348 = vmatpush1.msra.mxu0 0.0
    %349 = vmatprep.subr.mxu0 0.0
    %350 = vmatpush1.msra.mxu0 0.0
    %351 = vmatprep.subr.mxu0 0.0
    %352 = vmatpush1.msra.mxu0 0.0
    %353 = vmatprep.subr.mxu0 0.0
    %354 = vmatpush1.msra.mxu0 0.0
    %355 = vmatprep.subr.mxu0 0.0
    %356 = vmatpush1.msra.mxu0 0.0
    %357 = vmatprep.subr.mxu0 0.0
    %358 = vmatpush1.msra.mxu0 0.0
    %359 = vmatprep.subr.mxu0 0.0
    %360 = vmatpush1.msra.mxu0 0.0
    %361 = vmatprep.subr.mxu0 0.0
    %362 = vmatpush1.msra.mxu0 0.0
    %363 = vmatprep.subr.mxu0 0.0
    %364 = vmatpush1.msra.mxu0 0.0
    %365 = vmatprep.subr.mxu0 0.0
    %366 = vmatpush1.msra.mxu0 0.0
    %367 = vmatprep.subr.mxu0 0.0
    %368 = vmatpush1.msra.mxu0 0.0
    %369 = vmatprep.subr.mxu0 0.0
    %370 = vmatpush1.msra.mxu0 0.0
    %371 = vmatprep.subr.mxu0 0.0
    %372 = vmatpush1.msra.mxu0 0.0
    %373 = vmatprep.subr.mxu0 0.0
    %374 = vmatpush1.msra.mxu0 0.0
    %375 = vmatprep.subr.mxu0 0.0
    %376 = vmatpush1.msra.mxu0 0.0
    %377 = vmatprep.subr.mxu0 0.0
    %378 = vmatpush1.msra.mxu0 0.0
    %379 = vmatprep.subr.mxu0 0.0
    %380 = vmatpush1.msra.mxu0 0.0
    %381 = vmatprep.subr.mxu0 0.0
    %382 = vmatpush1.msra.mxu0 0.0
    %383 = vmatprep.subr.mxu0 0.0
    %384 = vmatpush1.msra.mxu0 0.0
    %385 = vmatprep.mubr.f32.mxu0 0.0
    %386 = vmatmul.mubr.f32.gmra.mrb[0].mxu0 %v126
    %v387 = vpop.f32.mrb[0].mxu0
    %v388 = vadd.f32 %v123, %v387
    %v389 = vpop.f32.mrb[0].mxu0
    %390 = vmatprep.mubr.f32.mxu0 0.0
    %391 = vmatmul.mubr.f32.gmra.mrb[0].mxu0 %v129
    %v392 = vpop.f32.mrb[0].mxu0
    %v393 = vadd.f32 %v123, %v392
    %v394 = vpop.f32.mrb[0].mxu0
    %395 = vmatprep.mubr.f32.mxu0 0.0
    %396 = vmatmul.mubr.f32.gmra.mrb[0].mxu0 %v132
    %v397 = vpop.f32.mrb[0].mxu0
    %v398 = vadd.f32 %v123, %v397
    %v399 = vpop.f32.mrb[0].mxu0
    %400 = vmatprep.mubr.f32.mxu0 0.0
    %401 = vmatmul.mubr.f32.gmra.mrb[0].mxu0 %v135
    %v402 = vpop.f32.mrb[0].mxu0
    %v403 = vadd.f32 %v123, %v402
    %v404 = vpop.f32.mrb[0].mxu0
    %405 = vmatprep.mubr.f32.mxu0 0.0
    %406 = vmatmul.mubr.f32.gmra.mrb[0].mxu0 %v138
    %v407 = vpop.f32.mrb[0].mxu0
    %v408 = vadd.f32 %v123, %v407
    %v409 = vpop.f32.mrb[0].mxu0
    %410 = vmatprep.mubr.f32.mxu0 0.0
    %411 = vmatmul.mubr.f32.gmra.mrb[0].mxu0 %v141
    %v412 = vpop.f32.mrb[0].mxu0
    %v413 = vadd.f32 %v123, %v412
    %v414 = vpop.f32.mrb[0].mxu0
    %415 = vmatprep.mubr.f32.mxu0 0.0
    %416 = vmatmul.mubr.f32.gmra.mrb[0].mxu0 %v144
    %v417 = vpop.f32.mrb[0].mxu0
    %v418 = vadd.f32 %v123, %v417
    %v419 = vpop.f32.mrb[0].mxu0
    %420 = vmatprep.mubr.f32.mxu0 0.0
    %421 = vmatmul.mubr.f32.gmra.mrb[0].mxu0 %v147
    %v422 = vpop.f32.mrb[0].mxu0
    %v423 = vadd.f32 %v123, %v422
    %v424 = vpop.f32.mrb[0].mxu0
    %425 = vmatprep.mubr.f32.mxu0 0.0
    %426 = vmatmul.mubr.f32.gmra.mrb[0].mxu0 %v150
    %v427 = vpop.f32.mrb[0].mxu0
    %v428 = vadd.f32 %v123, %v427
    %v429 = vpop.f32.mrb[0].mxu0
    %430 = vmatprep.mubr.f32.mxu0 0.0
    %431 = vmatmul.mubr.f32.gmra.mrb[0].mxu0 %v153
    %v432 = vpop.f32.mrb[0].mxu0
    %v433 = vadd.f32 %v123, %v432
    %v434 = vpop.f32.mrb[0].mxu0
    %435 = vmatprep.mubr.f32.mxu0 0.0
    %436 = vmatmul.mubr.f32.gmra.mrb[0].mxu0 %v156
    %v437 = vpop.f32.mrb[0].mxu0
    %v438 = vadd.f32 %v123, %v437
    %v439 = vpop.f32.mrb[0].mxu0
    %440 = vmatprep.mubr.f32.mxu0 0.0
    %441 = vmatmul.mubr.f32.gmra.mrb[0].mxu0 %v159
    %v442 = vpop.f32.mrb[0].mxu0
    %v443 = vadd.f32 %v123, %v442
    %v444 = vpop.f32.mrb[0].mxu0
    %445 = vmatprep.mubr.f32.mxu0 0.0
    %446 = vmatmul.mubr.f32.gmra.mrb[0].mxu0 %v162
    %v447 = vpop.f32.mrb[0].mxu0
    %v448 = vadd.f32 %v123, %v447
    %v449 = vpop.f32.mrb[0].mxu0
    %450 = vmatprep.mubr.f32.mxu0 0.0
    %451 = vmatmul.mubr.f32.gmra.mrb[0].mxu0 %v165
    %v452 = vpop.f32.mrb[0].mxu0
    %v453 = vadd.f32 %v123, %v452
    %v454 = vpop.f32.mrb[0].mxu0
    %455 = vmatprep.mubr.f32.mxu0 0.0
    %456 = vmatmul.mubr.f32.gmra.mrb[0].mxu0 %v168
    %v457 = vpop.f32.mrb[0].mxu0
    %v458 = vadd.f32 %v123, %v457
    %v459 = vpop.f32.mrb[0].mxu0
    %460 = vmatprep.mubr.f32.mxu0 0.0
    %461 = vmatmul.mubr.f32.gmra.mrb[0].mxu0 %v171
    %v462 = vpop.f32.mrb[0].mxu0
    %v463 = vadd.f32 %v123, %v462
    %v464 = vpop.f32.mrb[0].mxu0
    %465 = vmatprep.mubr.f32.mxu0 0.0
    %466 = vmatmul.mubr.f32.gmra.mrb[0].mxu0 %v174
    %v467 = vpop.f32.mrb[0].mxu0
    %v468 = vadd.f32 %v123, %v467
    %v469 = vpop.f32.mrb[0].mxu0
    %470 = vmatprep.mubr.f32.mxu0 0.0
    %471 = vmatmul.mubr.f32.gmra.mrb[0].mxu0 %v177
    %v472 = vpop.f32.mrb[0].mxu0
    %v473 = vadd.f32 %v123, %v472
    %v474 = vpop.f32.mrb[0].mxu0
    %475 = vmatprep.mubr.f32.mxu0 0.0
    %476 = vmatmul.mubr.f32.gmra.mrb[0].mxu0 %v180
    %v477 = vpop.f32.mrb[0].mxu0
    %v478 = vadd.f32 %v123, %v477
    %v479 = vpop.f32.mrb[0].mxu0
    %480 = vmatprep.mubr.f32.mxu0 0.0
    %481 = vmatmul.mubr.f32.gmra.mrb[0].mxu0 %v183
    %v482 = vpop.f32.mrb[0].mxu0
    %v483 = vadd.f32 %v123, %v482
    %v484 = vpop.f32.mrb[0].mxu0
    %485 = vmatprep.mubr.f32.mxu0 0.0
    %486 = vmatmul.mubr.f32.gmra.mrb[0].mxu0 %v186
    %v487 = vpop.f32.mrb[0].mxu0
    %v488 = vadd.f32 %v123, %v487
    %v489 = vpop.f32.mrb[0].mxu0
    %490 = vmatprep.mubr.f32.mxu0 0.0
    %491 = vmatmul.mubr.f32.gmra.mrb[0].mxu0 %v189
    %v492 = vpop.f32.mrb[0].mxu0
    %v493 = vadd.f32 %v123, %v492
    %v494 = vpop.f32.mrb[0].mxu0
    %495 = vmatprep.mubr.f32.mxu0 0.0
    %496 = vmatmul.mubr.f32.gmra.mrb[0].mxu0 %v192
    %v497 = vpop.f32.mrb[0].mxu0
    %v498 = vadd.f32 %v123, %v497
    %v499 = vpop.f32.mrb[0].mxu0
    %500 = vmatprep.mubr.f32.mxu0 0.0
    %501 = vmatmul.mubr.f32.gmra.mrb[0].mxu0 %v195
    %v502 = vpop.f32.mrb[0].mxu0
    %v503 = vadd.f32 %v123, %v502
    %v504 = vpop.f32.mrb[0].mxu0
    %505 = vmatprep.mubr.f32.mxu0 0.0
    %506 = vmatmul.mubr.f32.gmra.mrb[0].mxu0 %v198
    %v507 = vpop.f32.mrb[0].mxu0
    %v508 = vadd.f32 %v123, %v507
    %v509 = vpop.f32.mrb[0].mxu0
    %510 = vmatprep.mubr.f32.mxu0 0.0
    %511 = vmatmul.mubr.f32.gmra.mrb[0].mxu0 %v201
    %v512 = vpop.f32.mrb[0].mxu0
    %v513 = vadd.f32 %v123, %v512
    %v514 = vpop.f32.mrb[0].mxu0
    %515 = vmatprep.mubr.f32.mxu0 0.0
    %516 = vmatmul.mubr.f32.gmra.mrb[0].mxu0 %v204
    %v517 = vpop.f32.mrb[0].mxu0
    %v518 = vadd.f32 %v123, %v517
    %v519 = vpop.f32.mrb[0].mxu0
    %520 = vmatprep.mubr.f32.mxu0 0.0
    %521 = vmatmul.mubr.f32.gmra.mrb[0].mxu0 %v207
    %v522 = vpop.f32.mrb[0].mxu0
    %v523 = vadd.f32 %v123, %v522
    %v524 = vpop.f32.mrb[0].mxu0
    %525 = vmatprep.mubr.f32.mxu0 0.0
    %526 = vmatmul.mubr.f32.gmra.mrb[0].mxu0 %v210
    %v527 = vpop.f32.mrb[0].mxu0
    %v528 = vadd.f32 %v123, %v527
    %v529 = vpop.f32.mrb[0].mxu0
    %530 = vmatprep.mubr.f32.mxu0 0.0
    %531 = vmatmul.mubr.f32.gmra.mrb[0].mxu0 %v213
    %v532 = vpop.f32.mrb[0].mxu0
    %v533 = vadd.f32 %v123, %v532
    %v534 = vpop.f32.mrb[0].mxu0
    %535 = vmatprep.mubr.f32.mxu0 0.0
    %536 = vmatmul.mubr.f32.gmra.mrb[0].mxu0 %v216
    %v537 = vpop.f32.mrb[0].mxu0
    %v538 = vadd.f32 %v123, %v537
    %v539 = vpop.f32.mrb[0].mxu0
    %540 = vmatprep.mubr.f32.mxu0 0.0
    %541 = vmatmul.mubr.f32.gmra.mrb[0].mxu0 %v219
    %v542 = vpop.f32.mrb[0].mxu0
    %v543 = vadd.f32 %v123, %v542
    %v544 = vpop.f32.mrb[0].mxu0
    %545 = vmatprep.mubr.f32.mxu0 0.0
    %546 = vmatmul.mubr.f32.gmra.mrb[0].mxu0 %v222
    %v547 = vpop.f32.mrb[0].mxu0
    %v548 = vadd.f32 %v123, %v547
    %v549 = vpop.f32.mrb[0].mxu0
    %550 = vmatprep.mubr.f32.mxu0 0.0
    %551 = vmatmul.mubr.f32.gmra.mrb[0].mxu0 %v225
    %v552 = vpop.f32.mrb[0].mxu0
    %v553 = vadd.f32 %v123, %v552
    %v554 = vpop.f32.mrb[0].mxu0
    %555 = vmatprep.mubr.f32.mxu0 0.0
    %556 = vmatmul.mubr.f32.gmra.mrb[0].mxu0 %v228
    %v557 = vpop.f32.mrb[0].mxu0
    %v558 = vadd.f32 %v123, %v557
    %v559 = vpop.f32.mrb[0].mxu0
    %560 = vmatprep.mubr.f32.mxu0 0.0
    %561 = vmatmul.mubr.f32.gmra.mrb[0].mxu0 %v231
    %v562 = vpop.f32.mrb[0].mxu0
    %v563 = vadd.f32 %v123, %v562
    %v564 = vpop.f32.mrb[0].mxu0
    %565 = vmatprep.mubr.f32.mxu0 0.0
    %566 = vmatmul.mubr.f32.gmra.mrb[0].mxu0 %v234
    %v567 = vpop.f32.mrb[0].mxu0
    %v568 = vadd.f32 %v123, %v567
    %v569 = vpop.f32.mrb[0].mxu0
    %570 = vmatprep.mubr.f32.mxu0 0.0
    %571 = vmatmul.mubr.f32.gmra.mrb[0].mxu0 %v237
    %v572 = vpop.f32.mrb[0].mxu0
    %v573 = vadd.f32 %v123, %v572
    %v574 = vpop.f32.mrb[0].mxu0
    %575 = vmatprep.mubr.f32.mxu0 0.0
    %576 = vmatmul.mubr.f32.gmra.mrb[0].mxu0 %v240
    %v577 = vpop.f32.mrb[0].mxu0
    %v578 = vadd.f32 %v123, %v577
    %v579 = vpop.f32.mrb[0].mxu0
    %580 = vmatprep.mubr.f32.mxu0 0.0
    %581 = vmatmul.mubr.f32.gmra.mrb[0].mxu0 %v243
    %v582 = vpop.f32.mrb[0].mxu0
    %v583 = vadd.f32 %v123, %v582
    %v584 = vpop.f32.mrb[0].mxu0
    %585 = vmatprep.mubr.f32.mxu0 0.0
    %586 = vmatmul.mubr.f32.gmra.mrb[0].mxu0 %v246
    %v587 = vpop.f32.mrb[0].mxu0
    %v588 = vadd.f32 %v123, %v587
    %v589 = vpop.f32.mrb[0].mxu0
    %590 = vmatprep.mubr.f32.mxu0 0.0
    %591 = vmatmul.mubr.f32.gmra.mrb[0].mxu0 %v249
    %v592 = vpop.f32.mrb[0].mxu0
    %v593 = vadd.f32 %v123, %v592
    %v594 = vpop.f32.mrb[0].mxu0
    %595 = vmatprep.mubr.f32.mxu0 0.0
    %596 = vmatmul.mubr.f32.gmra.mrb[0].mxu0 %v252
    %v597 = vpop.f32.mrb[0].mxu0
    %v598 = vadd.f32 %v123, %v597
    %v599 = vpop.f32.mrb[0].mxu0
    %600 = vmatprep.mubr.f32.mxu0 0.0
    %601 = vmatmul.mubr.f32.gmra.mrb[0].mxu0 %v255
    %v602 = vpop.f32.mrb[0].mxu0
    %v603 = vadd.f32 %v123, %v602
    %v604 = vpop.f32.mrb[0].mxu0
    %605 = vmatprep.mubr.f32.mxu0 0.0
    %606 = vmatmul.mubr.f32.gmra.mrb[0].mxu0 %v258
    %v607 = vpop.f32.mrb[0].mxu0
    %v608 = vadd.f32 %v123, %v607
    %v609 = vpop.f32.mrb[0].mxu0
    %610 = vmatprep.mubr.f32.mxu0 0.0
    %611 = vmatmul.mubr.f32.gmra.mrb[0].mxu0 %v261
    %v612 = vpop.f32.mrb[0].mxu0
    %v613 = vadd.f32 %v123, %v612
    %v614 = vpop.f32.mrb[0].mxu0
    %615 = vmatprep.mubr.f32.mxu0 0.0
    %616 = vmatmul.mubr.f32.gmra.mrb[0].mxu0 %v264
    %v617 = vpop.f32.mrb[0].mxu0
    %v618 = vadd.f32 %v123, %v617
    %v619 = vpop.f32.mrb[0].mxu0
    %620 = vmatprep.mubr.f32.mxu0 0.0
    %621 = vmatmul.mubr.f32.gmra.mrb[0].mxu0 %v267
    %v622 = vpop.f32.mrb[0].mxu0
    %v623 = vadd.f32 %v123, %v622
    %v624 = vpop.f32.mrb[0].mxu0
    %625 = vmatprep.mubr.f32.mxu0 0.0
    %626 = vmatmul.mubr.f32.gmra.mrb[0].mxu0 %v270
    %v627 = vpop.f32.mrb[0].mxu0
    %v628 = vadd.f32 %v123, %v627
    %v629 = vpop.f32.mrb[0].mxu0
    %630 = vmatprep.mubr.f32.mxu0 0.0
    %631 = vmatmul.mubr.f32.gmra.mrb[0].mxu0 %v273
    %v632 = vpop.f32.mrb[0].mxu0
    %v633 = vadd.f32 %v123, %v632
    %v634 = vpop.f32.mrb[0].mxu0
    %635 = vmatprep.mubr.f32.mxu0 0.0
    %636 = vmatmul.mubr.f32.gmra.mrb[0].mxu0 %v276
    %v637 = vpop.f32.mrb[0].mxu0
    %v638 = vadd.f32 %v123, %v637
    %v639 = vpop.f32.mrb[0].mxu0
    %640 = vmatprep.mubr.f32.mxu0 0.0
    %641 = vmatmul.mubr.f32.gmra.mrb[0].mxu0 %v279
    %v642 = vpop.f32.mrb[0].mxu0
    %v643 = vadd.f32 %v123, %v642
    %v644 = vpop.f32.mrb[0].mxu0
    %645 = vmatprep.mubr.f32.mxu0 0.0
    %646 = vmatmul.mubr.f32.gmra.mrb[0].mxu0 %v282
    %v647 = vpop.f32.mrb[0].mxu0
    %v648 = vadd.f32 %v123, %v647
    %v649 = vpop.f32.mrb[0].mxu0
    %650 = vmatprep.mubr.f32.mxu0 0.0
    %651 = vmatmul.mubr.f32.gmra.mrb[0].mxu0 %v285
    %v652 = vpop.f32.mrb[0].mxu0
    %v653 = vadd.f32 %v123, %v652
    %v654 = vpop.f32.mrb[0].mxu0
    %655 = vmatprep.mubr.f32.mxu0 0.0
    %656 = vmatmul.mubr.f32.gmra.mrb[0].mxu0 %v288
    %v657 = vpop.f32.mrb[0].mxu0
    %v658 = vadd.f32 %v123, %v657
    %v659 = vpop.f32.mrb[0].mxu0
    %660 = vmatprep.mubr.f32.mxu0 0.0
    %661 = vmatmul.mubr.f32.gmra.mrb[0].mxu0 %v291
    %v662 = vpop.f32.mrb[0].mxu0
    %v663 = vadd.f32 %v123, %v662
    %v664 = vpop.f32.mrb[0].mxu0
    %665 = vmatprep.mubr.f32.mxu0 0.0
    %666 = vmatmul.mubr.f32.gmra.mrb[0].mxu0 %v294
    %v667 = vpop.f32.mrb[0].mxu0
    %v668 = vadd.f32 %v123, %v667
    %v669 = vpop.f32.mrb[0].mxu0
    %670 = vmatprep.mubr.f32.mxu0 0.0
    %671 = vmatmul.mubr.f32.gmra.mrb[0].mxu0 %v297
    %v672 = vpop.f32.mrb[0].mxu0
    %v673 = vadd.f32 %v123, %v672
    %v674 = vpop.f32.mrb[0].mxu0
    %675 = vmatprep.mubr.f32.mxu0 0.0
    %676 = vmatmul.mubr.f32.gmra.mrb[0].mxu0 %v300
    %v677 = vpop.f32.mrb[0].mxu0
    %v678 = vadd.f32 %v123, %v677
    %v679 = vpop.f32.mrb[0].mxu0
    %680 = vmatprep.mubr.f32.mxu0 0.0
    %681 = vmatmul.mubr.f32.gmra.mrb[0].mxu0 %v303
    %v682 = vpop.f32.mrb[0].mxu0
    %v683 = vadd.f32 %v123, %v682
    %v684 = vpop.f32.mrb[0].mxu0
    %685 = vmatprep.mubr.f32.mxu0 0.0
    %686 = vmatmul.mubr.f32.gmra.mrb[0].mxu0 %v306
    %v687 = vpop.f32.mrb[0].mxu0
    %v688 = vadd.f32 %v123, %v687
    %v689 = vpop.f32.mrb[0].mxu0
    %690 = vmatprep.mubr.f32.mxu0 0.0
    %691 = vmatmul.mubr.f32.gmra.mrb[0].mxu0 %v309
    %v692 = vpop.f32.mrb[0].mxu0
    %v693 = vadd.f32 %v123, %v692
    %v694 = vpop.f32.mrb[0].mxu0
    %695 = vmatprep.mubr.f32.mxu0 0.0
    %696 = vmatmul.mubr.f32.gmra.mrb[0].mxu0 %v312
    %v697 = vpop.f32.mrb[0].mxu0
    %v698 = vadd.f32 %v123, %v697
    %v699 = vpop.f32.mrb[0].mxu0
    %700 = vmatprep.mubr.f32.mxu0 0.0
    %701 = vmatmul.mubr.f32.gmra.mrb[0].mxu0 %v315
    %v702 = vpop.f32.mrb[0].mxu0
    %v703 = vadd.f32 %v123, %v702
    %v704 = vpop.f32.mrb[0].mxu0
    %705 = vdwg.mxu0
    %v706 = vmax.f32 %v388, 0.0
    %v707 = vmax.f32 %v393, 0.0
    %v708 = vmax.f32 %v398, 0.0
    %v709 = vmax.f32 %v403, 0.0
    %v710 = vmax.f32 %v408, 0.0
    %v711 = vmax.f32 %v413, 0.0
    %v712 = vmax.f32 %v418, 0.0
    %v713 = vmax.f32 %v423, 0.0
    %v714 = vmax.f32 %v428, 0.0
    %v715 = vmax.f32 %v433, 0.0
    %v716 = vmax.f32 %v438, 0.0
    %v717 = vmax.f32 %v443, 0.0
    %v718 = vmax.f32 %v448, 0.0
    %v719 = vmax.f32 %v453, 0.0
    %v720 = vmax.f32 %v458, 0.0
    %v721 = vmax.f32 %v463, 0.0
    %v722 = vmax.f32 %v468, 0.0
    %v723 = vmax.f32 %v473, 0.0
    %v724 = vmax.f32 %v478, 0.0
    %v725 = vmax.f32 %v483, 0.0
    %v726 = vmax.f32 %v488, 0.0
    %v727 = vmax.f32 %v493, 0.0
    %v728 = vmax.f32 %v498, 0.0
    %v729 = vmax.f32 %v503, 0.0
    %v730 = vmax.f32 %v508, 0.0
    %v731 = vmax.f32 %v513, 0.0
    %v732 = vmax.f32 %v518, 0.0
    %v733 = vmax.f32 %v523, 0.0
    %v734 = vmax.f32 %v528, 0.0
    %v735 = vmax.f32 %v533, 0.0
    %v736 = vmax.f32 %v538, 0.0
    %v737 = vmax.f32 %v543, 0.0
    %v738 = vmax.f32 %v548, 0.0
    %v739 = vmax.f32 %v553, 0.0
    %v740 = vmax.f32 %v558, 0.0
    %v741 = vmax.f32 %v563, 0.0
    %v742 = vmax.f32 %v568, 0.0
    %v743 = vmax.f32 %v573, 0.0
    %v744 = vmax.f32 %v578, 0.0
    %v745 = vmax.f32 %v583, 0.0
    %v746 = vmax.f32 %v588, 0.0
    %v747 = vmax.f32 %v593, 0.0
    %v748 = vmax.f32 %v598, 0.0
    %v749 = vmax.f32 %v603, 0.0
    %v750 = vmax.f32 %v608, 0.0
    %v751 = vmax.f32 %v613, 0.0
    %v752 = vmax.f32 %v618, 0.0
    %v753 = vmax.f32 %v623, 0.0
    %v754 = vmax.f32 %v628, 0.0
    %v755 = vmax.f32 %v633, 0.0
    %v756 = vmax.f32 %v638, 0.0
    %v757 = vmax.f32 %v643, 0.0
    %v758 = vmax.f32 %v648, 0.0
    %v759 = vmax.f32 %v653, 0.0
    %v760 = vmax.f32 %v658, 0.0
    %v761 = vmax.f32 %v663, 0.0
    %v762 = vmax.f32 %v668, 0.0
    %v763 = vmax.f32 %v673, 0.0
    %v764 = vmax.f32 %v678, 0.0
    %v765 = vmax.f32 %v683, 0.0
    %v766 = vmax.f32 %v688, 0.0
    %v767 = vmax.f32 %v693, 0.0
    %v768 = vmax.f32 %v698, 0.0
    %v769 = vmax.f32 %v703, 0.0
    %770 = vmatprep.subr.mxu0 0.0
    %771 = vmatpush1.msra.mxu0 %v706
    %772 = vmatprep.subr.mxu0 0.0
    %773 = vmatpush1.msra.mxu0 %v707
    %774 = vmatprep.subr.mxu0 0.0
    %775 = vmatpush1.msra.mxu0 %v708
    %776 = vmatprep.subr.mxu0 0.0
    %777 = vmatpush1.msra.mxu0 %v709
    %778 = vmatprep.subr.mxu0 0.0
    %779 = vmatpush1.msra.mxu0 %v710
    %780 = vmatprep.subr.mxu0 0.0
    %781 = vmatpush1.msra.mxu0 %v711
    %782 = vmatprep.subr.mxu0 0.0
    %783 = vmatpush1.msra.mxu0 %v712
    %784 = vmatprep.subr.mxu0 0.0
    %785 = vmatpush1.msra.mxu0 %v713
    %786 = vmatprep.subr.mxu0 0.0
    %787 = vmatpush1.msra.mxu0 %v714
    %788 = vmatprep.subr.mxu0 0.0
    %789 = vmatpush1.msra.mxu0 %v715
    %790 = vmatprep.subr.mxu0 0.0
    %791 = vmatpush1.msra.mxu0 %v716
    %792 = vmatprep.subr.mxu0 0.0
    %793 = vmatpush1.msra.mxu0 %v717
    %794 = vmatprep.subr.mxu0 0.0
    %795 = vmatpush1.msra.mxu0 %v718
    %796 = vmatprep.subr.mxu0 0.0
    %797 = vmatpush1.msra.mxu0 %v719
    %798 = vmatprep.subr.mxu0 0.0
    %799 = vmatpush1.msra.mxu0 %v720
    %800 = vmatprep.subr.mxu0 0.0
    %801 = vmatpush1.msra.mxu0 %v721
    %802 = vmatprep.subr.mxu0 0.0
    %803 = vmatpush1.msra.mxu0 %v722
    %804 = vmatprep.subr.mxu0 0.0
    %805 = vmatpush1.msra.mxu0 %v723
    %806 = vmatprep.subr.mxu0 0.0
    %807 = vmatpush1.msra.mxu0 %v724
    %808 = vmatprep.subr.mxu0 0.0
    %809 = vmatpush1.msra.mxu0 %v725
    %810 = vmatprep.subr.mxu0 0.0
    %811 = vmatpush1.msra.mxu0 %v726
    %812 = vmatprep.subr.mxu0 0.0
    %813 = vmatpush1.msra.mxu0 %v727
    %814 = vmatprep.subr.mxu0 0.0
    %815 = vmatpush1.msra.mxu0 %v728
    %816 = vmatprep.subr.mxu0 0.0
    %817 = vmatpush1.msra.mxu0 %v729
    %818 = vmatprep.subr.mxu0 0.0
    %819 = vmatpush1.msra.mxu0 %v730
    %820 = vmatprep.subr.mxu0 0.0
    %821 = vmatpush1.msra.mxu0 %v731
    %822 = vmatprep.subr.mxu0 0.0
    %823 = vmatpush1.msra.mxu0 %v732
    %824 = vmatprep.subr.mxu0 0.0
    %825 = vmatpush1.msra.mxu0 %v733
    %826 = vmatprep.subr.mxu0 0.0
    %827 = vmatpush1.msra.mxu0 %v734
    %828 = vmatprep.subr.mxu0 0.0
    %829 = vmatpush1.msra.mxu0 %v735
    %830 = vmatprep.subr.mxu0 0.0
    %831 = vmatpush1.msra.mxu0 %v736
    %832 = vmatprep.subr.mxu0 0.0
    %833 = vmatpush1.msra.mxu0 %v737
    %834 = vmatprep.mubr.f32.mxu0 %v53
    %835 = vmatmul.mubr.f32.gmra.mrb[0].mxu0 %v52
    %v836 = vpop.f32.mrb[0].mxu0
    %v837 = vadd.f32 0.0, %v836
    %v838 = vpop.f32.mrb[0].mxu0
    %839 = vdwg.mxu0
    %840 = vmatprep.subr.mxu0 0.0
    %841 = vmatpush1.msra.mxu0 %v738
    %842 = vmatprep.subr.mxu0 0.0
    %843 = vmatpush1.msra.mxu0 %v739
    %844 = vmatprep.subr.mxu0 0.0
    %845 = vmatpush1.msra.mxu0 %v740
    %846 = vmatprep.subr.mxu0 0.0
    %847 = vmatpush1.msra.mxu0 %v741
    %848 = vmatprep.subr.mxu0 0.0
    %849 = vmatpush1.msra.mxu0 %v742
    %850 = vmatprep.subr.mxu0 0.0
    %851 = vmatpush1.msra.mxu0 %v743
    %852 = vmatprep.subr.mxu0 0.0
    %853 = vmatpush1.msra.mxu0 %v744
    %854 = vmatprep.subr.mxu0 0.0
    %855 = vmatpush1.msra.mxu0 %v745
    %856 = vmatprep.subr.mxu0 0.0
    %857 = vmatpush1.msra.mxu0 %v746
    %858 = vmatprep.subr.mxu0 0.0
    %859 = vmatpush1.msra.mxu0 %v747
    %860 = vmatprep.subr.mxu0 0.0
    %861 = vmatpush1.msra.mxu0 %v748
    %862 = vmatprep.subr.mxu0 0.0
    %863 = vmatpush1.msra.mxu0 %v749
    %864 = vmatprep.subr.mxu0 0.0
    %865 = vmatpush1.msra.mxu0 %v750
    %866 = vmatprep.subr.mxu0 0.0
    %867 = vmatpush1.msra.mxu0 %v751
    %868 = vmatprep.subr.mxu0 0.0
    %869 = vmatpush1.msra.mxu0 %v752
    %870 = vmatprep.subr.mxu0 0.0
    %871 = vmatpush1.msra.mxu0 %v753
    %872 = vmatprep.subr.mxu0 0.0
    %873 = vmatpush1.msra.mxu0 %v754
    %874 = vmatprep.subr.mxu0 0.0
    %875 = vmatpush1.msra.mxu0 %v755
    %876 = vmatprep.subr.mxu0 0.0
    %877 = vmatpush1.msra.mxu0 %v756
    %878 = vmatprep.subr.mxu0 0.0
    %879 = vmatpush1.msra.mxu0 %v757
    %880 = vmatprep.subr.mxu0 0.0
    %881 = vmatpush1.msra.mxu0 %v758
    %882 = vmatprep.subr.mxu0 0.0
    %883 = vmatpush1.msra.mxu0 %v759
    %884 = vmatprep.subr.mxu0 0.0
    %885 = vmatpush1.msra.mxu0 %v760
    %886 = vmatprep.subr.mxu0 0.0
    %887 = vmatpush1.msra.mxu0 %v761
    %888 = vmatprep.subr.mxu0 0.0
    %889 = vmatpush1.msra.mxu0 %v762
    %890 = vmatprep.subr.mxu0 0.0
    %891 = vmatpush1.msra.mxu0 %v763
    %892 = vmatprep.subr.mxu0 0.0
    %893 = vmatpush1.msra.mxu0 %v764
    %894 = vmatprep.subr.mxu0 0.0
    %895 = vmatpush1.msra.mxu0 %v765
    %896 = vmatprep.subr.mxu0 0.0
    %897 = vmatpush1.msra.mxu0 %v766
    %898 = vmatprep.subr.mxu0 0.0
    %899 = vmatpush1.msra.mxu0 %v767
    %900 = vmatprep.subr.mxu0 0.0
    %901 = vmatpush1.msra.mxu0 %v768
    %902 = vmatprep.subr.mxu0 0.0
    %903 = vmatpush1.msra.mxu0 %v769
    %904 = vmatprep.mubr.f32.mxu0 %v55
    %905 = vmatmul.mubr.f32.gmra.mrb[0].mxu0 %v54
    %v906 = vpop.f32.mrb[0].mxu0
    %v907 = vadd.f32 %v837, %v906
    %v908 = vpop.f32.mrb[0].mxu0
    %909 = vdwg.mxu0
    %v910 = vlaneseq
    %v911 = vshrl.u32 %v910, 7
    %v912 = vsub.s32 0, %v911
    %v913 = vrot.slane %v24, %v912
    %vm914 = vcmask 130048
    %v916 = vsel %vm914, %v907, 0
    %918 = vmatprep.subr.mxu0 0.0
    %919 = vmatpush1.msra.mxu0 %v18
    %920 = vmatprep.subr.mxu0 0.0
    %921 = vmatpush1.msra.mxu0 %v19
    %922 = vmatprep.subr.mxu0 0.0
    %923 = vmatpush1.msra.mxu0 0.0
    %924 = vmatprep.subr.mxu0 0.0
    %925 = vmatpush1.msra.mxu0 0.0
    %926 = vmatprep.subr.mxu0 0.0
    %927 = vmatpush1.msra.mxu0 0.0
    %928 = vmatprep.subr.mxu0 0.0
    %929 = vmatpush1.msra.mxu0 0.0
    %930 = vmatprep.subr.mxu0 0.0
    %931 = vmatpush1.msra.mxu0 0.0
    %932 = vmatprep.subr.mxu0 0.0
    %933 = vmatpush1.msra.mxu0 0.0
    %934 = vmatprep.subr.mxu0 0.0
    %935 = vmatpush1.msra.mxu0 0.0
    %936 = vmatprep.subr.mxu0 0.0
    %937 = vmatpush1.msra.mxu0 0.0
    %938 = vmatprep.subr.mxu0 0.0
    %939 = vmatpush1.msra.mxu0 0.0
    %940 = vmatprep.subr.mxu0 0.0
    %941 = vmatpush1.msra.mxu0 0.0
    %942 = vmatprep.subr.mxu0 0.0
    %943 = vmatpush1.msra.mxu0 0.0
    %944 = vmatprep.subr.mxu0 0.0
    %945 = vmatpush1.msra.mxu0 0.0
    %946 = vmatprep.subr.mxu0 0.0
    %947 = vmatpush1.msra.mxu0 0.0
    %948 = vmatprep.subr.mxu0 0.0
    %949 = vmatpush1.msra.mxu0 0.0
    %950 = vmatprep.subr.mxu0 0.0
    %951 = vmatpush1.msra.mxu0 0.0
    %952 = vmatprep.subr.mxu0 0.0
    %953 = vmatpush1.msra.mxu0 0.0
    %954 = vmatprep.subr.mxu0 0.0
    %955 = vmatpush1.msra.mxu0 0.0
    %956 = vmatprep.subr.mxu0 0.0
    %957 = vmatpush1.msra.mxu0 0.0
    %958 = vmatprep.subr.mxu0 0.0
    %959 = vmatpush1.msra.mxu0 0.0
    %960 = vmatprep.subr.mxu0 0.0
    %961 = vmatpush1.msra.mxu0 0.0
    %962 = vmatprep.subr.mxu0 0.0
    %963 = vmatpush1.msra.mxu0 0.0
    %964 = vmatprep.subr.mxu0 0.0
    %965 = vmatpush1.msra.mxu0 0.0
    %966 = vmatprep.subr.mxu0 0.0
    %967 = vmatpush1.msra.mxu0 0.0
    %968 = vmatprep.subr.mxu0 0.0
    %969 = vmatpush1.msra.mxu0 0.0
    %970 = vmatprep.subr.mxu0 0.0
    %971 = vmatpush1.msra.mxu0 0.0
    %972 = vmatprep.subr.mxu0 0.0
    %973 = vmatpush1.msra.mxu0 0.0
    %974 = vmatprep.subr.mxu0 0.0
    %975 = vmatpush1.msra.mxu0 0.0
    %976 = vmatprep.subr.mxu0 0.0
    %977 = vmatpush1.msra.mxu0 0.0
    %978 = vmatprep.subr.mxu0 0.0
    %979 = vmatpush1.msra.mxu0 0.0
    %980 = vmatprep.subr.mxu0 0.0
    %981 = vmatpush1.msra.mxu0 0.0
    %982 = vmatprep.mubr.f32.mxu0 0.0
    %983 = vmatmul.mubr.f32.gmra.mrb[0].mxu0 %v916
    %v984 = vpop.f32.mrb[0].mxu0
    %v985 = vadd.f32 %v913, %v984
    %v986 = vpop.f32.mrb[0].mxu0
    %987 = vdwg.mxu0
    %vm988 = vcmask 261120
    %v990 = vsel %vm988, 0.0, 0
    %992 = vmatprep.subr.mxu0 0.0
    %993 = vmatpush1.msra.mxu0 %v20
    %994 = vmatprep.subr.mxu0 0.0
    %995 = vmatpush1.msra.mxu0 %v21
    %996 = vmatprep.subr.mxu0 0.0
    %997 = vmatpush1.msra.mxu0 %v22
    %998 = vmatprep.subr.mxu0 0.0
    %999 = vmatpush1.msra.mxu0 %v23
    %1000 = vmatprep.subr.mxu0 0.0
    %1001 = vmatpush1.msra.mxu0 0.0
    %1002 = vmatprep.subr.mxu0 0.0
    %1003 = vmatpush1.msra.mxu0 0.0
    %1004 = vmatprep.subr.mxu0 0.0
    %1005 = vmatpush1.msra.mxu0 0.0
    %1006 = vmatprep.subr.mxu0 0.0
    %1007 = vmatpush1.msra.mxu0 0.0
    %1008 = vmatprep.subr.mxu0 0.0
    %1009 = vmatpush1.msra.mxu0 0.0
    %1010 = vmatprep.subr.mxu0 0.0
    %1011 = vmatpush1.msra.mxu0 0.0
    %1012 = vmatprep.subr.mxu0 0.0
    %1013 = vmatpush1.msra.mxu0 0.0
    %1014 = vmatprep.subr.mxu0 0.0
    %1015 = vmatpush1.msra.mxu0 0.0
    %1016 = vmatprep.subr.mxu0 0.0
    %1017 = vmatpush1.msra.mxu0 0.0
    %1018 = vmatprep.subr.mxu0 0.0
    %1019 = vmatpush1.msra.mxu0 0.0
    %1020 = vmatprep.subr.mxu0 0.0
    %1021 = vmatpush1.msra.mxu0 0.0
    %1022 = vmatprep.subr.mxu0 0.0
    %1023 = vmatpush1.msra.mxu0 0.0
    %1024 = vmatprep.subr.mxu0 0.0
    %1025 = vmatpush1.msra.mxu0 0.0
    %1026 = vmatprep.subr.mxu0 0.0
    %1027 = vmatpush1.msra.mxu0 0.0
    %1028 = vmatprep.subr.mxu0 0.0
    %1029 = vmatpush1.msra.mxu0 0.0
    %1030 = vmatprep.subr.mxu0 0.0
    %1031 = vmatpush1.msra.mxu0 0.0
    %1032 = vmatprep.subr.mxu0 0.0
    %1033 = vmatpush1.msra.mxu0 0.0
    %1034 = vmatprep.subr.mxu0 0.0
    %1035 = vmatpush1.msra.mxu0 0.0
    %1036 = vmatprep.subr.mxu0 0.0
    %1037 = vmatpush1.msra.mxu0 0.0
    %1038 = vmatprep.subr.mxu0 0.0
    %1039 = vmatpush1.msra.mxu0 0.0
    %1040 = vmatprep.subr.mxu0 0.0
    %1041 = vmatpush1.msra.mxu0 0.0
    %1042 = vmatprep.subr.mxu0 0.0
    %1043 = vmatpush1.msra.mxu0 0.0
    %1044 = vmatprep.subr.mxu0 0.0
    %1045 = vmatpush1.msra.mxu0 0.0
    %1046 = vmatprep.subr.mxu0 0.0
    %1047 = vmatpush1.msra.mxu0 0.0
    %1048 = vmatprep.subr.mxu0 0.0
    %1049 = vmatpush1.msra.mxu0 0.0
    %1050 = vmatprep.subr.mxu0 0.0
    %1051 = vmatpush1.msra.mxu0 0.0
    %1052 = vmatprep.subr.mxu0 0.0
    %1053 = vmatpush1.msra.mxu0 0.0
    %1054 = vmatprep.subr.mxu0 0.0
    %1055 = vmatpush1.msra.mxu0 0.0
    %1056 = vmatprep.mubr.f32.mxu0 0.0
    %1057 = vmatmul.mubr.f32.gmra.mrb[0].mxu0 %v990
    %v1058 = vpop.f32.mrb[0].mxu0
    %v1059 = vadd.f32 0.0, %v1058
    %v1060 = vpop.f32.mrb[0].mxu0
    %1061 = vdwg.mxu0
    %v1062 = vadd.f32 %v985, %v1059
    %v1063 = vtanh.pop %v1062
    %v1064 = vld [vmem:[%s0 + $0x200] sm:$0xff]
    %v1065 = vld [vmem:[%s0 + $0x208] sm:$0xff]
    %v1066 = vld [vmem:[%s0 + $0x210] sm:$0xff]
    %v1067 = vld [vmem:[%s0 + $0x218] sm:$0xff]
    %v1068 = vld [vmem:[%s0 + $0x220] sm:$0xff]
    %v1069 = vld [vmem:[%s0 + $0x228] sm:$0xff]
    %v1070 = vld [vmem:[%s0 + $0x230] sm:$0xff]
    %v1071 = vld [vmem:[%s0 + $0x238] sm:$0xff]
    %v1072 = vld [vmem:[%s0 + $0x240] sm:$0xff]
    %v1073 = vld [vmem:[%s0 + $0x248] sm:$0xff]
    %v1074 = vld [vmem:[%s0 + $0x250] sm:$0xff]
    %v1075 = vld [vmem:[%s0 + $0x258] sm:$0xff]
    %v1076 = vld [vmem:[%s0 + $0x260] sm:$0xff]
    %v1077 = vld [vmem:[%s0 + $0x268] sm:$0xff]
    %v1078 = vld [vmem:[%s0 + $0x270] sm:$0xff]
    %v1079 = vld [vmem:[%s0 + $0x278] sm:$0xff]
    %v1080 = vld [vmem:[%s0 + $0x280] sm:$0xff]
    %v1081 = vld [vmem:[%s0 + $0x288] sm:$0xff]
    %v1082 = vld [vmem:[%s0 + $0x290] sm:$0xff]
    %v1083 = vld [vmem:[%s0 + $0x298] sm:$0xff]
    %v1084 = vld [vmem:[%s0 + $0x2a0] sm:$0xff]
    %v1085 = vld [vmem:[%s0 + $0x2a8] sm:$0xff]
    %v1086 = vld [vmem:[%s0 + $0x2b0] sm:$0xff]
    %v1087 = vld [vmem:[%s0 + $0x2b8] sm:$0xff]
    %v1088 = vld [vmem:[%s0 + $0x2c0] sm:$0xff]
    %v1089 = vld [vmem:[%s0 + $0x2c8] sm:$0xff]
    %v1090 = vld [vmem:[%s0 + $0x2d0] sm:$0xff]
    %v1091 = vld [vmem:[%s0 + $0x2d8] sm:$0xff]
    %v1092 = vld [vmem:[%s0 + $0x2e0] sm:$0xff]
    %v1093 = vld [vmem:[%s0 + $0x2e8] sm:$0xff]
    %v1094 = vld [vmem:[%s0 + $0x2f0] sm:$0xff]
    %v1095 = vld [vmem:[%s0 + $0x2f8] sm:$0xff]
    %v1096 = vld [vmem:[%s0 + $0x300] sm:$0xff]
    %v1097 = vld [vmem:[%s0 + $0x308] sm:$0xff]
    %v1098 = vld [vmem:[%s0 + $0x310] sm:$0xff]
    %v1099 = vld [vmem:[%s0 + $0x318] sm:$0xff]
    %v1100 = vld [vmem:[%s0 + $0x320] sm:$0xff]
    %v1101 = vld [vmem:[%s0 + $0x328] sm:$0xff]
    %v1102 = vld [vmem:[%s0 + $0x330] sm:$0xff]
    %v1103 = vld [vmem:[%s0 + $0x338] sm:$0xff]
    %v1104 = vld [vmem:[%s0 + $0x340] sm:$0xff]
    %v1105 = vld [vmem:[%s0 + $0x348] sm:$0xff]
    %v1106 = vld [vmem:[%s0 + $0x350] sm:$0xff]
    %v1107 = vld [vmem:[%s0 + $0x358] sm:$0xff]
    %v1108 = vld [vmem:[%s0 + $0x360] sm:$0xff]
    %v1109 = vld [vmem:[%s0 + $0x368] sm:$0xff]
    %v1110 = vld [vmem:[%s0 + $0x370] sm:$0xff]
    %v1111 = vld [vmem:[%s0 + $0x378] sm:$0xff]
    %v1112 = vld [vmem:[%s0 + $0x380] sm:$0xff]
    %v1113 = vld [vmem:[%s0 + $0x388] sm:$0xff]
    %v1114 = vld [vmem:[%s0 + $0x390] sm:$0xff]
    %v1115 = vld [vmem:[%s0 + $0x398] sm:$0xff]
    %v1116 = vld [vmem:[%s0 + $0x3a0] sm:$0xff]
    %v1117 = vld [vmem:[%s0 + $0x3a8] sm:$0xff]
    %v1118 = vld [vmem:[%s0 + $0x3b0] sm:$0xff]
    %v1119 = vld [vmem:[%s0 + $0x3b8] sm:$0xff]
    %v1120 = vld [vmem:[%s0 + $0x3c0] sm:$0xff]
    %v1121 = vld [vmem:[%s0 + $0x3c8] sm:$0xff]
    %v1122 = vld [vmem:[%s0 + $0x3d0] sm:$0xff]
    %v1123 = vld [vmem:[%s0 + $0x3d8] sm:$0xff]
    %v1124 = vld [vmem:[%s0 + $0x3e0] sm:$0xff]
    %v1125 = vld [vmem:[%s0 + $0x3e8] sm:$0xff]
    %v1126 = vld [vmem:[%s0 + $0x3f0] sm:$0xff]
    %v1127 = vld [vmem:[%s0 + $0x3f8] sm:$0xff]
    %v1129 = vsel %vm124, %v1064, 0
    %v1132 = vsel %vm124, %v1065, 0
    %v1135 = vsel %vm124, %v1066, 0
    %v1138 = vsel %vm124, %v1067, 0
    %v1141 = vsel %vm124, %v1068, 0
    %v1144 = vsel %vm124, %v1069, 0
    %v1147 = vsel %vm124, %v1070, 0
    %v1150 = vsel %vm124, %v1071, 0
    %v1153 = vsel %vm124, %v1072, 0
    %v1156 = vsel %vm124, %v1073, 0
    %v1159 = vsel %vm124, %v1074, 0
    %v1162 = vsel %vm124, %v1075, 0
    %v1165 = vsel %vm124, %v1076, 0
    %v1168 = vsel %vm124, %v1077, 0
    %v1171 = vsel %vm124, %v1078, 0
    %v1174 = vsel %vm124, %v1079, 0
    %v1177 = vsel %vm124, %v1080, 0
    %v1180 = vsel %vm124, %v1081, 0
    %v1183 = vsel %vm124, %v1082, 0
    %v1186 = vsel %vm124, %v1083, 0
    %v1189 = vsel %vm124, %v1084, 0
    %v1192 = vsel %vm124, %v1085, 0
    %v1195 = vsel %vm124, %v1086, 0
    %v1198 = vsel %vm124, %v1087, 0
    %v1201 = vsel %vm124, %v1088, 0
    %v1204 = vsel %vm124, %v1089, 0
    %v1207 = vsel %vm124, %v1090, 0
    %v1210 = vsel %vm124, %v1091, 0
    %v1213 = vsel %vm124, %v1092, 0
    %v1216 = vsel %vm124, %v1093, 0
    %v1219 = vsel %vm124, %v1094, 0
    %v1222 = vsel %vm124, %v1095, 0
    %v1225 = vsel %vm124, %v1096, 0
    %v1228 = vsel %vm124, %v1097, 0
    %v1231 = vsel %vm124, %v1098, 0
    %v1234 = vsel %vm124, %v1099, 0
    %v1237 = vsel %vm124, %v1100, 0
    %v1240 = vsel %vm124, %v1101, 0
    %v1243 = vsel %vm124, %v1102, 0
    %v1246 = vsel %vm124, %v1103, 0
    %v1249 = vsel %vm124, %v1104, 0
    %v1252 = vsel %vm124, %v1105, 0
    %v1255 = vsel %vm124, %v1106, 0
    %v1258 = vsel %vm124, %v1107, 0
    %v1261 = vsel %vm124, %v1108, 0
    %v1264 = vsel %vm124, %v1109, 0
    %v1267 = vsel %vm124, %v1110, 0
    %v1270 = vsel %vm124, %v1111, 0
    %v1273 = vsel %vm124, %v1112, 0
    %v1276 = vsel %vm124, %v1113, 0
    %v1279 = vsel %vm124, %v1114, 0
    %v1282 = vsel %vm124, %v1115, 0
    %v1285 = vsel %vm124, %v1116, 0
    %v1288 = vsel %vm124, %v1117, 0
    %v1291 = vsel %vm124, %v1118, 0
    %v1294 = vsel %vm124, %v1119, 0
    %v1297 = vsel %vm124, %v1120, 0
    %v1300 = vsel %vm124, %v1121, 0
    %v1303 = vsel %vm124, %v1122, 0
    %v1306 = vsel %vm124, %v1123, 0
    %v1309 = vsel %vm124, %v1124, 0
    %v1312 = vsel %vm124, %v1125, 0
    %v1315 = vsel %vm124, %v1126, 0
    %v1318 = vsel %vm124, %v1127, 0
    %1320 = vmatprep.subr.mxu0 0.0
    %1321 = vmatpush1.msra.mxu0 %v12
    %1322 = vmatprep.subr.mxu0 0.0
    %1323 = vmatpush1.msra.mxu0 %v13
    %1324 = vmatprep.subr.mxu0 0.0
    %1325 = vmatpush1.msra.mxu0 %v14
    %1326 = vmatprep.subr.mxu0 0.0
    %1327 = vmatpush1.msra.mxu0 %v15
    %1328 = vmatprep.subr.mxu0 0.0
    %1329 = vmatpush1.msra.mxu0 %v319
    %1330 = vmatprep.subr.mxu0 0.0
    %1331 = vmatpush1.msra.mxu0 0.0
    %1332 = vmatprep.subr.mxu0 0.0
    %1333 = vmatpush1.msra.mxu0 0.0
    %1334 = vmatprep.subr.mxu0 0.0
    %1335 = vmatpush1.msra.mxu0 0.0
    %1336 = vmatprep.subr.mxu0 0.0
    %1337 = vmatpush1.msra.mxu0 0.0
    %1338 = vmatprep.subr.mxu0 0.0
    %1339 = vmatpush1.msra.mxu0 0.0
    %1340 = vmatprep.subr.mxu0 0.0
    %1341 = vmatpush1.msra.mxu0 0.0
    %1342 = vmatprep.subr.mxu0 0.0
    %1343 = vmatpush1.msra.mxu0 0.0
    %1344 = vmatprep.subr.mxu0 0.0
    %1345 = vmatpush1.msra.mxu0 0.0
    %1346 = vmatprep.subr.mxu0 0.0
    %1347 = vmatpush1.msra.mxu0 0.0
    %1348 = vmatprep.subr.mxu0 0.0
    %1349 = vmatpush1.msra.mxu0 0.0
    %1350 = vmatprep.subr.mxu0 0.0
    %1351 = vmatpush1.msra.mxu0 0.0
    %1352 = vmatprep.subr.mxu0 0.0
    %1353 = vmatpush1.msra.mxu0 0.0
    %1354 = vmatprep.subr.mxu0 0.0
    %1355 = vmatpush1.msra.mxu0 0.0
    %1356 = vmatprep.subr.mxu0 0.0
    %1357 = vmatpush1.msra.mxu0 0.0
    %1358 = vmatprep.subr.mxu0 0.0
    %1359 = vmatpush1.msra.mxu0 0.0
    %1360 = vmatprep.subr.mxu0 0.0
    %1361 = vmatpush1.msra.mxu0 0.0
    %1362 = vmatprep.subr.mxu0 0.0
    %1363 = vmatpush1.msra.mxu0 0.0
    %1364 = vmatprep.subr.mxu0 0.0
    %1365 = vmatpush1.msra.mxu0 0.0
    %1366 = vmatprep.subr.mxu0 0.0
    %1367 = vmatpush1.msra.mxu0 0.0
    %1368 = vmatprep.subr.mxu0 0.0
    %1369 = vmatpush1.msra.mxu0 0.0
    %1370 = vmatprep.subr.mxu0 0.0
    %1371 = vmatpush1.msra.mxu0 0.0
    %1372 = vmatprep.subr.mxu0 0.0
    %1373 = vmatpush1.msra.mxu0 0.0
    %1374 = vmatprep.subr.mxu0 0.0
    %1375 = vmatpush1.msra.mxu0 0.0
    %1376 = vmatprep.subr.mxu0 0.0
    %1377 = vmatpush1.msra.mxu0 0.0
    %1378 = vmatprep.subr.mxu0 0.0
    %1379 = vmatpush1.msra.mxu0 0.0
    %1380 = vmatprep.subr.mxu0 0.0
    %1381 = vmatpush1.msra.mxu0 0.0
    %1382 = vmatprep.subr.mxu0 0.0
    %1383 = vmatpush1.msra.mxu0 0.0
    %1384 = vmatprep.mubr.f32.mxu0 0.0
    %1385 = vmatmul.mubr.f32.gmra.mrb[0].mxu0 %v1129
    %v1386 = vpop.f32.mrb[0].mxu0
    %v1387 = vadd.f32 %v123, %v1386
    %v1388 = vpop.f32.mrb[0].mxu0
    %1389 = vmatprep.mubr.f32.mxu0 0.0
    %1390 = vmatmul.mubr.f32.gmra.mrb[0].mxu0 %v1132
    %v1391 = vpop.f32.mrb[0].mxu0
    %v1392 = vadd.f32 %v123, %v1391
    %v1393 = vpop.f32.mrb[0].mxu0
    %1394 = vmatprep.mubr.f32.mxu0 0.0
    %1395 = vmatmul.mubr.f32.gmra.mrb[0].mxu0 %v1135
    %v1396 = vpop.f32.mrb[0].mxu0
    %v1397 = vadd.f32 %v123, %v1396
    %v1398 = vpop.f32.mrb[0].mxu0
    %1399 = vmatprep.mubr.f32.mxu0 0.0
    %1400 = vmatmul.mubr.f32.gmra.mrb[0].mxu0 %v1138
    %v1401 = vpop.f32.mrb[0].mxu0
    %v1402 = vadd.f32 %v123, %v1401
    %v1403 = vpop.f32.mrb[0].mxu0
    %1404 = vmatprep.mubr.f32.mxu0 0.0
    %1405 = vmatmul.mubr.f32.gmra.mrb[0].mxu0 %v1141
    %v1406 = vpop.f32.mrb[0].mxu0
    %v1407 = vadd.f32 %v123, %v1406
    %v1408 = vpop.f32.mrb[0].mxu0
    %1409 = vmatprep.mubr.f32.mxu0 0.0
    %1410 = vmatmul.mubr.f32.gmra.mrb[0].mxu0 %v1144
    %v1411 = vpop.f32.mrb[0].mxu0
    %v1412 = vadd.f32 %v123, %v1411
    %v1413 = vpop.f32.mrb[0].mxu0
    %1414 = vmatprep.mubr.f32.mxu0 0.0
    %1415 = vmatmul.mubr.f32.gmra.mrb[0].mxu0 %v1147
    %v1416 = vpop.f32.mrb[0].mxu0
    %v1417 = vadd.f32 %v123, %v1416
    %v1418 = vpop.f32.mrb[0].mxu0
    %1419 = vmatprep.mubr.f32.mxu0 0.0
    %1420 = vmatmul.mubr.f32.gmra.mrb[0].mxu0 %v1150
    %v1421 = vpop.f32.mrb[0].mxu0
    %v1422 = vadd.f32 %v123, %v1421
    %v1423 = vpop.f32.mrb[0].mxu0
    %1424 = vmatprep.mubr.f32.mxu0 0.0
    %1425 = vmatmul.mubr.f32.gmra.mrb[0].mxu0 %v1153
    %v1426 = vpop.f32.mrb[0].mxu0
    %v1427 = vadd.f32 %v123, %v1426
    %v1428 = vpop.f32.mrb[0].mxu0
    %1429 = vmatprep.mubr.f32.mxu0 0.0
    %1430 = vmatmul.mubr.f32.gmra.mrb[0].mxu0 %v1156
    %v1431 = vpop.f32.mrb[0].mxu0
    %v1432 = vadd.f32 %v123, %v1431
    %v1433 = vpop.f32.mrb[0].mxu0
    %1434 = vmatprep.mubr.f32.mxu0 0.0
    %1435 = vmatmul.mubr.f32.gmra.mrb[0].mxu0 %v1159
    %v1436 = vpop.f32.mrb[0].mxu0
    %v1437 = vadd.f32 %v123, %v1436
    %v1438 = vpop.f32.mrb[0].mxu0
    %1439 = vmatprep.mubr.f32.mxu0 0.0
    %1440 = vmatmul.mubr.f32.gmra.mrb[0].mxu0 %v1162
    %v1441 = vpop.f32.mrb[0].mxu0
    %v1442 = vadd.f32 %v123, %v1441
    %v1443 = vpop.f32.mrb[0].mxu0
    %1444 = vmatprep.mubr.f32.mxu0 0.0
    %1445 = vmatmul.mubr.f32.gmra.mrb[0].mxu0 %v1165
    %v1446 = vpop.f32.mrb[0].mxu0
    %v1447 = vadd.f32 %v123, %v1446
    %v1448 = vpop.f32.mrb[0].mxu0
    %1449 = vmatprep.mubr.f32.mxu0 0.0
    %1450 = vmatmul.mubr.f32.gmra.mrb[0].mxu0 %v1168
    %v1451 = vpop.f32.mrb[0].mxu0
    %v1452 = vadd.f32 %v123, %v1451
    %v1453 = vpop.f32.mrb[0].mxu0
    %1454 = vmatprep.mubr.f32.mxu0 0.0
    %1455 = vmatmul.mubr.f32.gmra.mrb[0].mxu0 %v1171
    %v1456 = vpop.f32.mrb[0].mxu0
    %v1457 = vadd.f32 %v123, %v1456
    %v1458 = vpop.f32.mrb[0].mxu0
    %1459 = vmatprep.mubr.f32.mxu0 0.0
    %1460 = vmatmul.mubr.f32.gmra.mrb[0].mxu0 %v1174
    %v1461 = vpop.f32.mrb[0].mxu0
    %v1462 = vadd.f32 %v123, %v1461
    %v1463 = vpop.f32.mrb[0].mxu0
    %1464 = vmatprep.mubr.f32.mxu0 0.0
    %1465 = vmatmul.mubr.f32.gmra.mrb[0].mxu0 %v1177
    %v1466 = vpop.f32.mrb[0].mxu0
    %v1467 = vadd.f32 %v123, %v1466
    %v1468 = vpop.f32.mrb[0].mxu0
    %1469 = vmatprep.mubr.f32.mxu0 0.0
    %1470 = vmatmul.mubr.f32.gmra.mrb[0].mxu0 %v1180
    %v1471 = vpop.f32.mrb[0].mxu0
    %v1472 = vadd.f32 %v123, %v1471
    %v1473 = vpop.f32.mrb[0].mxu0
    %1474 = vmatprep.mubr.f32.mxu0 0.0
    %1475 = vmatmul.mubr.f32.gmra.mrb[0].mxu0 %v1183
    %v1476 = vpop.f32.mrb[0].mxu0
    %v1477 = vadd.f32 %v123, %v1476
    %v1478 = vpop.f32.mrb[0].mxu0
    %1479 = vmatprep.mubr.f32.mxu0 0.0
    %1480 = vmatmul.mubr.f32.gmra.mrb[0].mxu0 %v1186
    %v1481 = vpop.f32.mrb[0].mxu0
    %v1482 = vadd.f32 %v123, %v1481
    %v1483 = vpop.f32.mrb[0].mxu0
    %1484 = vmatprep.mubr.f32.mxu0 0.0
    %1485 = vmatmul.mubr.f32.gmra.mrb[0].mxu0 %v1189
    %v1486 = vpop.f32.mrb[0].mxu0
    %v1487 = vadd.f32 %v123, %v1486
    %v1488 = vpop.f32.mrb[0].mxu0
    %1489 = vmatprep.mubr.f32.mxu0 0.0
    %1490 = vmatmul.mubr.f32.gmra.mrb[0].mxu0 %v1192
    %v1491 = vpop.f32.mrb[0].mxu0
    %v1492 = vadd.f32 %v123, %v1491
    %v1493 = vpop.f32.mrb[0].mxu0
    %1494 = vmatprep.mubr.f32.mxu0 0.0
    %1495 = vmatmul.mubr.f32.gmra.mrb[0].mxu0 %v1195
    %v1496 = vpop.f32.mrb[0].mxu0
    %v1497 = vadd.f32 %v123, %v1496
    %v1498 = vpop.f32.mrb[0].mxu0
    %1499 = vmatprep.mubr.f32.mxu0 0.0
    %1500 = vmatmul.mubr.f32.gmra.mrb[0].mxu0 %v1198
    %v1501 = vpop.f32.mrb[0].mxu0
    %v1502 = vadd.f32 %v123, %v1501
    %v1503 = vpop.f32.mrb[0].mxu0
    %1504 = vmatprep.mubr.f32.mxu0 0.0
    %1505 = vmatmul.mubr.f32.gmra.mrb[0].mxu0 %v1201
    %v1506 = vpop.f32.mrb[0].mxu0
    %v1507 = vadd.f32 %v123, %v1506
    %v1508 = vpop.f32.mrb[0].mxu0
    %1509 = vmatprep.mubr.f32.mxu0 0.0
    %1510 = vmatmul.mubr.f32.gmra.mrb[0].mxu0 %v1204
    %v1511 = vpop.f32.mrb[0].mxu0
    %v1512 = vadd.f32 %v123, %v1511
    %v1513 = vpop.f32.mrb[0].mxu0
    %1514 = vmatprep.mubr.f32.mxu0 0.0
    %1515 = vmatmul.mubr.f32.gmra.mrb[0].mxu0 %v1207
    %v1516 = vpop.f32.mrb[0].mxu0
    %v1517 = vadd.f32 %v123, %v1516
    %v1518 = vpop.f32.mrb[0].mxu0
    %1519 = vmatprep.mubr.f32.mxu0 0.0
    %1520 = vmatmul.mubr.f32.gmra.mrb[0].mxu0 %v1210
    %v1521 = vpop.f32.mrb[0].mxu0
    %v1522 = vadd.f32 %v123, %v1521
    %v1523 = vpop.f32.mrb[0].mxu0
    %1524 = vmatprep.mubr.f32.mxu0 0.0
    %1525 = vmatmul.mubr.f32.gmra.mrb[0].mxu0 %v1213
    %v1526 = vpop.f32.mrb[0].mxu0
    %v1527 = vadd.f32 %v123, %v1526
    %v1528 = vpop.f32.mrb[0].mxu0
    %1529 = vmatprep.mubr.f32.mxu0 0.0
    %1530 = vmatmul.mubr.f32.gmra.mrb[0].mxu0 %v1216
    %v1531 = vpop.f32.mrb[0].mxu0
    %v1532 = vadd.f32 %v123, %v1531
    %v1533 = vpop.f32.mrb[0].mxu0
    %1534 = vmatprep.mubr.f32.mxu0 0.0
    %1535 = vmatmul.mubr.f32.gmra.mrb[0].mxu0 %v1219
    %v1536 = vpop.f32.mrb[0].mxu0
    %v1537 = vadd.f32 %v123, %v1536
    %v1538 = vpop.f32.mrb[0].mxu0
    %1539 = vmatprep.mubr.f32.mxu0 0.0
    %1540 = vmatmul.mubr.f32.gmra.mrb[0].mxu0 %v1222
    %v1541 = vpop.f32.mrb[0].mxu0
    %v1542 = vadd.f32 %v123, %v1541
    %v1543 = vpop.f32.mrb[0].mxu0
    %1544 = vmatprep.mubr.f32.mxu0 0.0
    %1545 = vmatmul.mubr.f32.gmra.mrb[0].mxu0 %v1225
    %v1546 = vpop.f32.mrb[0].mxu0
    %v1547 = vadd.f32 %v123, %v1546
    %v1548 = vpop.f32.mrb[0].mxu0
    %1549 = vmatprep.mubr.f32.mxu0 0.0
    %1550 = vmatmul.mubr.f32.gmra.mrb[0].mxu0 %v1228
    %v1551 = vpop.f32.mrb[0].mxu0
    %v1552 = vadd.f32 %v123, %v1551
    %v1553 = vpop.f32.mrb[0].mxu0
    %1554 = vmatprep.mubr.f32.mxu0 0.0
    %1555 = vmatmul.mubr.f32.gmra.mrb[0].mxu0 %v1231
    %v1556 = vpop.f32.mrb[0].mxu0
    %v1557 = vadd.f32 %v123, %v1556
    %v1558 = vpop.f32.mrb[0].mxu0
    %1559 = vmatprep.mubr.f32.mxu0 0.0
    %1560 = vmatmul.mubr.f32.gmra.mrb[0].mxu0 %v1234
    %v1561 = vpop.f32.mrb[0].mxu0
    %v1562 = vadd.f32 %v123, %v1561
    %v1563 = vpop.f32.mrb[0].mxu0
    %1564 = vmatprep.mubr.f32.mxu0 0.0
    %1565 = vmatmul.mubr.f32.gmra.mrb[0].mxu0 %v1237
    %v1566 = vpop.f32.mrb[0].mxu0
    %v1567 = vadd.f32 %v123, %v1566
    %v1568 = vpop.f32.mrb[0].mxu0
    %1569 = vmatprep.mubr.f32.mxu0 0.0
    %1570 = vmatmul.mubr.f32.gmra.mrb[0].mxu0 %v1240
    %v1571 = vpop.f32.mrb[0].mxu0
    %v1572 = vadd.f32 %v123, %v1571
    %v1573 = vpop.f32.mrb[0].mxu0
    %1574 = vmatprep.mubr.f32.mxu0 0.0
    %1575 = vmatmul.mubr.f32.gmra.mrb[0].mxu0 %v1243
    %v1576 = vpop.f32.mrb[0].mxu0
    %v1577 = vadd.f32 %v123, %v1576
    %v1578 = vpop.f32.mrb[0].mxu0
    %1579 = vmatprep.mubr.f32.mxu0 0.0
    %1580 = vmatmul.mubr.f32.gmra.mrb[0].mxu0 %v1246
    %v1581 = vpop.f32.mrb[0].mxu0
    %v1582 = vadd.f32 %v123, %v1581
    %v1583 = vpop.f32.mrb[0].mxu0
    %1584 = vmatprep.mubr.f32.mxu0 0.0
    %1585 = vmatmul.mubr.f32.gmra.mrb[0].mxu0 %v1249
    %v1586 = vpop.f32.mrb[0].mxu0
    %v1587 = vadd.f32 %v123, %v1586
    %v1588 = vpop.f32.mrb[0].mxu0
    %1589 = vmatprep.mubr.f32.mxu0 0.0
    %1590 = vmatmul.mubr.f32.gmra.mrb[0].mxu0 %v1252
    %v1591 = vpop.f32.mrb[0].mxu0
    %v1592 = vadd.f32 %v123, %v1591
    %v1593 = vpop.f32.mrb[0].mxu0
    %1594 = vmatprep.mubr.f32.mxu0 0.0
    %1595 = vmatmul.mubr.f32.gmra.mrb[0].mxu0 %v1255
    %v1596 = vpop.f32.mrb[0].mxu0
    %v1597 = vadd.f32 %v123, %v1596
    %v1598 = vpop.f32.mrb[0].mxu0
    %1599 = vmatprep.mubr.f32.mxu0 0.0
    %1600 = vmatmul.mubr.f32.gmra.mrb[0].mxu0 %v1258
    %v1601 = vpop.f32.mrb[0].mxu0
    %v1602 = vadd.f32 %v123, %v1601
    %v1603 = vpop.f32.mrb[0].mxu0
    %1604 = vmatprep.mubr.f32.mxu0 0.0
    %1605 = vmatmul.mubr.f32.gmra.mrb[0].mxu0 %v1261
    %v1606 = vpop.f32.mrb[0].mxu0
    %v1607 = vadd.f32 %v123, %v1606
    %v1608 = vpop.f32.mrb[0].mxu0
    %1609 = vmatprep.mubr.f32.mxu0 0.0
    %1610 = vmatmul.mubr.f32.gmra.mrb[0].mxu0 %v1264
    %v1611 = vpop.f32.mrb[0].mxu0
    %v1612 = vadd.f32 %v123, %v1611
    %v1613 = vpop.f32.mrb[0].mxu0
    %1614 = vmatprep.mubr.f32.mxu0 0.0
    %1615 = vmatmul.mubr.f32.gmra.mrb[0].mxu0 %v1267
    %v1616 = vpop.f32.mrb[0].mxu0
    %v1617 = vadd.f32 %v123, %v1616
    %v1618 = vpop.f32.mrb[0].mxu0
    %1619 = vmatprep.mubr.f32.mxu0 0.0
    %1620 = vmatmul.mubr.f32.gmra.mrb[0].mxu0 %v1270
    %v1621 = vpop.f32.mrb[0].mxu0
    %v1622 = vadd.f32 %v123, %v1621
    %v1623 = vpop.f32.mrb[0].mxu0
    %1624 = vmatprep.mubr.f32.mxu0 0.0
    %1625 = vmatmul.mubr.f32.gmra.mrb[0].mxu0 %v1273
    %v1626 = vpop.f32.mrb[0].mxu0
    %v1627 = vadd.f32 %v123, %v1626
    %v1628 = vpop.f32.mrb[0].mxu0
    %1629 = vmatprep.mubr.f32.mxu0 0.0
    %1630 = vmatmul.mubr.f32.gmra.mrb[0].mxu0 %v1276
    %v1631 = vpop.f32.mrb[0].mxu0
    %v1632 = vadd.f32 %v123, %v1631
    %v1633 = vpop.f32.mrb[0].mxu0
    %1634 = vmatprep.mubr.f32.mxu0 0.0
    %1635 = vmatmul.mubr.f32.gmra.mrb[0].mxu0 %v1279
    %v1636 = vpop.f32.mrb[0].mxu0
    %v1637 = vadd.f32 %v123, %v1636
    %v1638 = vpop.f32.mrb[0].mxu0
    %1639 = vmatprep.mubr.f32.mxu0 0.0
    %1640 = vmatmul.mubr.f32.gmra.mrb[0].mxu0 %v1282
    %v1641 = vpop.f32.mrb[0].mxu0
    %v1642 = vadd.f32 %v123, %v1641
    %v1643 = vpop.f32.mrb[0].mxu0
    %1644 = vmatprep.mubr.f32.mxu0 0.0
    %1645 = vmatmul.mubr.f32.gmra.mrb[0].mxu0 %v1285
    %v1646 = vpop.f32.mrb[0].mxu0
    %v1647 = vadd.f32 %v123, %v1646
    %v1648 = vpop.f32.mrb[0].mxu0
    %1649 = vmatprep.mubr.f32.mxu0 0.0
    %1650 = vmatmul.mubr.f32.gmra.mrb[0].mxu0 %v1288
    %v1651 = vpop.f32.mrb[0].mxu0
    %v1652 = vadd.f32 %v123, %v1651
    %v1653 = vpop.f32.mrb[0].mxu0
    %1654 = vmatprep.mubr.f32.mxu0 0.0
    %1655 = vmatmul.mubr.f32.gmra.mrb[0].mxu0 %v1291
    %v1656 = vpop.f32.mrb[0].mxu0
    %v1657 = vadd.f32 %v123, %v1656
    %v1658 = vpop.f32.mrb[0].mxu0
    %1659 = vmatprep.mubr.f32.mxu0 0.0
    %1660 = vmatmul.mubr.f32.gmra.mrb[0].mxu0 %v1294
    %v1661 = vpop.f32.mrb[0].mxu0
    %v1662 = vadd.f32 %v123, %v1661
    %v1663 = vpop.f32.mrb[0].mxu0
    %1664 = vmatprep.mubr.f32.mxu0 0.0
    %1665 = vmatmul.mubr.f32.gmra.mrb[0].mxu0 %v1297
    %v1666 = vpop.f32.mrb[0].mxu0
    %v1667 = vadd.f32 %v123, %v1666
    %v1668 = vpop.f32.mrb[0].mxu0
    %1669 = vmatprep.mubr.f32.mxu0 0.0
    %1670 = vmatmul.mubr.f32.gmra.mrb[0].mxu0 %v1300
    %v1671 = vpop.f32.mrb[0].mxu0
    %v1672 = vadd.f32 %v123, %v1671
    %v1673 = vpop.f32.mrb[0].mxu0
    %1674 = vmatprep.mubr.f32.mxu0 0.0
    %1675 = vmatmul.mubr.f32.gmra.mrb[0].mxu0 %v1303
    %v1676 = vpop.f32.mrb[0].mxu0
    %v1677 = vadd.f32 %v123, %v1676
    %v1678 = vpop.f32.mrb[0].mxu0
    %1679 = vmatprep.mubr.f32.mxu0 0.0
    %1680 = vmatmul.mubr.f32.gmra.mrb[0].mxu0 %v1306
    %v1681 = vpop.f32.mrb[0].mxu0
    %v1682 = vadd.f32 %v123, %v1681
    %v1683 = vpop.f32.mrb[0].mxu0
    %1684 = vmatprep.mubr.f32.mxu0 0.0
    %1685 = vmatmul.mubr.f32.gmra.mrb[0].mxu0 %v1309
    %v1686 = vpop.f32.mrb[0].mxu0
    %v1687 = vadd.f32 %v123, %v1686
    %v1688 = vpop.f32.mrb[0].mxu0
    %1689 = vmatprep.mubr.f32.mxu0 0.0
    %1690 = vmatmul.mubr.f32.gmra.mrb[0].mxu0 %v1312
    %v1691 = vpop.f32.mrb[0].mxu0
    %v1692 = vadd.f32 %v123, %v1691
    %v1693 = vpop.f32.mrb[0].mxu0
    %1694 = vmatprep.mubr.f32.mxu0 0.0
    %1695 = vmatmul.mubr.f32.gmra.mrb[0].mxu0 %v1315
    %v1696 = vpop.f32.mrb[0].mxu0
    %v1697 = vadd.f32 %v123, %v1696
    %v1698 = vpop.f32.mrb[0].mxu0
    %1699 = vmatprep.mubr.f32.mxu0 0.0
    %1700 = vmatmul.mubr.f32.gmra.mrb[0].mxu0 %v1318
    %v1701 = vpop.f32.mrb[0].mxu0
    %v1702 = vadd.f32 %v123, %v1701
    %v1703 = vpop.f32.mrb[0].mxu0
    %1704 = vdwg.mxu0
    %v1705 = vmax.f32 %v1387, 0.0
    %v1706 = vmax.f32 %v1392, 0.0
    %v1707 = vmax.f32 %v1397, 0.0
    %v1708 = vmax.f32 %v1402, 0.0
    %v1709 = vmax.f32 %v1407, 0.0
    %v1710 = vmax.f32 %v1412, 0.0
    %v1711 = vmax.f32 %v1417, 0.0
    %v1712 = vmax.f32 %v1422, 0.0
    %v1713 = vmax.f32 %v1427, 0.0
    %v1714 = vmax.f32 %v1432, 0.0
    %v1715 = vmax.f32 %v1437, 0.0
    %v1716 = vmax.f32 %v1442, 0.0
    %v1717 = vmax.f32 %v1447, 0.0
    %v1718 = vmax.f32 %v1452, 0.0
    %v1719 = vmax.f32 %v1457, 0.0
    %v1720 = vmax.f32 %v1462, 0.0
    %v1721 = vmax.f32 %v1467, 0.0
    %v1722 = vmax.f32 %v1472, 0.0
    %v1723 = vmax.f32 %v1477, 0.0
    %v1724 = vmax.f32 %v1482, 0.0
    %v1725 = vmax.f32 %v1487, 0.0
    %v1726 = vmax.f32 %v1492, 0.0
    %v1727 = vmax.f32 %v1497, 0.0
    %v1728 = vmax.f32 %v1502, 0.0
    %v1729 = vmax.f32 %v1507, 0.0
    %v1730 = vmax.f32 %v1512, 0.0
    %v1731 = vmax.f32 %v1517, 0.0
    %v1732 = vmax.f32 %v1522, 0.0
    %v1733 = vmax.f32 %v1527, 0.0
    %v1734 = vmax.f32 %v1532, 0.0
    %v1735 = vmax.f32 %v1537, 0.0
    %v1736 = vmax.f32 %v1542, 0.0
    %v1737 = vmax.f32 %v1547, 0.0
    %v1738 = vmax.f32 %v1552, 0.0
    %v1739 = vmax.f32 %v1557, 0.0
    %v1740 = vmax.f32 %v1562, 0.0
    %v1741 = vmax.f32 %v1567, 0.0
    %v1742 = vmax.f32 %v1572, 0.0
    %v1743 = vmax.f32 %v1577, 0.0
    %v1744 = vmax.f32 %v1582, 0.0
    %v1745 = vmax.f32 %v1587, 0.0
    %v1746 = vmax.f32 %v1592, 0.0
    %v1747 = vmax.f32 %v1597, 0.0
    %v1748 = vmax.f32 %v1602, 0.0
    %v1749 = vmax.f32 %v1607, 0.0
    %v1750 = vmax.f32 %v1612, 0.0
    %v1751 = vmax.f32 %v1617, 0.0
    %v1752 = vmax.f32 %v1622, 0.0
    %v1753 = vmax.f32 %v1627, 0.0
    %v1754 = vmax.f32 %v1632, 0.0
    %v1755 = vmax.f32 %v1637, 0.0
    %v1756 = vmax.f32 %v1642, 0.0
    %v1757 = vmax.f32 %v1647, 0.0
    %v1758 = vmax.f32 %v1652, 0.0
    %v1759 = vmax.f32 %v1657, 0.0
    %v1760 = vmax.f32 %v1662, 0.0
    %v1761 = vmax.f32 %v1667, 0.0
    %v1762 = vmax.f32 %v1672, 0.0
    %v1763 = vmax.f32 %v1677, 0.0
    %v1764 = vmax.f32 %v1682, 0.0
    %v1765 = vmax.f32 %v1687, 0.0
    %v1766 = vmax.f32 %v1692, 0.0
    %v1767 = vmax.f32 %v1697, 0.0
    %v1768 = vmax.f32 %v1702, 0.0
    %1769 = vmatprep.subr.mxu0 0.0
    %1770 = vmatpush1.msra.mxu0 %v1705
    %1771 = vmatprep.subr.mxu0 0.0
    %1772 = vmatpush1.msra.mxu0 %v1706
    %1773 = vmatprep.subr.mxu0 0.0
    %1774 = vmatpush1.msra.mxu0 %v1707
    %1775 = vmatprep.subr.mxu0 0.0
    %1776 = vmatpush1.msra.mxu0 %v1708
    %1777 = vmatprep.subr.mxu0 0.0
    %1778 = vmatpush1.msra.mxu0 %v1709
    %1779 = vmatprep.subr.mxu0 0.0
    %1780 = vmatpush1.msra.mxu0 %v1710
    %1781 = vmatprep.subr.mxu0 0.0
    %1782 = vmatpush1.msra.mxu0 %v1711
    %1783 = vmatprep.subr.mxu0 0.0
    %1784 = vmatpush1.msra.mxu0 %v1712
    %1785 = vmatprep.subr.mxu0 0.0
    %1786 = vmatpush1.msra.mxu0 %v1713
    %1787 = vmatprep.subr.mxu0 0.0
    %1788 = vmatpush1.msra.mxu0 %v1714
    %1789 = vmatprep.subr.mxu0 0.0
    %1790 = vmatpush1.msra.mxu0 %v1715
    %1791 = vmatprep.subr.mxu0 0.0
    %1792 = vmatpush1.msra.mxu0 %v1716
    %1793 = vmatprep.subr.mxu0 0.0
    %1794 = vmatpush1.msra.mxu0 %v1717
    %1795 = vmatprep.subr.mxu0 0.0
    %1796 = vmatpush1.msra.mxu0 %v1718
    %1797 = vmatprep.subr.mxu0 0.0
    %1798 = vmatpush1.msra.mxu0 %v1719
    %1799 = vmatprep.subr.mxu0 0.0
    %1800 = vmatpush1.msra.mxu0 %v1720
    %1801 = vmatprep.subr.mxu0 0.0
    %1802 = vmatpush1.msra.mxu0 %v1721
    %1803 = vmatprep.subr.mxu0 0.0
    %1804 = vmatpush1.msra.mxu0 %v1722
    %1805 = vmatprep.subr.mxu0 0.0
    %1806 = vmatpush1.msra.mxu0 %v1723
    %1807 = vmatprep.subr.mxu0 0.0
    %1808 = vmatpush1.msra.mxu0 %v1724
    %1809 = vmatprep.subr.mxu0 0.0
    %1810 = vmatpush1.msra.mxu0 %v1725
    %1811 = vmatprep.subr.mxu0 0.0
    %1812 = vmatpush1.msra.mxu0 %v1726
    %1813 = vmatprep.subr.mxu0 0.0
    %1814 = vmatpush1.msra.mxu0 %v1727
    %1815 = vmatprep.subr.mxu0 0.0
    %1816 = vmatpush1.msra.mxu0 %v1728
    %1817 = vmatprep.subr.mxu0 0.0
    %1818 = vmatpush1.msra.mxu0 %v1729
    %1819 = vmatprep.subr.mxu0 0.0
    %1820 = vmatpush1.msra.mxu0 %v1730
    %1821 = vmatprep.subr.mxu0 0.0
    %1822 = vmatpush1.msra.mxu0 %v1731
    %1823 = vmatprep.subr.mxu0 0.0
    %1824 = vmatpush1.msra.mxu0 %v1732
    %1825 = vmatprep.subr.mxu0 0.0
    %1826 = vmatpush1.msra.mxu0 %v1733
    %1827 = vmatprep.subr.mxu0 0.0
    %1828 = vmatpush1.msra.mxu0 %v1734
    %1829 = vmatprep.subr.mxu0 0.0
    %1830 = vmatpush1.msra.mxu0 %v1735
    %1831 = vmatprep.subr.mxu0 0.0
    %1832 = vmatpush1.msra.mxu0 %v1736
    %1833 = vmatprep.mubr.f32.mxu0 %v53
    %1834 = vmatmul.mubr.f32.gmra.mrb[0].mxu0 %v52
    %v1835 = vpop.f32.mrb[0].mxu0
    %v1836 = vadd.f32 0.0, %v1835
    %v1837 = vpop.f32.mrb[0].mxu0
    %1838 = vdwg.mxu0
    %1839 = vmatprep.subr.mxu0 0.0
    %1840 = vmatpush1.msra.mxu0 %v1737
    %1841 = vmatprep.subr.mxu0 0.0
    %1842 = vmatpush1.msra.mxu0 %v1738
    %1843 = vmatprep.subr.mxu0 0.0
    %1844 = vmatpush1.msra.mxu0 %v1739
    %1845 = vmatprep.subr.mxu0 0.0
    %1846 = vmatpush1.msra.mxu0 %v1740
    %1847 = vmatprep.subr.mxu0 0.0
    %1848 = vmatpush1.msra.mxu0 %v1741
    %1849 = vmatprep.subr.mxu0 0.0
    %1850 = vmatpush1.msra.mxu0 %v1742
    %1851 = vmatprep.subr.mxu0 0.0
    %1852 = vmatpush1.msra.mxu0 %v1743
    %1853 = vmatprep.subr.mxu0 0.0
    %1854 = vmatpush1.msra.mxu0 %v1744
    %1855 = vmatprep.subr.mxu0 0.0
    %1856 = vmatpush1.msra.mxu0 %v1745
    %1857 = vmatprep.subr.mxu0 0.0
    %1858 = vmatpush1.msra.mxu0 %v1746
    %1859 = vmatprep.subr.mxu0 0.0
    %1860 = vmatpush1.msra.mxu0 %v1747
    %1861 = vmatprep.subr.mxu0 0.0
    %1862 = vmatpush1.msra.mxu0 %v1748
    %1863 = vmatprep.subr.mxu0 0.0
    %1864 = vmatpush1.msra.mxu0 %v1749
    %1865 = vmatprep.subr.mxu0 0.0
    %1866 = vmatpush1.msra.mxu0 %v1750
    %1867 = vmatprep.subr.mxu0 0.0
    %1868 = vmatpush1.msra.mxu0 %v1751
    %1869 = vmatprep.subr.mxu0 0.0
    %1870 = vmatpush1.msra.mxu0 %v1752
    %1871 = vmatprep.subr.mxu0 0.0
    %1872 = vmatpush1.msra.mxu0 %v1753
    %1873 = vmatprep.subr.mxu0 0.0
    %1874 = vmatpush1.msra.mxu0 %v1754
    %1875 = vmatprep.subr.mxu0 0.0
    %1876 = vmatpush1.msra.mxu0 %v1755
    %1877 = vmatprep.subr.mxu0 0.0
    %1878 = vmatpush1.msra.mxu0 %v1756
    %1879 = vmatprep.subr.mxu0 0.0
    %1880 = vmatpush1.msra.mxu0 %v1757
    %1881 = vmatprep.subr.mxu0 0.0
    %1882 = vmatpush1.msra.mxu0 %v1758
    %1883 = vmatprep.subr.mxu0 0.0
    %1884 = vmatpush1.msra.mxu0 %v1759
    %1885 = vmatprep.subr.mxu0 0.0
    %1886 = vmatpush1.msra.mxu0 %v1760
    %1887 = vmatprep.subr.mxu0 0.0
    %1888 = vmatpush1.msra.mxu0 %v1761
    %1889 = vmatprep.subr.mxu0 0.0
    %1890 = vmatpush1.msra.mxu0 %v1762
    %1891 = vmatprep.subr.mxu0 0.0
    %1892 = vmatpush1.msra.mxu0 %v1763
    %1893 = vmatprep.subr.mxu0 0.0
    %1894 = vmatpush1.msra.mxu0 %v1764
    %1895 = vmatprep.subr.mxu0 0.0
    %1896 = vmatpush1.msra.mxu0 %v1765
    %1897 = vmatprep.subr.mxu0 0.0
    %1898 = vmatpush1.msra.mxu0 %v1766
    %1899 = vmatprep.subr.mxu0 0.0
    %1900 = vmatpush1.msra.mxu0 %v1767
    %1901 = vmatprep.subr.mxu0 0.0
    %1902 = vmatpush1.msra.mxu0 %v1768
    %1903 = vmatprep.mubr.f32.mxu0 %v55
    %1904 = vmatmul.mubr.f32.gmra.mrb[0].mxu0 %v54
    %v1905 = vpop.f32.mrb[0].mxu0
    %v1906 = vadd.f32 %v1836, %v1905
    %v1907 = vpop.f32.mrb[0].mxu0
    %1908 = vdwg.mxu0
    %v1910 = vsel %vm914, %v1906, 0
    %1912 = vmatprep.subr.mxu0 0.0
    %1913 = vmatpush1.msra.mxu0 %v18
    %1914 = vmatprep.subr.mxu0 0.0
    %1915 = vmatpush1.msra.mxu0 %v19
    %1916 = vmatprep.subr.mxu0 0.0
    %1917 = vmatpush1.msra.mxu0 0.0
    %1918 = vmatprep.subr.mxu0 0.0
    %1919 = vmatpush1.msra.mxu0 0.0
    %1920 = vmatprep.subr.mxu0 0.0
    %1921 = vmatpush1.msra.mxu0 0.0
    %1922 = vmatprep.subr.mxu0 0.0
    %1923 = vmatpush1.msra.mxu0 0.0
    %1924 = vmatprep.subr.mxu0 0.0
    %1925 = vmatpush1.msra.mxu0 0.0
    %1926 = vmatprep.subr.mxu0 0.0
    %1927 = vmatpush1.msra.mxu0 0.0
    %1928 = vmatprep.subr.mxu0 0.0
    %1929 = vmatpush1.msra.mxu0 0.0
    %1930 = vmatprep.subr.mxu0 0.0
    %1931 = vmatpush1.msra.mxu0 0.0
    %1932 = vmatprep.subr.mxu0 0.0
    %1933 = vmatpush1.msra.mxu0 0.0
    %1934 = vmatprep.subr.mxu0 0.0
    %1935 = vmatpush1.msra.mxu0 0.0
    %1936 = vmatprep.subr.mxu0 0.0
    %1937 = vmatpush1.msra.mxu0 0.0
    %1938 = vmatprep.subr.mxu0 0.0
    %1939 = vmatpush1.msra.mxu0 0.0
    %1940 = vmatprep.subr.mxu0 0.0
    %1941 = vmatpush1.msra.mxu0 0.0
    %1942 = vmatprep.subr.mxu0 0.0
    %1943 = vmatpush1.msra.mxu0 0.0
    %1944 = vmatprep.subr.mxu0 0.0
    %1945 = vmatpush1.msra.mxu0 0.0
    %1946 = vmatprep.subr.mxu0 0.0
    %1947 = vmatpush1.msra.mxu0 0.0
    %1948 = vmatprep.subr.mxu0 0.0
    %1949 = vmatpush1.msra.mxu0 0.0
    %1950 = vmatprep.subr.mxu0 0.0
    %1951 = vmatpush1.msra.mxu0 0.0
    %1952 = vmatprep.subr.mxu0 0.0
    %1953 = vmatpush1.msra.mxu0 0.0
    %1954 = vmatprep.subr.mxu0 0.0
    %1955 = vmatpush1.msra.mxu0 0.0
    %1956 = vmatprep.subr.mxu0 0.0
    %1957 = vmatpush1.msra.mxu0 0.0
    %1958 = vmatprep.subr.mxu0 0.0
    %1959 = vmatpush1.msra.mxu0 0.0
    %1960 = vmatprep.subr.mxu0 0.0
    %1961 = vmatpush1.msra.mxu0 0.0
    %1962 = vmatprep.subr.mxu0 0.0
    %1963 = vmatpush1.msra.mxu0 0.0
    %1964 = vmatprep.subr.mxu0 0.0
    %1965 = vmatpush1.msra.mxu0 0.0
    %1966 = vmatprep.subr.mxu0 0.0
    %1967 = vmatpush1.msra.mxu0 0.0
    %1968 = vmatprep.subr.mxu0 0.0
    %1969 = vmatpush1.msra.mxu0 0.0
    %1970 = vmatprep.subr.mxu0 0.0
    %1971 = vmatpush1.msra.mxu0 0.0
    %1972 = vmatprep.subr.mxu0 0.0
    %1973 = vmatpush1.msra.mxu0 0.0
    %1974 = vmatprep.subr.mxu0 0.0
    %1975 = vmatpush1.msra.mxu0 0.0
    %1976 = vmatprep.mubr.f32.mxu0 0.0
    %1977 = vmatmul.mubr.f32.gmra.mrb[0].mxu0 %v1910
    %v1978 = vpop.f32.mrb[0].mxu0
    %v1979 = vadd.f32 %v913, %v1978
    %v1980 = vpop.f32.mrb[0].mxu0
    %1981 = vdwg.mxu0
    %v1983 = vsel %vm988, %v1063, 0
    %1985 = vmatprep.subr.mxu0 0.0
    %1986 = vmatpush1.msra.mxu0 %v20
    %1987 = vmatprep.subr.mxu0 0.0
    %1988 = vmatpush1.msra.mxu0 %v21
    %1989 = vmatprep.subr.mxu0 0.0
    %1990 = vmatpush1.msra.mxu0 %v22
    %1991 = vmatprep.subr.mxu0 0.0
    %1992 = vmatpush1.msra.mxu0 %v23
    %1993 = vmatprep.subr.mxu0 0.0
    %1994 = vmatpush1.msra.mxu0 0.0
    %1995 = vmatprep.subr.mxu0 0.0
    %1996 = vmatpush1.msra.mxu0 0.0
    %1997 = vmatprep.subr.mxu0 0.0
    %1998 = vmatpush1.msra.mxu0 0.0
    %1999 = vmatprep.subr.mxu0 0.0
    %2000 = vmatpush1.msra.mxu0 0.0
    %2001 = vmatprep.subr.mxu0 0.0
    %2002 = vmatpush1.msra.mxu0 0.0
    %2003 = vmatprep.subr.mxu0 0.0
    %2004 = vmatpush1.msra.mxu0 0.0
    %2005 = vmatprep.subr.mxu0 0.0
    %2006 = vmatpush1.msra.mxu0 0.0
    %2007 = vmatprep.subr.mxu0 0.0
    %2008 = vmatpush1.msra.mxu0 0.0
    %2009 = vmatprep.subr.mxu0 0.0
    %2010 = vmatpush1.msra.mxu0 0.0
    %2011 = vmatprep.subr.mxu0 0.0
    %2012 = vmatpush1.msra.mxu0 0.0
    %2013 = vmatprep.subr.mxu0 0.0
    %2014 = vmatpush1.msra.mxu0 0.0
    %2015 = vmatprep.subr.mxu0 0.0
    %2016 = vmatpush1.msra.mxu0 0.0
    %2017 = vmatprep.subr.mxu0 0.0
    %2018 = vmatpush1.msra.mxu0 0.0
    %2019 = vmatprep.subr.mxu0 0.0
    %2020 = vmatpush1.msra.mxu0 0.0
    %2021 = vmatprep.subr.mxu0 0.0
    %2022 = vmatpush1.msra.mxu0 0.0
    %2023 = vmatprep.subr.mxu0 0.0
    %2024 = vmatpush1.msra.mxu0 0.0
    %2025 = vmatprep.subr.mxu0 0.0
    %2026 = vmatpush1.msra.mxu0 0.0
    %2027 = vmatprep.subr.mxu0 0.0
    %2028 = vmatpush1.msra.mxu0 0.0
    %2029 = vmatprep.subr.mxu0 0.0
    %2030 = vmatpush1.msra.mxu0 0.0
    %2031 = vmatprep.subr.mxu0 0.0
    %2032 = vmatpush1.msra.mxu0 0.0
    %2033 = vmatprep.subr.mxu0 0.0
    %2034 = vmatpush1.msra.mxu0 0.0
    %2035 = vmatprep.subr.mxu0 0.0
    %2036 = vmatpush1.msra.mxu0 0.0
    %2037 = vmatprep.subr.mxu0 0.0
    %2038 = vmatpush1.msra.mxu0 0.0
    %2039 = vmatprep.subr.mxu0 0.0
    %2040 = vmatpush1.msra.mxu0 0.0
    %2041 = vmatprep.subr.mxu0 0.0
    %2042 = vmatpush1.msra.mxu0 0.0
    %2043 = vmatprep.subr.mxu0 0.0
    %2044 = vmatpush1.msra.mxu0 0.0
    %2045 = vmatprep.subr.mxu0 0.0
    %2046 = vmatpush1.msra.mxu0 0.0
    %2047 = vmatprep.subr.mxu0 0.0
    %2048 = vmatpush1.msra.mxu0 0.0
    %2049 = vmatprep.mubr.f32.mxu0 0.0
    %2050 = vmatmul.mubr.f32.gmra.mrb[0].mxu0 %v1983
    %v2051 = vpop.f32.mrb[0].mxu0
    %v2052 = vadd.f32 0.0, %v2051
    %v2053 = vpop.f32.mrb[0].mxu0
    %2054 = vdwg.mxu0
    %v2055 = vadd.f32 %v1979, %v2052
    %v2056 = vtanh.pop %v2055
    %v2057 = vld [vmem:[%s0 + $0x400] sm:$0xff]
    %v2058 = vld [vmem:[%s0 + $0x408] sm:$0xff]
    %v2059 = vld [vmem:[%s0 + $0x410] sm:$0xff]
    %v2060 = vld [vmem:[%s0 + $0x418] sm:$0xff]
    %v2061 = vld [vmem:[%s0 + $0x420] sm:$0xff]
    %v2062 = vld [vmem:[%s0 + $0x428] sm:$0xff]
    %v2063 = vld [vmem:[%s0 + $0x430] sm:$0xff]
    %v2064 = vld [vmem:[%s0 + $0x438] sm:$0xff]
    %v2065 = vld [vmem:[%s0 + $0x440] sm:$0xff]
    %v2066 = vld [vmem:[%s0 + $0x448] sm:$0xff]
    %v2067 = vld [vmem:[%s0 + $0x450] sm:$0xff]
    %v2068 = vld [vmem:[%s0 + $0x458] sm:$0xff]
    %v2069 = vld [vmem:[%s0 + $0x460] sm:$0xff]
    %v2070 = vld [vmem:[%s0 + $0x468] sm:$0xff]
    %v2071 = vld [vmem:[%s0 + $0x470] sm:$0xff]
    %v2072 = vld [vmem:[%s0 + $0x478] sm:$0xff]
    %v2073 = vld [vmem:[%s0 + $0x480] sm:$0xff]
    %v2074 = vld [vmem:[%s0 + $0x488] sm:$0xff]
    %v2075 = vld [vmem:[%s0 + $0x490] sm:$0xff]
    %v2076 = vld [vmem:[%s0 + $0x498] sm:$0xff]
    %v2077 = vld [vmem:[%s0 + $0x4a0] sm:$0xff]
    %v2078 = vld [vmem:[%s0 + $0x4a8] sm:$0xff]
    %v2079 = vld [vmem:[%s0 + $0x4b0] sm:$0xff]
    %v2080 = vld [vmem:[%s0 + $0x4b8] sm:$0xff]
    %v2081 = vld [vmem:[%s0 + $0x4c0] sm:$0xff]
    %v2082 = vld [vmem:[%s0 + $0x4c8] sm:$0xff]
    %v2083 = vld [vmem:[%s0 + $0x4d0] sm:$0xff]
    %v2084 = vld [vmem:[%s0 + $0x4d8] sm:$0xff]
    %v2085 = vld [vmem:[%s0 + $0x4e0] sm:$0xff]
    %v2086 = vld [vmem:[%s0 + $0x4e8] sm:$0xff]
    %v2087 = vld [vmem:[%s0 + $0x4f0] sm:$0xff]
    %v2088 = vld [vmem:[%s0 + $0x4f8] sm:$0xff]
    %v2089 = vld [vmem:[%s0 + $0x500] sm:$0xff]
    %v2090 = vld [vmem:[%s0 + $0x508] sm:$0xff]
    %v2091 = vld [vmem:[%s0 + $0x510] sm:$0xff]
    %v2092 = vld [vmem:[%s0 + $0x518] sm:$0xff]
    %v2093 = vld [vmem:[%s0 + $0x520] sm:$0xff]
    %v2094 = vld [vmem:[%s0 + $0x528] sm:$0xff]
    %v2095 = vld [vmem:[%s0 + $0x530] sm:$0xff]
    %v2096 = vld [vmem:[%s0 + $0x538] sm:$0xff]
    %v2097 = vld [vmem:[%s0 + $0x540] sm:$0xff]
    %v2098 = vld [vmem:[%s0 + $0x548] sm:$0xff]
    %v2099 = vld [vmem:[%s0 + $0x550] sm:$0xff]
    %v2100 = vld [vmem:[%s0 + $0x558] sm:$0xff]
    %v2101 = vld [vmem:[%s0 + $0x560] sm:$0xff]
    %v2102 = vld [vmem:[%s0 + $0x568] sm:$0xff]
    %v2103 = vld [vmem:[%s0 + $0x570] sm:$0xff]
    %v2104 = vld [vmem:[%s0 + $0x578] sm:$0xff]
    %v2105 = vld [vmem:[%s0 + $0x580] sm:$0xff]
    %v2106 = vld [vmem:[%s0 + $0x588] sm:$0xff]
    %v2107 = vld [vmem:[%s0 + $0x590] sm:$0xff]
    %v2108 = vld [vmem:[%s0 + $0x598] sm:$0xff]
    %v2109 = vld [vmem:[%s0 + $0x5a0] sm:$0xff]
    %v2110 = vld [vmem:[%s0 + $0x5a8] sm:$0xff]
    %v2111 = vld [vmem:[%s0 + $0x5b0] sm:$0xff]
    %v2112 = vld [vmem:[%s0 + $0x5b8] sm:$0xff]
    %v2113 = vld [vmem:[%s0 + $0x5c0] sm:$0xff]
    %v2114 = vld [vmem:[%s0 + $0x5c8] sm:$0xff]
    %v2115 = vld [vmem:[%s0 + $0x5d0] sm:$0xff]
    %v2116 = vld [vmem:[%s0 + $0x5d8] sm:$0xff]
    %v2117 = vld [vmem:[%s0 + $0x5e0] sm:$0xff]
    %v2118 = vld [vmem:[%s0 + $0x5e8] sm:$0xff]
    %v2119 = vld [vmem:[%s0 + $0x5f0] sm:$0xff]
    %v2120 = vld [vmem:[%s0 + $0x5f8] sm:$0xff]
    %v2122 = vsel %vm124, %v2057, 0
    %v2125 = vsel %vm124, %v2058, 0
    %v2128 = vsel %vm124, %v2059, 0
    %v2131 = vsel %vm124, %v2060, 0
    %v2134 = vsel %vm124, %v2061, 0
    %v2137 = vsel %vm124, %v2062, 0
    %v2140 = vsel %vm124, %v2063, 0
    %v2143 = vsel %vm124, %v2064, 0
    %v2146 = vsel %vm124, %v2065, 0
    %v2149 = vsel %vm124, %v2066, 0
    %v2152 = vsel %vm124, %v2067, 0
    %v2155 = vsel %vm124, %v2068, 0
    %v2158 = vsel %vm124, %v2069, 0
    %v2161 = vsel %vm124, %v2070, 0
    %v2164 = vsel %vm124, %v2071, 0
    %v2167 = vsel %vm124, %v2072, 0
    %v2170 = vsel %vm124, %v2073, 0
    %v2173 = vsel %vm124, %v2074, 0
    %v2176 = vsel %vm124, %v2075, 0
    %v2179 = vsel %vm124, %v2076, 0
    %v2182 = vsel %vm124, %v2077, 0
    %v2185 = vsel %vm124, %v2078, 0
    %v2188 = vsel %vm124, %v2079, 0
    %v2191 = vsel %vm124, %v2080, 0
    %v2194 = vsel %vm124, %v2081, 0
    %v2197 = vsel %vm124, %v2082, 0
    %v2200 = vsel %vm124, %v2083, 0
    %v2203 = vsel %vm124, %v2084, 0
    %v2206 = vsel %vm124, %v2085, 0
    %v2209 = vsel %vm124, %v2086, 0
    %v2212 = vsel %vm124, %v2087, 0
    %v2215 = vsel %vm124, %v2088, 0
    %v2218 = vsel %vm124, %v2089, 0
    %v2221 = vsel %vm124, %v2090, 0
    %v2224 = vsel %vm124, %v2091, 0
    %v2227 = vsel %vm124, %v2092, 0
    %v2230 = vsel %vm124, %v2093, 0
    %v2233 = vsel %vm124, %v2094, 0
    %v2236 = vsel %vm124, %v2095, 0
    %v2239 = vsel %vm124, %v2096, 0
    %v2242 = vsel %vm124, %v2097, 0
    %v2245 = vsel %vm124, %v2098, 0
    %v2248 = vsel %vm124, %v2099, 0
    %v2251 = vsel %vm124, %v2100, 0
    %v2254 = vsel %vm124, %v2101, 0
    %v2257 = vsel %vm124, %v2102, 0
    %v2260 = vsel %vm124, %v2103, 0
    %v2263 = vsel %vm124, %v2104, 0
    %v2266 = vsel %vm124, %v2105, 0
    %v2269 = vsel %vm124, %v2106, 0
    %v2272 = vsel %vm124, %v2107, 0
    %v2275 = vsel %vm124, %v2108, 0
    %v2278 = vsel %vm124, %v2109, 0
    %v2281 = vsel %vm124, %v2110, 0
    %v2284 = vsel %vm124, %v2111, 0
    %v2287 = vsel %vm124, %v2112, 0
    %v2290 = vsel %vm124, %v2113, 0
    %v2293 = vsel %vm124, %v2114, 0
    %v2296 = vsel %vm124, %v2115, 0
    %v2299 = vsel %vm124, %v2116, 0
    %v2302 = vsel %vm124, %v2117, 0
    %v2305 = vsel %vm124, %v2118, 0
    %v2308 = vsel %vm124, %v2119, 0
    %v2311 = vsel %vm124, %v2120, 0
    %2313 = vmatprep.subr.mxu0 0.0
    %2314 = vmatpush1.msra.mxu0 %v12
    %2315 = vmatprep.subr.mxu0 0.0
    %2316 = vmatpush1.msra.mxu0 %v13
    %2317 = vmatprep.subr.mxu0 0.0
    %2318 = vmatpush1.msra.mxu0 %v14
    %2319 = vmatprep.subr.mxu0 0.0
    %2320 = vmatpush1.msra.mxu0 %v15
    %2321 = vmatprep.subr.mxu0 0.0
    %2322 = vmatpush1.msra.mxu0 %v319
    %2323 = vmatprep.subr.mxu0 0.0
    %2324 = vmatpush1.msra.mxu0 0.0
    %2325 = vmatprep.subr.mxu0 0.0
    %2326 = vmatpush1.msra.mxu0 0.0
    %2327 = vmatprep.subr.mxu0 0.0
    %2328 = vmatpush1.msra.mxu0 0.0
    %2329 = vmatprep.subr.mxu0 0.0
    %2330 = vmatpush1.msra.mxu0 0.0
    %2331 = vmatprep.subr.mxu0 0.0
    %2332 = vmatpush1.msra.mxu0 0.0
    %2333 = vmatprep.subr.mxu0 0.0
    %2334 = vmatpush1.msra.mxu0 0.0
    %2335 = vmatprep.subr.mxu0 0.0
    %2336 = vmatpush1.msra.mxu0 0.0
    %2337 = vmatprep.subr.mxu0 0.0
    %2338 = vmatpush1.msra.mxu0 0.0
    %2339 = vmatprep.subr.mxu0 0.0
    %2340 = vmatpush1.msra.mxu0 0.0
    %2341 = vmatprep.subr.mxu0 0.0
    %2342 = vmatpush1.msra.mxu0 0.0
    %2343 = vmatprep.subr.mxu0 0.0
    %2344 = vmatpush1.msra.mxu0 0.0
    %2345 = vmatprep.subr.mxu0 0.0
    %2346 = vmatpush1.msra.mxu0 0.0
    %2347 = vmatprep.subr.mxu0 0.0
    %2348 = vmatpush1.msra.mxu0 0.0
    %2349 = vmatprep.subr.mxu0 0.0
    %2350 = vmatpush1.msra.mxu0 0.0
    %2351 = vmatprep.subr.mxu0 0.0
    %2352 = vmatpush1.msra.mxu0 0.0
    %2353 = vmatprep.subr.mxu0 0.0
    %2354 = vmatpush1.msra.mxu0 0.0
    %2355 = vmatprep.subr.mxu0 0.0
    %2356 = vmatpush1.msra.mxu0 0.0
    %2357 = vmatprep.subr.mxu0 0.0
    %2358 = vmatpush1.msra.mxu0 0.0
    %2359 = vmatprep.subr.mxu0 0.0
    %2360 = vmatpush1.msra.mxu0 0.0
    %2361 = vmatprep.subr.mxu0 0.0
    %2362 = vmatpush1.msra.mxu0 0.0
    %2363 = vmatprep.subr.mxu0 0.0
    %2364 = vmatpush1.msra.mxu0 0.0
    %2365 = vmatprep.subr.mxu0 0.0
    %2366 = vmatpush1.msra.mxu0 0.0
    %2367 = vmatprep.subr.mxu0 0.0
    %2368 = vmatpush1.msra.mxu0 0.0
    %2369 = vmatprep.subr.mxu0 0.0
    %2370 = vmatpush1.msra.mxu0 0.0
    %2371 = vmatprep.subr.mxu0 0.0
    %2372 = vmatpush1.msra.mxu0 0.0
    %2373 = vmatprep.subr.mxu0 0.0
    %2374 = vmatpush1.msra.mxu0 0.0
    %2375 = vmatprep.subr.mxu0 0.0
    %2376 = vmatpush1.msra.mxu0 0.0
    %2377 = vmatprep.mubr.f32.mxu0 0.0
    %2378 = vmatmul.mubr.f32.gmra.mrb[0].mxu0 %v2122
    %v2379 = vpop.f32.mrb[0].mxu0
    %v2380 = vadd.f32 %v123, %v2379
    %v2381 = vpop.f32.mrb[0].mxu0
    %2382 = vmatprep.mubr.f32.mxu0 0.0
    %2383 = vmatmul.mubr.f32.gmra.mrb[0].mxu0 %v2125
    %v2384 = vpop.f32.mrb[0].mxu0
    %v2385 = vadd.f32 %v123, %v2384
    %v2386 = vpop.f32.mrb[0].mxu0
    %2387 = vmatprep.mubr.f32.mxu0 0.0
    %2388 = vmatmul.mubr.f32.gmra.mrb[0].mxu0 %v2128
    %v2389 = vpop.f32.mrb[0].mxu0
    %v2390 = vadd.f32 %v123, %v2389
    %v2391 = vpop.f32.mrb[0].mxu0
    %2392 = vmatprep.mubr.f32.mxu0 0.0
    %2393 = vmatmul.mubr.f32.gmra.mrb[0].mxu0 %v2131
    %v2394 = vpop.f32.mrb[0].mxu0
    %v2395 = vadd.f32 %v123, %v2394
    %v2396 = vpop.f32.mrb[0].mxu0
    %2397 = vmatprep.mubr.f32.mxu0 0.0
    %2398 = vmatmul.mubr.f32.gmra.mrb[0].mxu0 %v2134
    %v2399 = vpop.f32.mrb[0].mxu0
    %v2400 = vadd.f32 %v123, %v2399
    %v2401 = vpop.f32.mrb[0].mxu0
    %2402 = vmatprep.mubr.f32.mxu0 0.0
    %2403 = vmatmul.mubr.f32.gmra.mrb[0].mxu0 %v2137
    %v2404 = vpop.f32.mrb[0].mxu0
    %v2405 = vadd.f32 %v123, %v2404
    %v2406 = vpop.f32.mrb[0].mxu0
    %2407 = vmatprep.mubr.f32.mxu0 0.0
    %2408 = vmatmul.mubr.f32.gmra.mrb[0].mxu0 %v2140
    %v2409 = vpop.f32.mrb[0].mxu0
    %v2410 = vadd.f32 %v123, %v2409
    %v2411 = vpop.f32.mrb[0].mxu0
    %2412 = vmatprep.mubr.f32.mxu0 0.0
    %2413 = vmatmul.mubr.f32.gmra.mrb[0].mxu0 %v2143
    %v2414 = vpop.f32.mrb[0].mxu0
    %v2415 = vadd.f32 %v123, %v2414
    %v2416 = vpop.f32.mrb[0].mxu0
    %2417 = vmatprep.mubr.f32.mxu0 0.0
    %2418 = vmatmul.mubr.f32.gmra.mrb[0].mxu0 %v2146
    %v2419 = vpop.f32.mrb[0].mxu0
    %v2420 = vadd.f32 %v123, %v2419
    %v2421 = vpop.f32.mrb[0].mxu0
    %2422 = vmatprep.mubr.f32.mxu0 0.0
    %2423 = vmatmul.mubr.f32.gmra.mrb[0].mxu0 %v2149
    %v2424 = vpop.f32.mrb[0].mxu0
    %v2425 = vadd.f32 %v123, %v2424
    %v2426 = vpop.f32.mrb[0].mxu0
    %2427 = vmatprep.mubr.f32.mxu0 0.0
    %2428 = vmatmul.mubr.f32.gmra.mrb[0].mxu0 %v2152
    %v2429 = vpop.f32.mrb[0].mxu0
    %v2430 = vadd.f32 %v123, %v2429
    %v2431 = vpop.f32.mrb[0].mxu0
    %2432 = vmatprep.mubr.f32.mxu0 0.0
    %2433 = vmatmul.mubr.f32.gmra.mrb[0].mxu0 %v2155
    %v2434 = vpop.f32.mrb[0].mxu0
    %v2435 = vadd.f32 %v123, %v2434
    %v2436 = vpop.f32.mrb[0].mxu0
    %2437 = vmatprep.mubr.f32.mxu0 0.0
    %2438 = vmatmul.mubr.f32.gmra.mrb[0].mxu0 %v2158
    %v2439 = vpop.f32.mrb[0].mxu0
    %v2440 = vadd.f32 %v123, %v2439
    %v2441 = vpop.f32.mrb[0].mxu0
    %2442 = vmatprep.mubr.f32.mxu0 0.0
    %2443 = vmatmul.mubr.f32.gmra.mrb[0].mxu0 %v2161
    %v2444 = vpop.f32.mrb[0].mxu0
    %v2445 = vadd.f32 %v123, %v2444
    %v2446 = vpop.f32.mrb[0].mxu0
    %2447 = vmatprep.mubr.f32.mxu0 0.0
    %2448 = vmatmul.mubr.f32.gmra.mrb[0].mxu0 %v2164
    %v2449 = vpop.f32.mrb[0].mxu0
    %v2450 = vadd.f32 %v123, %v2449
    %v2451 = vpop.f32.mrb[0].mxu0
    %2452 = vmatprep.mubr.f32.mxu0 0.0
    %2453 = vmatmul.mubr.f32.gmra.mrb[0].mxu0 %v2167
    %v2454 = vpop.f32.mrb[0].mxu0
    %v2455 = vadd.f32 %v123, %v2454
    %v2456 = vpop.f32.mrb[0].mxu0
    %2457 = vmatprep.mubr.f32.mxu0 0.0
    %2458 = vmatmul.mubr.f32.gmra.mrb[0].mxu0 %v2170
    %v2459 = vpop.f32.mrb[0].mxu0
    %v2460 = vadd.f32 %v123, %v2459
    %v2461 = vpop.f32.mrb[0].mxu0
    %2462 = vmatprep.mubr.f32.mxu0 0.0
    %2463 = vmatmul.mubr.f32.gmra.mrb[0].mxu0 %v2173
    %v2464 = vpop.f32.mrb[0].mxu0
    %v2465 = vadd.f32 %v123, %v2464
    %v2466 = vpop.f32.mrb[0].mxu0
    %2467 = vmatprep.mubr.f32.mxu0 0.0
    %2468 = vmatmul.mubr.f32.gmra.mrb[0].mxu0 %v2176
    %v2469 = vpop.f32.mrb[0].mxu0
    %v2470 = vadd.f32 %v123, %v2469
    %v2471 = vpop.f32.mrb[0].mxu0
    %2472 = vmatprep.mubr.f32.mxu0 0.0
    %2473 = vmatmul.mubr.f32.gmra.mrb[0].mxu0 %v2179
    %v2474 = vpop.f32.mrb[0].mxu0
    %v2475 = vadd.f32 %v123, %v2474
    %v2476 = vpop.f32.mrb[0].mxu0
    %2477 = vmatprep.mubr.f32.mxu0 0.0
    %2478 = vmatmul.mubr.f32.gmra.mrb[0].mxu0 %v2182
    %v2479 = vpop.f32.mrb[0].mxu0
    %v2480 = vadd.f32 %v123, %v2479
    %v2481 = vpop.f32.mrb[0].mxu0
    %2482 = vmatprep.mubr.f32.mxu0 0.0
    %2483 = vmatmul.mubr.f32.gmra.mrb[0].mxu0 %v2185
    %v2484 = vpop.f32.mrb[0].mxu0
    %v2485 = vadd.f32 %v123, %v2484
    %v2486 = vpop.f32.mrb[0].mxu0
    %2487 = vmatprep.mubr.f32.mxu0 0.0
    %2488 = vmatmul.mubr.f32.gmra.mrb[0].mxu0 %v2188
    %v2489 = vpop.f32.mrb[0].mxu0
    %v2490 = vadd.f32 %v123, %v2489
    %v2491 = vpop.f32.mrb[0].mxu0
    %2492 = vmatprep.mubr.f32.mxu0 0.0
    %2493 = vmatmul.mubr.f32.gmra.mrb[0].mxu0 %v2191
    %v2494 = vpop.f32.mrb[0].mxu0
    %v2495 = vadd.f32 %v123, %v2494
    %v2496 = vpop.f32.mrb[0].mxu0
    %2497 = vmatprep.mubr.f32.mxu0 0.0
    %2498 = vmatmul.mubr.f32.gmra.mrb[0].mxu0 %v2194
    %v2499 = vpop.f32.mrb[0].mxu0
    %v2500 = vadd.f32 %v123, %v2499
    %v2501 = vpop.f32.mrb[0].mxu0
    %2502 = vmatprep.mubr.f32.mxu0 0.0
    %2503 = vmatmul.mubr.f32.gmra.mrb[0].mxu0 %v2197
    %v2504 = vpop.f32.mrb[0].mxu0
    %v2505 = vadd.f32 %v123, %v2504
    %v2506 = vpop.f32.mrb[0].mxu0
    %2507 = vmatprep.mubr.f32.mxu0 0.0
    %2508 = vmatmul.mubr.f32.gmra.mrb[0].mxu0 %v2200
    %v2509 = vpop.f32.mrb[0].mxu0
    %v2510 = vadd.f32 %v123, %v2509
    %v2511 = vpop.f32.mrb[0].mxu0
    %2512 = vmatprep.mubr.f32.mxu0 0.0
    %2513 = vmatmul.mubr.f32.gmra.mrb[0].mxu0 %v2203
    %v2514 = vpop.f32.mrb[0].mxu0
    %v2515 = vadd.f32 %v123, %v2514
    %v2516 = vpop.f32.mrb[0].mxu0
    %2517 = vmatprep.mubr.f32.mxu0 0.0
    %2518 = vmatmul.mubr.f32.gmra.mrb[0].mxu0 %v2206
    %v2519 = vpop.f32.mrb[0].mxu0
    %v2520 = vadd.f32 %v123, %v2519
    %v2521 = vpop.f32.mrb[0].mxu0
    %2522 = vmatprep.mubr.f32.mxu0 0.0
    %2523 = vmatmul.mubr.f32.gmra.mrb[0].mxu0 %v2209
    %v2524 = vpop.f32.mrb[0].mxu0
    %v2525 = vadd.f32 %v123, %v2524
    %v2526 = vpop.f32.mrb[0].mxu0
    %2527 = vmatprep.mubr.f32.mxu0 0.0
    %2528 = vmatmul.mubr.f32.gmra.mrb[0].mxu0 %v2212
    %v2529 = vpop.f32.mrb[0].mxu0
    %v2530 = vadd.f32 %v123, %v2529
    %v2531 = vpop.f32.mrb[0].mxu0
    %2532 = vmatprep.mubr.f32.mxu0 0.0
    %2533 = vmatmul.mubr.f32.gmra.mrb[0].mxu0 %v2215
    %v2534 = vpop.f32.mrb[0].mxu0
    %v2535 = vadd.f32 %v123, %v2534
    %v2536 = vpop.f32.mrb[0].mxu0
    %2537 = vmatprep.mubr.f32.mxu0 0.0
    %2538 = vmatmul.mubr.f32.gmra.mrb[0].mxu0 %v2218
    %v2539 = vpop.f32.mrb[0].mxu0
    %v2540 = vadd.f32 %v123, %v2539
    %v2541 = vpop.f32.mrb[0].mxu0
    %2542 = vmatprep.mubr.f32.mxu0 0.0
    %2543 = vmatmul.mubr.f32.gmra.mrb[0].mxu0 %v2221
    %v2544 = vpop.f32.mrb[0].mxu0
    %v2545 = vadd.f32 %v123, %v2544
    %v2546 = vpop.f32.mrb[0].mxu0
    %2547 = vmatprep.mubr.f32.mxu0 0.0
    %2548 = vmatmul.mubr.f32.gmra.mrb[0].mxu0 %v2224
    %v2549 = vpop.f32.mrb[0].mxu0
    %v2550 = vadd.f32 %v123, %v2549
    %v2551 = vpop.f32.mrb[0].mxu0
    %2552 = vmatprep.mubr.f32.mxu0 0.0
    %2553 = vmatmul.mubr.f32.gmra.mrb[0].mxu0 %v2227
    %v2554 = vpop.f32.mrb[0].mxu0
    %v2555 = vadd.f32 %v123, %v2554
    %v2556 = vpop.f32.mrb[0].mxu0
    %2557 = vmatprep.mubr.f32.mxu0 0.0
    %2558 = vmatmul.mubr.f32.gmra.mrb[0].mxu0 %v2230
    %v2559 = vpop.f32.mrb[0].mxu0
    %v2560 = vadd.f32 %v123, %v2559
    %v2561 = vpop.f32.mrb[0].mxu0
    %2562 = vmatprep.mubr.f32.mxu0 0.0
    %2563 = vmatmul.mubr.f32.gmra.mrb[0].mxu0 %v2233
    %v2564 = vpop.f32.mrb[0].mxu0
    %v2565 = vadd.f32 %v123, %v2564
    %v2566 = vpop.f32.mrb[0].mxu0
    %2567 = vmatprep.mubr.f32.mxu0 0.0
    %2568 = vmatmul.mubr.f32.gmra.mrb[0].mxu0 %v2236
    %v2569 = vpop.f32.mrb[0].mxu0
    %v2570 = vadd.f32 %v123, %v2569
    %v2571 = vpop.f32.mrb[0].mxu0
    %2572 = vmatprep.mubr.f32.mxu0 0.0
    %2573 = vmatmul.mubr.f32.gmra.mrb[0].mxu0 %v2239
    %v2574 = vpop.f32.mrb[0].mxu0
    %v2575 = vadd.f32 %v123, %v2574
    %v2576 = vpop.f32.mrb[0].mxu0
    %2577 = vmatprep.mubr.f32.mxu0 0.0
    %2578 = vmatmul.mubr.f32.gmra.mrb[0].mxu0 %v2242
    %v2579 = vpop.f32.mrb[0].mxu0
    %v2580 = vadd.f32 %v123, %v2579
    %v2581 = vpop.f32.mrb[0].mxu0
    %2582 = vmatprep.mubr.f32.mxu0 0.0
    %2583 = vmatmul.mubr.f32.gmra.mrb[0].mxu0 %v2245
    %v2584 = vpop.f32.mrb[0].mxu0
    %v2585 = vadd.f32 %v123, %v2584
    %v2586 = vpop.f32.mrb[0].mxu0
    %2587 = vmatprep.mubr.f32.mxu0 0.0
    %2588 = vmatmul.mubr.f32.gmra.mrb[0].mxu0 %v2248
    %v2589 = vpop.f32.mrb[0].mxu0
    %v2590 = vadd.f32 %v123, %v2589
    %v2591 = vpop.f32.mrb[0].mxu0
    %2592 = vmatprep.mubr.f32.mxu0 0.0
    %2593 = vmatmul.mubr.f32.gmra.mrb[0].mxu0 %v2251
    %v2594 = vpop.f32.mrb[0].mxu0
    %v2595 = vadd.f32 %v123, %v2594
    %v2596 = vpop.f32.mrb[0].mxu0
    %2597 = vmatprep.mubr.f32.mxu0 0.0
    %2598 = vmatmul.mubr.f32.gmra.mrb[0].mxu0 %v2254
    %v2599 = vpop.f32.mrb[0].mxu0
    %v2600 = vadd.f32 %v123, %v2599
    %v2601 = vpop.f32.mrb[0].mxu0
    %2602 = vmatprep.mubr.f32.mxu0 0.0
    %2603 = vmatmul.mubr.f32.gmra.mrb[0].mxu0 %v2257
    %v2604 = vpop.f32.mrb[0].mxu0
    %v2605 = vadd.f32 %v123, %v2604
    %v2606 = vpop.f32.mrb[0].mxu0
    %2607 = vmatprep.mubr.f32.mxu0 0.0
    %2608 = vmatmul.mubr.f32.gmra.mrb[0].mxu0 %v2260
    %v2609 = vpop.f32.mrb[0].mxu0
    %v2610 = vadd.f32 %v123, %v2609
    %v2611 = vpop.f32.mrb[0].mxu0
    %2612 = vmatprep.mubr.f32.mxu0 0.0
    %2613 = vmatmul.mubr.f32.gmra.mrb[0].mxu0 %v2263
    %v2614 = vpop.f32.mrb[0].mxu0
    %v2615 = vadd.f32 %v123, %v2614
    %v2616 = vpop.f32.mrb[0].mxu0
    %2617 = vmatprep.mubr.f32.mxu0 0.0
    %2618 = vmatmul.mubr.f32.gmra.mrb[0].mxu0 %v2266
    %v2619 = vpop.f32.mrb[0].mxu0
    %v2620 = vadd.f32 %v123, %v2619
    %v2621 = vpop.f32.mrb[0].mxu0
    %2622 = vmatprep.mubr.f32.mxu0 0.0
    %2623 = vmatmul.mubr.f32.gmra.mrb[0].mxu0 %v2269
    %v2624 = vpop.f32.mrb[0].mxu0
    %v2625 = vadd.f32 %v123, %v2624
    %v2626 = vpop.f32.mrb[0].mxu0
    %2627 = vmatprep.mubr.f32.mxu0 0.0
    %2628 = vmatmul.mubr.f32.gmra.mrb[0].mxu0 %v2272
    %v2629 = vpop.f32.mrb[0].mxu0
    %v2630 = vadd.f32 %v123, %v2629
    %v2631 = vpop.f32.mrb[0].mxu0
    %2632 = vmatprep.mubr.f32.mxu0 0.0
    %2633 = vmatmul.mubr.f32.gmra.mrb[0].mxu0 %v2275
    %v2634 = vpop.f32.mrb[0].mxu0
    %v2635 = vadd.f32 %v123, %v2634
    %v2636 = vpop.f32.mrb[0].mxu0
    %2637 = vmatprep.mubr.f32.mxu0 0.0
    %2638 = vmatmul.mubr.f32.gmra.mrb[0].mxu0 %v2278
    %v2639 = vpop.f32.mrb[0].mxu0
    %v2640 = vadd.f32 %v123, %v2639
    %v2641 = vpop.f32.mrb[0].mxu0
    %2642 = vmatprep.mubr.f32.mxu0 0.0
    %2643 = vmatmul.mubr.f32.gmra.mrb[0].mxu0 %v2281
    %v2644 = vpop.f32.mrb[0].mxu0
    %v2645 = vadd.f32 %v123, %v2644
    %v2646 = vpop.f32.mrb[0].mxu0
    %2647 = vmatprep.mubr.f32.mxu0 0.0
    %2648 = vmatmul.mubr.f32.gmra.mrb[0].mxu0 %v2284
    %v2649 = vpop.f32.mrb[0].mxu0
    %v2650 = vadd.f32 %v123, %v2649
    %v2651 = vpop.f32.mrb[0].mxu0
    %2652 = vmatprep.mubr.f32.mxu0 0.0
    %2653 = vmatmul.mubr.f32.gmra.mrb[0].mxu0 %v2287
    %v2654 = vpop.f32.mrb[0].mxu0
    %v2655 = vadd.f32 %v123, %v2654
    %v2656 = vpop.f32.mrb[0].mxu0
    %2657 = vmatprep.mubr.f32.mxu0 0.0
    %2658 = vmatmul.mubr.f32.gmra.mrb[0].mxu0 %v2290
    %v2659 = vpop.f32.mrb[0].mxu0
    %v2660 = vadd.f32 %v123, %v2659
    %v2661 = vpop.f32.mrb[0].mxu0
    %2662 = vmatprep.mubr.f32.mxu0 0.0
    %2663 = vmatmul.mubr.f32.gmra.mrb[0].mxu0 %v2293
    %v2664 = vpop.f32.mrb[0].mxu0
    %v2665 = vadd.f32 %v123, %v2664
    %v2666 = vpop.f32.mrb[0].mxu0
    %2667 = vmatprep.mubr.f32.mxu0 0.0
    %2668 = vmatmul.mubr.f32.gmra.mrb[0].mxu0 %v2296
    %v2669 = vpop.f32.mrb[0].mxu0
    %v2670 = vadd.f32 %v123, %v2669
    %v2671 = vpop.f32.mrb[0].mxu0
    %2672 = vmatprep.mubr.f32.mxu0 0.0
    %2673 = vmatmul.mubr.f32.gmra.mrb[0].mxu0 %v2299
    %v2674 = vpop.f32.mrb[0].mxu0
    %v2675 = vadd.f32 %v123, %v2674
    %v2676 = vpop.f32.mrb[0].mxu0
    %2677 = vmatprep.mubr.f32.mxu0 0.0
    %2678 = vmatmul.mubr.f32.gmra.mrb[0].mxu0 %v2302
    %v2679 = vpop.f32.mrb[0].mxu0
    %v2680 = vadd.f32 %v123, %v2679
    %v2681 = vpop.f32.mrb[0].mxu0
    %2682 = vmatprep.mubr.f32.mxu0 0.0
    %2683 = vmatmul.mubr.f32.gmra.mrb[0].mxu0 %v2305
    %v2684 = vpop.f32.mrb[0].mxu0
    %v2685 = vadd.f32 %v123, %v2684
    %v2686 = vpop.f32.mrb[0].mxu0
    %2687 = vmatprep.mubr.f32.mxu0 0.0
    %2688 = vmatmul.mubr.f32.gmra.mrb[0].mxu0 %v2308
    %v2689 = vpop.f32.mrb[0].mxu0
    %v2690 = vadd.f32 %v123, %v2689
    %v2691 = vpop.f32.mrb[0].mxu0
    %2692 = vmatprep.mubr.f32.mxu0 0.0
    %2693 = vmatmul.mubr.f32.gmra.mrb[0].mxu0 %v2311
    %v2694 = vpop.f32.mrb[0].mxu0
    %v2695 = vadd.f32 %v123, %v2694
    %v2696 = vpop.f32.mrb[0].mxu0
    %2697 = vdwg.mxu0
    %v2698 = vmax.f32 %v2380, 0.0
    %v2699 = vmax.f32 %v2385, 0.0
    %v2700 = vmax.f32 %v2390, 0.0
    %v2701 = vmax.f32 %v2395, 0.0
    %v2702 = vmax.f32 %v2400, 0.0
    %v2703 = vmax.f32 %v2405, 0.0
    %v2704 = vmax.f32 %v2410, 0.0
    %v2705 = vmax.f32 %v2415, 0.0
    %v2706 = vmax.f32 %v2420, 0.0
    %v2707 = vmax.f32 %v2425, 0.0
    %v2708 = vmax.f32 %v2430, 0.0
    %v2709 = vmax.f32 %v2435, 0.0
    %v2710 = vmax.f32 %v2440, 0.0
    %v2711 = vmax.f32 %v2445, 0.0
    %v2712 = vmax.f32 %v2450, 0.0
    %v2713 = vmax.f32 %v2455, 0.0
    %v2714 = vmax.f32 %v2460, 0.0
    %v2715 = vmax.f32 %v2465, 0.0
    %v2716 = vmax.f32 %v2470, 0.0
    %v2717 = vmax.f32 %v2475, 0.0
    %v2718 = vmax.f32 %v2480, 0.0
    %v2719 = vmax.f32 %v2485, 0.0
    %v2720 = vmax.f32 %v2490, 0.0
    %v2721 = vmax.f32 %v2495, 0.0
    %v2722 = vmax.f32 %v2500, 0.0
    %v2723 = vmax.f32 %v2505, 0.0
    %v2724 = vmax.f32 %v2510, 0.0
    %v2725 = vmax.f32 %v2515, 0.0
    %v2726 = vmax.f32 %v2520, 0.0
    %v2727 = vmax.f32 %v2525, 0.0
    %v2728 = vmax.f32 %v2530, 0.0
    %v2729 = vmax.f32 %v2535, 0.0
    %v2730 = vmax.f32 %v2540, 0.0
    %v2731 = vmax.f32 %v2545, 0.0
    %v2732 = vmax.f32 %v2550, 0.0
    %v2733 = vmax.f32 %v2555, 0.0
    %v2734 = vmax.f32 %v2560, 0.0
    %v2735 = vmax.f32 %v2565, 0.0
    %v2736 = vmax.f32 %v2570, 0.0
    %v2737 = vmax.f32 %v2575, 0.0
    %v2738 = vmax.f32 %v2580, 0.0
    %v2739 = vmax.f32 %v2585, 0.0
    %v2740 = vmax.f32 %v2590, 0.0
    %v2741 = vmax.f32 %v2595, 0.0
    %v2742 = vmax.f32 %v2600, 0.0
    %v2743 = vmax.f32 %v2605, 0.0
    %v2744 = vmax.f32 %v2610, 0.0
    %v2745 = vmax.f32 %v2615, 0.0
    %v2746 = vmax.f32 %v2620, 0.0
    %v2747 = vmax.f32 %v2625, 0.0
    %v2748 = vmax.f32 %v2630, 0.0
    %v2749 = vmax.f32 %v2635, 0.0
    %v2750 = vmax.f32 %v2640, 0.0
    %v2751 = vmax.f32 %v2645, 0.0
    %v2752 = vmax.f32 %v2650, 0.0
    %v2753 = vmax.f32 %v2655, 0.0
    %v2754 = vmax.f32 %v2660, 0.0
    %v2755 = vmax.f32 %v2665, 0.0
    %v2756 = vmax.f32 %v2670, 0.0
    %v2757 = vmax.f32 %v2675, 0.0
    %v2758 = vmax.f32 %v2680, 0.0
    %v2759 = vmax.f32 %v2685, 0.0
    %v2760 = vmax.f32 %v2690, 0.0
    %v2761 = vmax.f32 %v2695, 0.0
    %2762 = vmatprep.subr.mxu0 0.0
    %2763 = vmatpush1.msra.mxu0 %v2698
    %2764 = vmatprep.subr.mxu0 0.0
    %2765 = vmatpush1.msra.mxu0 %v2699
    %2766 = vmatprep.subr.mxu0 0.0
    %2767 = vmatpush1.msra.mxu0 %v2700
    %2768 = vmatprep.subr.mxu0 0.0
    %2769 = vmatpush1.msra.mxu0 %v2701
    %2770 = vmatprep.subr.mxu0 0.0
    %2771 = vmatpush1.msra.mxu0 %v2702
    %2772 = vmatprep.subr.mxu0 0.0
    %2773 = vmatpush1.msra.mxu0 %v2703
    %2774 = vmatprep.subr.mxu0 0.0
    %2775 = vmatpush1.msra.mxu0 %v2704
    %2776 = vmatprep.subr.mxu0 0.0
    %2777 = vmatpush1.msra.mxu0 %v2705
    %2778 = vmatprep.subr.mxu0 0.0
    %2779 = vmatpush1.msra.mxu0 %v2706
    %2780 = vmatprep.subr.mxu0 0.0
    %2781 = vmatpush1.msra.mxu0 %v2707
    %2782 = vmatprep.subr.mxu0 0.0
    %2783 = vmatpush1.msra.mxu0 %v2708
    %2784 = vmatprep.subr.mxu0 0.0
    %2785 = vmatpush1.msra.mxu0 %v2709
    %2786 = vmatprep.subr.mxu0 0.0
    %2787 = vmatpush1.msra.mxu0 %v2710
    %2788 = vmatprep.subr.mxu0 0.0
    %2789 = vmatpush1.msra.mxu0 %v2711
    %2790 = vmatprep.subr.mxu0 0.0
    %2791 = vmatpush1.msra.mxu0 %v2712
    %2792 = vmatprep.subr.mxu0 0.0
    %2793 = vmatpush1.msra.mxu0 %v2713
    %2794 = vmatprep.subr.mxu0 0.0
    %2795 = vmatpush1.msra.mxu0 %v2714
    %2796 = vmatprep.subr.mxu0 0.0
    %2797 = vmatpush1.msra.mxu0 %v2715
    %2798 = vmatprep.subr.mxu0 0.0
    %2799 = vmatpush1.msra.mxu0 %v2716
    %2800 = vmatprep.subr.mxu0 0.0
    %2801 = vmatpush1.msra.mxu0 %v2717
    %2802 = vmatprep.subr.mxu0 0.0
    %2803 = vmatpush1.msra.mxu0 %v2718
    %2804 = vmatprep.subr.mxu0 0.0
    %2805 = vmatpush1.msra.mxu0 %v2719
    %2806 = vmatprep.subr.mxu0 0.0
    %2807 = vmatpush1.msra.mxu0 %v2720
    %2808 = vmatprep.subr.mxu0 0.0
    %2809 = vmatpush1.msra.mxu0 %v2721
    %2810 = vmatprep.subr.mxu0 0.0
    %2811 = vmatpush1.msra.mxu0 %v2722
    %2812 = vmatprep.subr.mxu0 0.0
    %2813 = vmatpush1.msra.mxu0 %v2723
    %2814 = vmatprep.subr.mxu0 0.0
    %2815 = vmatpush1.msra.mxu0 %v2724
    %2816 = vmatprep.subr.mxu0 0.0
    %2817 = vmatpush1.msra.mxu0 %v2725
    %2818 = vmatprep.subr.mxu0 0.0
    %2819 = vmatpush1.msra.mxu0 %v2726
    %2820 = vmatprep.subr.mxu0 0.0
    %2821 = vmatpush1.msra.mxu0 %v2727
    %2822 = vmatprep.subr.mxu0 0.0
    %2823 = vmatpush1.msra.mxu0 %v2728
    %2824 = vmatprep.subr.mxu0 0.0
    %2825 = vmatpush1.msra.mxu0 %v2729
    %2826 = vmatprep.mubr.f32.mxu0 %v53
    %2827 = vmatmul.mubr.f32.gmra.mrb[0].mxu0 %v52
    %v2828 = vpop.f32.mrb[0].mxu0
    %v2829 = vadd.f32 0.0, %v2828
    %v2830 = vpop.f32.mrb[0].mxu0
    %2831 = vdwg.mxu0
    %2832 = vmatprep.subr.mxu0 0.0
    %2833 = vmatpush1.msra.mxu0 %v2730
    %2834 = vmatprep.subr.mxu0 0.0
    %2835 = vmatpush1.msra.mxu0 %v2731
    %2836 = vmatprep.subr.mxu0 0.0
    %2837 = vmatpush1.msra.mxu0 %v2732
    %2838 = vmatprep.subr.mxu0 0.0
    %2839 = vmatpush1.msra.mxu0 %v2733
    %2840 = vmatprep.subr.mxu0 0.0
    %2841 = vmatpush1.msra.mxu0 %v2734
    %2842 = vmatprep.subr.mxu0 0.0
    %2843 = vmatpush1.msra.mxu0 %v2735
    %2844 = vmatprep.subr.mxu0 0.0
    %2845 = vmatpush1.msra.mxu0 %v2736
    %2846 = vmatprep.subr.mxu0 0.0
    %2847 = vmatpush1.msra.mxu0 %v2737
    %2848 = vmatprep.subr.mxu0 0.0
    %2849 = vmatpush1.msra.mxu0 %v2738
    %2850 = vmatprep.subr.mxu0 0.0
    %2851 = vmatpush1.msra.mxu0 %v2739
    %2852 = vmatprep.subr.mxu0 0.0
    %2853 = vmatpush1.msra.mxu0 %v2740
    %2854 = vmatprep.subr.mxu0 0.0
    %2855 = vmatpush1.msra.mxu0 %v2741
    %2856 = vmatprep.subr.mxu0 0.0
    %2857 = vmatpush1.msra.mxu0 %v2742
    %2858 = vmatprep.subr.mxu0 0.0
    %2859 = vmatpush1.msra.mxu0 %v2743
    %2860 = vmatprep.subr.mxu0 0.0
    %2861 = vmatpush1.msra.mxu0 %v2744
    %2862 = vmatprep.subr.mxu0 0.0
    %2863 = vmatpush1.msra.mxu0 %v2745
    %2864 = vmatprep.subr.mxu0 0.0
    %2865 = vmatpush1.msra.mxu0 %v2746
    %2866 = vmatprep.subr.mxu0 0.0
    %2867 = vmatpush1.msra.mxu0 %v2747
    %2868 = vmatprep.subr.mxu0 0.0
    %2869 = vmatpush1.msra.mxu0 %v2748
    %2870 = vmatprep.subr.mxu0 0.0
    %2871 = vmatpush1.msra.mxu0 %v2749
    %2872 = vmatprep.subr.mxu0 0.0
    %2873 = vmatpush1.msra.mxu0 %v2750
    %2874 = vmatprep.subr.mxu0 0.0
    %2875 = vmatpush1.msra.mxu0 %v2751
    %2876 = vmatprep.subr.mxu0 0.0
    %2877 = vmatpush1.msra.mxu0 %v2752
    %2878 = vmatprep.subr.mxu0 0.0
    %2879 = vmatpush1.msra.mxu0 %v2753
    %2880 = vmatprep.subr.mxu0 0.0
    %2881 = vmatpush1.msra.mxu0 %v2754
    %2882 = vmatprep.subr.mxu0 0.0
    %2883 = vmatpush1.msra.mxu0 %v2755
    %2884 = vmatprep.subr.mxu0 0.0
    %2885 = vmatpush1.msra.mxu0 %v2756
    %2886 = vmatprep.subr.mxu0 0.0
    %2887 = vmatpush1.msra.mxu0 %v2757
    %2888 = vmatprep.subr.mxu0 0.0
    %2889 = vmatpush1.msra.mxu0 %v2758
    %2890 = vmatprep.subr.mxu0 0.0
    %2891 = vmatpush1.msra.mxu0 %v2759
    %2892 = vmatprep.subr.mxu0 0.0
    %2893 = vmatpush1.msra.mxu0 %v2760
    %2894 = vmatprep.subr.mxu0 0.0
    %2895 = vmatpush1.msra.mxu0 %v2761
    %2896 = vmatprep.mubr.f32.mxu0 %v55
    %2897 = vmatmul.mubr.f32.gmra.mrb[0].mxu0 %v54
    %v2898 = vpop.f32.mrb[0].mxu0
    %v2899 = vadd.f32 %v2829, %v2898
    %v2900 = vpop.f32.mrb[0].mxu0
    %2901 = vdwg.mxu0
    %v2903 = vsel %vm914, %v2899, 0
    %2905 = vmatprep.subr.mxu0 0.0
    %2906 = vmatpush1.msra.mxu0 %v18
    %2907 = vmatprep.subr.mxu0 0.0
    %2908 = vmatpush1.msra.mxu0 %v19
    %2909 = vmatprep.subr.mxu0 0.0
    %2910 = vmatpush1.msra.mxu0 0.0
    %2911 = vmatprep.subr.mxu0 0.0
    %2912 = vmatpush1.msra.mxu0 0.0
    %2913 = vmatprep.subr.mxu0 0.0
    %2914 = vmatpush1.msra.mxu0 0.0
    %2915 = vmatprep.subr.mxu0 0.0
    %2916 = vmatpush1.msra.mxu0 0.0
    %2917 = vmatprep.subr.mxu0 0.0
    %2918 = vmatpush1.msra.mxu0 0.0
    %2919 = vmatprep.subr.mxu0 0.0
    %2920 = vmatpush1.msra.mxu0 0.0
    %2921 = vmatprep.subr.mxu0 0.0
    %2922 = vmatpush1.msra.mxu0 0.0
    %2923 = vmatprep.subr.mxu0 0.0
    %2924 = vmatpush1.msra.mxu0 0.0
    %2925 = vmatprep.subr.mxu0 0.0
    %2926 = vmatpush1.msra.mxu0 0.0
    %2927 = vmatprep.subr.mxu0 0.0
    %2928 = vmatpush1.msra.mxu0 0.0
    %2929 = vmatprep.subr.mxu0 0.0
    %2930 = vmatpush1.msra.mxu0 0.0
    %2931 = vmatprep.subr.mxu0 0.0
    %2932 = vmatpush1.msra.mxu0 0.0
    %2933 = vmatprep.subr.mxu0 0.0
    %2934 = vmatpush1.msra.mxu0 0.0
    %2935 = vmatprep.subr.mxu0 0.0
    %2936 = vmatpush1.msra.mxu0 0.0
    %2937 = vmatprep.subr.mxu0 0.0
    %2938 = vmatpush1.msra.mxu0 0.0
    %2939 = vmatprep.subr.mxu0 0.0
    %2940 = vmatpush1.msra.mxu0 0.0
    %2941 = vmatprep.subr.mxu0 0.0
    %2942 = vmatpush1.msra.mxu0 0.0
    %2943 = vmatprep.subr.mxu0 0.0
    %2944 = vmatpush1.msra.mxu0 0.0
    %2945 = vmatprep.subr.mxu0 0.0
    %2946 = vmatpush1.msra.mxu0 0.0
    %2947 = vmatprep.subr.mxu0 0.0
    %2948 = vmatpush1.msra.mxu0 0.0
    %2949 = vmatprep.subr.mxu0 0.0
    %2950 = vmatpush1.msra.mxu0 0.0
    %2951 = vmatprep.subr.mxu0 0.0
    %2952 = vmatpush1.msra.mxu0 0.0
    %2953 = vmatprep.subr.mxu0 0.0
    %2954 = vmatpush1.msra.mxu0 0.0
    %2955 = vmatprep.subr.mxu0 0.0
    %2956 = vmatpush1.msra.mxu0 0.0
    %2957 = vmatprep.subr.mxu0 0.0
    %2958 = vmatpush1.msra.mxu0 0.0
    %2959 = vmatprep.subr.mxu0 0.0
    %2960 = vmatpush1.msra.mxu0 0.0
    %2961 = vmatprep.subr.mxu0 0.0
    %2962 = vmatpush1.msra.mxu0 0.0
    %2963 = vmatprep.subr.mxu0 0.0
    %2964 = vmatpush1.msra.mxu0 0.0
    %2965 = vmatprep.subr.mxu0 0.0
    %2966 = vmatpush1.msra.mxu0 0.0
    %2967 = vmatprep.subr.mxu0 0.0
    %2968 = vmatpush1.msra.mxu0 0.0
    %2969 = vmatprep.mubr.f32.mxu0 0.0
    %2970 = vmatmul.mubr.f32.gmra.mrb[0].mxu0 %v2903
    %v2971 = vpop.f32.mrb[0].mxu0
    %v2972 = vadd.f32 %v913, %v2971
    %v2973 = vpop.f32.mrb[0].mxu0
    %2974 = vdwg.mxu0
    %v2976 = vsel %vm988, %v2056, 0
    %2978 = vmatprep.subr.mxu0 0.0
    %2979 = vmatpush1.msra.mxu0 %v20
    %2980 = vmatprep.subr.mxu0 0.0
    %2981 = vmatpush1.msra.mxu0 %v21
    %2982 = vmatprep.subr.mxu0 0.0
    %2983 = vmatpush1.msra.mxu0 %v22
    %2984 = vmatprep.subr.mxu0 0.0
    %2985 = vmatpush1.msra.mxu0 %v23
    %2986 = vmatprep.subr.mxu0 0.0
    %2987 = vmatpush1.msra.mxu0 0.0
    %2988 = vmatprep.subr.mxu0 0.0
    %2989 = vmatpush1.msra.mxu0 0.0
    %2990 = vmatprep.subr.mxu0 0.0
    %2991 = vmatpush1.msra.mxu0 0.0
    %2992 = vmatprep.subr.mxu0 0.0
    %2993 = vmatpush1.msra.mxu0 0.0
    %2994 = vmatprep.subr.mxu0 0.0
    %2995 = vmatpush1.msra.mxu0 0.0
    %2996 = vmatprep.subr.mxu0 0.0
    %2997 = vmatpush1.msra.mxu0 0.0
    %2998 = vmatprep.subr.mxu0 0.0
    %2999 = vmatpush1.msra.mxu0 0.0
    %3000 = vmatprep.subr.mxu0 0.0
    %3001 = vmatpush1.msra.mxu0 0.0
    %3002 = vmatprep.subr.mxu0 0.0
    %3003 = vmatpush1.msra.mxu0 0.0
    %3004 = vmatprep.subr.mxu0 0.0
    %3005 = vmatpush1.msra.mxu0 0.0
    %3006 = vmatprep.subr.mxu0 0.0
    %3007 = vmatpush1.msra.mxu0 0.0
    %3008 = vmatprep.subr.mxu0 0.0
    %3009 = vmatpush1.msra.mxu0 0.0
    %3010 = vmatprep.subr.mxu0 0.0
    %3011 = vmatpush1.msra.mxu0 0.0
    %3012 = vmatprep.subr.mxu0 0.0
    %3013 = vmatpush1.msra.mxu0 0.0
    %3014 = vmatprep.subr.mxu0 0.0
    %3015 = vmatpush1.msra.mxu0 0.0
    %3016 = vmatprep.subr.mxu0 0.0
    %3017 = vmatpush1.msra.mxu0 0.0
    %3018 = vmatprep.subr.mxu0 0.0
    %3019 = vmatpush1.msra.mxu0 0.0
    %3020 = vmatprep.subr.mxu0 0.0
    %3021 = vmatpush1.msra.mxu0 0.0
    %3022 = vmatprep.subr.mxu0 0.0
    %3023 = vmatpush1.msra.mxu0 0.0
    %3024 = vmatprep.subr.mxu0 0.0
    %3025 = vmatpush1.msra.mxu0 0.0
    %3026 = vmatprep.subr.mxu0 0.0
    %3027 = vmatpush1.msra.mxu0 0.0
    %3028 = vmatprep.subr.mxu0 0.0
    %3029 = vmatpush1.msra.mxu0 0.0
    %3030 = vmatprep.subr.mxu0 0.0
    %3031 = vmatpush1.msra.mxu0 0.0
    %3032 = vmatprep.subr.mxu0 0.0
    %3033 = vmatpush1.msra.mxu0 0.0
    %3034 = vmatprep.subr.mxu0 0.0
    %3035 = vmatpush1.msra.mxu0 0.0
    %3036 = vmatprep.subr.mxu0 0.0
    %3037 = vmatpush1.msra.mxu0 0.0
    %3038 = vmatprep.subr.mxu0 0.0
    %3039 = vmatpush1.msra.mxu0 0.0
    %3040 = vmatprep.subr.mxu0 0.0
    %3041 = vmatpush1.msra.mxu0 0.0
    %3042 = vmatprep.mubr.f32.mxu0 0.0
    %3043 = vmatmul.mubr.f32.gmra.mrb[0].mxu0 %v2976
    %v3044 = vpop.f32.mrb[0].mxu0
    %v3045 = vadd.f32 0.0, %v3044
    %v3046 = vpop.f32.mrb[0].mxu0
    %3047 = vdwg.mxu0
    %v3048 = vadd.f32 %v2972, %v3045
    %v3049 = vtanh.pop %v3048
    %v3050 = vld [vmem:[%s0 + $0x600] sm:$0xff]
    %v3051 = vld [vmem:[%s0 + $0x608] sm:$0xff]
    %v3052 = vld [vmem:[%s0 + $0x610] sm:$0xff]
    %v3053 = vld [vmem:[%s0 + $0x618] sm:$0xff]
    %v3054 = vld [vmem:[%s0 + $0x620] sm:$0xff]
    %v3055 = vld [vmem:[%s0 + $0x628] sm:$0xff]
    %v3056 = vld [vmem:[%s0 + $0x630] sm:$0xff]
    %v3057 = vld [vmem:[%s0 + $0x638] sm:$0xff]
    %v3058 = vld [vmem:[%s0 + $0x640] sm:$0xff]
    %v3059 = vld [vmem:[%s0 + $0x648] sm:$0xff]
    %v3060 = vld [vmem:[%s0 + $0x650] sm:$0xff]
    %v3061 = vld [vmem:[%s0 + $0x658] sm:$0xff]
    %v3062 = vld [vmem:[%s0 + $0x660] sm:$0xff]
    %v3063 = vld [vmem:[%s0 + $0x668] sm:$0xff]
    %v3064 = vld [vmem:[%s0 + $0x670] sm:$0xff]
    %v3065 = vld [vmem:[%s0 + $0x678] sm:$0xff]
    %v3066 = vld [vmem:[%s0 + $0x680] sm:$0xff]
    %v3067 = vld [vmem:[%s0 + $0x688] sm:$0xff]
    %v3068 = vld [vmem:[%s0 + $0x690] sm:$0xff]
    %v3069 = vld [vmem:[%s0 + $0x698] sm:$0xff]
    %v3070 = vld [vmem:[%s0 + $0x6a0] sm:$0xff]
    %v3071 = vld [vmem:[%s0 + $0x6a8] sm:$0xff]
    %v3072 = vld [vmem:[%s0 + $0x6b0] sm:$0xff]
    %v3073 = vld [vmem:[%s0 + $0x6b8] sm:$0xff]
    %v3074 = vld [vmem:[%s0 + $0x6c0] sm:$0xff]
    %v3075 = vld [vmem:[%s0 + $0x6c8] sm:$0xff]
    %v3076 = vld [vmem:[%s0 + $0x6d0] sm:$0xff]
    %v3077 = vld [vmem:[%s0 + $0x6d8] sm:$0xff]
    %v3078 = vld [vmem:[%s0 + $0x6e0] sm:$0xff]
    %v3079 = vld [vmem:[%s0 + $0x6e8] sm:$0xff]
    %v3080 = vld [vmem:[%s0 + $0x6f0] sm:$0xff]
    %v3081 = vld [vmem:[%s0 + $0x6f8] sm:$0xff]
    %v3082 = vld [vmem:[%s0 + $0x700] sm:$0xff]
    %v3083 = vld [vmem:[%s0 + $0x708] sm:$0xff]
    %v3084 = vld [vmem:[%s0 + $0x710] sm:$0xff]
    %v3085 = vld [vmem:[%s0 + $0x718] sm:$0xff]
    %v3086 = vld [vmem:[%s0 + $0x720] sm:$0xff]
    %v3087 = vld [vmem:[%s0 + $0x728] sm:$0xff]
    %v3088 = vld [vmem:[%s0 + $0x730] sm:$0xff]
    %v3089 = vld [vmem:[%s0 + $0x738] sm:$0xff]
    %v3090 = vld [vmem:[%s0 + $0x740] sm:$0xff]
    %v3091 = vld [vmem:[%s0 + $0x748] sm:$0xff]
    %v3092 = vld [vmem:[%s0 + $0x750] sm:$0xff]
    %v3093 = vld [vmem:[%s0 + $0x758] sm:$0xff]
    %v3094 = vld [vmem:[%s0 + $0x760] sm:$0xff]
    %v3095 = vld [vmem:[%s0 + $0x768] sm:$0xff]
    %v3096 = vld [vmem:[%s0 + $0x770] sm:$0xff]
    %v3097 = vld [vmem:[%s0 + $0x778] sm:$0xff]
    %v3098 = vld [vmem:[%s0 + $0x780] sm:$0xff]
    %v3099 = vld [vmem:[%s0 + $0x788] sm:$0xff]
    %v3100 = vld [vmem:[%s0 + $0x790] sm:$0xff]
    %v3101 = vld [vmem:[%s0 + $0x798] sm:$0xff]
    %v3102 = vld [vmem:[%s0 + $0x7a0] sm:$0xff]
    %v3103 = vld [vmem:[%s0 + $0x7a8] sm:$0xff]
    %v3104 = vld [vmem:[%s0 + $0x7b0] sm:$0xff]
    %v3105 = vld [vmem:[%s0 + $0x7b8] sm:$0xff]
    %v3106 = vld [vmem:[%s0 + $0x7c0] sm:$0xff]
    %v3107 = vld [vmem:[%s0 + $0x7c8] sm:$0xff]
    %v3108 = vld [vmem:[%s0 + $0x7d0] sm:$0xff]
    %v3109 = vld [vmem:[%s0 + $0x7d8] sm:$0xff]
    %v3110 = vld [vmem:[%s0 + $0x7e0] sm:$0xff]
    %v3111 = vld [vmem:[%s0 + $0x7e8] sm:$0xff]
    %v3112 = vld [vmem:[%s0 + $0x7f0] sm:$0xff]
    %v3113 = vld [vmem:[%s0 + $0x7f8] sm:$0xff]
    %v3115 = vsel %vm124, %v3050, 0
    %v3118 = vsel %vm124, %v3051, 0
    %v3121 = vsel %vm124, %v3052, 0
    %v3124 = vsel %vm124, %v3053, 0
    %v3127 = vsel %vm124, %v3054, 0
    %v3130 = vsel %vm124, %v3055, 0
    %v3133 = vsel %vm124, %v3056, 0
    %v3136 = vsel %vm124, %v3057, 0
    %v3139 = vsel %vm124, %v3058, 0
    %v3142 = vsel %vm124, %v3059, 0
    %v3145 = vsel %vm124, %v3060, 0
    %v3148 = vsel %vm124, %v3061, 0
    %v3151 = vsel %vm124, %v3062, 0
    %v3154 = vsel %vm124, %v3063, 0
    %v3157 = vsel %vm124, %v3064, 0
    %v3160 = vsel %vm124, %v3065, 0
    %v3163 = vsel %vm124, %v3066, 0
    %v3166 = vsel %vm124, %v3067, 0
    %v3169 = vsel %vm124, %v3068, 0
    %v3172 = vsel %vm124, %v3069, 0
    %v3175 = vsel %vm124, %v3070, 0
    %v3178 = vsel %vm124, %v3071, 0
    %v3181 = vsel %vm124, %v3072, 0
    %v3184 = vsel %vm124, %v3073, 0
    %v3187 = vsel %vm124, %v3074, 0
    %v3190 = vsel %vm124, %v3075, 0
    %v3193 = vsel %vm124, %v3076, 0
    %v3196 = vsel %vm124, %v3077, 0
    %v3199 = vsel %vm124, %v3078, 0
    %v3202 = vsel %vm124, %v3079, 0
    %v3205 = vsel %vm124, %v3080, 0
    %v3208 = vsel %vm124, %v3081, 0
    %v3211 = vsel %vm124, %v3082, 0
    %v3214 = vsel %vm124, %v3083, 0
    %v3217 = vsel %vm124, %v3084, 0
    %v3220 = vsel %vm124, %v3085, 0
    %v3223 = vsel %vm124, %v3086, 0
    %v3226 = vsel %vm124, %v3087, 0
    %v3229 = vsel %vm124, %v3088, 0
    %v3232 = vsel %vm124, %v3089, 0
    %v3235 = vsel %vm124, %v3090, 0
    %v3238 = vsel %vm124, %v3091, 0
    %v3241 = vsel %vm124, %v3092, 0
    %v3244 = vsel %vm124, %v3093, 0
    %v3247 = vsel %vm124, %v3094, 0
    %v3250 = vsel %vm124, %v3095, 0
    %v3253 = vsel %vm124, %v3096, 0
    %v3256 = vsel %vm124, %v3097, 0
    %v3259 = vsel %vm124, %v3098, 0
    %v3262 = vsel %vm124, %v3099, 0
    %v3265 = vsel %vm124, %v3100, 0
    %v3268 = vsel %vm124, %v3101, 0
    %v3271 = vsel %vm124, %v3102, 0
    %v3274 = vsel %vm124, %v3103, 0
    %v3277 = vsel %vm124, %v3104, 0
    %v3280 = vsel %vm124, %v3105, 0
    %v3283 = vsel %vm124, %v3106, 0
    %v3286 = vsel %vm124, %v3107, 0
    %v3289 = vsel %vm124, %v3108, 0
    %v3292 = vsel %vm124, %v3109, 0
    %v3295 = vsel %vm124, %v3110, 0
    %v3298 = vsel %vm124, %v3111, 0
    %v3301 = vsel %vm124, %v3112, 0
    %v3304 = vsel %vm124, %v3113, 0
    %3306 = vmatprep.subr.mxu0 0.0
    %3307 = vmatpush1.msra.mxu0 %v12
    %3308 = vmatprep.subr.mxu0 0.0
    %3309 = vmatpush1.msra.mxu0 %v13
    %3310 = vmatprep.subr.mxu0 0.0
    %3311 = vmatpush1.msra.mxu0 %v14
    %3312 = vmatprep.subr.mxu0 0.0
    %3313 = vmatpush1.msra.mxu0 %v15
    %3314 = vmatprep.subr.mxu0 0.0
    %3315 = vmatpush1.msra.mxu0 %v319
    %3316 = vmatprep.subr.mxu0 0.0
    %3317 = vmatpush1.msra.mxu0 0.0
    %3318 = vmatprep.subr.mxu0 0.0
    %3319 = vmatpush1.msra.mxu0 0.0
    %3320 = vmatprep.subr.mxu0 0.0
    %3321 = vmatpush1.msra.mxu0 0.0
    %3322 = vmatprep.subr.mxu0 0.0
    %3323 = vmatpush1.msra.mxu0 0.0
    %3324 = vmatprep.subr.mxu0 0.0
    %3325 = vmatpush1.msra.mxu0 0.0
    %3326 = vmatprep.subr.mxu0 0.0
    %3327 = vmatpush1.msra.mxu0 0.0
    %3328 = vmatprep.subr.mxu0 0.0
    %3329 = vmatpush1.msra.mxu0 0.0
    %3330 = vmatprep.subr.mxu0 0.0
    %3331 = vmatpush1.msra.mxu0 0.0
    %3332 = vmatprep.subr.mxu0 0.0
    %3333 = vmatpush1.msra.mxu0 0.0
    %3334 = vmatprep.subr.mxu0 0.0
    %3335 = vmatpush1.msra.mxu0 0.0
    %3336 = vmatprep.subr.mxu0 0.0
    %3337 = vmatpush1.msra.mxu0 0.0
    %3338 = vmatprep.subr.mxu0 0.0
    %3339 = vmatpush1.msra.mxu0 0.0
    %3340 = vmatprep.subr.mxu0 0.0
    %3341 = vmatpush1.msra.mxu0 0.0
    %3342 = vmatprep.subr.mxu0 0.0
    %3343 = vmatpush1.msra.mxu0 0.0
    %3344 = vmatprep.subr.mxu0 0.0
    %3345 = vmatpush1.msra.mxu0 0.0
    %3346 = vmatprep.subr.mxu0 0.0
    %3347 = vmatpush1.msra.mxu0 0.0
    %3348 = vmatprep.subr.mxu0 0.0
    %3349 = vmatpush1.msra.mxu0 0.0
    %3350 = vmatprep.subr.mxu0 0.0
    %3351 = vmatpush1.msra.mxu0 0.0
    %3352 = vmatprep.subr.mxu0 0.0
    %3353 = vmatpush1.msra.mxu0 0.0
    %3354 = vmatprep.subr.mxu0 0.0
    %3355 = vmatpush1.msra.mxu0 0.0
    %3356 = vmatprep.subr.mxu0 0.0
    %3357 = vmatpush1.msra.mxu0 0.0
    %3358 = vmatprep.subr.mxu0 0.0
    %3359 = vmatpush1.msra.mxu0 0.0
    %3360 = vmatprep.subr.mxu0 0.0
    %3361 = vmatpush1.msra.mxu0 0.0
    %3362 = vmatprep.subr.mxu0 0.0
    %3363 = vmatpush1.msra.mxu0 0.0
    %3364 = vmatprep.subr.mxu0 0.0
    %3365 = vmatpush1.msra.mxu0 0.0
    %3366 = vmatprep.subr.mxu0 0.0
    %3367 = vmatpush1.msra.mxu0 0.0
    %3368 = vmatprep.subr.mxu0 0.0
    %3369 = vmatpush1.msra.mxu0 0.0
    %3370 = vmatprep.mubr.f32.mxu0 0.0
    %3371 = vmatmul.mubr.f32.gmra.mrb[0].mxu0 %v3115
    %v3372 = vpop.f32.mrb[0].mxu0
    %v3373 = vadd.f32 %v123, %v3372
    %v3374 = vpop.f32.mrb[0].mxu0
    %3375 = vmatprep.mubr.f32.mxu0 0.0
    %3376 = vmatmul.mubr.f32.gmra.mrb[0].mxu0 %v3118
    %v3377 = vpop.f32.mrb[0].mxu0
    %v3378 = vadd.f32 %v123, %v3377
    %v3379 = vpop.f32.mrb[0].mxu0
    %3380 = vmatprep.mubr.f32.mxu0 0.0
    %3381 = vmatmul.mubr.f32.gmra.mrb[0].mxu0 %v3121
    %v3382 = vpop.f32.mrb[0].mxu0
    %v3383 = vadd.f32 %v123, %v3382
    %v3384 = vpop.f32.mrb[0].mxu0
    %3385 = vmatprep.mubr.f32.mxu0 0.0
    %3386 = vmatmul.mubr.f32.gmra.mrb[0].mxu0 %v3124
    %v3387 = vpop.f32.mrb[0].mxu0
    %v3388 = vadd.f32 %v123, %v3387
    %v3389 = vpop.f32.mrb[0].mxu0
    %3390 = vmatprep.mubr.f32.mxu0 0.0
    %3391 = vmatmul.mubr.f32.gmra.mrb[0].mxu0 %v3127
    %v3392 = vpop.f32.mrb[0].mxu0
    %v3393 = vadd.f32 %v123, %v3392
    %v3394 = vpop.f32.mrb[0].mxu0
    %3395 = vmatprep.mubr.f32.mxu0 0.0
    %3396 = vmatmul.mubr.f32.gmra.mrb[0].mxu0 %v3130
    %v3397 = vpop.f32.mrb[0].mxu0
    %v3398 = vadd.f32 %v123, %v3397
    %v3399 = vpop.f32.mrb[0].mxu0
    %3400 = vmatprep.mubr.f32.mxu0 0.0
    %3401 = vmatmul.mubr.f32.gmra.mrb[0].mxu0 %v3133
    %v3402 = vpop.f32.mrb[0].mxu0
    %v3403 = vadd.f32 %v123, %v3402
    %v3404 = vpop.f32.mrb[0].mxu0
    %3405 = vmatprep.mubr.f32.mxu0 0.0
    %3406 = vmatmul.mubr.f32.gmra.mrb[0].mxu0 %v3136
    %v3407 = vpop.f32.mrb[0].mxu0
    %v3408 = vadd.f32 %v123, %v3407
    %v3409 = vpop.f32.mrb[0].mxu0
    %3410 = vmatprep.mubr.f32.mxu0 0.0
    %3411 = vmatmul.mubr.f32.gmra.mrb[0].mxu0 %v3139
    %v3412 = vpop.f32.mrb[0].mxu0
    %v3413 = vadd.f32 %v123, %v3412
    %v3414 = vpop.f32.mrb[0].mxu0
    %3415 = vmatprep.mubr.f32.mxu0 0.0
    %3416 = vmatmul.mubr.f32.gmra.mrb[0].mxu0 %v3142
    %v3417 = vpop.f32.mrb[0].mxu0
    %v3418 = vadd.f32 %v123, %v3417
    %v3419 = vpop.f32.mrb[0].mxu0
    %3420 = vmatprep.mubr.f32.mxu0 0.0
    %3421 = vmatmul.mubr.f32.gmra.mrb[0].mxu0 %v3145
    %v3422 = vpop.f32.mrb[0].mxu0
    %v3423 = vadd.f32 %v123, %v3422
    %v3424 = vpop.f32.mrb[0].mxu0
    %3425 = vmatprep.mubr.f32.mxu0 0.0
    %3426 = vmatmul.mubr.f32.gmra.mrb[0].mxu0 %v3148
    %v3427 = vpop.f32.mrb[0].mxu0
    %v3428 = vadd.f32 %v123, %v3427
    %v3429 = vpop.f32.mrb[0].mxu0
    %3430 = vmatprep.mubr.f32.mxu0 0.0
    %3431 = vmatmul.mubr.f32.gmra.mrb[0].mxu0 %v3151
    %v3432 = vpop.f32.mrb[0].mxu0
    %v3433 = vadd.f32 %v123, %v3432
    %v3434 = vpop.f32.mrb[0].mxu0
    %3435 = vmatprep.mubr.f32.mxu0 0.0
    %3436 = vmatmul.mubr.f32.gmra.mrb[0].mxu0 %v3154
    %v3437 = vpop.f32.mrb[0].mxu0
    %v3438 = vadd.f32 %v123, %v3437
    %v3439 = vpop.f32.mrb[0].mxu0
    %3440 = vmatprep.mubr.f32.mxu0 0.0
    %3441 = vmatmul.mubr.f32.gmra.mrb[0].mxu0 %v3157
    %v3442 = vpop.f32.mrb[0].mxu0
    %v3443 = vadd.f32 %v123, %v3442
    %v3444 = vpop.f32.mrb[0].mxu0
    %3445 = vmatprep.mubr.f32.mxu0 0.0
    %3446 = vmatmul.mubr.f32.gmra.mrb[0].mxu0 %v3160
    %v3447 = vpop.f32.mrb[0].mxu0
    %v3448 = vadd.f32 %v123, %v3447
    %v3449 = vpop.f32.mrb[0].mxu0
    %3450 = vmatprep.mubr.f32.mxu0 0.0
    %3451 = vmatmul.mubr.f32.gmra.mrb[0].mxu0 %v3163
    %v3452 = vpop.f32.mrb[0].mxu0
    %v3453 = vadd.f32 %v123, %v3452
    %v3454 = vpop.f32.mrb[0].mxu0
    %3455 = vmatprep.mubr.f32.mxu0 0.0
    %3456 = vmatmul.mubr.f32.gmra.mrb[0].mxu0 %v3166
    %v3457 = vpop.f32.mrb[0].mxu0
    %v3458 = vadd.f32 %v123, %v3457
    %v3459 = vpop.f32.mrb[0].mxu0
    %3460 = vmatprep.mubr.f32.mxu0 0.0
    %3461 = vmatmul.mubr.f32.gmra.mrb[0].mxu0 %v3169
    %v3462 = vpop.f32.mrb[0].mxu0
    %v3463 = vadd.f32 %v123, %v3462
    %v3464 = vpop.f32.mrb[0].mxu0
    %3465 = vmatprep.mubr.f32.mxu0 0.0
    %3466 = vmatmul.mubr.f32.gmra.mrb[0].mxu0 %v3172
    %v3467 = vpop.f32.mrb[0].mxu0
    %v3468 = vadd.f32 %v123, %v3467
    %v3469 = vpop.f32.mrb[0].mxu0
    %3470 = vmatprep.mubr.f32.mxu0 0.0
    %3471 = vmatmul.mubr.f32.gmra.mrb[0].mxu0 %v3175
    %v3472 = vpop.f32.mrb[0].mxu0
    %v3473 = vadd.f32 %v123, %v3472
    %v3474 = vpop.f32.mrb[0].mxu0
    %3475 = vmatprep.mubr.f32.mxu0 0.0
    %3476 = vmatmul.mubr.f32.gmra.mrb[0].mxu0 %v3178
    %v3477 = vpop.f32.mrb[0].mxu0
    %v3478 = vadd.f32 %v123, %v3477
    %v3479 = vpop.f32.mrb[0].mxu0
    %3480 = vmatprep.mubr.f32.mxu0 0.0
    %3481 = vmatmul.mubr.f32.gmra.mrb[0].mxu0 %v3181
    %v3482 = vpop.f32.mrb[0].mxu0
    %v3483 = vadd.f32 %v123, %v3482
    %v3484 = vpop.f32.mrb[0].mxu0
    %3485 = vmatprep.mubr.f32.mxu0 0.0
    %3486 = vmatmul.mubr.f32.gmra.mrb[0].mxu0 %v3184
    %v3487 = vpop.f32.mrb[0].mxu0
    %v3488 = vadd.f32 %v123, %v3487
    %v3489 = vpop.f32.mrb[0].mxu0
    %3490 = vmatprep.mubr.f32.mxu0 0.0
    %3491 = vmatmul.mubr.f32.gmra.mrb[0].mxu0 %v3187
    %v3492 = vpop.f32.mrb[0].mxu0
    %v3493 = vadd.f32 %v123, %v3492
    %v3494 = vpop.f32.mrb[0].mxu0
    %3495 = vmatprep.mubr.f32.mxu0 0.0
    %3496 = vmatmul.mubr.f32.gmra.mrb[0].mxu0 %v3190
    %v3497 = vpop.f32.mrb[0].mxu0
    %v3498 = vadd.f32 %v123, %v3497
    %v3499 = vpop.f32.mrb[0].mxu0
    %3500 = vmatprep.mubr.f32.mxu0 0.0
    %3501 = vmatmul.mubr.f32.gmra.mrb[0].mxu0 %v3193
    %v3502 = vpop.f32.mrb[0].mxu0
    %v3503 = vadd.f32 %v123, %v3502
    %v3504 = vpop.f32.mrb[0].mxu0
    %3505 = vmatprep.mubr.f32.mxu0 0.0
    %3506 = vmatmul.mubr.f32.gmra.mrb[0].mxu0 %v3196
    %v3507 = vpop.f32.mrb[0].mxu0
    %v3508 = vadd.f32 %v123, %v3507
    %v3509 = vpop.f32.mrb[0].mxu0
    %3510 = vmatprep.mubr.f32.mxu0 0.0
    %3511 = vmatmul.mubr.f32.gmra.mrb[0].mxu0 %v3199
    %v3512 = vpop.f32.mrb[0].mxu0
    %v3513 = vadd.f32 %v123, %v3512
    %v3514 = vpop.f32.mrb[0].mxu0
    %3515 = vmatprep.mubr.f32.mxu0 0.0
    %3516 = vmatmul.mubr.f32.gmra.mrb[0].mxu0 %v3202
    %v3517 = vpop.f32.mrb[0].mxu0
    %v3518 = vadd.f32 %v123, %v3517
    %v3519 = vpop.f32.mrb[0].mxu0
    %3520 = vmatprep.mubr.f32.mxu0 0.0
    %3521 = vmatmul.mubr.f32.gmra.mrb[0].mxu0 %v3205
    %v3522 = vpop.f32.mrb[0].mxu0
    %v3523 = vadd.f32 %v123, %v3522
    %v3524 = vpop.f32.mrb[0].mxu0
    %3525 = vmatprep.mubr.f32.mxu0 0.0
    %3526 = vmatmul.mubr.f32.gmra.mrb[0].mxu0 %v3208
    %v3527 = vpop.f32.mrb[0].mxu0
    %v3528 = vadd.f32 %v123, %v3527
    %v3529 = vpop.f32.mrb[0].mxu0
    %3530 = vmatprep.mubr.f32.mxu0 0.0
    %3531 = vmatmul.mubr.f32.gmra.mrb[0].mxu0 %v3211
    %v3532 = vpop.f32.mrb[0].mxu0
    %v3533 = vadd.f32 %v123, %v3532
    %v3534 = vpop.f32.mrb[0].mxu0
    %3535 = vmatprep.mubr.f32.mxu0 0.0
    %3536 = vmatmul.mubr.f32.gmra.mrb[0].mxu0 %v3214
    %v3537 = vpop.f32.mrb[0].mxu0
    %v3538 = vadd.f32 %v123, %v3537
    %v3539 = vpop.f32.mrb[0].mxu0
    %3540 = vmatprep.mubr.f32.mxu0 0.0
    %3541 = vmatmul.mubr.f32.gmra.mrb[0].mxu0 %v3217
    %v3542 = vpop.f32.mrb[0].mxu0
    %v3543 = vadd.f32 %v123, %v3542
    %v3544 = vpop.f32.mrb[0].mxu0
    %3545 = vmatprep.mubr.f32.mxu0 0.0
    %3546 = vmatmul.mubr.f32.gmra.mrb[0].mxu0 %v3220
    %v3547 = vpop.f32.mrb[0].mxu0
    %v3548 = vadd.f32 %v123, %v3547
    %v3549 = vpop.f32.mrb[0].mxu0
    %3550 = vmatprep.mubr.f32.mxu0 0.0
    %3551 = vmatmul.mubr.f32.gmra.mrb[0].mxu0 %v3223
    %v3552 = vpop.f32.mrb[0].mxu0
    %v3553 = vadd.f32 %v123, %v3552
    %v3554 = vpop.f32.mrb[0].mxu0
    %3555 = vmatprep.mubr.f32.mxu0 0.0
    %3556 = vmatmul.mubr.f32.gmra.mrb[0].mxu0 %v3226
    %v3557 = vpop.f32.mrb[0].mxu0
    %v3558 = vadd.f32 %v123, %v3557
    %v3559 = vpop.f32.mrb[0].mxu0
    %3560 = vmatprep.mubr.f32.mxu0 0.0
    %3561 = vmatmul.mubr.f32.gmra.mrb[0].mxu0 %v3229
    %v3562 = vpop.f32.mrb[0].mxu0
    %v3563 = vadd.f32 %v123, %v3562
    %v3564 = vpop.f32.mrb[0].mxu0
    %3565 = vmatprep.mubr.f32.mxu0 0.0
    %3566 = vmatmul.mubr.f32.gmra.mrb[0].mxu0 %v3232
    %v3567 = vpop.f32.mrb[0].mxu0
    %v3568 = vadd.f32 %v123, %v3567
    %v3569 = vpop.f32.mrb[0].mxu0
    %3570 = vmatprep.mubr.f32.mxu0 0.0
    %3571 = vmatmul.mubr.f32.gmra.mrb[0].mxu0 %v3235
    %v3572 = vpop.f32.mrb[0].mxu0
    %v3573 = vadd.f32 %v123, %v3572
    %v3574 = vpop.f32.mrb[0].mxu0
    %3575 = vmatprep.mubr.f32.mxu0 0.0
    %3576 = vmatmul.mubr.f32.gmra.mrb[0].mxu0 %v3238
    %v3577 = vpop.f32.mrb[0].mxu0
    %v3578 = vadd.f32 %v123, %v3577
    %v3579 = vpop.f32.mrb[0].mxu0
    %3580 = vmatprep.mubr.f32.mxu0 0.0
    %3581 = vmatmul.mubr.f32.gmra.mrb[0].mxu0 %v3241
    %v3582 = vpop.f32.mrb[0].mxu0
    %v3583 = vadd.f32 %v123, %v3582
    %v3584 = vpop.f32.mrb[0].mxu0
    %3585 = vmatprep.mubr.f32.mxu0 0.0
    %3586 = vmatmul.mubr.f32.gmra.mrb[0].mxu0 %v3244
    %v3587 = vpop.f32.mrb[0].mxu0
    %v3588 = vadd.f32 %v123, %v3587
    %v3589 = vpop.f32.mrb[0].mxu0
    %3590 = vmatprep.mubr.f32.mxu0 0.0
    %3591 = vmatmul.mubr.f32.gmra.mrb[0].mxu0 %v3247
    %v3592 = vpop.f32.mrb[0].mxu0
    %v3593 = vadd.f32 %v123, %v3592
    %v3594 = vpop.f32.mrb[0].mxu0
    %3595 = vmatprep.mubr.f32.mxu0 0.0
    %3596 = vmatmul.mubr.f32.gmra.mrb[0].mxu0 %v3250
    %v3597 = vpop.f32.mrb[0].mxu0
    %v3598 = vadd.f32 %v123, %v3597
    %v3599 = vpop.f32.mrb[0].mxu0
    %3600 = vmatprep.mubr.f32.mxu0 0.0
    %3601 = vmatmul.mubr.f32.gmra.mrb[0].mxu0 %v3253
    %v3602 = vpop.f32.mrb[0].mxu0
    %v3603 = vadd.f32 %v123, %v3602
    %v3604 = vpop.f32.mrb[0].mxu0
    %3605 = vmatprep.mubr.f32.mxu0 0.0
    %3606 = vmatmul.mubr.f32.gmra.mrb[0].mxu0 %v3256
    %v3607 = vpop.f32.mrb[0].mxu0
    %v3608 = vadd.f32 %v123, %v3607
    %v3609 = vpop.f32.mrb[0].mxu0
    %3610 = vmatprep.mubr.f32.mxu0 0.0
    %3611 = vmatmul.mubr.f32.gmra.mrb[0].mxu0 %v3259
    %v3612 = vpop.f32.mrb[0].mxu0
    %v3613 = vadd.f32 %v123, %v3612
    %v3614 = vpop.f32.mrb[0].mxu0
    %3615 = vmatprep.mubr.f32.mxu0 0.0
    %3616 = vmatmul.mubr.f32.gmra.mrb[0].mxu0 %v3262
    %v3617 = vpop.f32.mrb[0].mxu0
    %v3618 = vadd.f32 %v123, %v3617
    %v3619 = vpop.f32.mrb[0].mxu0
    %3620 = vmatprep.mubr.f32.mxu0 0.0
    %3621 = vmatmul.mubr.f32.gmra.mrb[0].mxu0 %v3265
    %v3622 = vpop.f32.mrb[0].mxu0
    %v3623 = vadd.f32 %v123, %v3622
    %v3624 = vpop.f32.mrb[0].mxu0
    %3625 = vmatprep.mubr.f32.mxu0 0.0
    %3626 = vmatmul.mubr.f32.gmra.mrb[0].mxu0 %v3268
    %v3627 = vpop.f32.mrb[0].mxu0
    %v3628 = vadd.f32 %v123, %v3627
    %v3629 = vpop.f32.mrb[0].mxu0
    %3630 = vmatprep.mubr.f32.mxu0 0.0
    %3631 = vmatmul.mubr.f32.gmra.mrb[0].mxu0 %v3271
    %v3632 = vpop.f32.mrb[0].mxu0
    %v3633 = vadd.f32 %v123, %v3632
    %v3634 = vpop.f32.mrb[0].mxu0
    %3635 = vmatprep.mubr.f32.mxu0 0.0
    %3636 = vmatmul.mubr.f32.gmra.mrb[0].mxu0 %v3274
    %v3637 = vpop.f32.mrb[0].mxu0
    %v3638 = vadd.f32 %v123, %v3637
    %v3639 = vpop.f32.mrb[0].mxu0
    %3640 = vmatprep.mubr.f32.mxu0 0.0
    %3641 = vmatmul.mubr.f32.gmra.mrb[0].mxu0 %v3277
    %v3642 = vpop.f32.mrb[0].mxu0
    %v3643 = vadd.f32 %v123, %v3642
    %v3644 = vpop.f32.mrb[0].mxu0
    %3645 = vmatprep.mubr.f32.mxu0 0.0
    %3646 = vmatmul.mubr.f32.gmra.mrb[0].mxu0 %v3280
    %v3647 = vpop.f32.mrb[0].mxu0
    %v3648 = vadd.f32 %v123, %v3647
    %v3649 = vpop.f32.mrb[0].mxu0
    %3650 = vmatprep.mubr.f32.mxu0 0.0
    %3651 = vmatmul.mubr.f32.gmra.mrb[0].mxu0 %v3283
    %v3652 = vpop.f32.mrb[0].mxu0
    %v3653 = vadd.f32 %v123, %v3652
    %v3654 = vpop.f32.mrb[0].mxu0
    %3655 = vmatprep.mubr.f32.mxu0 0.0
    %3656 = vmatmul.mubr.f32.gmra.mrb[0].mxu0 %v3286
    %v3657 = vpop.f32.mrb[0].mxu0
    %v3658 = vadd.f32 %v123, %v3657
    %v3659 = vpop.f32.mrb[0].mxu0
    %3660 = vmatprep.mubr.f32.mxu0 0.0
    %3661 = vmatmul.mubr.f32.gmra.mrb[0].mxu0 %v3289
    %v3662 = vpop.f32.mrb[0].mxu0
    %v3663 = vadd.f32 %v123, %v3662
    %v3664 = vpop.f32.mrb[0].mxu0
    %3665 = vmatprep.mubr.f32.mxu0 0.0
    %3666 = vmatmul.mubr.f32.gmra.mrb[0].mxu0 %v3292
    %v3667 = vpop.f32.mrb[0].mxu0
    %v3668 = vadd.f32 %v123, %v3667
    %v3669 = vpop.f32.mrb[0].mxu0
    %3670 = vmatprep.mubr.f32.mxu0 0.0
    %3671 = vmatmul.mubr.f32.gmra.mrb[0].mxu0 %v3295
    %v3672 = vpop.f32.mrb[0].mxu0
    %v3673 = vadd.f32 %v123, %v3672
    %v3674 = vpop.f32.mrb[0].mxu0
    %3675 = vmatprep.mubr.f32.mxu0 0.0
    %3676 = vmatmul.mubr.f32.gmra.mrb[0].mxu0 %v3298
    %v3677 = vpop.f32.mrb[0].mxu0
    %v3678 = vadd.f32 %v123, %v3677
    %v3679 = vpop.f32.mrb[0].mxu0
    %3680 = vmatprep.mubr.f32.mxu0 0.0
    %3681 = vmatmul.mubr.f32.gmra.mrb[0].mxu0 %v3301
    %v3682 = vpop.f32.mrb[0].mxu0
    %v3683 = vadd.f32 %v123, %v3682
    %v3684 = vpop.f32.mrb[0].mxu0
    %3685 = vmatprep.mubr.f32.mxu0 0.0
    %3686 = vmatmul.mubr.f32.gmra.mrb[0].mxu0 %v3304
    %v3687 = vpop.f32.mrb[0].mxu0
    %v3688 = vadd.f32 %v123, %v3687
    %v3689 = vpop.f32.mrb[0].mxu0
    %3690 = vdwg.mxu0
    %v3691 = vmax.f32 %v3373, 0.0
    %v3692 = vmax.f32 %v3378, 0.0
    %v3693 = vmax.f32 %v3383, 0.0
    %v3694 = vmax.f32 %v3388, 0.0
    %v3695 = vmax.f32 %v3393, 0.0
    %v3696 = vmax.f32 %v3398, 0.0
    %v3697 = vmax.f32 %v3403, 0.0
    %v3698 = vmax.f32 %v3408, 0.0
    %v3699 = vmax.f32 %v3413, 0.0
    %v3700 = vmax.f32 %v3418, 0.0
    %v3701 = vmax.f32 %v3423, 0.0
    %v3702 = vmax.f32 %v3428, 0.0
    %v3703 = vmax.f32 %v3433, 0.0
    %v3704 = vmax.f32 %v3438, 0.0
    %v3705 = vmax.f32 %v3443, 0.0
    %v3706 = vmax.f32 %v3448, 0.0
    %v3707 = vmax.f32 %v3453, 0.0
    %v3708 = vmax.f32 %v3458, 0.0
    %v3709 = vmax.f32 %v3463, 0.0
    %v3710 = vmax.f32 %v3468, 0.0
    %v3711 = vmax.f32 %v3473, 0.0
    %v3712 = vmax.f32 %v3478, 0.0
    %v3713 = vmax.f32 %v3483, 0.0
    %v3714 = vmax.f32 %v3488, 0.0
    %v3715 = vmax.f32 %v3493, 0.0
    %v3716 = vmax.f32 %v3498, 0.0
    %v3717 = vmax.f32 %v3503, 0.0
    %v3718 = vmax.f32 %v3508, 0.0
    %v3719 = vmax.f32 %v3513, 0.0
    %v3720 = vmax.f32 %v3518, 0.0
    %v3721 = vmax.f32 %v3523, 0.0
    %v3722 = vmax.f32 %v3528, 0.0
    %v3723 = vmax.f32 %v3533, 0.0
    %v3724 = vmax.f32 %v3538, 0.0
    %v3725 = vmax.f32 %v3543, 0.0
    %v3726 = vmax.f32 %v3548, 0.0
    %v3727 = vmax.f32 %v3553, 0.0
    %v3728 = vmax.f32 %v3558, 0.0
    %v3729 = vmax.f32 %v3563, 0.0
    %v3730 = vmax.f32 %v3568, 0.0
    %v3731 = vmax.f32 %v3573, 0.0
    %v3732 = vmax.f32 %v3578, 0.0
    %v3733 = vmax.f32 %v3583, 0.0
    %v3734 = vmax.f32 %v3588, 0.0
    %v3735 = vmax.f32 %v3593, 0.0
    %v3736 = vmax.f32 %v3598, 0.0
    %v3737 = vmax.f32 %v3603, 0.0
    %v3738 = vmax.f32 %v3608, 0.0
    %v3739 = vmax.f32 %v3613, 0.0
    %v3740 = vmax.f32 %v3618, 0.0
    %v3741 = vmax.f32 %v3623, 0.0
    %v3742 = vmax.f32 %v3628, 0.0
    %v3743 = vmax.f32 %v3633, 0.0
    %v3744 = vmax.f32 %v3638, 0.0
    %v3745 = vmax.f32 %v3643, 0.0
    %v3746 = vmax.f32 %v3648, 0.0
    %v3747 = vmax.f32 %v3653, 0.0
    %v3748 = vmax.f32 %v3658, 0.0
    %v3749 = vmax.f32 %v3663, 0.0
    %v3750 = vmax.f32 %v3668, 0.0
    %v3751 = vmax.f32 %v3673, 0.0
    %v3752 = vmax.f32 %v3678, 0.0
    %v3753 = vmax.f32 %v3683, 0.0
    %v3754 = vmax.f32 %v3688, 0.0
    %3755 = vmatprep.subr.mxu0 0.0
    %3756 = vmatpush1.msra.mxu0 %v3691
    %3757 = vmatprep.subr.mxu0 0.0
    %3758 = vmatpush1.msra.mxu0 %v3692
    %3759 = vmatprep.subr.mxu0 0.0
    %3760 = vmatpush1.msra.mxu0 %v3693
    %3761 = vmatprep.subr.mxu0 0.0
    %3762 = vmatpush1.msra.mxu0 %v3694
    %3763 = vmatprep.subr.mxu0 0.0
    %3764 = vmatpush1.msra.mxu0 %v3695
    %3765 = vmatprep.subr.mxu0 0.0
    %3766 = vmatpush1.msra.mxu0 %v3696
    %3767 = vmatprep.subr.mxu0 0.0
    %3768 = vmatpush1.msra.mxu0 %v3697
    %3769 = vmatprep.subr.mxu0 0.0
    %3770 = vmatpush1.msra.mxu0 %v3698
    %3771 = vmatprep.subr.mxu0 0.0
    %3772 = vmatpush1.msra.mxu0 %v3699
    %3773 = vmatprep.subr.mxu0 0.0
    %3774 = vmatpush1.msra.mxu0 %v3700
    %3775 = vmatprep.subr.mxu0 0.0
    %3776 = vmatpush1.msra.mxu0 %v3701
    %3777 = vmatprep.subr.mxu0 0.0
    %3778 = vmatpush1.msra.mxu0 %v3702
    %3779 = vmatprep.subr.mxu0 0.0
    %3780 = vmatpush1.msra.mxu0 %v3703
    %3781 = vmatprep.subr.mxu0 0.0
    %3782 = vmatpush1.msra.mxu0 %v3704
    %3783 = vmatprep.subr.mxu0 0.0
    %3784 = vmatpush1.msra.mxu0 %v3705
    %3785 = vmatprep.subr.mxu0 0.0
    %3786 = vmatpush1.msra.mxu0 %v3706
    %3787 = vmatprep.subr.mxu0 0.0
    %3788 = vmatpush1.msra.mxu0 %v3707
    %3789 = vmatprep.subr.mxu0 0.0
    %3790 = vmatpush1.msra.mxu0 %v3708
    %3791 = vmatprep.subr.mxu0 0.0
    %3792 = vmatpush1.msra.mxu0 %v3709
    %3793 = vmatprep.subr.mxu0 0.0
    %3794 = vmatpush1.msra.mxu0 %v3710
    %3795 = vmatprep.subr.mxu0 0.0
    %3796 = vmatpush1.msra.mxu0 %v3711
    %3797 = vmatprep.subr.mxu0 0.0
    %3798 = vmatpush1.msra.mxu0 %v3712
    %3799 = vmatprep.subr.mxu0 0.0
    %3800 = vmatpush1.msra.mxu0 %v3713
    %3801 = vmatprep.subr.mxu0 0.0
    %3802 = vmatpush1.msra.mxu0 %v3714
    %3803 = vmatprep.subr.mxu0 0.0
    %3804 = vmatpush1.msra.mxu0 %v3715
    %3805 = vmatprep.subr.mxu0 0.0
    %3806 = vmatpush1.msra.mxu0 %v3716
    %3807 = vmatprep.subr.mxu0 0.0
    %3808 = vmatpush1.msra.mxu0 %v3717
    %3809 = vmatprep.subr.mxu0 0.0
    %3810 = vmatpush1.msra.mxu0 %v3718
    %3811 = vmatprep.subr.mxu0 0.0
    %3812 = vmatpush1.msra.mxu0 %v3719
    %3813 = vmatprep.subr.mxu0 0.0
    %3814 = vmatpush1.msra.mxu0 %v3720
    %3815 = vmatprep.subr.mxu0 0.0
    %3816 = vmatpush1.msra.mxu0 %v3721
    %3817 = vmatprep.subr.mxu0 0.0
    %3818 = vmatpush1.msra.mxu0 %v3722
    %3819 = vmatprep.mubr.f32.mxu0 %v53
    %3820 = vmatmul.mubr.f32.gmra.mrb[0].mxu0 %v52
    %v3821 = vpop.f32.mrb[0].mxu0
    %v3822 = vadd.f32 0.0, %v3821
    %v3823 = vpop.f32.mrb[0].mxu0
    %3824 = vdwg.mxu0
    %3825 = vmatprep.subr.mxu0 0.0
    %3826 = vmatpush1.msra.mxu0 %v3723
    %3827 = vmatprep.subr.mxu0 0.0
    %3828 = vmatpush1.msra.mxu0 %v3724
    %3829 = vmatprep.subr.mxu0 0.0
    %3830 = vmatpush1.msra.mxu0 %v3725
    %3831 = vmatprep.subr.mxu0 0.0
    %3832 = vmatpush1.msra.mxu0 %v3726
    %3833 = vmatprep.subr.mxu0 0.0
    %3834 = vmatpush1.msra.mxu0 %v3727
    %3835 = vmatprep.subr.mxu0 0.0
    %3836 = vmatpush1.msra.mxu0 %v3728
    %3837 = vmatprep.subr.mxu0 0.0
    %3838 = vmatpush1.msra.mxu0 %v3729
    %3839 = vmatprep.subr.mxu0 0.0
    %3840 = vmatpush1.msra.mxu0 %v3730
    %3841 = vmatprep.subr.mxu0 0.0
    %3842 = vmatpush1.msra.mxu0 %v3731
    %3843 = vmatprep.subr.mxu0 0.0
    %3844 = vmatpush1.msra.mxu0 %v3732
    %3845 = vmatprep.subr.mxu0 0.0
    %3846 = vmatpush1.msra.mxu0 %v3733
    %3847 = vmatprep.subr.mxu0 0.0
    %3848 = vmatpush1.msra.mxu0 %v3734
    %3849 = vmatprep.subr.mxu0 0.0
    %3850 = vmatpush1.msra.mxu0 %v3735
    %3851 = vmatprep.subr.mxu0 0.0
    %3852 = vmatpush1.msra.mxu0 %v3736
    %3853 = vmatprep.subr.mxu0 0.0
    %3854 = vmatpush1.msra.mxu0 %v3737
    %3855 = vmatprep.subr.mxu0 0.0
    %3856 = vmatpush1.msra.mxu0 %v3738
    %3857 = vmatprep.subr.mxu0 0.0
    %3858 = vmatpush1.msra.mxu0 %v3739
    %3859 = vmatprep.subr.mxu0 0.0
    %3860 = vmatpush1.msra.mxu0 %v3740
    %3861 = vmatprep.subr.mxu0 0.0
    %3862 = vmatpush1.msra.mxu0 %v3741
    %3863 = vmatprep.subr.mxu0 0.0
    %3864 = vmatpush1.msra.mxu0 %v3742
    %3865 = vmatprep.subr.mxu0 0.0
    %3866 = vmatpush1.msra.mxu0 %v3743
    %3867 = vmatprep.subr.mxu0 0.0
    %3868 = vmatpush1.msra.mxu0 %v3744
    %3869 = vmatprep.subr.mxu0 0.0
    %3870 = vmatpush1.msra.mxu0 %v3745
    %3871 = vmatprep.subr.mxu0 0.0
    %3872 = vmatpush1.msra.mxu0 %v3746
    %3873 = vmatprep.subr.mxu0 0.0
    %3874 = vmatpush1.msra.mxu0 %v3747
    %3875 = vmatprep.subr.mxu0 0.0
    %3876 = vmatpush1.msra.mxu0 %v3748
    %3877 = vmatprep.subr.mxu0 0.0
    %3878 = vmatpush1.msra.mxu0 %v3749
    %3879 = vmatprep.subr.mxu0 0.0
    %3880 = vmatpush1.msra.mxu0 %v3750
    %3881 = vmatprep.subr.mxu0 0.0
    %3882 = vmatpush1.msra.mxu0 %v3751
    %3883 = vmatprep.subr.mxu0 0.0
    %3884 = vmatpush1.msra.mxu0 %v3752
    %3885 = vmatprep.subr.mxu0 0.0
    %3886 = vmatpush1.msra.mxu0 %v3753
    %3887 = vmatprep.subr.mxu0 0.0
    %3888 = vmatpush1.msra.mxu0 %v3754
    %3889 = vmatprep.mubr.f32.mxu0 %v55
    %3890 = vmatmul.mubr.f32.gmra.mrb[0].mxu0 %v54
    %v3891 = vpop.f32.mrb[0].mxu0
    %v3892 = vadd.f32 %v3822, %v3891
    %v3893 = vpop.f32.mrb[0].mxu0
    %3894 = vdwg.mxu0
    %v3896 = vsel %vm914, %v3892, 0
    %3898 = vmatprep.subr.mxu0 0.0
    %3899 = vmatpush1.msra.mxu0 %v18
    %3900 = vmatprep.subr.mxu0 0.0
    %3901 = vmatpush1.msra.mxu0 %v19
    %3902 = vmatprep.subr.mxu0 0.0
    %3903 = vmatpush1.msra.mxu0 0.0
    %3904 = vmatprep.subr.mxu0 0.0
    %3905 = vmatpush1.msra.mxu0 0.0
    %3906 = vmatprep.subr.mxu0 0.0
    %3907 = vmatpush1.msra.mxu0 0.0
    %3908 = vmatprep.subr.mxu0 0.0
    %3909 = vmatpush1.msra.mxu0 0.0
    %3910 = vmatprep.subr.mxu0 0.0
    %3911 = vmatpush1.msra.mxu0 0.0
    %3912 = vmatprep.subr.mxu0 0.0
    %3913 = vmatpush1.msra.mxu0 0.0
    %3914 = vmatprep.subr.mxu0 0.0
    %3915 = vmatpush1.msra.mxu0 0.0
    %3916 = vmatprep.subr.mxu0 0.0
    %3917 = vmatpush1.msra.mxu0 0.0
    %3918 = vmatprep.subr.mxu0 0.0
    %3919 = vmatpush1.msra.mxu0 0.0
    %3920 = vmatprep.subr.mxu0 0.0
    %3921 = vmatpush1.msra.mxu0 0.0
    %3922 = vmatprep.subr.mxu0 0.0
    %3923 = vmatpush1.msra.mxu0 0.0
    %3924 = vmatprep.subr.mxu0 0.0
    %3925 = vmatpush1.msra.mxu0 0.0
    %3926 = vmatprep.subr.mxu0 0.0
    %3927 = vmatpush1.msra.mxu0 0.0
    %3928 = vmatprep.subr.mxu0 0.0
    %3929 = vmatpush1.msra.mxu0 0.0
    %3930 = vmatprep.subr.mxu0 0.0
    %3931 = vmatpush1.msra.mxu0 0.0
    %3932 = vmatprep.subr.mxu0 0.0
    %3933 = vmatpush1.msra.mxu0 0.0
    %3934 = vmatprep.subr.mxu0 0.0
    %3935 = vmatpush1.msra.mxu0 0.0
    %3936 = vmatprep.subr.mxu0 0.0
    %3937 = vmatpush1.msra.mxu0 0.0
    %3938 = vmatprep.subr.mxu0 0.0
    %3939 = vmatpush1.msra.mxu0 0.0
    %3940 = vmatprep.subr.mxu0 0.0
    %3941 = vmatpush1.msra.mxu0 0.0
    %3942 = vmatprep.subr.mxu0 0.0
    %3943 = vmatpush1.msra.mxu0 0.0
    %3944 = vmatprep.subr.mxu0 0.0
    %3945 = vmatpush1.msra.mxu0 0.0
    %3946 = vmatprep.subr.mxu0 0.0
    %3947 = vmatpush1.msra.mxu0 0.0
    %3948 = vmatprep.subr.mxu0 0.0
    %3949 = vmatpush1.msra.mxu0 0.0
    %3950 = vmatprep.subr.mxu0 0.0
    %3951 = vmatpush1.msra.mxu0 0.0
    %3952 = vmatprep.subr.mxu0 0.0
    %3953 = vmatpush1.msra.mxu0 0.0
    %3954 = vmatprep.subr.mxu0 0.0
    %3955 = vmatpush1.msra.mxu0 0.0
    %3956 = vmatprep.subr.mxu0 0.0
    %3957 = vmatpush1.msra.mxu0 0.0
    %3958 = vmatprep.subr.mxu0 0.0
    %3959 = vmatpush1.msra.mxu0 0.0
    %3960 = vmatprep.subr.mxu0 0.0
    %3961 = vmatpush1.msra.mxu0 0.0
    %3962 = vmatprep.mubr.f32.mxu0 0.0
    %3963 = vmatmul.mubr.f32.gmra.mrb[0].mxu0 %v3896
    %v3964 = vpop.f32.mrb[0].mxu0
    %v3965 = vadd.f32 %v913, %v3964
    %v3966 = vpop.f32.mrb[0].mxu0
    %3967 = vdwg.mxu0
    %v3969 = vsel %vm988, %v3049, 0
    %3971 = vmatprep.subr.mxu0 0.0
    %3972 = vmatpush1.msra.mxu0 %v20
    %3973 = vmatprep.subr.mxu0 0.0
    %3974 = vmatpush1.msra.mxu0 %v21
    %3975 = vmatprep.subr.mxu0 0.0
    %3976 = vmatpush1.msra.mxu0 %v22
    %3977 = vmatprep.subr.mxu0 0.0
    %3978 = vmatpush1.msra.mxu0 %v23
    %3979 = vmatprep.subr.mxu0 0.0
    %3980 = vmatpush1.msra.mxu0 0.0
    %3981 = vmatprep.subr.mxu0 0.0
    %3982 = vmatpush1.msra.mxu0 0.0
    %3983 = vmatprep.subr.mxu0 0.0
    %3984 = vmatpush1.msra.mxu0 0.0
    %3985 = vmatprep.subr.mxu0 0.0
    %3986 = vmatpush1.msra.mxu0 0.0
    %3987 = vmatprep.subr.mxu0 0.0
    %3988 = vmatpush1.msra.mxu0 0.0
    %3989 = vmatprep.subr.mxu0 0.0
    %3990 = vmatpush1.msra.mxu0 0.0
    %3991 = vmatprep.subr.mxu0 0.0
    %3992 = vmatpush1.msra.mxu0 0.0
    %3993 = vmatprep.subr.mxu0 0.0
    %3994 = vmatpush1.msra.mxu0 0.0
    %3995 = vmatprep.subr.mxu0 0.0
    %3996 = vmatpush1.msra.mxu0 0.0
    %3997 = vmatprep.subr.mxu0 0.0
    %3998 = vmatpush1.msra.mxu0 0.0
    %3999 = vmatprep.subr.mxu0 0.0
    %4000 = vmatpush1.msra.mxu0 0.0
    %4001 = vmatprep.subr.mxu0 0.0
    %4002 = vmatpush1.msra.mxu0 0.0
    %4003 = vmatprep.subr.mxu0 0.0
    %4004 = vmatpush1.msra.mxu0 0.0
    %4005 = vmatprep.subr.mxu0 0.0
    %4006 = vmatpush1.msra.mxu0 0.0
    %4007 = vmatprep.subr.mxu0 0.0
    %4008 = vmatpush1.msra.mxu0 0.0
    %4009 = vmatprep.subr.mxu0 0.0
    %4010 = vmatpush1.msra.mxu0 0.0
    %4011 = vmatprep.subr.mxu0 0.0
    %4012 = vmatpush1.msra.mxu0 0.0
    %4013 = vmatprep.subr.mxu0 0.0
    %4014 = vmatpush1.msra.mxu0 0.0
    %4015 = vmatprep.subr.mxu0 0.0
    %4016 = vmatpush1.msra.mxu0 0.0
    %4017 = vmatprep.subr.mxu0 0.0
    %4018 = vmatpush1.msra.mxu0 0.0
    %4019 = vmatprep.subr.mxu0 0.0
    %4020 = vmatpush1.msra.mxu0 0.0
    %4021 = vmatprep.subr.mxu0 0.0
    %4022 = vmatpush1.msra.mxu0 0.0
    %4023 = vmatprep.subr.mxu0 0.0
    %4024 = vmatpush1.msra.mxu0 0.0
    %4025 = vmatprep.subr.mxu0 0.0
    %4026 = vmatpush1.msra.mxu0 0.0
    %4027 = vmatprep.subr.mxu0 0.0
    %4028 = vmatpush1.msra.mxu0 0.0
    %4029 = vmatprep.subr.mxu0 0.0
    %4030 = vmatpush1.msra.mxu0 0.0
    %4031 = vmatprep.subr.mxu0 0.0
    %4032 = vmatpush1.msra.mxu0 0.0
    %4033 = vmatprep.subr.mxu0 0.0
    %4034 = vmatpush1.msra.mxu0 0.0
    %4035 = vmatprep.mubr.f32.mxu0 0.0
    %4036 = vmatmul.mubr.f32.gmra.mrb[0].mxu0 %v3969
    %v4037 = vpop.f32.mrb[0].mxu0
    %v4038 = vadd.f32 0.0, %v4037
    %v4039 = vpop.f32.mrb[0].mxu0
    %4040 = vdwg.mxu0
    %v4041 = vadd.f32 %v3965, %v4038
    %v4042 = vtanh.pop %v4041
    %v4043 = vld [vmem:[%s0 + $0x800] sm:$0xff]
    %v4044 = vld [vmem:[%s0 + $0x808] sm:$0xff]
    %v4045 = vld [vmem:[%s0 + $0x810] sm:$0xff]
    %v4046 = vld [vmem:[%s0 + $0x818] sm:$0xff]
    %v4047 = vld [vmem:[%s0 + $0x820] sm:$0xff]
    %v4048 = vld [vmem:[%s0 + $0x828] sm:$0xff]
    %v4049 = vld [vmem:[%s0 + $0x830] sm:$0xff]
    %v4050 = vld [vmem:[%s0 + $0x838] sm:$0xff]
    %v4051 = vld [vmem:[%s0 + $0x840] sm:$0xff]
    %v4052 = vld [vmem:[%s0 + $0x848] sm:$0xff]
    %v4053 = vld [vmem:[%s0 + $0x850] sm:$0xff]
    %v4054 = vld [vmem:[%s0 + $0x858] sm:$0xff]
    %v4055 = vld [vmem:[%s0 + $0x860] sm:$0xff]
    %v4056 = vld [vmem:[%s0 + $0x868] sm:$0xff]
    %v4057 = vld [vmem:[%s0 + $0x870] sm:$0xff]
    %v4058 = vld [vmem:[%s0 + $0x878] sm:$0xff]
    %v4059 = vld [vmem:[%s0 + $0x880] sm:$0xff]
    %v4060 = vld [vmem:[%s0 + $0x888] sm:$0xff]
    %v4061 = vld [vmem:[%s0 + $0x890] sm:$0xff]
    %v4062 = vld [vmem:[%s0 + $0x898] sm:$0xff]
    %v4063 = vld [vmem:[%s0 + $0x8a0] sm:$0xff]
    %v4064 = vld [vmem:[%s0 + $0x8a8] sm:$0xff]
    %v4065 = vld [vmem:[%s0 + $0x8b0] sm:$0xff]
    %v4066 = vld [vmem:[%s0 + $0x8b8] sm:$0xff]
    %v4067 = vld [vmem:[%s0 + $0x8c0] sm:$0xff]
    %v4068 = vld [vmem:[%s0 + $0x8c8] sm:$0xff]
    %v4069 = vld [vmem:[%s0 + $0x8d0] sm:$0xff]
    %v4070 = vld [vmem:[%s0 + $0x8d8] sm:$0xff]
    %v4071 = vld [vmem:[%s0 + $0x8e0] sm:$0xff]
    %v4072 = vld [vmem:[%s0 + $0x8e8] sm:$0xff]
    %v4073 = vld [vmem:[%s0 + $0x8f0] sm:$0xff]
    %v4074 = vld [vmem:[%s0 + $0x8f8] sm:$0xff]
    %v4075 = vld [vmem:[%s0 + $0x900] sm:$0xff]
    %v4076 = vld [vmem:[%s0 + $0x908] sm:$0xff]
    %v4077 = vld [vmem:[%s0 + $0x910] sm:$0xff]
    %v4078 = vld [vmem:[%s0 + $0x918] sm:$0xff]
    %v4079 = vld [vmem:[%s0 + $0x920] sm:$0xff]
    %v4080 = vld [vmem:[%s0 + $0x928] sm:$0xff]
    %v4081 = vld [vmem:[%s0 + $0x930] sm:$0xff]
    %v4082 = vld [vmem:[%s0 + $0x938] sm:$0xff]
    %v4083 = vld [vmem:[%s0 + $0x940] sm:$0xff]
    %v4084 = vld [vmem:[%s0 + $0x948] sm:$0xff]
    %v4085 = vld [vmem:[%s0 + $0x950] sm:$0xff]
    %v4086 = vld [vmem:[%s0 + $0x958] sm:$0xff]
    %v4087 = vld [vmem:[%s0 + $0x960] sm:$0xff]
    %v4088 = vld [vmem:[%s0 + $0x968] sm:$0xff]
    %v4089 = vld [vmem:[%s0 + $0x970] sm:$0xff]
    %v4090 = vld [vmem:[%s0 + $0x978] sm:$0xff]
    %v4091 = vld [vmem:[%s0 + $0x980] sm:$0xff]
    %v4092 = vld [vmem:[%s0 + $0x988] sm:$0xff]
    %v4093 = vld [vmem:[%s0 + $0x990] sm:$0xff]
    %v4094 = vld [vmem:[%s0 + $0x998] sm:$0xff]
    %v4095 = vld [vmem:[%s0 + $0x9a0] sm:$0xff]
    %v4096 = vld [vmem:[%s0 + $0x9a8] sm:$0xff]
    %v4097 = vld [vmem:[%s0 + $0x9b0] sm:$0xff]
    %v4098 = vld [vmem:[%s0 + $0x9b8] sm:$0xff]
    %v4099 = vld [vmem:[%s0 + $0x9c0] sm:$0xff]
    %v4100 = vld [vmem:[%s0 + $0x9c8] sm:$0xff]
    %v4101 = vld [vmem:[%s0 + $0x9d0] sm:$0xff]
    %v4102 = vld [vmem:[%s0 + $0x9d8] sm:$0xff]
    %v4103 = vld [vmem:[%s0 + $0x9e0] sm:$0xff]
    %v4104 = vld [vmem:[%s0 + $0x9e8] sm:$0xff]
    %v4105 = vld [vmem:[%s0 + $0x9f0] sm:$0xff]
    %v4106 = vld [vmem:[%s0 + $0x9f8] sm:$0xff]
    %v4108 = vsel %vm124, %v4043, 0
    %v4111 = vsel %vm124, %v4044, 0
    %v4114 = vsel %vm124, %v4045, 0
    %v4117 = vsel %vm124, %v4046, 0
    %v4120 = vsel %vm124, %v4047, 0
    %v4123 = vsel %vm124, %v4048, 0
    %v4126 = vsel %vm124, %v4049, 0
    %v4129 = vsel %vm124, %v4050, 0
    %v4132 = vsel %vm124, %v4051, 0
    %v4135 = vsel %vm124, %v4052, 0
    %v4138 = vsel %vm124, %v4053, 0
    %v4141 = vsel %vm124, %v4054, 0
    %v4144 = vsel %vm124, %v4055, 0
    %v4147 = vsel %vm124, %v4056, 0
    %v4150 = vsel %vm124, %v4057, 0
    %v4153 = vsel %vm124, %v4058, 0
    %v4156 = vsel %vm124, %v4059, 0
    %v4159 = vsel %vm124, %v4060, 0
    %v4162 = vsel %vm124, %v4061, 0
    %v4165 = vsel %vm124, %v4062, 0
    %v4168 = vsel %vm124, %v4063, 0
    %v4171 = vsel %vm124, %v4064, 0
    %v4174 = vsel %vm124, %v4065, 0
    %v4177 = vsel %vm124, %v4066, 0
    %v4180 = vsel %vm124, %v4067, 0
    %v4183 = vsel %vm124, %v4068, 0
    %v4186 = vsel %vm124, %v4069, 0
    %v4189 = vsel %vm124, %v4070, 0
    %v4192 = vsel %vm124, %v4071, 0
    %v4195 = vsel %vm124, %v4072, 0
    %v4198 = vsel %vm124, %v4073, 0
    %v4201 = vsel %vm124, %v4074, 0
    %v4204 = vsel %vm124, %v4075, 0
    %v4207 = vsel %vm124, %v4076, 0
    %v4210 = vsel %vm124, %v4077, 0
    %v4213 = vsel %vm124, %v4078, 0
    %v4216 = vsel %vm124, %v4079, 0
    %v4219 = vsel %vm124, %v4080, 0
    %v4222 = vsel %vm124, %v4081, 0
    %v4225 = vsel %vm124, %v4082, 0
    %v4228 = vsel %vm124, %v4083, 0
    %v4231 = vsel %vm124, %v4084, 0
    %v4234 = vsel %vm124, %v4085, 0
    %v4237 = vsel %vm124, %v4086, 0
    %v4240 = vsel %vm124, %v4087, 0
    %v4243 = vsel %vm124, %v4088, 0
    %v4246 = vsel %vm124, %v4089, 0
    %v4249 = vsel %vm124, %v4090, 0
    %v4252 = vsel %vm124, %v4091, 0
    %v4255 = vsel %vm124, %v4092, 0
    %v4258 = vsel %vm124, %v4093, 0
    %v4261 = vsel %vm124, %v4094, 0
    %v4264 = vsel %vm124, %v4095, 0
    %v4267 = vsel %vm124, %v4096, 0
    %v4270 = vsel %vm124, %v4097, 0
    %v4273 = vsel %vm124, %v4098, 0
    %v4276 = vsel %vm124, %v4099, 0
    %v4279 = vsel %vm124, %v4100, 0
    %v4282 = vsel %vm124, %v4101, 0
    %v4285 = vsel %vm124, %v4102, 0
    %v4288 = vsel %vm124, %v4103, 0
    %v4291 = vsel %vm124, %v4104, 0
    %v4294 = vsel %vm124, %v4105, 0
    %v4297 = vsel %vm124, %v4106, 0
    %4299 = vmatprep.subr.mxu0 0.0
    %4300 = vmatpush1.msra.mxu0 %v12
    %4301 = vmatprep.subr.mxu0 0.0
    %4302 = vmatpush1.msra.mxu0 %v13
    %4303 = vmatprep.subr.mxu0 0.0
    %4304 = vmatpush1.msra.mxu0 %v14
    %4305 = vmatprep.subr.mxu0 0.0
    %4306 = vmatpush1.msra.mxu0 %v15
    %4307 = vmatprep.subr.mxu0 0.0
    %4308 = vmatpush1.msra.mxu0 %v319
    %4309 = vmatprep.subr.mxu0 0.0
    %4310 = vmatpush1.msra.mxu0 0.0
    %4311 = vmatprep.subr.mxu0 0.0
    %4312 = vmatpush1.msra.mxu0 0.0
    %4313 = vmatprep.subr.mxu0 0.0
    %4314 = vmatpush1.msra.mxu0 0.0
    %4315 = vmatprep.subr.mxu0 0.0
    %4316 = vmatpush1.msra.mxu0 0.0
    %4317 = vmatprep.subr.mxu0 0.0
    %4318 = vmatpush1.msra.mxu0 0.0
    %4319 = vmatprep.subr.mxu0 0.0
    %4320 = vmatpush1.msra.mxu0 0.0
    %4321 = vmatprep.subr.mxu0 0.0
    %4322 = vmatpush1.msra.mxu0 0.0
    %4323 = vmatprep.subr.mxu0 0.0
    %4324 = vmatpush1.msra.mxu0 0.0
    %4325 = vmatprep.subr.mxu0 0.0
    %4326 = vmatpush1.msra.mxu0 0.0
    %4327 = vmatprep.subr.mxu0 0.0
    %4328 = vmatpush1.msra.mxu0 0.0
    %4329 = vmatprep.subr.mxu0 0.0
    %4330 = vmatpush1.msra.mxu0 0.0
    %4331 = vmatprep.subr.mxu0 0.0
    %4332 = vmatpush1.msra.mxu0 0.0
    %4333 = vmatprep.subr.mxu0 0.0
    %4334 = vmatpush1.msra.mxu0 0.0
    %4335 = vmatprep.subr.mxu0 0.0
    %4336 = vmatpush1.msra.mxu0 0.0
    %4337 = vmatprep.subr.mxu0 0.0
    %4338 = vmatpush1.msra.mxu0 0.0
    %4339 = vmatprep.subr.mxu0 0.0
    %4340 = vmatpush1.msra.mxu0 0.0
    %4341 = vmatprep.subr.mxu0 0.0
    %4342 = vmatpush1.msra.mxu0 0.0
    %4343 = vmatprep.subr.mxu0 0.0
    %4344 = vmatpush1.msra.mxu0 0.0
    %4345 = vmatprep.subr.mxu0 0.0
    %4346 = vmatpush1.msra.mxu0 0.0
    %4347 = vmatprep.subr.mxu0 0.0
    %4348 = vmatpush1.msra.mxu0 0.0
    %4349 = vmatprep.subr.mxu0 0.0
    %4350 = vmatpush1.msra.mxu0 0.0
    %4351 = vmatprep.subr.mxu0 0.0
    %4352 = vmatpush1.msra.mxu0 0.0
    %4353 = vmatprep.subr.mxu0 0.0
    %4354 = vmatpush1.msra.mxu0 0.0
    %4355 = vmatprep.subr.mxu0 0.0
    %4356 = vmatpush1.msra.mxu0 0.0
    %4357 = vmatprep.subr.mxu0 0.0
    %4358 = vmatpush1.msra.mxu0 0.0
    %4359 = vmatprep.subr.mxu0 0.0
    %4360 = vmatpush1.msra.mxu0 0.0
    %4361 = vmatprep.subr.mxu0 0.0
    %4362 = vmatpush1.msra.mxu0 0.0
    %4363 = vmatprep.mubr.f32.mxu0 0.0
    %4364 = vmatmul.mubr.f32.gmra.mrb[0].mxu0 %v4108
    %v4365 = vpop.f32.mrb[0].mxu0
    %v4366 = vadd.f32 %v123, %v4365
    %v4367 = vpop.f32.mrb[0].mxu0
    %4368 = vmatprep.mubr.f32.mxu0 0.0
    %4369 = vmatmul.mubr.f32.gmra.mrb[0].mxu0 %v4111
    %v4370 = vpop.f32.mrb[0].mxu0
    %v4371 = vadd.f32 %v123, %v4370
    %v4372 = vpop.f32.mrb[0].mxu0
    %4373 = vmatprep.mubr.f32.mxu0 0.0
    %4374 = vmatmul.mubr.f32.gmra.mrb[0].mxu0 %v4114
    %v4375 = vpop.f32.mrb[0].mxu0
    %v4376 = vadd.f32 %v123, %v4375
    %v4377 = vpop.f32.mrb[0].mxu0
    %4378 = vmatprep.mubr.f32.mxu0 0.0
    %4379 = vmatmul.mubr.f32.gmra.mrb[0].mxu0 %v4117
    %v4380 = vpop.f32.mrb[0].mxu0
    %v4381 = vadd.f32 %v123, %v4380
    %v4382 = vpop.f32.mrb[0].mxu0
    %4383 = vmatprep.mubr.f32.mxu0 0.0
    %4384 = vmatmul.mubr.f32.gmra.mrb[0].mxu0 %v4120
    %v4385 = vpop.f32.mrb[0].mxu0
    %v4386 = vadd.f32 %v123, %v4385
    %v4387 = vpop.f32.mrb[0].mxu0
    %4388 = vmatprep.mubr.f32.mxu0 0.0
    %4389 = vmatmul.mubr.f32.gmra.mrb[0].mxu0 %v4123
    %v4390 = vpop.f32.mrb[0].mxu0
    %v4391 = vadd.f32 %v123, %v4390
    %v4392 = vpop.f32.mrb[0].mxu0
    %4393 = vmatprep.mubr.f32.mxu0 0.0
    %4394 = vmatmul.mubr.f32.gmra.mrb[0].mxu0 %v4126
    %v4395 = vpop.f32.mrb[0].mxu0
    %v4396 = vadd.f32 %v123, %v4395
    %v4397 = vpop.f32.mrb[0].mxu0
    %4398 = vmatprep.mubr.f32.mxu0 0.0
    %4399 = vmatmul.mubr.f32.gmra.mrb[0].mxu0 %v4129
    %v4400 = vpop.f32.mrb[0].mxu0
    %v4401 = vadd.f32 %v123, %v4400
    %v4402 = vpop.f32.mrb[0].mxu0
    %4403 = vmatprep.mubr.f32.mxu0 0.0
    %4404 = vmatmul.mubr.f32.gmra.mrb[0].mxu0 %v4132
    %v4405 = vpop.f32.mrb[0].mxu0
    %v4406 = vadd.f32 %v123, %v4405
    %v4407 = vpop.f32.mrb[0].mxu0
    %4408 = vmatprep.mubr.f32.mxu0 0.0
    %4409 = vmatmul.mubr.f32.gmra.mrb[0].mxu0 %v4135
    %v4410 = vpop.f32.mrb[0].mxu0
    %v4411 = vadd.f32 %v123, %v4410
    %v4412 = vpop.f32.mrb[0].mxu0
    %4413 = vmatprep.mubr.f32.mxu0 0.0
    %4414 = vmatmul.mubr.f32.gmra.mrb[0].mxu0 %v4138
    %v4415 = vpop.f32.mrb[0].mxu0
    %v4416 = vadd.f32 %v123, %v4415
    %v4417 = vpop.f32.mrb[0].mxu0
    %4418 = vmatprep.mubr.f32.mxu0 0.0
    %4419 = vmatmul.mubr.f32.gmra.mrb[0].mxu0 %v4141
    %v4420 = vpop.f32.mrb[0].mxu0
    %v4421 = vadd.f32 %v123, %v4420
    %v4422 = vpop.f32.mrb[0].mxu0
    %4423 = vmatprep.mubr.f32.mxu0 0.0
    %4424 = vmatmul.mubr.f32.gmra.mrb[0].mxu0 %v4144
    %v4425 = vpop.f32.mrb[0].mxu0
    %v4426 = vadd.f32 %v123, %v4425
    %v4427 = vpop.f32.mrb[0].mxu0
    %4428 = vmatprep.mubr.f32.mxu0 0.0
    %4429 = vmatmul.mubr.f32.gmra.mrb[0].mxu0 %v4147
    %v4430 = vpop.f32.mrb[0].mxu0
    %v4431 = vadd.f32 %v123, %v4430
    %v4432 = vpop.f32.mrb[0].mxu0
    %4433 = vmatprep.mubr.f32.mxu0 0.0
    %4434 = vmatmul.mubr.f32.gmra.mrb[0].mxu0 %v4150
    %v4435 = vpop.f32.mrb[0].mxu0
    %v4436 = vadd.f32 %v123, %v4435
    %v4437 = vpop.f32.mrb[0].mxu0
    %4438 = vmatprep.mubr.f32.mxu0 0.0
    %4439 = vmatmul.mubr.f32.gmra.mrb[0].mxu0 %v4153
    %v4440 = vpop.f32.mrb[0].mxu0
    %v4441 = vadd.f32 %v123, %v4440
    %v4442 = vpop.f32.mrb[0].mxu0
    %4443 = vmatprep.mubr.f32.mxu0 0.0
    %4444 = vmatmul.mubr.f32.gmra.mrb[0].mxu0 %v4156
    %v4445 = vpop.f32.mrb[0].mxu0
    %v4446 = vadd.f32 %v123, %v4445
    %v4447 = vpop.f32.mrb[0].mxu0
    %4448 = vmatprep.mubr.f32.mxu0 0.0
    %4449 = vmatmul.mubr.f32.gmra.mrb[0].mxu0 %v4159
    %v4450 = vpop.f32.mrb[0].mxu0
    %v4451 = vadd.f32 %v123, %v4450
    %v4452 = vpop.f32.mrb[0].mxu0
    %4453 = vmatprep.mubr.f32.mxu0 0.0
    %4454 = vmatmul.mubr.f32.gmra.mrb[0].mxu0 %v4162
    %v4455 = vpop.f32.mrb[0].mxu0
    %v4456 = vadd.f32 %v123, %v4455
    %v4457 = vpop.f32.mrb[0].mxu0
    %4458 = vmatprep.mubr.f32.mxu0 0.0
    %4459 = vmatmul.mubr.f32.gmra.mrb[0].mxu0 %v4165
    %v4460 = vpop.f32.mrb[0].mxu0
    %v4461 = vadd.f32 %v123, %v4460
    %v4462 = vpop.f32.mrb[0].mxu0
    %4463 = vmatprep.mubr.f32.mxu0 0.0
    %4464 = vmatmul.mubr.f32.gmra.mrb[0].mxu0 %v4168
    %v4465 = vpop.f32.mrb[0].mxu0
    %v4466 = vadd.f32 %v123, %v4465
    %v4467 = vpop.f32.mrb[0].mxu0
    %4468 = vmatprep.mubr.f32.mxu0 0.0
    %4469 = vmatmul.mubr.f32.gmra.mrb[0].mxu0 %v4171
    %v4470 = vpop.f32.mrb[0].mxu0
    %v4471 = vadd.f32 %v123, %v4470
    %v4472 = vpop.f32.mrb[0].mxu0
    %4473 = vmatprep.mubr.f32.mxu0 0.0
    %4474 = vmatmul.mubr.f32.gmra.mrb[0].mxu0 %v4174
    %v4475 = vpop.f32.mrb[0].mxu0
    %v4476 = vadd.f32 %v123, %v4475
    %v4477 = vpop.f32.mrb[0].mxu0
    %4478 = vmatprep.mubr.f32.mxu0 0.0
    %4479 = vmatmul.mubr.f32.gmra.mrb[0].mxu0 %v4177
    %v4480 = vpop.f32.mrb[0].mxu0
    %v4481 = vadd.f32 %v123, %v4480
    %v4482 = vpop.f32.mrb[0].mxu0
    %4483 = vmatprep.mubr.f32.mxu0 0.0
    %4484 = vmatmul.mubr.f32.gmra.mrb[0].mxu0 %v4180
    %v4485 = vpop.f32.mrb[0].mxu0
    %v4486 = vadd.f32 %v123, %v4485
    %v4487 = vpop.f32.mrb[0].mxu0
    %4488 = vmatprep.mubr.f32.mxu0 0.0
    %4489 = vmatmul.mubr.f32.gmra.mrb[0].mxu0 %v4183
    %v4490 = vpop.f32.mrb[0].mxu0
    %v4491 = vadd.f32 %v123, %v4490
    %v4492 = vpop.f32.mrb[0].mxu0
    %4493 = vmatprep.mubr.f32.mxu0 0.0
    %4494 = vmatmul.mubr.f32.gmra.mrb[0].mxu0 %v4186
    %v4495 = vpop.f32.mrb[0].mxu0
    %v4496 = vadd.f32 %v123, %v4495
    %v4497 = vpop.f32.mrb[0].mxu0
    %4498 = vmatprep.mubr.f32.mxu0 0.0
    %4499 = vmatmul.mubr.f32.gmra.mrb[0].mxu0 %v4189
    %v4500 = vpop.f32.mrb[0].mxu0
    %v4501 = vadd.f32 %v123, %v4500
    %v4502 = vpop.f32.mrb[0].mxu0
    %4503 = vmatprep.mubr.f32.mxu0 0.0
    %4504 = vmatmul.mubr.f32.gmra.mrb[0].mxu0 %v4192
    %v4505 = vpop.f32.mrb[0].mxu0
    %v4506 = vadd.f32 %v123, %v4505
    %v4507 = vpop.f32.mrb[0].mxu0
    %4508 = vmatprep.mubr.f32.mxu0 0.0
    %4509 = vmatmul.mubr.f32.gmra.mrb[0].mxu0 %v4195
    %v4510 = vpop.f32.mrb[0].mxu0
    %v4511 = vadd.f32 %v123, %v4510
    %v4512 = vpop.f32.mrb[0].mxu0
    %4513 = vmatprep.mubr.f32.mxu0 0.0
    %4514 = vmatmul.mubr.f32.gmra.mrb[0].mxu0 %v4198
    %v4515 = vpop.f32.mrb[0].mxu0
    %v4516 = vadd.f32 %v123, %v4515
    %v4517 = vpop.f32.mrb[0].mxu0
    %4518 = vmatprep.mubr.f32.mxu0 0.0
    %4519 = vmatmul.mubr.f32.gmra.mrb[0].mxu0 %v4201
    %v4520 = vpop.f32.mrb[0].mxu0
    %v4521 = vadd.f32 %v123, %v4520
    %v4522 = vpop.f32.mrb[0].mxu0
    %4523 = vmatprep.mubr.f32.mxu0 0.0
    %4524 = vmatmul.mubr.f32.gmra.mrb[0].mxu0 %v4204
    %v4525 = vpop.f32.mrb[0].mxu0
    %v4526 = vadd.f32 %v123, %v4525
    %v4527 = vpop.f32.mrb[0].mxu0
    %4528 = vmatprep.mubr.f32.mxu0 0.0
    %4529 = vmatmul.mubr.f32.gmra.mrb[0].mxu0 %v4207
    %v4530 = vpop.f32.mrb[0].mxu0
    %v4531 = vadd.f32 %v123, %v4530
    %v4532 = vpop.f32.mrb[0].mxu0
    %4533 = vmatprep.mubr.f32.mxu0 0.0
    %4534 = vmatmul.mubr.f32.gmra.mrb[0].mxu0 %v4210
    %v4535 = vpop.f32.mrb[0].mxu0
    %v4536 = vadd.f32 %v123, %v4535
    %v4537 = vpop.f32.mrb[0].mxu0
    %4538 = vmatprep.mubr.f32.mxu0 0.0
    %4539 = vmatmul.mubr.f32.gmra.mrb[0].mxu0 %v4213
    %v4540 = vpop.f32.mrb[0].mxu0
    %v4541 = vadd.f32 %v123, %v4540
    %v4542 = vpop.f32.mrb[0].mxu0
    %4543 = vmatprep.mubr.f32.mxu0 0.0
    %4544 = vmatmul.mubr.f32.gmra.mrb[0].mxu0 %v4216
    %v4545 = vpop.f32.mrb[0].mxu0
    %v4546 = vadd.f32 %v123, %v4545
    %v4547 = vpop.f32.mrb[0].mxu0
    %4548 = vmatprep.mubr.f32.mxu0 0.0
    %4549 = vmatmul.mubr.f32.gmra.mrb[0].mxu0 %v4219
    %v4550 = vpop.f32.mrb[0].mxu0
    %v4551 = vadd.f32 %v123, %v4550
    %v4552 = vpop.f32.mrb[0].mxu0
    %4553 = vmatprep.mubr.f32.mxu0 0.0
    %4554 = vmatmul.mubr.f32.gmra.mrb[0].mxu0 %v4222
    %v4555 = vpop.f32.mrb[0].mxu0
    %v4556 = vadd.f32 %v123, %v4555
    %v4557 = vpop.f32.mrb[0].mxu0
    %4558 = vmatprep.mubr.f32.mxu0 0.0
    %4559 = vmatmul.mubr.f32.gmra.mrb[0].mxu0 %v4225
    %v4560 = vpop.f32.mrb[0].mxu0
    %v4561 = vadd.f32 %v123, %v4560
    %v4562 = vpop.f32.mrb[0].mxu0
    %4563 = vmatprep.mubr.f32.mxu0 0.0
    %4564 = vmatmul.mubr.f32.gmra.mrb[0].mxu0 %v4228
    %v4565 = vpop.f32.mrb[0].mxu0
    %v4566 = vadd.f32 %v123, %v4565
    %v4567 = vpop.f32.mrb[0].mxu0
    %4568 = vmatprep.mubr.f32.mxu0 0.0
    %4569 = vmatmul.mubr.f32.gmra.mrb[0].mxu0 %v4231
    %v4570 = vpop.f32.mrb[0].mxu0
    %v4571 = vadd.f32 %v123, %v4570
    %v4572 = vpop.f32.mrb[0].mxu0
    %4573 = vmatprep.mubr.f32.mxu0 0.0
    %4574 = vmatmul.mubr.f32.gmra.mrb[0].mxu0 %v4234
    %v4575 = vpop.f32.mrb[0].mxu0
    %v4576 = vadd.f32 %v123, %v4575
    %v4577 = vpop.f32.mrb[0].mxu0
    %4578 = vmatprep.mubr.f32.mxu0 0.0
    %4579 = vmatmul.mubr.f32.gmra.mrb[0].mxu0 %v4237
    %v4580 = vpop.f32.mrb[0].mxu0
    %v4581 = vadd.f32 %v123, %v4580
    %v4582 = vpop.f32.mrb[0].mxu0
    %4583 = vmatprep.mubr.f32.mxu0 0.0
    %4584 = vmatmul.mubr.f32.gmra.mrb[0].mxu0 %v4240
    %v4585 = vpop.f32.mrb[0].mxu0
    %v4586 = vadd.f32 %v123, %v4585
    %v4587 = vpop.f32.mrb[0].mxu0
    %4588 = vmatprep.mubr.f32.mxu0 0.0
    %4589 = vmatmul.mubr.f32.gmra.mrb[0].mxu0 %v4243
    %v4590 = vpop.f32.mrb[0].mxu0
    %v4591 = vadd.f32 %v123, %v4590
    %v4592 = vpop.f32.mrb[0].mxu0
    %4593 = vmatprep.mubr.f32.mxu0 0.0
    %4594 = vmatmul.mubr.f32.gmra.mrb[0].mxu0 %v4246
    %v4595 = vpop.f32.mrb[0].mxu0
    %v4596 = vadd.f32 %v123, %v4595
    %v4597 = vpop.f32.mrb[0].mxu0
    %4598 = vmatprep.mubr.f32.mxu0 0.0
    %4599 = vmatmul.mubr.f32.gmra.mrb[0].mxu0 %v4249
    %v4600 = vpop.f32.mrb[0].mxu0
    %v4601 = vadd.f32 %v123, %v4600
    %v4602 = vpop.f32.mrb[0].mxu0
    %4603 = vmatprep.mubr.f32.mxu0 0.0
    %4604 = vmatmul.mubr.f32.gmra.mrb[0].mxu0 %v4252
    %v4605 = vpop.f32.mrb[0].mxu0
    %v4606 = vadd.f32 %v123, %v4605
    %v4607 = vpop.f32.mrb[0].mxu0
    %4608 = vmatprep.mubr.f32.mxu0 0.0
    %4609 = vmatmul.mubr.f32.gmra.mrb[0].mxu0 %v4255
    %v4610 = vpop.f32.mrb[0].mxu0
    %v4611 = vadd.f32 %v123, %v4610
    %v4612 = vpop.f32.mrb[0].mxu0
    %4613 = vmatprep.mubr.f32.mxu0 0.0
    %4614 = vmatmul.mubr.f32.gmra.mrb[0].mxu0 %v4258
    %v4615 = vpop.f32.mrb[0].mxu0
    %v4616 = vadd.f32 %v123, %v4615
    %v4617 = vpop.f32.mrb[0].mxu0
    %4618 = vmatprep.mubr.f32.mxu0 0.0
    %4619 = vmatmul.mubr.f32.gmra.mrb[0].mxu0 %v4261
    %v4620 = vpop.f32.mrb[0].mxu0
    %v4621 = vadd.f32 %v123, %v4620
    %v4622 = vpop.f32.mrb[0].mxu0
    %4623 = vmatprep.mubr.f32.mxu0 0.0
    %4624 = vmatmul.mubr.f32.gmra.mrb[0].mxu0 %v4264
    %v4625 = vpop.f32.mrb[0].mxu0
    %v4626 = vadd.f32 %v123, %v4625
    %v4627 = vpop.f32.mrb[0].mxu0
    %4628 = vmatprep.mubr.f32.mxu0 0.0
    %4629 = vmatmul.mubr.f32.gmra.mrb[0].mxu0 %v4267
    %v4630 = vpop.f32.mrb[0].mxu0
    %v4631 = vadd.f32 %v123, %v4630
    %v4632 = vpop.f32.mrb[0].mxu0
    %4633 = vmatprep.mubr.f32.mxu0 0.0
    %4634 = vmatmul.mubr.f32.gmra.mrb[0].mxu0 %v4270
    %v4635 = vpop.f32.mrb[0].mxu0
    %v4636 = vadd.f32 %v123, %v4635
    %v4637 = vpop.f32.mrb[0].mxu0
    %4638 = vmatprep.mubr.f32.mxu0 0.0
    %4639 = vmatmul.mubr.f32.gmra.mrb[0].mxu0 %v4273
    %v4640 = vpop.f32.mrb[0].mxu0
    %v4641 = vadd.f32 %v123, %v4640
    %v4642 = vpop.f32.mrb[0].mxu0
    %4643 = vmatprep.mubr.f32.mxu0 0.0
    %4644 = vmatmul.mubr.f32.gmra.mrb[0].mxu0 %v4276
    %v4645 = vpop.f32.mrb[0].mxu0
    %v4646 = vadd.f32 %v123, %v4645
    %v4647 = vpop.f32.mrb[0].mxu0
    %4648 = vmatprep.mubr.f32.mxu0 0.0
    %4649 = vmatmul.mubr.f32.gmra.mrb[0].mxu0 %v4279
    %v4650 = vpop.f32.mrb[0].mxu0
    %v4651 = vadd.f32 %v123, %v4650
    %v4652 = vpop.f32.mrb[0].mxu0
    %4653 = vmatprep.mubr.f32.mxu0 0.0
    %4654 = vmatmul.mubr.f32.gmra.mrb[0].mxu0 %v4282
    %v4655 = vpop.f32.mrb[0].mxu0
    %v4656 = vadd.f32 %v123, %v4655
    %v4657 = vpop.f32.mrb[0].mxu0
    %4658 = vmatprep.mubr.f32.mxu0 0.0
    %4659 = vmatmul.mubr.f32.gmra.mrb[0].mxu0 %v4285
    %v4660 = vpop.f32.mrb[0].mxu0
    %v4661 = vadd.f32 %v123, %v4660
    %v4662 = vpop.f32.mrb[0].mxu0
    %4663 = vmatprep.mubr.f32.mxu0 0.0
    %4664 = vmatmul.mubr.f32.gmra.mrb[0].mxu0 %v4288
    %v4665 = vpop.f32.mrb[0].mxu0
    %v4666 = vadd.f32 %v123, %v4665
    %v4667 = vpop.f32.mrb[0].mxu0
    %4668 = vmatprep.mubr.f32.mxu0 0.0
    %4669 = vmatmul.mubr.f32.gmra.mrb[0].mxu0 %v4291
    %v4670 = vpop.f32.mrb[0].mxu0
    %v4671 = vadd.f32 %v123, %v4670
    %v4672 = vpop.f32.mrb[0].mxu0
    %4673 = vmatprep.mubr.f32.mxu0 0.0
    %4674 = vmatmul.mubr.f32.gmra.mrb[0].mxu0 %v4294
    %v4675 = vpop.f32.mrb[0].mxu0
    %v4676 = vadd.f32 %v123, %v4675
    %v4677 = vpop.f32.mrb[0].mxu0
    %4678 = vmatprep.mubr.f32.mxu0 0.0
    %4679 = vmatmul.mubr.f32.gmra.mrb[0].mxu0 %v4297
    %v4680 = vpop.f32.mrb[0].mxu0
    %v4681 = vadd.f32 %v123, %v4680
    %v4682 = vpop.f32.mrb[0].mxu0
    %4683 = vdwg.mxu0
    %v4684 = vmax.f32 %v4366, 0.0
    %v4685 = vmax.f32 %v4371, 0.0
    %v4686 = vmax.f32 %v4376, 0.0
    %v4687 = vmax.f32 %v4381, 0.0
    %v4688 = vmax.f32 %v4386, 0.0
    %v4689 = vmax.f32 %v4391, 0.0
    %v4690 = vmax.f32 %v4396, 0.0
    %v4691 = vmax.f32 %v4401, 0.0
    %v4692 = vmax.f32 %v4406, 0.0
    %v4693 = vmax.f32 %v4411, 0.0
    %v4694 = vmax.f32 %v4416, 0.0
    %v4695 = vmax.f32 %v4421, 0.0
    %v4696 = vmax.f32 %v4426, 0.0
    %v4697 = vmax.f32 %v4431, 0.0
    %v4698 = vmax.f32 %v4436, 0.0
    %v4699 = vmax.f32 %v4441, 0.0
    %v4700 = vmax.f32 %v4446, 0.0
    %v4701 = vmax.f32 %v4451, 0.0
    %v4702 = vmax.f32 %v4456, 0.0
    %v4703 = vmax.f32 %v4461, 0.0
    %v4704 = vmax.f32 %v4466, 0.0
    %v4705 = vmax.f32 %v4471, 0.0
    %v4706 = vmax.f32 %v4476, 0.0
    %v4707 = vmax.f32 %v4481, 0.0
    %v4708 = vmax.f32 %v4486, 0.0
    %v4709 = vmax.f32 %v4491, 0.0
    %v4710 = vmax.f32 %v4496, 0.0
    %v4711 = vmax.f32 %v4501, 0.0
    %v4712 = vmax.f32 %v4506, 0.0
    %v4713 = vmax.f32 %v4511, 0.0
    %v4714 = vmax.f32 %v4516, 0.0
    %v4715 = vmax.f32 %v4521, 0.0
    %v4716 = vmax.f32 %v4526, 0.0
    %v4717 = vmax.f32 %v4531, 0.0
    %v4718 = vmax.f32 %v4536, 0.0
    %v4719 = vmax.f32 %v4541, 0.0
    %v4720 = vmax.f32 %v4546, 0.0
    %v4721 = vmax.f32 %v4551, 0.0
    %v4722 = vmax.f32 %v4556, 0.0
    %v4723 = vmax.f32 %v4561, 0.0
    %v4724 = vmax.f32 %v4566, 0.0
    %v4725 = vmax.f32 %v4571, 0.0
    %v4726 = vmax.f32 %v4576, 0.0
    %v4727 = vmax.f32 %v4581, 0.0
    %v4728 = vmax.f32 %v4586, 0.0
    %v4729 = vmax.f32 %v4591, 0.0
    %v4730 = vmax.f32 %v4596, 0.0
    %v4731 = vmax.f32 %v4601, 0.0
    %v4732 = vmax.f32 %v4606, 0.0
    %v4733 = vmax.f32 %v4611, 0.0
    %v4734 = vmax.f32 %v4616, 0.0
    %v4735 = vmax.f32 %v4621, 0.0
    %v4736 = vmax.f32 %v4626, 0.0
    %v4737 = vmax.f32 %v4631, 0.0
    %v4738 = vmax.f32 %v4636, 0.0
    %v4739 = vmax.f32 %v4641, 0.0
    %v4740 = vmax.f32 %v4646, 0.0
    %v4741 = vmax.f32 %v4651, 0.0
    %v4742 = vmax.f32 %v4656, 0.0
    %v4743 = vmax.f32 %v4661, 0.0
    %v4744 = vmax.f32 %v4666, 0.0
    %v4745 = vmax.f32 %v4671, 0.0
    %v4746 = vmax.f32 %v4676, 0.0
    %v4747 = vmax.f32 %v4681, 0.0
    %4748 = vmatprep.subr.mxu0 0.0
    %4749 = vmatpush1.msra.mxu0 %v4684
    %4750 = vmatprep.subr.mxu0 0.0
    %4751 = vmatpush1.msra.mxu0 %v4685
    %4752 = vmatprep.subr.mxu0 0.0
    %4753 = vmatpush1.msra.mxu0 %v4686
    %4754 = vmatprep.subr.mxu0 0.0
    %4755 = vmatpush1.msra.mxu0 %v4687
    %4756 = vmatprep.subr.mxu0 0.0
    %4757 = vmatpush1.msra.mxu0 %v4688
    %4758 = vmatprep.subr.mxu0 0.0
    %4759 = vmatpush1.msra.mxu0 %v4689
    %4760 = vmatprep.subr.mxu0 0.0
    %4761 = vmatpush1.msra.mxu0 %v4690
    %4762 = vmatprep.subr.mxu0 0.0
    %4763 = vmatpush1.msra.mxu0 %v4691
    %4764 = vmatprep.subr.mxu0 0.0
    %4765 = vmatpush1.msra.mxu0 %v4692
    %4766 = vmatprep.subr.mxu0 0.0
    %4767 = vmatpush1.msra.mxu0 %v4693
    %4768 = vmatprep.subr.mxu0 0.0
    %4769 = vmatpush1.msra.mxu0 %v4694
    %4770 = vmatprep.subr.mxu0 0.0
    %4771 = vmatpush1.msra.mxu0 %v4695
    %4772 = vmatprep.subr.mxu0 0.0
    %4773 = vmatpush1.msra.mxu0 %v4696
    %4774 = vmatprep.subr.mxu0 0.0
    %4775 = vmatpush1.msra.mxu0 %v4697
    %4776 = vmatprep.subr.mxu0 0.0
    %4777 = vmatpush1.msra.mxu0 %v4698
    %4778 = vmatprep.subr.mxu0 0.0
    %4779 = vmatpush1.msra.mxu0 %v4699
    %4780 = vmatprep.subr.mxu0 0.0
    %4781 = vmatpush1.msra.mxu0 %v4700
    %4782 = vmatprep.subr.mxu0 0.0
    %4783 = vmatpush1.msra.mxu0 %v4701
    %4784 = vmatprep.subr.mxu0 0.0
    %4785 = vmatpush1.msra.mxu0 %v4702
    %4786 = vmatprep.subr.mxu0 0.0
    %4787 = vmatpush1.msra.mxu0 %v4703
    %4788 = vmatprep.subr.mxu0 0.0
    %4789 = vmatpush1.msra.mxu0 %v4704
    %4790 = vmatprep.subr.mxu0 0.0
    %4791 = vmatpush1.msra.mxu0 %v4705
    %4792 = vmatprep.subr.mxu0 0.0
    %4793 = vmatpush1.msra.mxu0 %v4706
    %4794 = vmatprep.subr.mxu0 0.0
    %4795 = vmatpush1.msra.mxu0 %v4707
    %4796 = vmatprep.subr.mxu0 0.0
    %4797 = vmatpush1.msra.mxu0 %v4708
    %4798 = vmatprep.subr.mxu0 0.0
    %4799 = vmatpush1.msra.mxu0 %v4709
    %4800 = vmatprep.subr.mxu0 0.0
    %4801 = vmatpush1.msra.mxu0 %v4710
    %4802 = vmatprep.subr.mxu0 0.0
    %4803 = vmatpush1.msra.mxu0 %v4711
    %4804 = vmatprep.subr.mxu0 0.0
    %4805 = vmatpush1.msra.mxu0 %v4712
    %4806 = vmatprep.subr.mxu0 0.0
    %4807 = vmatpush1.msra.mxu0 %v4713
    %4808 = vmatprep.subr.mxu0 0.0
    %4809 = vmatpush1.msra.mxu0 %v4714
    %4810 = vmatprep.subr.mxu0 0.0
    %4811 = vmatpush1.msra.mxu0 %v4715
    %4812 = vmatprep.mubr.f32.mxu0 %v53
    %4813 = vmatmul.mubr.f32.gmra.mrb[0].mxu0 %v52
    %v4814 = vpop.f32.mrb[0].mxu0
    %v4815 = vadd.f32 0.0, %v4814
    %v4816 = vpop.f32.mrb[0].mxu0
    %4817 = vdwg.mxu0
    %4818 = vmatprep.subr.mxu0 0.0
    %4819 = vmatpush1.msra.mxu0 %v4716
    %4820 = vmatprep.subr.mxu0 0.0
    %4821 = vmatpush1.msra.mxu0 %v4717
    %4822 = vmatprep.subr.mxu0 0.0
    %4823 = vmatpush1.msra.mxu0 %v4718
    %4824 = vmatprep.subr.mxu0 0.0
    %4825 = vmatpush1.msra.mxu0 %v4719
    %4826 = vmatprep.subr.mxu0 0.0
    %4827 = vmatpush1.msra.mxu0 %v4720
    %4828 = vmatprep.subr.mxu0 0.0
    %4829 = vmatpush1.msra.mxu0 %v4721
    %4830 = vmatprep.subr.mxu0 0.0
    %4831 = vmatpush1.msra.mxu0 %v4722
    %4832 = vmatprep.subr.mxu0 0.0
    %4833 = vmatpush1.msra.mxu0 %v4723
    %4834 = vmatprep.subr.mxu0 0.0
    %4835 = vmatpush1.msra.mxu0 %v4724
    %4836 = vmatprep.subr.mxu0 0.0
    %4837 = vmatpush1.msra.mxu0 %v4725
    %4838 = vmatprep.subr.mxu0 0.0
    %4839 = vmatpush1.msra.mxu0 %v4726
    %4840 = vmatprep.subr.mxu0 0.0
    %4841 = vmatpush1.msra.mxu0 %v4727
    %4842 = vmatprep.subr.mxu0 0.0
    %4843 = vmatpush1.msra.mxu0 %v4728
    %4844 = vmatprep.subr.mxu0 0.0
    %4845 = vmatpush1.msra.mxu0 %v4729
    %4846 = vmatprep.subr.mxu0 0.0
    %4847 = vmatpush1.msra.mxu0 %v4730
    %4848 = vmatprep.subr.mxu0 0.0
    %4849 = vmatpush1.msra.mxu0 %v4731
    %4850 = vmatprep.subr.mxu0 0.0
    %4851 = vmatpush1.msra.mxu0 %v4732
    %4852 = vmatprep.subr.mxu0 0.0
    %4853 = vmatpush1.msra.mxu0 %v4733
    %4854 = vmatprep.subr.mxu0 0.0
    %4855 = vmatpush1.msra.mxu0 %v4734
    %4856 = vmatprep.subr.mxu0 0.0
    %4857 = vmatpush1.msra.mxu0 %v4735
    %4858 = vmatprep.subr.mxu0 0.0
    %4859 = vmatpush1.msra.mxu0 %v4736
    %4860 = vmatprep.subr.mxu0 0.0
    %4861 = vmatpush1.msra.mxu0 %v4737
    %4862 = vmatprep.subr.mxu0 0.0
    %4863 = vmatpush1.msra.mxu0 %v4738
    %4864 = vmatprep.subr.mxu0 0.0
    %4865 = vmatpush1.msra.mxu0 %v4739
    %4866 = vmatprep.subr.mxu0 0.0
    %4867 = vmatpush1.msra.mxu0 %v4740
    %4868 = vmatprep.subr.mxu0 0.0
    %4869 = vmatpush1.msra.mxu0 %v4741
    %4870 = vmatprep.subr.mxu0 0.0
    %4871 = vmatpush1.msra.mxu0 %v4742
    %4872 = vmatprep.subr.mxu0 0.0
    %4873 = vmatpush1.msra.mxu0 %v4743
    %4874 = vmatprep.subr.mxu0 0.0
    %4875 = vmatpush1.msra.mxu0 %v4744
    %4876 = vmatprep.subr.mxu0 0.0
    %4877 = vmatpush1.msra.mxu0 %v4745
    %4878 = vmatprep.subr.mxu0 0.0
    %4879 = vmatpush1.msra.mxu0 %v4746
    %4880 = vmatprep.subr.mxu0 0.0
    %4881 = vmatpush1.msra.mxu0 %v4747
    %4882 = vmatprep.mubr.f32.mxu0 %v55
    %4883 = vmatmul.mubr.f32.gmra.mrb[0].mxu0 %v54
    %v4884 = vpop.f32.mrb[0].mxu0
    %v4885 = vadd.f32 %v4815, %v4884
    %v4886 = vpop.f32.mrb[0].mxu0
    %4887 = vdwg.mxu0
    %v4889 = vsel %vm914, %v4885, 0
    %4891 = vmatprep.subr.mxu0 0.0
    %4892 = vmatpush1.msra.mxu0 %v18
    %4893 = vmatprep.subr.mxu0 0.0
    %4894 = vmatpush1.msra.mxu0 %v19
    %4895 = vmatprep.subr.mxu0 0.0
    %4896 = vmatpush1.msra.mxu0 0.0
    %4897 = vmatprep.subr.mxu0 0.0
    %4898 = vmatpush1.msra.mxu0 0.0
    %4899 = vmatprep.subr.mxu0 0.0
    %4900 = vmatpush1.msra.mxu0 0.0
    %4901 = vmatprep.subr.mxu0 0.0
    %4902 = vmatpush1.msra.mxu0 0.0
    %4903 = vmatprep.subr.mxu0 0.0
    %4904 = vmatpush1.msra.mxu0 0.0
    %4905 = vmatprep.subr.mxu0 0.0
    %4906 = vmatpush1.msra.mxu0 0.0
    %4907 = vmatprep.subr.mxu0 0.0
    %4908 = vmatpush1.msra.mxu0 0.0
    %4909 = vmatprep.subr.mxu0 0.0
    %4910 = vmatpush1.msra.mxu0 0.0
    %4911 = vmatprep.subr.mxu0 0.0
    %4912 = vmatpush1.msra.mxu0 0.0
    %4913 = vmatprep.subr.mxu0 0.0
    %4914 = vmatpush1.msra.mxu0 0.0
    %4915 = vmatprep.subr.mxu0 0.0
    %4916 = vmatpush1.msra.mxu0 0.0
    %4917 = vmatprep.subr.mxu0 0.0
    %4918 = vmatpush1.msra.mxu0 0.0
    %4919 = vmatprep.subr.mxu0 0.0
    %4920 = vmatpush1.msra.mxu0 0.0
    %4921 = vmatprep.subr.mxu0 0.0
    %4922 = vmatpush1.msra.mxu0 0.0
    %4923 = vmatprep.subr.mxu0 0.0
    %4924 = vmatpush1.msra.mxu0 0.0
    %4925 = vmatprep.subr.mxu0 0.0
    %4926 = vmatpush1.msra.mxu0 0.0
    %4927 = vmatprep.subr.mxu0 0.0
    %4928 = vmatpush1.msra.mxu0 0.0
    %4929 = vmatprep.subr.mxu0 0.0
    %4930 = vmatpush1.msra.mxu0 0.0
    %4931 = vmatprep.subr.mxu0 0.0
    %4932 = vmatpush1.msra.mxu0 0.0
    %4933 = vmatprep.subr.mxu0 0.0
    %4934 = vmatpush1.msra.mxu0 0.0
    %4935 = vmatprep.subr.mxu0 0.0
    %4936 = vmatpush1.msra.mxu0 0.0
    %4937 = vmatprep.subr.mxu0 0.0
    %4938 = vmatpush1.msra.mxu0 0.0
    %4939 = vmatprep.subr.mxu0 0.0
    %4940 = vmatpush1.msra.mxu0 0.0
    %4941 = vmatprep.subr.mxu0 0.0
    %4942 = vmatpush1.msra.mxu0 0.0
    %4943 = vmatprep.subr.mxu0 0.0
    %4944 = vmatpush1.msra.mxu0 0.0
    %4945 = vmatprep.subr.mxu0 0.0
    %4946 = vmatpush1.msra.mxu0 0.0
    %4947 = vmatprep.subr.mxu0 0.0
    %4948 = vmatpush1.msra.mxu0 0.0
    %4949 = vmatprep.subr.mxu0 0.0
    %4950 = vmatpush1.msra.mxu0 0.0
    %4951 = vmatprep.subr.mxu0 0.0
    %4952 = vmatpush1.msra.mxu0 0.0
    %4953 = vmatprep.subr.mxu0 0.0
    %4954 = vmatpush1.msra.mxu0 0.0
    %4955 = vmatprep.mubr.f32.mxu0 0.0
    %4956 = vmatmul.mubr.f32.gmra.mrb[0].mxu0 %v4889
    %v4957 = vpop.f32.mrb[0].mxu0
    %v4958 = vadd.f32 %v913, %v4957
    %v4959 = vpop.f32.mrb[0].mxu0
    %4960 = vdwg.mxu0
    %v4962 = vsel %vm988, %v4042, 0
    %4964 = vmatprep.subr.mxu0 0.0
    %4965 = vmatpush1.msra.mxu0 %v20
    %4966 = vmatprep.subr.mxu0 0.0
    %4967 = vmatpush1.msra.mxu0 %v21
    %4968 = vmatprep.subr.mxu0 0.0
    %4969 = vmatpush1.msra.mxu0 %v22
    %4970 = vmatprep.subr.mxu0 0.0
    %4971 = vmatpush1.msra.mxu0 %v23
    %4972 = vmatprep.subr.mxu0 0.0
    %4973 = vmatpush1.msra.mxu0 0.0
    %4974 = vmatprep.subr.mxu0 0.0
    %4975 = vmatpush1.msra.mxu0 0.0
    %4976 = vmatprep.subr.mxu0 0.0
    %4977 = vmatpush1.msra.mxu0 0.0
    %4978 = vmatprep.subr.mxu0 0.0
    %4979 = vmatpush1.msra.mxu0 0.0
    %4980 = vmatprep.subr.mxu0 0.0
    %4981 = vmatpush1.msra.mxu0 0.0
    %4982 = vmatprep.subr.mxu0 0.0
    %4983 = vmatpush1.msra.mxu0 0.0
    %4984 = vmatprep.subr.mxu0 0.0
    %4985 = vmatpush1.msra.mxu0 0.0
    %4986 = vmatprep.subr.mxu0 0.0
    %4987 = vmatpush1.msra.mxu0 0.0
    %4988 = vmatprep.subr.mxu0 0.0
    %4989 = vmatpush1.msra.mxu0 0.0
    %4990 = vmatprep.subr.mxu0 0.0
    %4991 = vmatpush1.msra.mxu0 0.0
    %4992 = vmatprep.subr.mxu0 0.0
    %4993 = vmatpush1.msra.mxu0 0.0
    %4994 = vmatprep.subr.mxu0 0.0
    %4995 = vmatpush1.msra.mxu0 0.0
    %4996 = vmatprep.subr.mxu0 0.0
    %4997 = vmatpush1.msra.mxu0 0.0
    %4998 = vmatprep.subr.mxu0 0.0
    %4999 = vmatpush1.msra.mxu0 0.0
    %5000 = vmatprep.subr.mxu0 0.0
    %5001 = vmatpush1.msra.mxu0 0.0
    %5002 = vmatprep.subr.mxu0 0.0
    %5003 = vmatpush1.msra.mxu0 0.0
    %5004 = vmatprep.subr.mxu0 0.0
    %5005 = vmatpush1.msra.mxu0 0.0
    %5006 = vmatprep.subr.mxu0 0.0
    %5007 = vmatpush1.msra.mxu0 0.0
    %5008 = vmatprep.subr.mxu0 0.0
    %5009 = vmatpush1.msra.mxu0 0.0
    %5010 = vmatprep.subr.mxu0 0.0
    %5011 = vmatpush1.msra.mxu0 0.0
    %5012 = vmatprep.subr.mxu0 0.0
    %5013 = vmatpush1.msra.mxu0 0.0
    %5014 = vmatprep.subr.mxu0 0.0
    %5015 = vmatpush1.msra.mxu0 0.0
    %5016 = vmatprep.subr.mxu0 0.0
    %5017 = vmatpush1.msra.mxu0 0.0
    %5018 = vmatprep.subr.mxu0 0.0
    %5019 = vmatpush1.msra.mxu0 0.0
    %5020 = vmatprep.subr.mxu0 0.0
    %5021 = vmatpush1.msra.mxu0 0.0
    %5022 = vmatprep.subr.mxu0 0.0
    %5023 = vmatpush1.msra.mxu0 0.0
    %5024 = vmatprep.subr.mxu0 0.0
    %5025 = vmatpush1.msra.mxu0 0.0
    %5026 = vmatprep.subr.mxu0 0.0
    %5027 = vmatpush1.msra.mxu0 0.0
    %5028 = vmatprep.mubr.f32.mxu0 0.0
    %5029 = vmatmul.mubr.f32.gmra.mrb[0].mxu0 %v4962
    %v5030 = vpop.f32.mrb[0].mxu0
    %v5031 = vadd.f32 0.0, %v5030
    %v5032 = vpop.f32.mrb[0].mxu0
    %5033 = vdwg.mxu0
    %v5034 = vadd.f32 %v4958, %v5031
    %v5035 = vtanh.pop %v5034
    %v5036 = vld [vmem:[%s0 + $0xa00] sm:$0xff]
    %v5037 = vld [vmem:[%s0 + $0xa08] sm:$0xff]
    %v5038 = vld [vmem:[%s0 + $0xa10] sm:$0xff]
    %v5039 = vld [vmem:[%s0 + $0xa18] sm:$0xff]
    %v5040 = vld [vmem:[%s0 + $0xa20] sm:$0xff]
    %v5041 = vld [vmem:[%s0 + $0xa28] sm:$0xff]
    %v5042 = vld [vmem:[%s0 + $0xa30] sm:$0xff]
    %v5043 = vld [vmem:[%s0 + $0xa38] sm:$0xff]
    %v5044 = vld [vmem:[%s0 + $0xa40] sm:$0xff]
    %v5045 = vld [vmem:[%s0 + $0xa48] sm:$0xff]
    %v5046 = vld [vmem:[%s0 + $0xa50] sm:$0xff]
    %v5047 = vld [vmem:[%s0 + $0xa58] sm:$0xff]
    %v5048 = vld [vmem:[%s0 + $0xa60] sm:$0xff]
    %v5049 = vld [vmem:[%s0 + $0xa68] sm:$0xff]
    %v5050 = vld [vmem:[%s0 + $0xa70] sm:$0xff]
    %v5051 = vld [vmem:[%s0 + $0xa78] sm:$0xff]
    %v5052 = vld [vmem:[%s0 + $0xa80] sm:$0xff]
    %v5053 = vld [vmem:[%s0 + $0xa88] sm:$0xff]
    %v5054 = vld [vmem:[%s0 + $0xa90] sm:$0xff]
    %v5055 = vld [vmem:[%s0 + $0xa98] sm:$0xff]
    %v5056 = vld [vmem:[%s0 + $0xaa0] sm:$0xff]
    %v5057 = vld [vmem:[%s0 + $0xaa8] sm:$0xff]
    %v5058 = vld [vmem:[%s0 + $0xab0] sm:$0xff]
    %v5059 = vld [vmem:[%s0 + $0xab8] sm:$0xff]
    %v5060 = vld [vmem:[%s0 + $0xac0] sm:$0xff]
    %v5061 = vld [vmem:[%s0 + $0xac8] sm:$0xff]
    %v5062 = vld [vmem:[%s0 + $0xad0] sm:$0xff]
    %v5063 = vld [vmem:[%s0 + $0xad8] sm:$0xff]
    %v5064 = vld [vmem:[%s0 + $0xae0] sm:$0xff]
    %v5065 = vld [vmem:[%s0 + $0xae8] sm:$0xff]
    %v5066 = vld [vmem:[%s0 + $0xaf0] sm:$0xff]
    %v5067 = vld [vmem:[%s0 + $0xaf8] sm:$0xff]
    %v5068 = vld [vmem:[%s0 + $0xb00] sm:$0xff]
    %v5069 = vld [vmem:[%s0 + $0xb08] sm:$0xff]
    %v5070 = vld [vmem:[%s0 + $0xb10] sm:$0xff]
    %v5071 = vld [vmem:[%s0 + $0xb18] sm:$0xff]
    %v5072 = vld [vmem:[%s0 + $0xb20] sm:$0xff]
    %v5073 = vld [vmem:[%s0 + $0xb28] sm:$0xff]
    %v5074 = vld [vmem:[%s0 + $0xb30] sm:$0xff]
    %v5075 = vld [vmem:[%s0 + $0xb38] sm:$0xff]
    %v5076 = vld [vmem:[%s0 + $0xb40] sm:$0xff]
    %v5077 = vld [vmem:[%s0 + $0xb48] sm:$0xff]
    %v5078 = vld [vmem:[%s0 + $0xb50] sm:$0xff]
    %v5079 = vld [vmem:[%s0 + $0xb58] sm:$0xff]
    %v5080 = vld [vmem:[%s0 + $0xb60] sm:$0xff]
    %v5081 = vld [vmem:[%s0 + $0xb68] sm:$0xff]
    %v5082 = vld [vmem:[%s0 + $0xb70] sm:$0xff]
    %v5083 = vld [vmem:[%s0 + $0xb78] sm:$0xff]
    %v5084 = vld [vmem:[%s0 + $0xb80] sm:$0xff]
    %v5085 = vld [vmem:[%s0 + $0xb88] sm:$0xff]
    %v5086 = vld [vmem:[%s0 + $0xb90] sm:$0xff]
    %v5087 = vld [vmem:[%s0 + $0xb98] sm:$0xff]
    %v5088 = vld [vmem:[%s0 + $0xba0] sm:$0xff]
    %v5089 = vld [vmem:[%s0 + $0xba8] sm:$0xff]
    %v5090 = vld [vmem:[%s0 + $0xbb0] sm:$0xff]
    %v5091 = vld [vmem:[%s0 + $0xbb8] sm:$0xff]
    %v5092 = vld [vmem:[%s0 + $0xbc0] sm:$0xff]
    %v5093 = vld [vmem:[%s0 + $0xbc8] sm:$0xff]
    %v5094 = vld [vmem:[%s0 + $0xbd0] sm:$0xff]
    %v5095 = vld [vmem:[%s0 + $0xbd8] sm:$0xff]
    %v5096 = vld [vmem:[%s0 + $0xbe0] sm:$0xff]
    %v5097 = vld [vmem:[%s0 + $0xbe8] sm:$0xff]
    %v5098 = vld [vmem:[%s0 + $0xbf0] sm:$0xff]
    %v5099 = vld [vmem:[%s0 + $0xbf8] sm:$0xff]
    %v5101 = vsel %vm124, %v5036, 0
    %v5104 = vsel %vm124, %v5037, 0
    %v5107 = vsel %vm124, %v5038, 0
    %v5110 = vsel %vm124, %v5039, 0
    %v5113 = vsel %vm124, %v5040, 0
    %v5116 = vsel %vm124, %v5041, 0
    %v5119 = vsel %vm124, %v5042, 0
    %v5122 = vsel %vm124, %v5043, 0
    %v5125 = vsel %vm124, %v5044, 0
    %v5128 = vsel %vm124, %v5045, 0
    %v5131 = vsel %vm124, %v5046, 0
    %v5134 = vsel %vm124, %v5047, 0
    %v5137 = vsel %vm124, %v5048, 0
    %v5140 = vsel %vm124, %v5049, 0
    %v5143 = vsel %vm124, %v5050, 0
    %v5146 = vsel %vm124, %v5051, 0
    %v5149 = vsel %vm124, %v5052, 0
    %v5152 = vsel %vm124, %v5053, 0
    %v5155 = vsel %vm124, %v5054, 0
    %v5158 = vsel %vm124, %v5055, 0
    %v5161 = vsel %vm124, %v5056, 0
    %v5164 = vsel %vm124, %v5057, 0
    %v5167 = vsel %vm124, %v5058, 0
    %v5170 = vsel %vm124, %v5059, 0
    %v5173 = vsel %vm124, %v5060, 0
    %v5176 = vsel %vm124, %v5061, 0
    %v5179 = vsel %vm124, %v5062, 0
    %v5182 = vsel %vm124, %v5063, 0
    %v5185 = vsel %vm124, %v5064, 0
    %v5188 = vsel %vm124, %v5065, 0
    %v5191 = vsel %vm124, %v5066, 0
    %v5194 = vsel %vm124, %v5067, 0
    %v5197 = vsel %vm124, %v5068, 0
    %v5200 = vsel %vm124, %v5069, 0
    %v5203 = vsel %vm124, %v5070, 0
    %v5206 = vsel %vm124, %v5071, 0
    %v5209 = vsel %vm124, %v5072, 0
    %v5212 = vsel %vm124, %v5073, 0
    %v5215 = vsel %vm124, %v5074, 0
    %v5218 = vsel %vm124, %v5075, 0
    %v5221 = vsel %vm124, %v5076, 0
    %v5224 = vsel %vm124, %v5077, 0
    %v5227 = vsel %vm124, %v5078, 0
    %v5230 = vsel %vm124, %v5079, 0
    %v5233 = vsel %vm124, %v5080, 0
    %v5236 = vsel %vm124, %v5081, 0
    %v5239 = vsel %vm124, %v5082, 0
    %v5242 = vsel %vm124, %v5083, 0
    %v5245 = vsel %vm124, %v5084, 0
    %v5248 = vsel %vm124, %v5085, 0
    %v5251 = vsel %vm124, %v5086, 0
    %v5254 = vsel %vm124, %v5087, 0
    %v5257 = vsel %vm124, %v5088, 0
    %v5260 = vsel %vm124, %v5089, 0
    %v5263 = vsel %vm124, %v5090, 0
    %v5266 = vsel %vm124, %v5091, 0
    %v5269 = vsel %vm124, %v5092, 0
    %v5272 = vsel %vm124, %v5093, 0
    %v5275 = vsel %vm124, %v5094, 0
    %v5278 = vsel %vm124, %v5095, 0
    %v5281 = vsel %vm124, %v5096, 0
    %v5284 = vsel %vm124, %v5097, 0
    %v5287 = vsel %vm124, %v5098, 0
    %v5290 = vsel %vm124, %v5099, 0
    %5292 = vmatprep.subr.mxu0 0.0
    %5293 = vmatpush1.msra.mxu0 %v12
    %5294 = vmatprep.subr.mxu0 0.0
    %5295 = vmatpush1.msra.mxu0 %v13
    %5296 = vmatprep.subr.mxu0 0.0
    %5297 = vmatpush1.msra.mxu0 %v14
    %5298 = vmatprep.subr.mxu0 0.0
    %5299 = vmatpush1.msra.mxu0 %v15
    %5300 = vmatprep.subr.mxu0 0.0
    %5301 = vmatpush1.msra.mxu0 %v319
    %5302 = vmatprep.subr.mxu0 0.0
    %5303 = vmatpush1.msra.mxu0 0.0
    %5304 = vmatprep.subr.mxu0 0.0
    %5305 = vmatpush1.msra.mxu0 0.0
    %5306 = vmatprep.subr.mxu0 0.0
    %5307 = vmatpush1.msra.mxu0 0.0
    %5308 = vmatprep.subr.mxu0 0.0
    %5309 = vmatpush1.msra.mxu0 0.0
    %5310 = vmatprep.subr.mxu0 0.0
    %5311 = vmatpush1.msra.mxu0 0.0
    %5312 = vmatprep.subr.mxu0 0.0
    %5313 = vmatpush1.msra.mxu0 0.0
    %5314 = vmatprep.subr.mxu0 0.0
    %5315 = vmatpush1.msra.mxu0 0.0
    %5316 = vmatprep.subr.mxu0 0.0
    %5317 = vmatpush1.msra.mxu0 0.0
    %5318 = vmatprep.subr.mxu0 0.0
    %5319 = vmatpush1.msra.mxu0 0.0
    %5320 = vmatprep.subr.mxu0 0.0
    %5321 = vmatpush1.msra.mxu0 0.0
    %5322 = vmatprep.subr.mxu0 0.0
    %5323 = vmatpush1.msra.mxu0 0.0
    %5324 = vmatprep.subr.mxu0 0.0
    %5325 = vmatpush1.msra.mxu0 0.0
    %5326 = vmatprep.subr.mxu0 0.0
    %5327 = vmatpush1.msra.mxu0 0.0
    %5328 = vmatprep.subr.mxu0 0.0
    %5329 = vmatpush1.msra.mxu0 0.0
    %5330 = vmatprep.subr.mxu0 0.0
    %5331 = vmatpush1.msra.mxu0 0.0
    %5332 = vmatprep.subr.mxu0 0.0
    %5333 = vmatpush1.msra.mxu0 0.0
    %5334 = vmatprep.subr.mxu0 0.0
    %5335 = vmatpush1.msra.mxu0 0.0
    %5336 = vmatprep.subr.mxu0 0.0
    %5337 = vmatpush1.msra.mxu0 0.0
    %5338 = vmatprep.subr.mxu0 0.0
    %5339 = vmatpush1.msra.mxu0 0.0
    %5340 = vmatprep.subr.mxu0 0.0
    %5341 = vmatpush1.msra.mxu0 0.0
    %5342 = vmatprep.subr.mxu0 0.0
    %5343 = vmatpush1.msra.mxu0 0.0
    %5344 = vmatprep.subr.mxu0 0.0
    %5345 = vmatpush1.msra.mxu0 0.0
    %5346 = vmatprep.subr.mxu0 0.0
    %5347 = vmatpush1.msra.mxu0 0.0
    %5348 = vmatprep.subr.mxu0 0.0
    %5349 = vmatpush1.msra.mxu0 0.0
    %5350 = vmatprep.subr.mxu0 0.0
    %5351 = vmatpush1.msra.mxu0 0.0
    %5352 = vmatprep.subr.mxu0 0.0
    %5353 = vmatpush1.msra.mxu0 0.0
    %5354 = vmatprep.subr.mxu0 0.0
    %5355 = vmatpush1.msra.mxu0 0.0
    %5356 = vmatprep.mubr.f32.mxu0 0.0
    %5357 = vmatmul.mubr.f32.gmra.mrb[0].mxu0 %v5101
    %v5358 = vpop.f32.mrb[0].mxu0
    %v5359 = vadd.f32 %v123, %v5358
    %v5360 = vpop.f32.mrb[0].mxu0
    %5361 = vmatprep.mubr.f32.mxu0 0.0
    %5362 = vmatmul.mubr.f32.gmra.mrb[0].mxu0 %v5104
    %v5363 = vpop.f32.mrb[0].mxu0
    %v5364 = vadd.f32 %v123, %v5363
    %v5365 = vpop.f32.mrb[0].mxu0
    %5366 = vmatprep.mubr.f32.mxu0 0.0
    %5367 = vmatmul.mubr.f32.gmra.mrb[0].mxu0 %v5107
    %v5368 = vpop.f32.mrb[0].mxu0
    %v5369 = vadd.f32 %v123, %v5368
    %v5370 = vpop.f32.mrb[0].mxu0
    %5371 = vmatprep.mubr.f32.mxu0 0.0
    %5372 = vmatmul.mubr.f32.gmra.mrb[0].mxu0 %v5110
    %v5373 = vpop.f32.mrb[0].mxu0
    %v5374 = vadd.f32 %v123, %v5373
    %v5375 = vpop.f32.mrb[0].mxu0
    %5376 = vmatprep.mubr.f32.mxu0 0.0
    %5377 = vmatmul.mubr.f32.gmra.mrb[0].mxu0 %v5113
    %v5378 = vpop.f32.mrb[0].mxu0
    %v5379 = vadd.f32 %v123, %v5378
    %v5380 = vpop.f32.mrb[0].mxu0
    %5381 = vmatprep.mubr.f32.mxu0 0.0
    %5382 = vmatmul.mubr.f32.gmra.mrb[0].mxu0 %v5116
    %v5383 = vpop.f32.mrb[0].mxu0
    %v5384 = vadd.f32 %v123, %v5383
    %v5385 = vpop.f32.mrb[0].mxu0
    %5386 = vmatprep.mubr.f32.mxu0 0.0
    %5387 = vmatmul.mubr.f32.gmra.mrb[0].mxu0 %v5119
    %v5388 = vpop.f32.mrb[0].mxu0
    %v5389 = vadd.f32 %v123, %v5388
    %v5390 = vpop.f32.mrb[0].mxu0
    %5391 = vmatprep.mubr.f32.mxu0 0.0
    %5392 = vmatmul.mubr.f32.gmra.mrb[0].mxu0 %v5122
    %v5393 = vpop.f32.mrb[0].mxu0
    %v5394 = vadd.f32 %v123, %v5393
    %v5395 = vpop.f32.mrb[0].mxu0
    %5396 = vmatprep.mubr.f32.mxu0 0.0
    %5397 = vmatmul.mubr.f32.gmra.mrb[0].mxu0 %v5125
    %v5398 = vpop.f32.mrb[0].mxu0
    %v5399 = vadd.f32 %v123, %v5398
    %v5400 = vpop.f32.mrb[0].mxu0
    %5401 = vmatprep.mubr.f32.mxu0 0.0
    %5402 = vmatmul.mubr.f32.gmra.mrb[0].mxu0 %v5128
    %v5403 = vpop.f32.mrb[0].mxu0
    %v5404 = vadd.f32 %v123, %v5403
    %v5405 = vpop.f32.mrb[0].mxu0
    %5406 = vmatprep.mubr.f32.mxu0 0.0
    %5407 = vmatmul.mubr.f32.gmra.mrb[0].mxu0 %v5131
    %v5408 = vpop.f32.mrb[0].mxu0
    %v5409 = vadd.f32 %v123, %v5408
    %v5410 = vpop.f32.mrb[0].mxu0
    %5411 = vmatprep.mubr.f32.mxu0 0.0
    %5412 = vmatmul.mubr.f32.gmra.mrb[0].mxu0 %v5134
    %v5413 = vpop.f32.mrb[0].mxu0
    %v5414 = vadd.f32 %v123, %v5413
    %v5415 = vpop.f32.mrb[0].mxu0
    %5416 = vmatprep.mubr.f32.mxu0 0.0
    %5417 = vmatmul.mubr.f32.gmra.mrb[0].mxu0 %v5137
    %v5418 = vpop.f32.mrb[0].mxu0
    %v5419 = vadd.f32 %v123, %v5418
    %v5420 = vpop.f32.mrb[0].mxu0
    %5421 = vmatprep.mubr.f32.mxu0 0.0
    %5422 = vmatmul.mubr.f32.gmra.mrb[0].mxu0 %v5140
    %v5423 = vpop.f32.mrb[0].mxu0
    %v5424 = vadd.f32 %v123, %v5423
    %v5425 = vpop.f32.mrb[0].mxu0
    %5426 = vmatprep.mubr.f32.mxu0 0.0
    %5427 = vmatmul.mubr.f32.gmra.mrb[0].mxu0 %v5143
    %v5428 = vpop.f32.mrb[0].mxu0
    %v5429 = vadd.f32 %v123, %v5428
    %v5430 = vpop.f32.mrb[0].mxu0
    %5431 = vmatprep.mubr.f32.mxu0 0.0
    %5432 = vmatmul.mubr.f32.gmra.mrb[0].mxu0 %v5146
    %v5433 = vpop.f32.mrb[0].mxu0
    %v5434 = vadd.f32 %v123, %v5433
    %v5435 = vpop.f32.mrb[0].mxu0
    %5436 = vmatprep.mubr.f32.mxu0 0.0
    %5437 = vmatmul.mubr.f32.gmra.mrb[0].mxu0 %v5149
    %v5438 = vpop.f32.mrb[0].mxu0
    %v5439 = vadd.f32 %v123, %v5438
    %v5440 = vpop.f32.mrb[0].mxu0
    %5441 = vmatprep.mubr.f32.mxu0 0.0
    %5442 = vmatmul.mubr.f32.gmra.mrb[0].mxu0 %v5152
    %v5443 = vpop.f32.mrb[0].mxu0
    %v5444 = vadd.f32 %v123, %v5443
    %v5445 = vpop.f32.mrb[0].mxu0
    %5446 = vmatprep.mubr.f32.mxu0 0.0
    %5447 = vmatmul.mubr.f32.gmra.mrb[0].mxu0 %v5155
    %v5448 = vpop.f32.mrb[0].mxu0
    %v5449 = vadd.f32 %v123, %v5448
    %v5450 = vpop.f32.mrb[0].mxu0
    %5451 = vmatprep.mubr.f32.mxu0 0.0
    %5452 = vmatmul.mubr.f32.gmra.mrb[0].mxu0 %v5158
    %v5453 = vpop.f32.mrb[0].mxu0
    %v5454 = vadd.f32 %v123, %v5453
    %v5455 = vpop.f32.mrb[0].mxu0
    %5456 = vmatprep.mubr.f32.mxu0 0.0
    %5457 = vmatmul.mubr.f32.gmra.mrb[0].mxu0 %v5161
    %v5458 = vpop.f32.mrb[0].mxu0
    %v5459 = vadd.f32 %v123, %v5458
    %v5460 = vpop.f32.mrb[0].mxu0
    %5461 = vmatprep.mubr.f32.mxu0 0.0
    %5462 = vmatmul.mubr.f32.gmra.mrb[0].mxu0 %v5164
    %v5463 = vpop.f32.mrb[0].mxu0
    %v5464 = vadd.f32 %v123, %v5463
    %v5465 = vpop.f32.mrb[0].mxu0
    %5466 = vmatprep.mubr.f32.mxu0 0.0
    %5467 = vmatmul.mubr.f32.gmra.mrb[0].mxu0 %v5167
    %v5468 = vpop.f32.mrb[0].mxu0
    %v5469 = vadd.f32 %v123, %v5468
    %v5470 = vpop.f32.mrb[0].mxu0
    %5471 = vmatprep.mubr.f32.mxu0 0.0
    %5472 = vmatmul.mubr.f32.gmra.mrb[0].mxu0 %v5170
    %v5473 = vpop.f32.mrb[0].mxu0
    %v5474 = vadd.f32 %v123, %v5473
    %v5475 = vpop.f32.mrb[0].mxu0
    %5476 = vmatprep.mubr.f32.mxu0 0.0
    %5477 = vmatmul.mubr.f32.gmra.mrb[0].mxu0 %v5173
    %v5478 = vpop.f32.mrb[0].mxu0
    %v5479 = vadd.f32 %v123, %v5478
    %v5480 = vpop.f32.mrb[0].mxu0
    %5481 = vmatprep.mubr.f32.mxu0 0.0
    %5482 = vmatmul.mubr.f32.gmra.mrb[0].mxu0 %v5176
    %v5483 = vpop.f32.mrb[0].mxu0
    %v5484 = vadd.f32 %v123, %v5483
    %v5485 = vpop.f32.mrb[0].mxu0
    %5486 = vmatprep.mubr.f32.mxu0 0.0
    %5487 = vmatmul.mubr.f32.gmra.mrb[0].mxu0 %v5179
    %v5488 = vpop.f32.mrb[0].mxu0
    %v5489 = vadd.f32 %v123, %v5488
    %v5490 = vpop.f32.mrb[0].mxu0
    %5491 = vmatprep.mubr.f32.mxu0 0.0
    %5492 = vmatmul.mubr.f32.gmra.mrb[0].mxu0 %v5182
    %v5493 = vpop.f32.mrb[0].mxu0
    %v5494 = vadd.f32 %v123, %v5493
    %v5495 = vpop.f32.mrb[0].mxu0
    %5496 = vmatprep.mubr.f32.mxu0 0.0
    %5497 = vmatmul.mubr.f32.gmra.mrb[0].mxu0 %v5185
    %v5498 = vpop.f32.mrb[0].mxu0
    %v5499 = vadd.f32 %v123, %v5498
    %v5500 = vpop.f32.mrb[0].mxu0
    %5501 = vmatprep.mubr.f32.mxu0 0.0
    %5502 = vmatmul.mubr.f32.gmra.mrb[0].mxu0 %v5188
    %v5503 = vpop.f32.mrb[0].mxu0
    %v5504 = vadd.f32 %v123, %v5503
    %v5505 = vpop.f32.mrb[0].mxu0
    %5506 = vmatprep.mubr.f32.mxu0 0.0
    %5507 = vmatmul.mubr.f32.gmra.mrb[0].mxu0 %v5191
    %v5508 = vpop.f32.mrb[0].mxu0
    %v5509 = vadd.f32 %v123, %v5508
    %v5510 = vpop.f32.mrb[0].mxu0
    %5511 = vmatprep.mubr.f32.mxu0 0.0
    %5512 = vmatmul.mubr.f32.gmra.mrb[0].mxu0 %v5194
    %v5513 = vpop.f32.mrb[0].mxu0
    %v5514 = vadd.f32 %v123, %v5513
    %v5515 = vpop.f32.mrb[0].mxu0
    %5516 = vmatprep.mubr.f32.mxu0 0.0
    %5517 = vmatmul.mubr.f32.gmra.mrb[0].mxu0 %v5197
    %v5518 = vpop.f32.mrb[0].mxu0
    %v5519 = vadd.f32 %v123, %v5518
    %v5520 = vpop.f32.mrb[0].mxu0
    %5521 = vmatprep.mubr.f32.mxu0 0.0
    %5522 = vmatmul.mubr.f32.gmra.mrb[0].mxu0 %v5200
    %v5523 = vpop.f32.mrb[0].mxu0
    %v5524 = vadd.f32 %v123, %v5523
    %v5525 = vpop.f32.mrb[0].mxu0
    %5526 = vmatprep.mubr.f32.mxu0 0.0
    %5527 = vmatmul.mubr.f32.gmra.mrb[0].mxu0 %v5203
    %v5528 = vpop.f32.mrb[0].mxu0
    %v5529 = vadd.f32 %v123, %v5528
    %v5530 = vpop.f32.mrb[0].mxu0
    %5531 = vmatprep.mubr.f32.mxu0 0.0
    %5532 = vmatmul.mubr.f32.gmra.mrb[0].mxu0 %v5206
    %v5533 = vpop.f32.mrb[0].mxu0
    %v5534 = vadd.f32 %v123, %v5533
    %v5535 = vpop.f32.mrb[0].mxu0
    %5536 = vmatprep.mubr.f32.mxu0 0.0
    %5537 = vmatmul.mubr.f32.gmra.mrb[0].mxu0 %v5209
    %v5538 = vpop.f32.mrb[0].mxu0
    %v5539 = vadd.f32 %v123, %v5538
    %v5540 = vpop.f32.mrb[0].mxu0
    %5541 = vmatprep.mubr.f32.mxu0 0.0
    %5542 = vmatmul.mubr.f32.gmra.mrb[0].mxu0 %v5212
    %v5543 = vpop.f32.mrb[0].mxu0
    %v5544 = vadd.f32 %v123, %v5543
    %v5545 = vpop.f32.mrb[0].mxu0
    %5546 = vmatprep.mubr.f32.mxu0 0.0
    %5547 = vmatmul.mubr.f32.gmra.mrb[0].mxu0 %v5215
    %v5548 = vpop.f32.mrb[0].mxu0
    %v5549 = vadd.f32 %v123, %v5548
    %v5550 = vpop.f32.mrb[0].mxu0
    %5551 = vmatprep.mubr.f32.mxu0 0.0
    %5552 = vmatmul.mubr.f32.gmra.mrb[0].mxu0 %v5218
    %v5553 = vpop.f32.mrb[0].mxu0
    %v5554 = vadd.f32 %v123, %v5553
    %v5555 = vpop.f32.mrb[0].mxu0
    %5556 = vmatprep.mubr.f32.mxu0 0.0
    %5557 = vmatmul.mubr.f32.gmra.mrb[0].mxu0 %v5221
    %v5558 = vpop.f32.mrb[0].mxu0
    %v5559 = vadd.f32 %v123, %v5558
    %v5560 = vpop.f32.mrb[0].mxu0
    %5561 = vmatprep.mubr.f32.mxu0 0.0
    %5562 = vmatmul.mubr.f32.gmra.mrb[0].mxu0 %v5224
    %v5563 = vpop.f32.mrb[0].mxu0
    %v5564 = vadd.f32 %v123, %v5563
    %v5565 = vpop.f32.mrb[0].mxu0
    %5566 = vmatprep.mubr.f32.mxu0 0.0
    %5567 = vmatmul.mubr.f32.gmra.mrb[0].mxu0 %v5227
    %v5568 = vpop.f32.mrb[0].mxu0
    %v5569 = vadd.f32 %v123, %v5568
    %v5570 = vpop.f32.mrb[0].mxu0
    %5571 = vmatprep.mubr.f32.mxu0 0.0
    %5572 = vmatmul.mubr.f32.gmra.mrb[0].mxu0 %v5230
    %v5573 = vpop.f32.mrb[0].mxu0
    %v5574 = vadd.f32 %v123, %v5573
    %v5575 = vpop.f32.mrb[0].mxu0
    %5576 = vmatprep.mubr.f32.mxu0 0.0
    %5577 = vmatmul.mubr.f32.gmra.mrb[0].mxu0 %v5233
    %v5578 = vpop.f32.mrb[0].mxu0
    %v5579 = vadd.f32 %v123, %v5578
    %v5580 = vpop.f32.mrb[0].mxu0
    %5581 = vmatprep.mubr.f32.mxu0 0.0
    %5582 = vmatmul.mubr.f32.gmra.mrb[0].mxu0 %v5236
    %v5583 = vpop.f32.mrb[0].mxu0
    %v5584 = vadd.f32 %v123, %v5583
    %v5585 = vpop.f32.mrb[0].mxu0
    %5586 = vmatprep.mubr.f32.mxu0 0.0
    %5587 = vmatmul.mubr.f32.gmra.mrb[0].mxu0 %v5239
    %v5588 = vpop.f32.mrb[0].mxu0
    %v5589 = vadd.f32 %v123, %v5588
    %v5590 = vpop.f32.mrb[0].mxu0
    %5591 = vmatprep.mubr.f32.mxu0 0.0
    %5592 = vmatmul.mubr.f32.gmra.mrb[0].mxu0 %v5242
    %v5593 = vpop.f32.mrb[0].mxu0
    %v5594 = vadd.f32 %v123, %v5593
    %v5595 = vpop.f32.mrb[0].mxu0
    %5596 = vmatprep.mubr.f32.mxu0 0.0
    %5597 = vmatmul.mubr.f32.gmra.mrb[0].mxu0 %v5245
    %v5598 = vpop.f32.mrb[0].mxu0
    %v5599 = vadd.f32 %v123, %v5598
    %v5600 = vpop.f32.mrb[0].mxu0
    %5601 = vmatprep.mubr.f32.mxu0 0.0
    %5602 = vmatmul.mubr.f32.gmra.mrb[0].mxu0 %v5248
    %v5603 = vpop.f32.mrb[0].mxu0
    %v5604 = vadd.f32 %v123, %v5603
    %v5605 = vpop.f32.mrb[0].mxu0
    %5606 = vmatprep.mubr.f32.mxu0 0.0
    %5607 = vmatmul.mubr.f32.gmra.mrb[0].mxu0 %v5251
    %v5608 = vpop.f32.mrb[0].mxu0
    %v5609 = vadd.f32 %v123, %v5608
    %v5610 = vpop.f32.mrb[0].mxu0
    %5611 = vmatprep.mubr.f32.mxu0 0.0
    %5612 = vmatmul.mubr.f32.gmra.mrb[0].mxu0 %v5254
    %v5613 = vpop.f32.mrb[0].mxu0
    %v5614 = vadd.f32 %v123, %v5613
    %v5615 = vpop.f32.mrb[0].mxu0
    %5616 = vmatprep.mubr.f32.mxu0 0.0
    %5617 = vmatmul.mubr.f32.gmra.mrb[0].mxu0 %v5257
    %v5618 = vpop.f32.mrb[0].mxu0
    %v5619 = vadd.f32 %v123, %v5618
    %v5620 = vpop.f32.mrb[0].mxu0
    %5621 = vmatprep.mubr.f32.mxu0 0.0
    %5622 = vmatmul.mubr.f32.gmra.mrb[0].mxu0 %v5260
    %v5623 = vpop.f32.mrb[0].mxu0
    %v5624 = vadd.f32 %v123, %v5623
    %v5625 = vpop.f32.mrb[0].mxu0
    %5626 = vmatprep.mubr.f32.mxu0 0.0
    %5627 = vmatmul.mubr.f32.gmra.mrb[0].mxu0 %v5263
    %v5628 = vpop.f32.mrb[0].mxu0
    %v5629 = vadd.f32 %v123, %v5628
    %v5630 = vpop.f32.mrb[0].mxu0
    %5631 = vmatprep.mubr.f32.mxu0 0.0
    %5632 = vmatmul.mubr.f32.gmra.mrb[0].mxu0 %v5266
    %v5633 = vpop.f32.mrb[0].mxu0
    %v5634 = vadd.f32 %v123, %v5633
    %v5635 = vpop.f32.mrb[0].mxu0
    %5636 = vmatprep.mubr.f32.mxu0 0.0
    %5637 = vmatmul.mubr.f32.gmra.mrb[0].mxu0 %v5269
    %v5638 = vpop.f32.mrb[0].mxu0
    %v5639 = vadd.f32 %v123, %v5638
    %v5640 = vpop.f32.mrb[0].mxu0
    %5641 = vmatprep.mubr.f32.mxu0 0.0
    %5642 = vmatmul.mubr.f32.gmra.mrb[0].mxu0 %v5272
    %v5643 = vpop.f32.mrb[0].mxu0
    %v5644 = vadd.f32 %v123, %v5643
    %v5645 = vpop.f32.mrb[0].mxu0
    %5646 = vmatprep.mubr.f32.mxu0 0.0
    %5647 = vmatmul.mubr.f32.gmra.mrb[0].mxu0 %v5275
    %v5648 = vpop.f32.mrb[0].mxu0
    %v5649 = vadd.f32 %v123, %v5648
    %v5650 = vpop.f32.mrb[0].mxu0
    %5651 = vmatprep.mubr.f32.mxu0 0.0
    %5652 = vmatmul.mubr.f32.gmra.mrb[0].mxu0 %v5278
    %v5653 = vpop.f32.mrb[0].mxu0
    %v5654 = vadd.f32 %v123, %v5653
    %v5655 = vpop.f32.mrb[0].mxu0
    %5656 = vmatprep.mubr.f32.mxu0 0.0
    %5657 = vmatmul.mubr.f32.gmra.mrb[0].mxu0 %v5281
    %v5658 = vpop.f32.mrb[0].mxu0
    %v5659 = vadd.f32 %v123, %v5658
    %v5660 = vpop.f32.mrb[0].mxu0
    %5661 = vmatprep.mubr.f32.mxu0 0.0
    %5662 = vmatmul.mubr.f32.gmra.mrb[0].mxu0 %v5284
    %v5663 = vpop.f32.mrb[0].mxu0
    %v5664 = vadd.f32 %v123, %v5663
    %v5665 = vpop.f32.mrb[0].mxu0
    %5666 = vmatprep.mubr.f32.mxu0 0.0
    %5667 = vmatmul.mubr.f32.gmra.mrb[0].mxu0 %v5287
    %v5668 = vpop.f32.mrb[0].mxu0
    %v5669 = vadd.f32 %v123, %v5668
    %v5670 = vpop.f32.mrb[0].mxu0
    %5671 = vmatprep.mubr.f32.mxu0 0.0
    %5672 = vmatmul.mubr.f32.gmra.mrb[0].mxu0 %v5290
    %v5673 = vpop.f32.mrb[0].mxu0
    %v5674 = vadd.f32 %v123, %v5673
    %v5675 = vpop.f32.mrb[0].mxu0
    %5676 = vdwg.mxu0
    %v5677 = vmax.f32 %v5359, 0.0
    %v5678 = vmax.f32 %v5364, 0.0
    %v5679 = vmax.f32 %v5369, 0.0
    %v5680 = vmax.f32 %v5374, 0.0
    %v5681 = vmax.f32 %v5379, 0.0
    %v5682 = vmax.f32 %v5384, 0.0
    %v5683 = vmax.f32 %v5389, 0.0
    %v5684 = vmax.f32 %v5394, 0.0
    %v5685 = vmax.f32 %v5399, 0.0
    %v5686 = vmax.f32 %v5404, 0.0
    %v5687 = vmax.f32 %v5409, 0.0
    %v5688 = vmax.f32 %v5414, 0.0
    %v5689 = vmax.f32 %v5419, 0.0
    %v5690 = vmax.f32 %v5424, 0.0
    %v5691 = vmax.f32 %v5429, 0.0
    %v5692 = vmax.f32 %v5434, 0.0
    %v5693 = vmax.f32 %v5439, 0.0
    %v5694 = vmax.f32 %v5444, 0.0
    %v5695 = vmax.f32 %v5449, 0.0
    %v5696 = vmax.f32 %v5454, 0.0
    %v5697 = vmax.f32 %v5459, 0.0
    %v5698 = vmax.f32 %v5464, 0.0
    %v5699 = vmax.f32 %v5469, 0.0
    %v5700 = vmax.f32 %v5474, 0.0
    %v5701 = vmax.f32 %v5479, 0.0
    %v5702 = vmax.f32 %v5484, 0.0
    %v5703 = vmax.f32 %v5489, 0.0
    %v5704 = vmax.f32 %v5494, 0.0
    %v5705 = vmax.f32 %v5499, 0.0
    %v5706 = vmax.f32 %v5504, 0.0
    %v5707 = vmax.f32 %v5509, 0.0
    %v5708 = vmax.f32 %v5514, 0.0
    %v5709 = vmax.f32 %v5519, 0.0
    %v5710 = vmax.f32 %v5524, 0.0
    %v5711 = vmax.f32 %v5529, 0.0
    %v5712 = vmax.f32 %v5534, 0.0
    %v5713 = vmax.f32 %v5539, 0.0
    %v5714 = vmax.f32 %v5544, 0.0
    %v5715 = vmax.f32 %v5549, 0.0
    %v5716 = vmax.f32 %v5554, 0.0
    %v5717 = vmax.f32 %v5559, 0.0
    %v5718 = vmax.f32 %v5564, 0.0
    %v5719 = vmax.f32 %v5569, 0.0
    %v5720 = vmax.f32 %v5574, 0.0
    %v5721 = vmax.f32 %v5579, 0.0
    %v5722 = vmax.f32 %v5584, 0.0
    %v5723 = vmax.f32 %v5589, 0.0
    %v5724 = vmax.f32 %v5594, 0.0
    %v5725 = vmax.f32 %v5599, 0.0
    %v5726 = vmax.f32 %v5604, 0.0
    %v5727 = vmax.f32 %v5609, 0.0
    %v5728 = vmax.f32 %v5614, 0.0
    %v5729 = vmax.f32 %v5619, 0.0
    %v5730 = vmax.f32 %v5624, 0.0
    %v5731 = vmax.f32 %v5629, 0.0
    %v5732 = vmax.f32 %v5634, 0.0
    %v5733 = vmax.f32 %v5639, 0.0
    %v5734 = vmax.f32 %v5644, 0.0
    %v5735 = vmax.f32 %v5649, 0.0
    %v5736 = vmax.f32 %v5654, 0.0
    %v5737 = vmax.f32 %v5659, 0.0
    %v5738 = vmax.f32 %v5664, 0.0
    %v5739 = vmax.f32 %v5669, 0.0
    %v5740 = vmax.f32 %v5674, 0.0
    %5741 = vmatprep.subr.mxu0 0.0
    %5742 = vmatpush1.msra.mxu0 %v5677
    %5743 = vmatprep.subr.mxu0 0.0
    %5744 = vmatpush1.msra.mxu0 %v5678
    %5745 = vmatprep.subr.mxu0 0.0
    %5746 = vmatpush1.msra.mxu0 %v5679
    %5747 = vmatprep.subr.mxu0 0.0
    %5748 = vmatpush1.msra.mxu0 %v5680
    %5749 = vmatprep.subr.mxu0 0.0
    %5750 = vmatpush1.msra.mxu0 %v5681
    %5751 = vmatprep.subr.mxu0 0.0
    %5752 = vmatpush1.msra.mxu0 %v5682
    %5753 = vmatprep.subr.mxu0 0.0
    %5754 = vmatpush1.msra.mxu0 %v5683
    %5755 = vmatprep.subr.mxu0 0.0
    %5756 = vmatpush1.msra.mxu0 %v5684
    %5757 = vmatprep.subr.mxu0 0.0
    %5758 = vmatpush1.msra.mxu0 %v5685
    %5759 = vmatprep.subr.mxu0 0.0
    %5760 = vmatpush1.msra.mxu0 %v5686
    %5761 = vmatprep.subr.mxu0 0.0
    %5762 = vmatpush1.msra.mxu0 %v5687
    %5763 = vmatprep.subr.mxu0 0.0
    %5764 = vmatpush1.msra.mxu0 %v5688
    %5765 = vmatprep.subr.mxu0 0.0
    %5766 = vmatpush1.msra.mxu0 %v5689
    %5767 = vmatprep.subr.mxu0 0.0
    %5768 = vmatpush1.msra.mxu0 %v5690
    %5769 = vmatprep.subr.mxu0 0.0
    %5770 = vmatpush1.msra.mxu0 %v5691
    %5771 = vmatprep.subr.mxu0 0.0
    %5772 = vmatpush1.msra.mxu0 %v5692
    %5773 = vmatprep.subr.mxu0 0.0
    %5774 = vmatpush1.msra.mxu0 %v5693
    %5775 = vmatprep.subr.mxu0 0.0
    %5776 = vmatpush1.msra.mxu0 %v5694
    %5777 = vmatprep.subr.mxu0 0.0
    %5778 = vmatpush1.msra.mxu0 %v5695
    %5779 = vmatprep.subr.mxu0 0.0
    %5780 = vmatpush1.msra.mxu0 %v5696
    %5781 = vmatprep.subr.mxu0 0.0
    %5782 = vmatpush1.msra.mxu0 %v5697
    %5783 = vmatprep.subr.mxu0 0.0
    %5784 = vmatpush1.msra.mxu0 %v5698
    %5785 = vmatprep.subr.mxu0 0.0
    %5786 = vmatpush1.msra.mxu0 %v5699
    %5787 = vmatprep.subr.mxu0 0.0
    %5788 = vmatpush1.msra.mxu0 %v5700
    %5789 = vmatprep.subr.mxu0 0.0
    %5790 = vmatpush1.msra.mxu0 %v5701
    %5791 = vmatprep.subr.mxu0 0.0
    %5792 = vmatpush1.msra.mxu0 %v5702
    %5793 = vmatprep.subr.mxu0 0.0
    %5794 = vmatpush1.msra.mxu0 %v5703
    %5795 = vmatprep.subr.mxu0 0.0
    %5796 = vmatpush1.msra.mxu0 %v5704
    %5797 = vmatprep.subr.mxu0 0.0
    %5798 = vmatpush1.msra.mxu0 %v5705
    %5799 = vmatprep.subr.mxu0 0.0
    %5800 = vmatpush1.msra.mxu0 %v5706
    %5801 = vmatprep.subr.mxu0 0.0
    %5802 = vmatpush1.msra.mxu0 %v5707
    %5803 = vmatprep.subr.mxu0 0.0
    %5804 = vmatpush1.msra.mxu0 %v5708
    %5805 = vmatprep.mubr.f32.mxu0 %v53
    %5806 = vmatmul.mubr.f32.gmra.mrb[0].mxu0 %v52
    %v5807 = vpop.f32.mrb[0].mxu0
    %v5808 = vadd.f32 0.0, %v5807
    %v5809 = vpop.f32.mrb[0].mxu0
    %5810 = vdwg.mxu0
    %5811 = vmatprep.subr.mxu0 0.0
    %5812 = vmatpush1.msra.mxu0 %v5709
    %5813 = vmatprep.subr.mxu0 0.0
    %5814 = vmatpush1.msra.mxu0 %v5710
    %5815 = vmatprep.subr.mxu0 0.0
    %5816 = vmatpush1.msra.mxu0 %v5711
    %5817 = vmatprep.subr.mxu0 0.0
    %5818 = vmatpush1.msra.mxu0 %v5712
    %5819 = vmatprep.subr.mxu0 0.0
    %5820 = vmatpush1.msra.mxu0 %v5713
    %5821 = vmatprep.subr.mxu0 0.0
    %5822 = vmatpush1.msra.mxu0 %v5714
    %5823 = vmatprep.subr.mxu0 0.0
    %5824 = vmatpush1.msra.mxu0 %v5715
    %5825 = vmatprep.subr.mxu0 0.0
    %5826 = vmatpush1.msra.mxu0 %v5716
    %5827 = vmatprep.subr.mxu0 0.0
    %5828 = vmatpush1.msra.mxu0 %v5717
    %5829 = vmatprep.subr.mxu0 0.0
    %5830 = vmatpush1.msra.mxu0 %v5718
    %5831 = vmatprep.subr.mxu0 0.0
    %5832 = vmatpush1.msra.mxu0 %v5719
    %5833 = vmatprep.subr.mxu0 0.0
    %5834 = vmatpush1.msra.mxu0 %v5720
    %5835 = vmatprep.subr.mxu0 0.0
    %5836 = vmatpush1.msra.mxu0 %v5721
    %5837 = vmatprep.subr.mxu0 0.0
    %5838 = vmatpush1.msra.mxu0 %v5722
    %5839 = vmatprep.subr.mxu0 0.0
    %5840 = vmatpush1.msra.mxu0 %v5723
    %5841 = vmatprep.subr.mxu0 0.0
    %5842 = vmatpush1.msra.mxu0 %v5724
    %5843 = vmatprep.subr.mxu0 0.0
    %5844 = vmatpush1.msra.mxu0 %v5725
    %5845 = vmatprep.subr.mxu0 0.0
    %5846 = vmatpush1.msra.mxu0 %v5726
    %5847 = vmatprep.subr.mxu0 0.0
    %5848 = vmatpush1.msra.mxu0 %v5727
    %5849 = vmatprep.subr.mxu0 0.0
    %5850 = vmatpush1.msra.mxu0 %v5728
    %5851 = vmatprep.subr.mxu0 0.0
    %5852 = vmatpush1.msra.mxu0 %v5729
    %5853 = vmatprep.subr.mxu0 0.0
    %5854 = vmatpush1.msra.mxu0 %v5730
    %5855 = vmatprep.subr.mxu0 0.0
    %5856 = vmatpush1.msra.mxu0 %v5731
    %5857 = vmatprep.subr.mxu0 0.0
    %5858 = vmatpush1.msra.mxu0 %v5732
    %5859 = vmatprep.subr.mxu0 0.0
    %5860 = vmatpush1.msra.mxu0 %v5733
    %5861 = vmatprep.subr.mxu0 0.0
    %5862 = vmatpush1.msra.mxu0 %v5734
    %5863 = vmatprep.subr.mxu0 0.0
    %5864 = vmatpush1.msra.mxu0 %v5735
    %5865 = vmatprep.subr.mxu0 0.0
    %5866 = vmatpush1.msra.mxu0 %v5736
    %5867 = vmatprep.subr.mxu0 0.0
    %5868 = vmatpush1.msra.mxu0 %v5737
    %5869 = vmatprep.subr.mxu0 0.0
    %5870 = vmatpush1.msra.mxu0 %v5738
    %5871 = vmatprep.subr.mxu0 0.0
    %5872 = vmatpush1.msra.mxu0 %v5739
    %5873 = vmatprep.subr.mxu0 0.0
    %5874 = vmatpush1.msra.mxu0 %v5740
    %5875 = vmatprep.mubr.f32.mxu0 %v55
    %5876 = vmatmul.mubr.f32.gmra.mrb[0].mxu0 %v54
    %v5877 = vpop.f32.mrb[0].mxu0
    %v5878 = vadd.f32 %v5808, %v5877
    %v5879 = vpop.f32.mrb[0].mxu0
    %5880 = vdwg.mxu0
    %v5882 = vsel %vm914, %v5878, 0
    %5884 = vmatprep.subr.mxu0 0.0
    %5885 = vmatpush1.msra.mxu0 %v18
    %5886 = vmatprep.subr.mxu0 0.0
    %5887 = vmatpush1.msra.mxu0 %v19
    %5888 = vmatprep.subr.mxu0 0.0
    %5889 = vmatpush1.msra.mxu0 0.0
    %5890 = vmatprep.subr.mxu0 0.0
    %5891 = vmatpush1.msra.mxu0 0.0
    %5892 = vmatprep.subr.mxu0 0.0
    %5893 = vmatpush1.msra.mxu0 0.0
    %5894 = vmatprep.subr.mxu0 0.0
    %5895 = vmatpush1.msra.mxu0 0.0
    %5896 = vmatprep.subr.mxu0 0.0
    %5897 = vmatpush1.msra.mxu0 0.0
    %5898 = vmatprep.subr.mxu0 0.0
    %5899 = vmatpush1.msra.mxu0 0.0
    %5900 = vmatprep.subr.mxu0 0.0
    %5901 = vmatpush1.msra.mxu0 0.0
    %5902 = vmatprep.subr.mxu0 0.0
    %5903 = vmatpush1.msra.mxu0 0.0
    %5904 = vmatprep.subr.mxu0 0.0
    %5905 = vmatpush1.msra.mxu0 0.0
    %5906 = vmatprep.subr.mxu0 0.0
    %5907 = vmatpush1.msra.mxu0 0.0
    %5908 = vmatprep.subr.mxu0 0.0
    %5909 = vmatpush1.msra.mxu0 0.0
    %5910 = vmatprep.subr.mxu0 0.0
    %5911 = vmatpush1.msra.mxu0 0.0
    %5912 = vmatprep.subr.mxu0 0.0
    %5913 = vmatpush1.msra.mxu0 0.0
    %5914 = vmatprep.subr.mxu0 0.0
    %5915 = vmatpush1.msra.mxu0 0.0
    %5916 = vmatprep.subr.mxu0 0.0
    %5917 = vmatpush1.msra.mxu0 0.0
    %5918 = vmatprep.subr.mxu0 0.0
    %5919 = vmatpush1.msra.mxu0 0.0
    %5920 = vmatprep.subr.mxu0 0.0
    %5921 = vmatpush1.msra.mxu0 0.0
    %5922 = vmatprep.subr.mxu0 0.0
    %5923 = vmatpush1.msra.mxu0 0.0
    %5924 = vmatprep.subr.mxu0 0.0
    %5925 = vmatpush1.msra.mxu0 0.0
    %5926 = vmatprep.subr.mxu0 0.0
    %5927 = vmatpush1.msra.mxu0 0.0
    %5928 = vmatprep.subr.mxu0 0.0
    %5929 = vmatpush1.msra.mxu0 0.0
    %5930 = vmatprep.subr.mxu0 0.0
    %5931 = vmatpush1.msra.mxu0 0.0
    %5932 = vmatprep.subr.mxu0 0.0
    %5933 = vmatpush1.msra.mxu0 0.0
    %5934 = vmatprep.subr.mxu0 0.0
    %5935 = vmatpush1.msra.mxu0 0.0
    %5936 = vmatprep.subr.mxu0 0.0
    %5937 = vmatpush1.msra.mxu0 0.0
    %5938 = vmatprep.subr.mxu0 0.0
    %5939 = vmatpush1.msra.mxu0 0.0
    %5940 = vmatprep.subr.mxu0 0.0
    %5941 = vmatpush1.msra.mxu0 0.0
    %5942 = vmatprep.subr.mxu0 0.0
    %5943 = vmatpush1.msra.mxu0 0.0
    %5944 = vmatprep.subr.mxu0 0.0
    %5945 = vmatpush1.msra.mxu0 0.0
    %5946 = vmatprep.subr.mxu0 0.0
    %5947 = vmatpush1.msra.mxu0 0.0
    %5948 = vmatprep.mubr.f32.mxu0 0.0
    %5949 = vmatmul.mubr.f32.gmra.mrb[0].mxu0 %v5882
    %v5950 = vpop.f32.mrb[0].mxu0
    %v5951 = vadd.f32 %v913, %v5950
    %v5952 = vpop.f32.mrb[0].mxu0
    %5953 = vdwg.mxu0
    %v5955 = vsel %vm988, %v5035, 0
    %5957 = vmatprep.subr.mxu0 0.0
    %5958 = vmatpush1.msra.mxu0 %v20
    %5959 = vmatprep.subr.mxu0 0.0
    %5960 = vmatpush1.msra.mxu0 %v21
    %5961 = vmatprep.subr.mxu0 0.0
    %5962 = vmatpush1.msra.mxu0 %v22
    %5963 = vmatprep.subr.mxu0 0.0
    %5964 = vmatpush1.msra.mxu0 %v23
    %5965 = vmatprep.subr.mxu0 0.0
    %5966 = vmatpush1.msra.mxu0 0.0
    %5967 = vmatprep.subr.mxu0 0.0
    %5968 = vmatpush1.msra.mxu0 0.0
    %5969 = vmatprep.subr.mxu0 0.0
    %5970 = vmatpush1.msra.mxu0 0.0
    %5971 = vmatprep.subr.mxu0 0.0
    %5972 = vmatpush1.msra.mxu0 0.0
    %5973 = vmatprep.subr.mxu0 0.0
    %5974 = vmatpush1.msra.mxu0 0.0
    %5975 = vmatprep.subr.mxu0 0.0
    %5976 = vmatpush1.msra.mxu0 0.0
    %5977 = vmatprep.subr.mxu0 0.0
    %5978 = vmatpush1.msra.mxu0 0.0
    %5979 = vmatprep.subr.mxu0 0.0
    %5980 = vmatpush1.msra.mxu0 0.0
    %5981 = vmatprep.subr.mxu0 0.0
    %5982 = vmatpush1.msra.mxu0 0.0
    %5983 = vmatprep.subr.mxu0 0.0
    %5984 = vmatpush1.msra.mxu0 0.0
    %5985 = vmatprep.subr.mxu0 0.0
    %5986 = vmatpush1.msra.mxu0 0.0
    %5987 = vmatprep.subr.mxu0 0.0
    %5988 = vmatpush1.msra.mxu0 0.0
    %5989 = vmatprep.subr.mxu0 0.0
    %5990 = vmatpush1.msra.mxu0 0.0
    %5991 = vmatprep.subr.mxu0 0.0
    %5992 = vmatpush1.msra.mxu0 0.0
    %5993 = vmatprep.subr.mxu0 0.0
    %5994 = vmatpush1.msra.mxu0 0.0
    %5995 = vmatprep.subr.mxu0 0.0
    %5996 = vmatpush1.msra.mxu0 0.0
    %5997 = vmatprep.subr.mxu0 0.0
    %5998 = vmatpush1.msra.mxu0 0.0
    %5999 = vmatprep.subr.mxu0 0.0
    %6000 = vmatpush1.msra.mxu0 0.0
    %6001 = vmatprep.subr.mxu0 0.0
    %6002 = vmatpush1.msra.mxu0 0.0
    %6003 = vmatprep.subr.mxu0 0.0
    %6004 = vmatpush1.msra.mxu0 0.0
    %6005 = vmatprep.subr.mxu0 0.0
    %6006 = vmatpush1.msra.mxu0 0.0
    %6007 = vmatprep.subr.mxu0 0.0
    %6008 = vmatpush1.msra.mxu0 0.0
    %6009 = vmatprep.subr.mxu0 0.0
    %6010 = vmatpush1.msra.mxu0 0.0
    %6011 = vmatprep.subr.mxu0 0.0
    %6012 = vmatpush1.msra.mxu0 0.0
    %6013 = vmatprep.subr.mxu0 0.0
    %6014 = vmatpush1.msra.mxu0 0.0
    %6015 = vmatprep.subr.mxu0 0.0
    %6016 = vmatpush1.msra.mxu0 0.0
    %6017 = vmatprep.subr.mxu0 0.0
    %6018 = vmatpush1.msra.mxu0 0.0
    %6019 = vmatprep.subr.mxu0 0.0
    %6020 = vmatpush1.msra.mxu0 0.0
    %6021 = vmatprep.mubr.f32.mxu0 0.0
    %6022 = vmatmul.mubr.f32.gmra.mrb[0].mxu0 %v5955
    %v6023 = vpop.f32.mrb[0].mxu0
    %v6024 = vadd.f32 0.0, %v6023
    %v6025 = vpop.f32.mrb[0].mxu0
    %6026 = vdwg.mxu0
    %v6027 = vadd.f32 %v5951, %v6024
    %v6028 = vtanh.pop %v6027
    %v6029 = vld [vmem:[%s0 + $0xc00] sm:$0xff]
    %v6030 = vld [vmem:[%s0 + $0xc08] sm:$0xff]
    %v6031 = vld [vmem:[%s0 + $0xc10] sm:$0xff]
    %v6032 = vld [vmem:[%s0 + $0xc18] sm:$0xff]
    %v6033 = vld [vmem:[%s0 + $0xc20] sm:$0xff]
    %v6034 = vld [vmem:[%s0 + $0xc28] sm:$0xff]
    %v6035 = vld [vmem:[%s0 + $0xc30] sm:$0xff]
    %v6036 = vld [vmem:[%s0 + $0xc38] sm:$0xff]
    %v6037 = vld [vmem:[%s0 + $0xc40] sm:$0xff]
    %v6038 = vld [vmem:[%s0 + $0xc48] sm:$0xff]
    %v6039 = vld [vmem:[%s0 + $0xc50] sm:$0xff]
    %v6040 = vld [vmem:[%s0 + $0xc58] sm:$0xff]
    %v6041 = vld [vmem:[%s0 + $0xc60] sm:$0xff]
    %v6042 = vld [vmem:[%s0 + $0xc68] sm:$0xff]
    %v6043 = vld [vmem:[%s0 + $0xc70] sm:$0xff]
    %v6044 = vld [vmem:[%s0 + $0xc78] sm:$0xff]
    %v6045 = vld [vmem:[%s0 + $0xc80] sm:$0xff]
    %v6046 = vld [vmem:[%s0 + $0xc88] sm:$0xff]
    %v6047 = vld [vmem:[%s0 + $0xc90] sm:$0xff]
    %v6048 = vld [vmem:[%s0 + $0xc98] sm:$0xff]
    %v6049 = vld [vmem:[%s0 + $0xca0] sm:$0xff]
    %v6050 = vld [vmem:[%s0 + $0xca8] sm:$0xff]
    %v6051 = vld [vmem:[%s0 + $0xcb0] sm:$0xff]
    %v6052 = vld [vmem:[%s0 + $0xcb8] sm:$0xff]
    %v6053 = vld [vmem:[%s0 + $0xcc0] sm:$0xff]
    %v6054 = vld [vmem:[%s0 + $0xcc8] sm:$0xff]
    %v6055 = vld [vmem:[%s0 + $0xcd0] sm:$0xff]
    %v6056 = vld [vmem:[%s0 + $0xcd8] sm:$0xff]
    %v6057 = vld [vmem:[%s0 + $0xce0] sm:$0xff]
    %v6058 = vld [vmem:[%s0 + $0xce8] sm:$0xff]
    %v6059 = vld [vmem:[%s0 + $0xcf0] sm:$0xff]
    %v6060 = vld [vmem:[%s0 + $0xcf8] sm:$0xff]
    %v6061 = vld [vmem:[%s0 + $0xd00] sm:$0xff]
    %v6062 = vld [vmem:[%s0 + $0xd08] sm:$0xff]
    %v6063 = vld [vmem:[%s0 + $0xd10] sm:$0xff]
    %v6064 = vld [vmem:[%s0 + $0xd18] sm:$0xff]
    %v6065 = vld [vmem:[%s0 + $0xd20] sm:$0xff]
    %v6066 = vld [vmem:[%s0 + $0xd28] sm:$0xff]
    %v6067 = vld [vmem:[%s0 + $0xd30] sm:$0xff]
    %v6068 = vld [vmem:[%s0 + $0xd38] sm:$0xff]
    %v6069 = vld [vmem:[%s0 + $0xd40] sm:$0xff]
    %v6070 = vld [vmem:[%s0 + $0xd48] sm:$0xff]
    %v6071 = vld [vmem:[%s0 + $0xd50] sm:$0xff]
    %v6072 = vld [vmem:[%s0 + $0xd58] sm:$0xff]
    %v6073 = vld [vmem:[%s0 + $0xd60] sm:$0xff]
    %v6074 = vld [vmem:[%s0 + $0xd68] sm:$0xff]
    %v6075 = vld [vmem:[%s0 + $0xd70] sm:$0xff]
    %v6076 = vld [vmem:[%s0 + $0xd78] sm:$0xff]
    %v6077 = vld [vmem:[%s0 + $0xd80] sm:$0xff]
    %v6078 = vld [vmem:[%s0 + $0xd88] sm:$0xff]
    %v6079 = vld [vmem:[%s0 + $0xd90] sm:$0xff]
    %v6080 = vld [vmem:[%s0 + $0xd98] sm:$0xff]
    %v6081 = vld [vmem:[%s0 + $0xda0] sm:$0xff]
    %v6082 = vld [vmem:[%s0 + $0xda8] sm:$0xff]
    %v6083 = vld [vmem:[%s0 + $0xdb0] sm:$0xff]
    %v6084 = vld [vmem:[%s0 + $0xdb8] sm:$0xff]
    %v6085 = vld [vmem:[%s0 + $0xdc0] sm:$0xff]
    %v6086 = vld [vmem:[%s0 + $0xdc8] sm:$0xff]
    %v6087 = vld [vmem:[%s0 + $0xdd0] sm:$0xff]
    %v6088 = vld [vmem:[%s0 + $0xdd8] sm:$0xff]
    %v6089 = vld [vmem:[%s0 + $0xde0] sm:$0xff]
    %v6090 = vld [vmem:[%s0 + $0xde8] sm:$0xff]
    %v6091 = vld [vmem:[%s0 + $0xdf0] sm:$0xff]
    %v6092 = vld [vmem:[%s0 + $0xdf8] sm:$0xff]
    %v6094 = vsel %vm124, %v6029, 0
    %v6097 = vsel %vm124, %v6030, 0
    %v6100 = vsel %vm124, %v6031, 0
    %v6103 = vsel %vm124, %v6032, 0
    %v6106 = vsel %vm124, %v6033, 0
    %v6109 = vsel %vm124, %v6034, 0
    %v6112 = vsel %vm124, %v6035, 0
    %v6115 = vsel %vm124, %v6036, 0
    %v6118 = vsel %vm124, %v6037, 0
    %v6121 = vsel %vm124, %v6038, 0
    %v6124 = vsel %vm124, %v6039, 0
    %v6127 = vsel %vm124, %v6040, 0
    %v6130 = vsel %vm124, %v6041, 0
    %v6133 = vsel %vm124, %v6042, 0
    %v6136 = vsel %vm124, %v6043, 0
    %v6139 = vsel %vm124, %v6044, 0
    %v6142 = vsel %vm124, %v6045, 0
    %v6145 = vsel %vm124, %v6046, 0
    %v6148 = vsel %vm124, %v6047, 0
    %v6151 = vsel %vm124, %v6048, 0
    %v6154 = vsel %vm124, %v6049, 0
    %v6157 = vsel %vm124, %v6050, 0
    %v6160 = vsel %vm124, %v6051, 0
    %v6163 = vsel %vm124, %v6052, 0
    %v6166 = vsel %vm124, %v6053, 0
    %v6169 = vsel %vm124, %v6054, 0
    %v6172 = vsel %vm124, %v6055, 0
    %v6175 = vsel %vm124, %v6056, 0
    %v6178 = vsel %vm124, %v6057, 0
    %v6181 = vsel %vm124, %v6058, 0
    %v6184 = vsel %vm124, %v6059, 0
    %v6187 = vsel %vm124, %v6060, 0
    %v6190 = vsel %vm124, %v6061, 0
    %v6193 = vsel %vm124, %v6062, 0
    %v6196 = vsel %vm124, %v6063, 0
    %v6199 = vsel %vm124, %v6064, 0
    %v6202 = vsel %vm124, %v6065, 0
    %v6205 = vsel %vm124, %v6066, 0
    %v6208 = vsel %vm124, %v6067, 0
    %v6211 = vsel %vm124, %v6068, 0
    %v6214 = vsel %vm124, %v6069, 0
    %v6217 = vsel %vm124, %v6070, 0
    %v6220 = vsel %vm124, %v6071, 0
    %v6223 = vsel %vm124, %v6072, 0
    %v6226 = vsel %vm124, %v6073, 0
    %v6229 = vsel %vm124, %v6074, 0
    %v6232 = vsel %vm124, %v6075, 0
    %v6235 = vsel %vm124, %v6076, 0
    %v6238 = vsel %vm124, %v6077, 0
    %v6241 = vsel %vm124, %v6078, 0
    %v6244 = vsel %vm124, %v6079, 0
    %v6247 = vsel %vm124, %v6080, 0
    %v6250 = vsel %vm124, %v6081, 0
    %v6253 = vsel %vm124, %v6082, 0
    %v6256 = vsel %vm124, %v6083, 0
    %v6259 = vsel %vm124, %v6084, 0
    %v6262 = vsel %vm124, %v6085, 0
    %v6265 = vsel %vm124, %v6086, 0
    %v6268 = vsel %vm124, %v6087, 0
    %v6271 = vsel %vm124, %v6088, 0
    %v6274 = vsel %vm124, %v6089, 0
    %v6277 = vsel %vm124, %v6090, 0
    %v6280 = vsel %vm124, %v6091, 0
    %v6283 = vsel %vm124, %v6092, 0
    %6285 = vmatprep.subr.mxu0 0.0
    %6286 = vmatpush1.msra.mxu0 %v12
    %6287 = vmatprep.subr.mxu0 0.0
    %6288 = vmatpush1.msra.mxu0 %v13
    %6289 = vmatprep.subr.mxu0 0.0
    %6290 = vmatpush1.msra.mxu0 %v14
    %6291 = vmatprep.subr.mxu0 0.0
    %6292 = vmatpush1.msra.mxu0 %v15
    %6293 = vmatprep.subr.mxu0 0.0
    %6294 = vmatpush1.msra.mxu0 %v319
    %6295 = vmatprep.subr.mxu0 0.0
    %6296 = vmatpush1.msra.mxu0 0.0
    %6297 = vmatprep.subr.mxu0 0.0
    %6298 = vmatpush1.msra.mxu0 0.0
    %6299 = vmatprep.subr.mxu0 0.0
    %6300 = vmatpush1.msra.mxu0 0.0
    %6301 = vmatprep.subr.mxu0 0.0
    %6302 = vmatpush1.msra.mxu0 0.0
    %6303 = vmatprep.subr.mxu0 0.0
    %6304 = vmatpush1.msra.mxu0 0.0
    %6305 = vmatprep.subr.mxu0 0.0
    %6306 = vmatpush1.msra.mxu0 0.0
    %6307 = vmatprep.subr.mxu0 0.0
    %6308 = vmatpush1.msra.mxu0 0.0
    %6309 = vmatprep.subr.mxu0 0.0
    %6310 = vmatpush1.msra.mxu0 0.0
    %6311 = vmatprep.subr.mxu0 0.0
    %6312 = vmatpush1.msra.mxu0 0.0
    %6313 = vmatprep.subr.mxu0 0.0
    %6314 = vmatpush1.msra.mxu0 0.0
    %6315 = vmatprep.subr.mxu0 0.0
    %6316 = vmatpush1.msra.mxu0 0.0
    %6317 = vmatprep.subr.mxu0 0.0
    %6318 = vmatpush1.msra.mxu0 0.0
    %6319 = vmatprep.subr.mxu0 0.0
    %6320 = vmatpush1.msra.mxu0 0.0
    %6321 = vmatprep.subr.mxu0 0.0
    %6322 = vmatpush1.msra.mxu0 0.0
    %6323 = vmatprep.subr.mxu0 0.0
    %6324 = vmatpush1.msra.mxu0 0.0
    %6325 = vmatprep.subr.mxu0 0.0
    %6326 = vmatpush1.msra.mxu0 0.0
    %6327 = vmatprep.subr.mxu0 0.0
    %6328 = vmatpush1.msra.mxu0 0.0
    %6329 = vmatprep.subr.mxu0 0.0
    %6330 = vmatpush1.msra.mxu0 0.0
    %6331 = vmatprep.subr.mxu0 0.0
    %6332 = vmatpush1.msra.mxu0 0.0
    %6333 = vmatprep.subr.mxu0 0.0
    %6334 = vmatpush1.msra.mxu0 0.0
    %6335 = vmatprep.subr.mxu0 0.0
    %6336 = vmatpush1.msra.mxu0 0.0
    %6337 = vmatprep.subr.mxu0 0.0
    %6338 = vmatpush1.msra.mxu0 0.0
    %6339 = vmatprep.subr.mxu0 0.0
    %6340 = vmatpush1.msra.mxu0 0.0
    %6341 = vmatprep.subr.mxu0 0.0
    %6342 = vmatpush1.msra.mxu0 0.0
    %6343 = vmatprep.subr.mxu0 0.0
    %6344 = vmatpush1.msra.mxu0 0.0
    %6345 = vmatprep.subr.mxu0 0.0
    %6346 = vmatpush1.msra.mxu0 0.0
    %6347 = vmatprep.subr.mxu0 0.0
    %6348 = vmatpush1.msra.mxu0 0.0
    %6349 = vmatprep.mubr.f32.mxu0 0.0
    %6350 = vmatmul.mubr.f32.gmra.mrb[0].mxu0 %v6094
    %v6351 = vpop.f32.mrb[0].mxu0
    %v6352 = vadd.f32 %v123, %v6351
    %v6353 = vpop.f32.mrb[0].mxu0
    %6354 = vmatprep.mubr.f32.mxu0 0.0
    %6355 = vmatmul.mubr.f32.gmra.mrb[0].mxu0 %v6097
    %v6356 = vpop.f32.mrb[0].mxu0
    %v6357 = vadd.f32 %v123, %v6356
    %v6358 = vpop.f32.mrb[0].mxu0
    %6359 = vmatprep.mubr.f32.mxu0 0.0
    %6360 = vmatmul.mubr.f32.gmra.mrb[0].mxu0 %v6100
    %v6361 = vpop.f32.mrb[0].mxu0
    %v6362 = vadd.f32 %v123, %v6361
    %v6363 = vpop.f32.mrb[0].mxu0
    %6364 = vmatprep.mubr.f32.mxu0 0.0
    %6365 = vmatmul.mubr.f32.gmra.mrb[0].mxu0 %v6103
    %v6366 = vpop.f32.mrb[0].mxu0
    %v6367 = vadd.f32 %v123, %v6366
    %v6368 = vpop.f32.mrb[0].mxu0
    %6369 = vmatprep.mubr.f32.mxu0 0.0
    %6370 = vmatmul.mubr.f32.gmra.mrb[0].mxu0 %v6106
    %v6371 = vpop.f32.mrb[0].mxu0
    %v6372 = vadd.f32 %v123, %v6371
    %v6373 = vpop.f32.mrb[0].mxu0
    %6374 = vmatprep.mubr.f32.mxu0 0.0
    %6375 = vmatmul.mubr.f32.gmra.mrb[0].mxu0 %v6109
    %v6376 = vpop.f32.mrb[0].mxu0
    %v6377 = vadd.f32 %v123, %v6376
    %v6378 = vpop.f32.mrb[0].mxu0
    %6379 = vmatprep.mubr.f32.mxu0 0.0
    %6380 = vmatmul.mubr.f32.gmra.mrb[0].mxu0 %v6112
    %v6381 = vpop.f32.mrb[0].mxu0
    %v6382 = vadd.f32 %v123, %v6381
    %v6383 = vpop.f32.mrb[0].mxu0
    %6384 = vmatprep.mubr.f32.mxu0 0.0
    %6385 = vmatmul.mubr.f32.gmra.mrb[0].mxu0 %v6115
    %v6386 = vpop.f32.mrb[0].mxu0
    %v6387 = vadd.f32 %v123, %v6386
    %v6388 = vpop.f32.mrb[0].mxu0
    %6389 = vmatprep.mubr.f32.mxu0 0.0
    %6390 = vmatmul.mubr.f32.gmra.mrb[0].mxu0 %v6118
    %v6391 = vpop.f32.mrb[0].mxu0
    %v6392 = vadd.f32 %v123, %v6391
    %v6393 = vpop.f32.mrb[0].mxu0
    %6394 = vmatprep.mubr.f32.mxu0 0.0
    %6395 = vmatmul.mubr.f32.gmra.mrb[0].mxu0 %v6121
    %v6396 = vpop.f32.mrb[0].mxu0
    %v6397 = vadd.f32 %v123, %v6396
    %v6398 = vpop.f32.mrb[0].mxu0
    %6399 = vmatprep.mubr.f32.mxu0 0.0
    %6400 = vmatmul.mubr.f32.gmra.mrb[0].mxu0 %v6124
    %v6401 = vpop.f32.mrb[0].mxu0
    %v6402 = vadd.f32 %v123, %v6401
    %v6403 = vpop.f32.mrb[0].mxu0
    %6404 = vmatprep.mubr.f32.mxu0 0.0
    %6405 = vmatmul.mubr.f32.gmra.mrb[0].mxu0 %v6127
    %v6406 = vpop.f32.mrb[0].mxu0
    %v6407 = vadd.f32 %v123, %v6406
    %v6408 = vpop.f32.mrb[0].mxu0
    %6409 = vmatprep.mubr.f32.mxu0 0.0
    %6410 = vmatmul.mubr.f32.gmra.mrb[0].mxu0 %v6130
    %v6411 = vpop.f32.mrb[0].mxu0
    %v6412 = vadd.f32 %v123, %v6411
    %v6413 = vpop.f32.mrb[0].mxu0
    %6414 = vmatprep.mubr.f32.mxu0 0.0
    %6415 = vmatmul.mubr.f32.gmra.mrb[0].mxu0 %v6133
    %v6416 = vpop.f32.mrb[0].mxu0
    %v6417 = vadd.f32 %v123, %v6416
    %v6418 = vpop.f32.mrb[0].mxu0
    %6419 = vmatprep.mubr.f32.mxu0 0.0
    %6420 = vmatmul.mubr.f32.gmra.mrb[0].mxu0 %v6136
    %v6421 = vpop.f32.mrb[0].mxu0
    %v6422 = vadd.f32 %v123, %v6421
    %v6423 = vpop.f32.mrb[0].mxu0
    %6424 = vmatprep.mubr.f32.mxu0 0.0
    %6425 = vmatmul.mubr.f32.gmra.mrb[0].mxu0 %v6139
    %v6426 = vpop.f32.mrb[0].mxu0
    %v6427 = vadd.f32 %v123, %v6426
    %v6428 = vpop.f32.mrb[0].mxu0
    %6429 = vmatprep.mubr.f32.mxu0 0.0
    %6430 = vmatmul.mubr.f32.gmra.mrb[0].mxu0 %v6142
    %v6431 = vpop.f32.mrb[0].mxu0
    %v6432 = vadd.f32 %v123, %v6431
    %v6433 = vpop.f32.mrb[0].mxu0
    %6434 = vmatprep.mubr.f32.mxu0 0.0
    %6435 = vmatmul.mubr.f32.gmra.mrb[0].mxu0 %v6145
    %v6436 = vpop.f32.mrb[0].mxu0
    %v6437 = vadd.f32 %v123, %v6436
    %v6438 = vpop.f32.mrb[0].mxu0
    %6439 = vmatprep.mubr.f32.mxu0 0.0
    %6440 = vmatmul.mubr.f32.gmra.mrb[0].mxu0 %v6148
    %v6441 = vpop.f32.mrb[0].mxu0
    %v6442 = vadd.f32 %v123, %v6441
    %v6443 = vpop.f32.mrb[0].mxu0
    %6444 = vmatprep.mubr.f32.mxu0 0.0
    %6445 = vmatmul.mubr.f32.gmra.mrb[0].mxu0 %v6151
    %v6446 = vpop.f32.mrb[0].mxu0
    %v6447 = vadd.f32 %v123, %v6446
    %v6448 = vpop.f32.mrb[0].mxu0
    %6449 = vmatprep.mubr.f32.mxu0 0.0
    %6450 = vmatmul.mubr.f32.gmra.mrb[0].mxu0 %v6154
    %v6451 = vpop.f32.mrb[0].mxu0
    %v6452 = vadd.f32 %v123, %v6451
    %v6453 = vpop.f32.mrb[0].mxu0
    %6454 = vmatprep.mubr.f32.mxu0 0.0
    %6455 = vmatmul.mubr.f32.gmra.mrb[0].mxu0 %v6157
    %v6456 = vpop.f32.mrb[0].mxu0
    %v6457 = vadd.f32 %v123, %v6456
    %v6458 = vpop.f32.mrb[0].mxu0
    %6459 = vmatprep.mubr.f32.mxu0 0.0
    %6460 = vmatmul.mubr.f32.gmra.mrb[0].mxu0 %v6160
    %v6461 = vpop.f32.mrb[0].mxu0
    %v6462 = vadd.f32 %v123, %v6461
    %v6463 = vpop.f32.mrb[0].mxu0
    %6464 = vmatprep.mubr.f32.mxu0 0.0
    %6465 = vmatmul.mubr.f32.gmra.mrb[0].mxu0 %v6163
    %v6466 = vpop.f32.mrb[0].mxu0
    %v6467 = vadd.f32 %v123, %v6466
    %v6468 = vpop.f32.mrb[0].mxu0
    %6469 = vmatprep.mubr.f32.mxu0 0.0
    %6470 = vmatmul.mubr.f32.gmra.mrb[0].mxu0 %v6166
    %v6471 = vpop.f32.mrb[0].mxu0
    %v6472 = vadd.f32 %v123, %v6471
    %v6473 = vpop.f32.mrb[0].mxu0
    %6474 = vmatprep.mubr.f32.mxu0 0.0
    %6475 = vmatmul.mubr.f32.gmra.mrb[0].mxu0 %v6169
    %v6476 = vpop.f32.mrb[0].mxu0
    %v6477 = vadd.f32 %v123, %v6476
    %v6478 = vpop.f32.mrb[0].mxu0
    %6479 = vmatprep.mubr.f32.mxu0 0.0
    %6480 = vmatmul.mubr.f32.gmra.mrb[0].mxu0 %v6172
    %v6481 = vpop.f32.mrb[0].mxu0
    %v6482 = vadd.f32 %v123, %v6481
    %v6483 = vpop.f32.mrb[0].mxu0
    %6484 = vmatprep.mubr.f32.mxu0 0.0
    %6485 = vmatmul.mubr.f32.gmra.mrb[0].mxu0 %v6175
    %v6486 = vpop.f32.mrb[0].mxu0
    %v6487 = vadd.f32 %v123, %v6486
    %v6488 = vpop.f32.mrb[0].mxu0
    %6489 = vmatprep.mubr.f32.mxu0 0.0
    %6490 = vmatmul.mubr.f32.gmra.mrb[0].mxu0 %v6178
    %v6491 = vpop.f32.mrb[0].mxu0
    %v6492 = vadd.f32 %v123, %v6491
    %v6493 = vpop.f32.mrb[0].mxu0
    %6494 = vmatprep.mubr.f32.mxu0 0.0
    %6495 = vmatmul.mubr.f32.gmra.mrb[0].mxu0 %v6181
    %v6496 = vpop.f32.mrb[0].mxu0
    %v6497 = vadd.f32 %v123, %v6496
    %v6498 = vpop.f32.mrb[0].mxu0
    %6499 = vmatprep.mubr.f32.mxu0 0.0
    %6500 = vmatmul.mubr.f32.gmra.mrb[0].mxu0 %v6184
    %v6501 = vpop.f32.mrb[0].mxu0
    %v6502 = vadd.f32 %v123, %v6501
    %v6503 = vpop.f32.mrb[0].mxu0
    %6504 = vmatprep.mubr.f32.mxu0 0.0
    %6505 = vmatmul.mubr.f32.gmra.mrb[0].mxu0 %v6187
    %v6506 = vpop.f32.mrb[0].mxu0
    %v6507 = vadd.f32 %v123, %v6506
    %v6508 = vpop.f32.mrb[0].mxu0
    %6509 = vmatprep.mubr.f32.mxu0 0.0
    %6510 = vmatmul.mubr.f32.gmra.mrb[0].mxu0 %v6190
    %v6511 = vpop.f32.mrb[0].mxu0
    %v6512 = vadd.f32 %v123, %v6511
    %v6513 = vpop.f32.mrb[0].mxu0
    %6514 = vmatprep.mubr.f32.mxu0 0.0
    %6515 = vmatmul.mubr.f32.gmra.mrb[0].mxu0 %v6193
    %v6516 = vpop.f32.mrb[0].mxu0
    %v6517 = vadd.f32 %v123, %v6516
    %v6518 = vpop.f32.mrb[0].mxu0
    %6519 = vmatprep.mubr.f32.mxu0 0.0
    %6520 = vmatmul.mubr.f32.gmra.mrb[0].mxu0 %v6196
    %v6521 = vpop.f32.mrb[0].mxu0
    %v6522 = vadd.f32 %v123, %v6521
    %v6523 = vpop.f32.mrb[0].mxu0
    %6524 = vmatprep.mubr.f32.mxu0 0.0
    %6525 = vmatmul.mubr.f32.gmra.mrb[0].mxu0 %v6199
    %v6526 = vpop.f32.mrb[0].mxu0
    %v6527 = vadd.f32 %v123, %v6526
    %v6528 = vpop.f32.mrb[0].mxu0
    %6529 = vmatprep.mubr.f32.mxu0 0.0
    %6530 = vmatmul.mubr.f32.gmra.mrb[0].mxu0 %v6202
    %v6531 = vpop.f32.mrb[0].mxu0
    %v6532 = vadd.f32 %v123, %v6531
    %v6533 = vpop.f32.mrb[0].mxu0
    %6534 = vmatprep.mubr.f32.mxu0 0.0
    %6535 = vmatmul.mubr.f32.gmra.mrb[0].mxu0 %v6205
    %v6536 = vpop.f32.mrb[0].mxu0
    %v6537 = vadd.f32 %v123, %v6536
    %v6538 = vpop.f32.mrb[0].mxu0
    %6539 = vmatprep.mubr.f32.mxu0 0.0
    %6540 = vmatmul.mubr.f32.gmra.mrb[0].mxu0 %v6208
    %v6541 = vpop.f32.mrb[0].mxu0
    %v6542 = vadd.f32 %v123, %v6541
    %v6543 = vpop.f32.mrb[0].mxu0
    %6544 = vmatprep.mubr.f32.mxu0 0.0
    %6545 = vmatmul.mubr.f32.gmra.mrb[0].mxu0 %v6211
    %v6546 = vpop.f32.mrb[0].mxu0
    %v6547 = vadd.f32 %v123, %v6546
    %v6548 = vpop.f32.mrb[0].mxu0
    %6549 = vmatprep.mubr.f32.mxu0 0.0
    %6550 = vmatmul.mubr.f32.gmra.mrb[0].mxu0 %v6214
    %v6551 = vpop.f32.mrb[0].mxu0
    %v6552 = vadd.f32 %v123, %v6551
    %v6553 = vpop.f32.mrb[0].mxu0
    %6554 = vmatprep.mubr.f32.mxu0 0.0
    %6555 = vmatmul.mubr.f32.gmra.mrb[0].mxu0 %v6217
    %v6556 = vpop.f32.mrb[0].mxu0
    %v6557 = vadd.f32 %v123, %v6556
    %v6558 = vpop.f32.mrb[0].mxu0
    %6559 = vmatprep.mubr.f32.mxu0 0.0
    %6560 = vmatmul.mubr.f32.gmra.mrb[0].mxu0 %v6220
    %v6561 = vpop.f32.mrb[0].mxu0
    %v6562 = vadd.f32 %v123, %v6561
    %v6563 = vpop.f32.mrb[0].mxu0
    %6564 = vmatprep.mubr.f32.mxu0 0.0
    %6565 = vmatmul.mubr.f32.gmra.mrb[0].mxu0 %v6223
    %v6566 = vpop.f32.mrb[0].mxu0
    %v6567 = vadd.f32 %v123, %v6566
    %v6568 = vpop.f32.mrb[0].mxu0
    %6569 = vmatprep.mubr.f32.mxu0 0.0
    %6570 = vmatmul.mubr.f32.gmra.mrb[0].mxu0 %v6226
    %v6571 = vpop.f32.mrb[0].mxu0
    %v6572 = vadd.f32 %v123, %v6571
    %v6573 = vpop.f32.mrb[0].mxu0
    %6574 = vmatprep.mubr.f32.mxu0 0.0
    %6575 = vmatmul.mubr.f32.gmra.mrb[0].mxu0 %v6229
    %v6576 = vpop.f32.mrb[0].mxu0
    %v6577 = vadd.f32 %v123, %v6576
    %v6578 = vpop.f32.mrb[0].mxu0
    %6579 = vmatprep.mubr.f32.mxu0 0.0
    %6580 = vmatmul.mubr.f32.gmra.mrb[0].mxu0 %v6232
    %v6581 = vpop.f32.mrb[0].mxu0
    %v6582 = vadd.f32 %v123, %v6581
    %v6583 = vpop.f32.mrb[0].mxu0
    %6584 = vmatprep.mubr.f32.mxu0 0.0
    %6585 = vmatmul.mubr.f32.gmra.mrb[0].mxu0 %v6235
    %v6586 = vpop.f32.mrb[0].mxu0
    %v6587 = vadd.f32 %v123, %v6586
    %v6588 = vpop.f32.mrb[0].mxu0
    %6589 = vmatprep.mubr.f32.mxu0 0.0
    %6590 = vmatmul.mubr.f32.gmra.mrb[0].mxu0 %v6238
    %v6591 = vpop.f32.mrb[0].mxu0
    %v6592 = vadd.f32 %v123, %v6591
    %v6593 = vpop.f32.mrb[0].mxu0
    %6594 = vmatprep.mubr.f32.mxu0 0.0
    %6595 = vmatmul.mubr.f32.gmra.mrb[0].mxu0 %v6241
    %v6596 = vpop.f32.mrb[0].mxu0
    %v6597 = vadd.f32 %v123, %v6596
    %v6598 = vpop.f32.mrb[0].mxu0
    %6599 = vmatprep.mubr.f32.mxu0 0.0
    %6600 = vmatmul.mubr.f32.gmra.mrb[0].mxu0 %v6244
    %v6601 = vpop.f32.mrb[0].mxu0
    %v6602 = vadd.f32 %v123, %v6601
    %v6603 = vpop.f32.mrb[0].mxu0
    %6604 = vmatprep.mubr.f32.mxu0 0.0
    %6605 = vmatmul.mubr.f32.gmra.mrb[0].mxu0 %v6247
    %v6606 = vpop.f32.mrb[0].mxu0
    %v6607 = vadd.f32 %v123, %v6606
    %v6608 = vpop.f32.mrb[0].mxu0
    %6609 = vmatprep.mubr.f32.mxu0 0.0
    %6610 = vmatmul.mubr.f32.gmra.mrb[0].mxu0 %v6250
    %v6611 = vpop.f32.mrb[0].mxu0
    %v6612 = vadd.f32 %v123, %v6611
    %v6613 = vpop.f32.mrb[0].mxu0
    %6614 = vmatprep.mubr.f32.mxu0 0.0
    %6615 = vmatmul.mubr.f32.gmra.mrb[0].mxu0 %v6253
    %v6616 = vpop.f32.mrb[0].mxu0
    %v6617 = vadd.f32 %v123, %v6616
    %v6618 = vpop.f32.mrb[0].mxu0
    %6619 = vmatprep.mubr.f32.mxu0 0.0
    %6620 = vmatmul.mubr.f32.gmra.mrb[0].mxu0 %v6256
    %v6621 = vpop.f32.mrb[0].mxu0
    %v6622 = vadd.f32 %v123, %v6621
    %v6623 = vpop.f32.mrb[0].mxu0
    %6624 = vmatprep.mubr.f32.mxu0 0.0
    %6625 = vmatmul.mubr.f32.gmra.mrb[0].mxu0 %v6259
    %v6626 = vpop.f32.mrb[0].mxu0
    %v6627 = vadd.f32 %v123, %v6626
    %v6628 = vpop.f32.mrb[0].mxu0
    %6629 = vmatprep.mubr.f32.mxu0 0.0
    %6630 = vmatmul.mubr.f32.gmra.mrb[0].mxu0 %v6262
    %v6631 = vpop.f32.mrb[0].mxu0
    %v6632 = vadd.f32 %v123, %v6631
    %v6633 = vpop.f32.mrb[0].mxu0
    %6634 = vmatprep.mubr.f32.mxu0 0.0
    %6635 = vmatmul.mubr.f32.gmra.mrb[0].mxu0 %v6265
    %v6636 = vpop.f32.mrb[0].mxu0
    %v6637 = vadd.f32 %v123, %v6636
    %v6638 = vpop.f32.mrb[0].mxu0
    %6639 = vmatprep.mubr.f32.mxu0 0.0
    %6640 = vmatmul.mubr.f32.gmra.mrb[0].mxu0 %v6268
    %v6641 = vpop.f32.mrb[0].mxu0
    %v6642 = vadd.f32 %v123, %v6641
    %v6643 = vpop.f32.mrb[0].mxu0
    %6644 = vmatprep.mubr.f32.mxu0 0.0
    %6645 = vmatmul.mubr.f32.gmra.mrb[0].mxu0 %v6271
    %v6646 = vpop.f32.mrb[0].mxu0
    %v6647 = vadd.f32 %v123, %v6646
    %v6648 = vpop.f32.mrb[0].mxu0
    %6649 = vmatprep.mubr.f32.mxu0 0.0
    %6650 = vmatmul.mubr.f32.gmra.mrb[0].mxu0 %v6274
    %v6651 = vpop.f32.mrb[0].mxu0
    %v6652 = vadd.f32 %v123, %v6651
    %v6653 = vpop.f32.mrb[0].mxu0
    %6654 = vmatprep.mubr.f32.mxu0 0.0
    %6655 = vmatmul.mubr.f32.gmra.mrb[0].mxu0 %v6277
    %v6656 = vpop.f32.mrb[0].mxu0
    %v6657 = vadd.f32 %v123, %v6656
    %v6658 = vpop.f32.mrb[0].mxu0
    %6659 = vmatprep.mubr.f32.mxu0 0.0
    %6660 = vmatmul.mubr.f32.gmra.mrb[0].mxu0 %v6280
    %v6661 = vpop.f32.mrb[0].mxu0
    %v6662 = vadd.f32 %v123, %v6661
    %v6663 = vpop.f32.mrb[0].mxu0
    %6664 = vmatprep.mubr.f32.mxu0 0.0
    %6665 = vmatmul.mubr.f32.gmra.mrb[0].mxu0 %v6283
    %v6666 = vpop.f32.mrb[0].mxu0
    %v6667 = vadd.f32 %v123, %v6666
    %v6668 = vpop.f32.mrb[0].mxu0
    %6669 = vdwg.mxu0
    %v6670 = vmax.f32 %v6352, 0.0
    %v6671 = vmax.f32 %v6357, 0.0
    %v6672 = vmax.f32 %v6362, 0.0
    %v6673 = vmax.f32 %v6367, 0.0
    %v6674 = vmax.f32 %v6372, 0.0
    %v6675 = vmax.f32 %v6377, 0.0
    %v6676 = vmax.f32 %v6382, 0.0
    %v6677 = vmax.f32 %v6387, 0.0
    %v6678 = vmax.f32 %v6392, 0.0
    %v6679 = vmax.f32 %v6397, 0.0
    %v6680 = vmax.f32 %v6402, 0.0
    %v6681 = vmax.f32 %v6407, 0.0
    %v6682 = vmax.f32 %v6412, 0.0
    %v6683 = vmax.f32 %v6417, 0.0
    %v6684 = vmax.f32 %v6422, 0.0
    %v6685 = vmax.f32 %v6427, 0.0
    %v6686 = vmax.f32 %v6432, 0.0
    %v6687 = vmax.f32 %v6437, 0.0
    %v6688 = vmax.f32 %v6442, 0.0
    %v6689 = vmax.f32 %v6447, 0.0
    %v6690 = vmax.f32 %v6452, 0.0
    %v6691 = vmax.f32 %v6457, 0.0
    %v6692 = vmax.f32 %v6462, 0.0
    %v6693 = vmax.f32 %v6467, 0.0
    %v6694 = vmax.f32 %v6472, 0.0
    %v6695 = vmax.f32 %v6477, 0.0
    %v6696 = vmax.f32 %v6482, 0.0
    %v6697 = vmax.f32 %v6487, 0.0
    %v6698 = vmax.f32 %v6492, 0.0
    %v6699 = vmax.f32 %v6497, 0.0
    %v6700 = vmax.f32 %v6502, 0.0
    %v6701 = vmax.f32 %v6507, 0.0
    %v6702 = vmax.f32 %v6512, 0.0
    %v6703 = vmax.f32 %v6517, 0.0
    %v6704 = vmax.f32 %v6522, 0.0
    %v6705 = vmax.f32 %v6527, 0.0
    %v6706 = vmax.f32 %v6532, 0.0
    %v6707 = vmax.f32 %v6537, 0.0
    %v6708 = vmax.f32 %v6542, 0.0
    %v6709 = vmax.f32 %v6547, 0.0
    %v6710 = vmax.f32 %v6552, 0.0
    %v6711 = vmax.f32 %v6557, 0.0
    %v6712 = vmax.f32 %v6562, 0.0
    %v6713 = vmax.f32 %v6567, 0.0
    %v6714 = vmax.f32 %v6572, 0.0
    %v6715 = vmax.f32 %v6577, 0.0
    %v6716 = vmax.f32 %v6582, 0.0
    %v6717 = vmax.f32 %v6587, 0.0
    %v6718 = vmax.f32 %v6592, 0.0
    %v6719 = vmax.f32 %v6597, 0.0
    %v6720 = vmax.f32 %v6602, 0.0
    %v6721 = vmax.f32 %v6607, 0.0
    %v6722 = vmax.f32 %v6612, 0.0
    %v6723 = vmax.f32 %v6617, 0.0
    %v6724 = vmax.f32 %v6622, 0.0
    %v6725 = vmax.f32 %v6627, 0.0
    %v6726 = vmax.f32 %v6632, 0.0
    %v6727 = vmax.f32 %v6637, 0.0
    %v6728 = vmax.f32 %v6642, 0.0
    %v6729 = vmax.f32 %v6647, 0.0
    %v6730 = vmax.f32 %v6652, 0.0
    %v6731 = vmax.f32 %v6657, 0.0
    %v6732 = vmax.f32 %v6662, 0.0
    %v6733 = vmax.f32 %v6667, 0.0
    %6734 = vmatprep.subr.mxu0 0.0
    %6735 = vmatpush1.msra.mxu0 %v6670
    %6736 = vmatprep.subr.mxu0 0.0
    %6737 = vmatpush1.msra.mxu0 %v6671
    %6738 = vmatprep.subr.mxu0 0.0
    %6739 = vmatpush1.msra.mxu0 %v6672
    %6740 = vmatprep.subr.mxu0 0.0
    %6741 = vmatpush1.msra.mxu0 %v6673
    %6742 = vmatprep.subr.mxu0 0.0
    %6743 = vmatpush1.msra.mxu0 %v6674
    %6744 = vmatprep.subr.mxu0 0.0
    %6745 = vmatpush1.msra.mxu0 %v6675
    %6746 = vmatprep.subr.mxu0 0.0
    %6747 = vmatpush1.msra.mxu0 %v6676
    %6748 = vmatprep.subr.mxu0 0.0
    %6749 = vmatpush1.msra.mxu0 %v6677
    %6750 = vmatprep.subr.mxu0 0.0
    %6751 = vmatpush1.msra.mxu0 %v6678
    %6752 = vmatprep.subr.mxu0 0.0
    %6753 = vmatpush1.msra.mxu0 %v6679
    %6754 = vmatprep.subr.mxu0 0.0
    %6755 = vmatpush1.msra.mxu0 %v6680
    %6756 = vmatprep.subr.mxu0 0.0
    %6757 = vmatpush1.msra.mxu0 %v6681
    %6758 = vmatprep.subr.mxu0 0.0
    %6759 = vmatpush1.msra.mxu0 %v6682
    %6760 = vmatprep.subr.mxu0 0.0
    %6761 = vmatpush1.msra.mxu0 %v6683
    %6762 = vmatprep.subr.mxu0 0.0
    %6763 = vmatpush1.msra.mxu0 %v6684
    %6764 = vmatprep.subr.mxu0 0.0
    %6765 = vmatpush1.msra.mxu0 %v6685
    %6766 = vmatprep.subr.mxu0 0.0
    %6767 = vmatpush1.msra.mxu0 %v6686
    %6768 = vmatprep.subr.mxu0 0.0
    %6769 = vmatpush1.msra.mxu0 %v6687
    %6770 = vmatprep.subr.mxu0 0.0
    %6771 = vmatpush1.msra.mxu0 %v6688
    %6772 = vmatprep.subr.mxu0 0.0
    %6773 = vmatpush1.msra.mxu0 %v6689
    %6774 = vmatprep.subr.mxu0 0.0
    %6775 = vmatpush1.msra.mxu0 %v6690
    %6776 = vmatprep.subr.mxu0 0.0
    %6777 = vmatpush1.msra.mxu0 %v6691
    %6778 = vmatprep.subr.mxu0 0.0
    %6779 = vmatpush1.msra.mxu0 %v6692
    %6780 = vmatprep.subr.mxu0 0.0
    %6781 = vmatpush1.msra.mxu0 %v6693
    %6782 = vmatprep.subr.mxu0 0.0
    %6783 = vmatpush1.msra.mxu0 %v6694
    %6784 = vmatprep.subr.mxu0 0.0
    %6785 = vmatpush1.msra.mxu0 %v6695
    %6786 = vmatprep.subr.mxu0 0.0
    %6787 = vmatpush1.msra.mxu0 %v6696
    %6788 = vmatprep.subr.mxu0 0.0
    %6789 = vmatpush1.msra.mxu0 %v6697
    %6790 = vmatprep.subr.mxu0 0.0
    %6791 = vmatpush1.msra.mxu0 %v6698
    %6792 = vmatprep.subr.mxu0 0.0
    %6793 = vmatpush1.msra.mxu0 %v6699
    %6794 = vmatprep.subr.mxu0 0.0
    %6795 = vmatpush1.msra.mxu0 %v6700
    %6796 = vmatprep.subr.mxu0 0.0
    %6797 = vmatpush1.msra.mxu0 %v6701
    %6798 = vmatprep.mubr.f32.mxu0 %v53
    %6799 = vmatmul.mubr.f32.gmra.mrb[0].mxu0 %v52
    %v6800 = vpop.f32.mrb[0].mxu0
    %v6801 = vadd.f32 0.0, %v6800
    %v6802 = vpop.f32.mrb[0].mxu0
    %6803 = vdwg.mxu0
    %6804 = vmatprep.subr.mxu0 0.0
    %6805 = vmatpush1.msra.mxu0 %v6702
    %6806 = vmatprep.subr.mxu0 0.0
    %6807 = vmatpush1.msra.mxu0 %v6703
    %6808 = vmatprep.subr.mxu0 0.0
    %6809 = vmatpush1.msra.mxu0 %v6704
    %6810 = vmatprep.subr.mxu0 0.0
    %6811 = vmatpush1.msra.mxu0 %v6705
    %6812 = vmatprep.subr.mxu0 0.0
    %6813 = vmatpush1.msra.mxu0 %v6706
    %6814 = vmatprep.subr.mxu0 0.0
    %6815 = vmatpush1.msra.mxu0 %v6707
    %6816 = vmatprep.subr.mxu0 0.0
    %6817 = vmatpush1.msra.mxu0 %v6708
    %6818 = vmatprep.subr.mxu0 0.0
    %6819 = vmatpush1.msra.mxu0 %v6709
    %6820 = vmatprep.subr.mxu0 0.0
    %6821 = vmatpush1.msra.mxu0 %v6710
    %6822 = vmatprep.subr.mxu0 0.0
    %6823 = vmatpush1.msra.mxu0 %v6711
    %6824 = vmatprep.subr.mxu0 0.0
    %6825 = vmatpush1.msra.mxu0 %v6712
    %6826 = vmatprep.subr.mxu0 0.0
    %6827 = vmatpush1.msra.mxu0 %v6713
    %6828 = vmatprep.subr.mxu0 0.0
    %6829 = vmatpush1.msra.mxu0 %v6714
    %6830 = vmatprep.subr.mxu0 0.0
    %6831 = vmatpush1.msra.mxu0 %v6715
    %6832 = vmatprep.subr.mxu0 0.0
    %6833 = vmatpush1.msra.mxu0 %v6716
    %6834 = vmatprep.subr.mxu0 0.0
    %6835 = vmatpush1.msra.mxu0 %v6717
    %6836 = vmatprep.subr.mxu0 0.0
    %6837 = vmatpush1.msra.mxu0 %v6718
    %6838 = vmatprep.subr.mxu0 0.0
    %6839 = vmatpush1.msra.mxu0 %v6719
    %6840 = vmatprep.subr.mxu0 0.0
    %6841 = vmatpush1.msra.mxu0 %v6720
    %6842 = vmatprep.subr.mxu0 0.0
    %6843 = vmatpush1.msra.mxu0 %v6721
    %6844 = vmatprep.subr.mxu0 0.0
    %6845 = vmatpush1.msra.mxu0 %v6722
    %6846 = vmatprep.subr.mxu0 0.0
    %6847 = vmatpush1.msra.mxu0 %v6723
    %6848 = vmatprep.subr.mxu0 0.0
    %6849 = vmatpush1.msra.mxu0 %v6724
    %6850 = vmatprep.subr.mxu0 0.0
    %6851 = vmatpush1.msra.mxu0 %v6725
    %6852 = vmatprep.subr.mxu0 0.0
    %6853 = vmatpush1.msra.mxu0 %v6726
    %6854 = vmatprep.subr.mxu0 0.0
    %6855 = vmatpush1.msra.mxu0 %v6727
    %6856 = vmatprep.subr.mxu0 0.0
    %6857 = vmatpush1.msra.mxu0 %v6728
    %6858 = vmatprep.subr.mxu0 0.0
    %6859 = vmatpush1.msra.mxu0 %v6729
    %6860 = vmatprep.subr.mxu0 0.0
    %6861 = vmatpush1.msra.mxu0 %v6730
    %6862 = vmatprep.subr.mxu0 0.0
    %6863 = vmatpush1.msra.mxu0 %v6731
    %6864 = vmatprep.subr.mxu0 0.0
    %6865 = vmatpush1.msra.mxu0 %v6732
    %6866 = vmatprep.subr.mxu0 0.0
    %6867 = vmatpush1.msra.mxu0 %v6733
    %6868 = vmatprep.mubr.f32.mxu0 %v55
    %6869 = vmatmul.mubr.f32.gmra.mrb[0].mxu0 %v54
    %v6870 = vpop.f32.mrb[0].mxu0
    %v6871 = vadd.f32 %v6801, %v6870
    %v6872 = vpop.f32.mrb[0].mxu0
    %6873 = vdwg.mxu0
    %v6875 = vsel %vm914, %v6871, 0
    %6877 = vmatprep.subr.mxu0 0.0
    %6878 = vmatpush1.msra.mxu0 %v18
    %6879 = vmatprep.subr.mxu0 0.0
    %6880 = vmatpush1.msra.mxu0 %v19
    %6881 = vmatprep.subr.mxu0 0.0
    %6882 = vmatpush1.msra.mxu0 0.0
    %6883 = vmatprep.subr.mxu0 0.0
    %6884 = vmatpush1.msra.mxu0 0.0
    %6885 = vmatprep.subr.mxu0 0.0
    %6886 = vmatpush1.msra.mxu0 0.0
    %6887 = vmatprep.subr.mxu0 0.0
    %6888 = vmatpush1.msra.mxu0 0.0
    %6889 = vmatprep.subr.mxu0 0.0
    %6890 = vmatpush1.msra.mxu0 0.0
    %6891 = vmatprep.subr.mxu0 0.0
    %6892 = vmatpush1.msra.mxu0 0.0
    %6893 = vmatprep.subr.mxu0 0.0
    %6894 = vmatpush1.msra.mxu0 0.0
    %6895 = vmatprep.subr.mxu0 0.0
    %6896 = vmatpush1.msra.mxu0 0.0
    %6897 = vmatprep.subr.mxu0 0.0
    %6898 = vmatpush1.msra.mxu0 0.0
    %6899 = vmatprep.subr.mxu0 0.0
    %6900 = vmatpush1.msra.mxu0 0.0
    %6901 = vmatprep.subr.mxu0 0.0
    %6902 = vmatpush1.msra.mxu0 0.0
    %6903 = vmatprep.subr.mxu0 0.0
    %6904 = vmatpush1.msra.mxu0 0.0
    %6905 = vmatprep.subr.mxu0 0.0
    %6906 = vmatpush1.msra.mxu0 0.0
    %6907 = vmatprep.subr.mxu0 0.0
    %6908 = vmatpush1.msra.mxu0 0.0
    %6909 = vmatprep.subr.mxu0 0.0
    %6910 = vmatpush1.msra.mxu0 0.0
    %6911 = vmatprep.subr.mxu0 0.0
    %6912 = vmatpush1.msra.mxu0 0.0
    %6913 = vmatprep.subr.mxu0 0.0
    %6914 = vmatpush1.msra.mxu0 0.0
    %6915 = vmatprep.subr.mxu0 0.0
    %6916 = vmatpush1.msra.mxu0 0.0
    %6917 = vmatprep.subr.mxu0 0.0
    %6918 = vmatpush1.msra.mxu0 0.0
    %6919 = vmatprep.subr.mxu0 0.0
    %6920 = vmatpush1.msra.mxu0 0.0
    %6921 = vmatprep.subr.mxu0 0.0
    %6922 = vmatpush1.msra.mxu0 0.0
    %6923 = vmatprep.subr.mxu0 0.0
    %6924 = vmatpush1.msra.mxu0 0.0
    %6925 = vmatprep.subr.mxu0 0.0
    %6926 = vmatpush1.msra.mxu0 0.0
    %6927 = vmatprep.subr.mxu0 0.0
    %6928 = vmatpush1.msra.mxu0 0.0
    %6929 = vmatprep.subr.mxu0 0.0
    %6930 = vmatpush1.msra.mxu0 0.0
    %6931 = vmatprep.subr.mxu0 0.0
    %6932 = vmatpush1.msra.mxu0 0.0
    %6933 = vmatprep.subr.mxu0 0.0
    %6934 = vmatpush1.msra.mxu0 0.0
    %6935 = vmatprep.subr.mxu0 0.0
    %6936 = vmatpush1.msra.mxu0 0.0
    %6937 = vmatprep.subr.mxu0 0.0
    %6938 = vmatpush1.msra.mxu0 0.0
    %6939 = vmatprep.subr.mxu0 0.0
    %6940 = vmatpush1.msra.mxu0 0.0
    %6941 = vmatprep.mubr.f32.mxu0 0.0
    %6942 = vmatmul.mubr.f32.gmra.mrb[0].mxu0 %v6875
    %v6943 = vpop.f32.mrb[0].mxu0
    %v6944 = vadd.f32 %v913, %v6943
    %v6945 = vpop.f32.mrb[0].mxu0
    %6946 = vdwg.mxu0
    %v6948 = vsel %vm988, %v6028, 0
    %6950 = vmatprep.subr.mxu0 0.0
    %6951 = vmatpush1.msra.mxu0 %v20
    %6952 = vmatprep.subr.mxu0 0.0
    %6953 = vmatpush1.msra.mxu0 %v21
    %6954 = vmatprep.subr.mxu0 0.0
    %6955 = vmatpush1.msra.mxu0 %v22
    %6956 = vmatprep.subr.mxu0 0.0
    %6957 = vmatpush1.msra.mxu0 %v23
    %6958 = vmatprep.subr.mxu0 0.0
    %6959 = vmatpush1.msra.mxu0 0.0
    %6960 = vmatprep.subr.mxu0 0.0
    %6961 = vmatpush1.msra.mxu0 0.0
    %6962 = vmatprep.subr.mxu0 0.0
    %6963 = vmatpush1.msra.mxu0 0.0
    %6964 = vmatprep.subr.mxu0 0.0
    %6965 = vmatpush1.msra.mxu0 0.0
    %6966 = vmatprep.subr.mxu0 0.0
    %6967 = vmatpush1.msra.mxu0 0.0
    %6968 = vmatprep.subr.mxu0 0.0
    %6969 = vmatpush1.msra.mxu0 0.0
    %6970 = vmatprep.subr.mxu0 0.0
    %6971 = vmatpush1.msra.mxu0 0.0
    %6972 = vmatprep.subr.mxu0 0.0
    %6973 = vmatpush1.msra.mxu0 0.0
    %6974 = vmatprep.subr.mxu0 0.0
    %6975 = vmatpush1.msra.mxu0 0.0
    %6976 = vmatprep.subr.mxu0 0.0
    %6977 = vmatpush1.msra.mxu0 0.0
    %6978 = vmatprep.subr.mxu0 0.0
    %6979 = vmatpush1.msra.mxu0 0.0
    %6980 = vmatprep.subr.mxu0 0.0
    %6981 = vmatpush1.msra.mxu0 0.0
    %6982 = vmatprep.subr.mxu0 0.0
    %6983 = vmatpush1.msra.mxu0 0.0
    %6984 = vmatprep.subr.mxu0 0.0
    %6985 = vmatpush1.msra.mxu0 0.0
    %6986 = vmatprep.subr.mxu0 0.0
    %6987 = vmatpush1.msra.mxu0 0.0
    %6988 = vmatprep.subr.mxu0 0.0
    %6989 = vmatpush1.msra.mxu0 0.0
    %6990 = vmatprep.subr.mxu0 0.0
    %6991 = vmatpush1.msra.mxu0 0.0
    %6992 = vmatprep.subr.mxu0 0.0
    %6993 = vmatpush1.msra.mxu0 0.0
    %6994 = vmatprep.subr.mxu0 0.0
    %6995 = vmatpush1.msra.mxu0 0.0
    %6996 = vmatprep.subr.mxu0 0.0
    %6997 = vmatpush1.msra.mxu0 0.0
    %6998 = vmatprep.subr.mxu0 0.0
    %6999 = vmatpush1.msra.mxu0 0.0
    %7000 = vmatprep.subr.mxu0 0.0
    %7001 = vmatpush1.msra.mxu0 0.0
    %7002 = vmatprep.subr.mxu0 0.0
    %7003 = vmatpush1.msra.mxu0 0.0
    %7004 = vmatprep.subr.mxu0 0.0
    %7005 = vmatpush1.msra.mxu0 0.0
    %7006 = vmatprep.subr.mxu0 0.0
    %7007 = vmatpush1.msra.mxu0 0.0
    %7008 = vmatprep.subr.mxu0 0.0
    %7009 = vmatpush1.msra.mxu0 0.0
    %7010 = vmatprep.subr.mxu0 0.0
    %7011 = vmatpush1.msra.mxu0 0.0
    %7012 = vmatprep.subr.mxu0 0.0
    %7013 = vmatpush1.msra.mxu0 0.0
    %7014 = vmatprep.mubr.f32.mxu0 0.0
    %7015 = vmatmul.mubr.f32.gmra.mrb[0].mxu0 %v6948
    %v7016 = vpop.f32.mrb[0].mxu0
    %v7017 = vadd.f32 0.0, %v7016
    %v7018 = vpop.f32.mrb[0].mxu0
    %7019 = vdwg.mxu0
    %v7020 = vadd.f32 %v6944, %v7017
    %v7021 = vtanh.pop %v7020
    %v7022 = vld [vmem:[%s0 + $0xe00] sm:$0xff]
    %v7023 = vld [vmem:[%s0 + $0xe08] sm:$0xff]
    %v7024 = vld [vmem:[%s0 + $0xe10] sm:$0xff]
    %v7025 = vld [vmem:[%s0 + $0xe18] sm:$0xff]
    %v7026 = vld [vmem:[%s0 + $0xe20] sm:$0xff]
    %v7027 = vld [vmem:[%s0 + $0xe28] sm:$0xff]
    %v7028 = vld [vmem:[%s0 + $0xe30] sm:$0xff]
    %v7029 = vld [vmem:[%s0 + $0xe38] sm:$0xff]
    %v7030 = vld [vmem:[%s0 + $0xe40] sm:$0xff]
    %v7031 = vld [vmem:[%s0 + $0xe48] sm:$0xff]
    %v7032 = vld [vmem:[%s0 + $0xe50] sm:$0xff]
    %v7033 = vld [vmem:[%s0 + $0xe58] sm:$0xff]
    %v7034 = vld [vmem:[%s0 + $0xe60] sm:$0xff]
    %v7035 = vld [vmem:[%s0 + $0xe68] sm:$0xff]
    %v7036 = vld [vmem:[%s0 + $0xe70] sm:$0xff]
    %v7037 = vld [vmem:[%s0 + $0xe78] sm:$0xff]
    %v7038 = vld [vmem:[%s0 + $0xe80] sm:$0xff]
    %v7039 = vld [vmem:[%s0 + $0xe88] sm:$0xff]
    %v7040 = vld [vmem:[%s0 + $0xe90] sm:$0xff]
    %v7041 = vld [vmem:[%s0 + $0xe98] sm:$0xff]
    %v7042 = vld [vmem:[%s0 + $0xea0] sm:$0xff]
    %v7043 = vld [vmem:[%s0 + $0xea8] sm:$0xff]
    %v7044 = vld [vmem:[%s0 + $0xeb0] sm:$0xff]
    %v7045 = vld [vmem:[%s0 + $0xeb8] sm:$0xff]
    %v7046 = vld [vmem:[%s0 + $0xec0] sm:$0xff]
    %v7047 = vld [vmem:[%s0 + $0xec8] sm:$0xff]
    %v7048 = vld [vmem:[%s0 + $0xed0] sm:$0xff]
    %v7049 = vld [vmem:[%s0 + $0xed8] sm:$0xff]
    %v7050 = vld [vmem:[%s0 + $0xee0] sm:$0xff]
    %v7051 = vld [vmem:[%s0 + $0xee8] sm:$0xff]
    %v7052 = vld [vmem:[%s0 + $0xef0] sm:$0xff]
    %v7053 = vld [vmem:[%s0 + $0xef8] sm:$0xff]
    %v7054 = vld [vmem:[%s0 + $0xf00] sm:$0xff]
    %v7055 = vld [vmem:[%s0 + $0xf08] sm:$0xff]
    %v7056 = vld [vmem:[%s0 + $0xf10] sm:$0xff]
    %v7057 = vld [vmem:[%s0 + $0xf18] sm:$0xff]
    %v7058 = vld [vmem:[%s0 + $0xf20] sm:$0xff]
    %v7059 = vld [vmem:[%s0 + $0xf28] sm:$0xff]
    %v7060 = vld [vmem:[%s0 + $0xf30] sm:$0xff]
    %v7061 = vld [vmem:[%s0 + $0xf38] sm:$0xff]
    %v7062 = vld [vmem:[%s0 + $0xf40] sm:$0xff]
    %v7063 = vld [vmem:[%s0 + $0xf48] sm:$0xff]
    %v7064 = vld [vmem:[%s0 + $0xf50] sm:$0xff]
    %v7065 = vld [vmem:[%s0 + $0xf58] sm:$0xff]
    %v7066 = vld [vmem:[%s0 + $0xf60] sm:$0xff]
    %v7067 = vld [vmem:[%s0 + $0xf68] sm:$0xff]
    %v7068 = vld [vmem:[%s0 + $0xf70] sm:$0xff]
    %v7069 = vld [vmem:[%s0 + $0xf78] sm:$0xff]
    %v7070 = vld [vmem:[%s0 + $0xf80] sm:$0xff]
    %v7071 = vld [vmem:[%s0 + $0xf88] sm:$0xff]
    %v7072 = vld [vmem:[%s0 + $0xf90] sm:$0xff]
    %v7073 = vld [vmem:[%s0 + $0xf98] sm:$0xff]
    %v7074 = vld [vmem:[%s0 + $0xfa0] sm:$0xff]
    %v7075 = vld [vmem:[%s0 + $0xfa8] sm:$0xff]
    %v7076 = vld [vmem:[%s0 + $0xfb0] sm:$0xff]
    %v7077 = vld [vmem:[%s0 + $0xfb8] sm:$0xff]
    %v7078 = vld [vmem:[%s0 + $0xfc0] sm:$0xff]
    %v7079 = vld [vmem:[%s0 + $0xfc8] sm:$0xff]
    %v7080 = vld [vmem:[%s0 + $0xfd0] sm:$0xff]
    %v7081 = vld [vmem:[%s0 + $0xfd8] sm:$0xff]
    %v7082 = vld [vmem:[%s0 + $0xfe0] sm:$0xff]
    %v7083 = vld [vmem:[%s0 + $0xfe8] sm:$0xff]
    %v7084 = vld [vmem:[%s0 + $0xff0] sm:$0xff]
    %v7085 = vld [vmem:[%s0 + $0xff8] sm:$0xff]
    %v7087 = vsel %vm124, %v7022, 0
    %v7090 = vsel %vm124, %v7023, 0
    %v7093 = vsel %vm124, %v7024, 0
    %v7096 = vsel %vm124, %v7025, 0
    %v7099 = vsel %vm124, %v7026, 0
    %v7102 = vsel %vm124, %v7027, 0
    %v7105 = vsel %vm124, %v7028, 0
    %v7108 = vsel %vm124, %v7029, 0
    %v7111 = vsel %vm124, %v7030, 0
    %v7114 = vsel %vm124, %v7031, 0
    %v7117 = vsel %vm124, %v7032, 0
    %v7120 = vsel %vm124, %v7033, 0
    %v7123 = vsel %vm124, %v7034, 0
    %v7126 = vsel %vm124, %v7035, 0
    %v7129 = vsel %vm124, %v7036, 0
    %v7132 = vsel %vm124, %v7037, 0
    %v7135 = vsel %vm124, %v7038, 0
    %v7138 = vsel %vm124, %v7039, 0
    %v7141 = vsel %vm124, %v7040, 0
    %v7144 = vsel %vm124, %v7041, 0
    %v7147 = vsel %vm124, %v7042, 0
    %v7150 = vsel %vm124, %v7043, 0
    %v7153 = vsel %vm124, %v7044, 0
    %v7156 = vsel %vm124, %v7045, 0
    %v7159 = vsel %vm124, %v7046, 0
    %v7162 = vsel %vm124, %v7047, 0
    %v7165 = vsel %vm124, %v7048, 0
    %v7168 = vsel %vm124, %v7049, 0
    %v7171 = vsel %vm124, %v7050, 0
    %v7174 = vsel %vm124, %v7051, 0
    %v7177 = vsel %vm124, %v7052, 0
    %v7180 = vsel %vm124, %v7053, 0
    %v7183 = vsel %vm124, %v7054, 0
    %v7186 = vsel %vm124, %v7055, 0
    %v7189 = vsel %vm124, %v7056, 0
    %v7192 = vsel %vm124, %v7057, 0
    %v7195 = vsel %vm124, %v7058, 0
    %v7198 = vsel %vm124, %v7059, 0
    %v7201 = vsel %vm124, %v7060, 0
    %v7204 = vsel %vm124, %v7061, 0
    %v7207 = vsel %vm124, %v7062, 0
    %v7210 = vsel %vm124, %v7063, 0
    %v7213 = vsel %vm124, %v7064, 0
    %v7216 = vsel %vm124, %v7065, 0
    %v7219 = vsel %vm124, %v7066, 0
    %v7222 = vsel %vm124, %v7067, 0
    %v7225 = vsel %vm124, %v7068, 0
    %v7228 = vsel %vm124, %v7069, 0
    %v7231 = vsel %vm124, %v7070, 0
    %v7234 = vsel %vm124, %v7071, 0
    %v7237 = vsel %vm124, %v7072, 0
    %v7240 = vsel %vm124, %v7073, 0
    %v7243 = vsel %vm124, %v7074, 0
    %v7246 = vsel %vm124, %v7075, 0
    %v7249 = vsel %vm124, %v7076, 0
    %v7252 = vsel %vm124, %v7077, 0
    %v7255 = vsel %vm124, %v7078, 0
    %v7258 = vsel %vm124, %v7079, 0
    %v7261 = vsel %vm124, %v7080, 0
    %v7264 = vsel %vm124, %v7081, 0
    %v7267 = vsel %vm124, %v7082, 0
    %v7270 = vsel %vm124, %v7083, 0
    %v7273 = vsel %vm124, %v7084, 0
    %v7276 = vsel %vm124, %v7085, 0
    %7278 = vmatprep.subr.mxu0 0.0
    %7279 = vmatpush1.msra.mxu0 %v12
    %7280 = vmatprep.subr.mxu0 0.0
    %7281 = vmatpush1.msra.mxu0 %v13
    %7282 = vmatprep.subr.mxu0 0.0
    %7283 = vmatpush1.msra.mxu0 %v14
    %7284 = vmatprep.subr.mxu0 0.0
    %7285 = vmatpush1.msra.mxu0 %v15
    %7286 = vmatprep.subr.mxu0 0.0
    %7287 = vmatpush1.msra.mxu0 %v319
    %7288 = vmatprep.subr.mxu0 0.0
    %7289 = vmatpush1.msra.mxu0 0.0
    %7290 = vmatprep.subr.mxu0 0.0
    %7291 = vmatpush1.msra.mxu0 0.0
    %7292 = vmatprep.subr.mxu0 0.0
    %7293 = vmatpush1.msra.mxu0 0.0
    %7294 = vmatprep.subr.mxu0 0.0
    %7295 = vmatpush1.msra.mxu0 0.0
    %7296 = vmatprep.subr.mxu0 0.0
    %7297 = vmatpush1.msra.mxu0 0.0
    %7298 = vmatprep.subr.mxu0 0.0
    %7299 = vmatpush1.msra.mxu0 0.0
    %7300 = vmatprep.subr.mxu0 0.0
    %7301 = vmatpush1.msra.mxu0 0.0
    %7302 = vmatprep.subr.mxu0 0.0
    %7303 = vmatpush1.msra.mxu0 0.0
    %7304 = vmatprep.subr.mxu0 0.0
    %7305 = vmatpush1.msra.mxu0 0.0
    %7306 = vmatprep.subr.mxu0 0.0
    %7307 = vmatpush1.msra.mxu0 0.0
    %7308 = vmatprep.subr.mxu0 0.0
    %7309 = vmatpush1.msra.mxu0 0.0
    %7310 = vmatprep.subr.mxu0 0.0
    %7311 = vmatpush1.msra.mxu0 0.0
    %7312 = vmatprep.subr.mxu0 0.0
    %7313 = vmatpush1.msra.mxu0 0.0
    %7314 = vmatprep.subr.mxu0 0.0
    %7315 = vmatpush1.msra.mxu0 0.0
    %7316 = vmatprep.subr.mxu0 0.0
    %7317 = vmatpush1.msra.mxu0 0.0
    %7318 = vmatprep.subr.mxu0 0.0
    %7319 = vmatpush1.msra.mxu0 0.0
    %7320 = vmatprep.subr.mxu0 0.0
    %7321 = vmatpush1.msra.mxu0 0.0
    %7322 = vmatprep.subr.mxu0 0.0
    %7323 = vmatpush1.msra.mxu0 0.0
    %7324 = vmatprep.subr.mxu0 0.0
    %7325 = vmatpush1.msra.mxu0 0.0
    %7326 = vmatprep.subr.mxu0 0.0
    %7327 = vmatpush1.msra.mxu0 0.0
    %7328 = vmatprep.subr.mxu0 0.0
    %7329 = vmatpush1.msra.mxu0 0.0
    %7330 = vmatprep.subr.mxu0 0.0
    %7331 = vmatpush1.msra.mxu0 0.0
    %7332 = vmatprep.subr.mxu0 0.0
    %7333 = vmatpush1.msra.mxu0 0.0
    %7334 = vmatprep.subr.mxu0 0.0
    %7335 = vmatpush1.msra.mxu0 0.0
    %7336 = vmatprep.subr.mxu0 0.0
    %7337 = vmatpush1.msra.mxu0 0.0
    %7338 = vmatprep.subr.mxu0 0.0
    %7339 = vmatpush1.msra.mxu0 0.0
    %7340 = vmatprep.subr.mxu0 0.0
    %7341 = vmatpush1.msra.mxu0 0.0
    %7342 = vmatprep.mubr.f32.mxu0 0.0
    %7343 = vmatmul.mubr.f32.gmra.mrb[0].mxu0 %v7087
    %v7344 = vpop.f32.mrb[0].mxu0
    %v7345 = vadd.f32 %v123, %v7344
    %v7346 = vpop.f32.mrb[0].mxu0
    %7347 = vmatprep.mubr.f32.mxu0 0.0
    %7348 = vmatmul.mubr.f32.gmra.mrb[0].mxu0 %v7090
    %v7349 = vpop.f32.mrb[0].mxu0
    %v7350 = vadd.f32 %v123, %v7349
    %v7351 = vpop.f32.mrb[0].mxu0
    %7352 = vmatprep.mubr.f32.mxu0 0.0
    %7353 = vmatmul.mubr.f32.gmra.mrb[0].mxu0 %v7093
    %v7354 = vpop.f32.mrb[0].mxu0
    %v7355 = vadd.f32 %v123, %v7354
    %v7356 = vpop.f32.mrb[0].mxu0
    %7357 = vmatprep.mubr.f32.mxu0 0.0
    %7358 = vmatmul.mubr.f32.gmra.mrb[0].mxu0 %v7096
    %v7359 = vpop.f32.mrb[0].mxu0
    %v7360 = vadd.f32 %v123, %v7359
    %v7361 = vpop.f32.mrb[0].mxu0
    %7362 = vmatprep.mubr.f32.mxu0 0.0
    %7363 = vmatmul.mubr.f32.gmra.mrb[0].mxu0 %v7099
    %v7364 = vpop.f32.mrb[0].mxu0
    %v7365 = vadd.f32 %v123, %v7364
    %v7366 = vpop.f32.mrb[0].mxu0
    %7367 = vmatprep.mubr.f32.mxu0 0.0
    %7368 = vmatmul.mubr.f32.gmra.mrb[0].mxu0 %v7102
    %v7369 = vpop.f32.mrb[0].mxu0
    %v7370 = vadd.f32 %v123, %v7369
    %v7371 = vpop.f32.mrb[0].mxu0
    %7372 = vmatprep.mubr.f32.mxu0 0.0
    %7373 = vmatmul.mubr.f32.gmra.mrb[0].mxu0 %v7105
    %v7374 = vpop.f32.mrb[0].mxu0
    %v7375 = vadd.f32 %v123, %v7374
    %v7376 = vpop.f32.mrb[0].mxu0
    %7377 = vmatprep.mubr.f32.mxu0 0.0
    %7378 = vmatmul.mubr.f32.gmra.mrb[0].mxu0 %v7108
    %v7379 = vpop.f32.mrb[0].mxu0
    %v7380 = vadd.f32 %v123, %v7379
    %v7381 = vpop.f32.mrb[0].mxu0
    %7382 = vmatprep.mubr.f32.mxu0 0.0
    %7383 = vmatmul.mubr.f32.gmra.mrb[0].mxu0 %v7111
    %v7384 = vpop.f32.mrb[0].mxu0
    %v7385 = vadd.f32 %v123, %v7384
    %v7386 = vpop.f32.mrb[0].mxu0
    %7387 = vmatprep.mubr.f32.mxu0 0.0
    %7388 = vmatmul.mubr.f32.gmra.mrb[0].mxu0 %v7114
    %v7389 = vpop.f32.mrb[0].mxu0
    %v7390 = vadd.f32 %v123, %v7389
    %v7391 = vpop.f32.mrb[0].mxu0
    %7392 = vmatprep.mubr.f32.mxu0 0.0
    %7393 = vmatmul.mubr.f32.gmra.mrb[0].mxu0 %v7117
    %v7394 = vpop.f32.mrb[0].mxu0
    %v7395 = vadd.f32 %v123, %v7394
    %v7396 = vpop.f32.mrb[0].mxu0
    %7397 = vmatprep.mubr.f32.mxu0 0.0
    %7398 = vmatmul.mubr.f32.gmra.mrb[0].mxu0 %v7120
    %v7399 = vpop.f32.mrb[0].mxu0
    %v7400 = vadd.f32 %v123, %v7399
    %v7401 = vpop.f32.mrb[0].mxu0
    %7402 = vmatprep.mubr.f32.mxu0 0.0
    %7403 = vmatmul.mubr.f32.gmra.mrb[0].mxu0 %v7123
    %v7404 = vpop.f32.mrb[0].mxu0
    %v7405 = vadd.f32 %v123, %v7404
    %v7406 = vpop.f32.mrb[0].mxu0
    %7407 = vmatprep.mubr.f32.mxu0 0.0
    %7408 = vmatmul.mubr.f32.gmra.mrb[0].mxu0 %v7126
    %v7409 = vpop.f32.mrb[0].mxu0
    %v7410 = vadd.f32 %v123, %v7409
    %v7411 = vpop.f32.mrb[0].mxu0
    %7412 = vmatprep.mubr.f32.mxu0 0.0
    %7413 = vmatmul.mubr.f32.gmra.mrb[0].mxu0 %v7129
    %v7414 = vpop.f32.mrb[0].mxu0
    %v7415 = vadd.f32 %v123, %v7414
    %v7416 = vpop.f32.mrb[0].mxu0
    %7417 = vmatprep.mubr.f32.mxu0 0.0
    %7418 = vmatmul.mubr.f32.gmra.mrb[0].mxu0 %v7132
    %v7419 = vpop.f32.mrb[0].mxu0
    %v7420 = vadd.f32 %v123, %v7419
    %v7421 = vpop.f32.mrb[0].mxu0
    %7422 = vmatprep.mubr.f32.mxu0 0.0
    %7423 = vmatmul.mubr.f32.gmra.mrb[0].mxu0 %v7135
    %v7424 = vpop.f32.mrb[0].mxu0
    %v7425 = vadd.f32 %v123, %v7424
    %v7426 = vpop.f32.mrb[0].mxu0
    %7427 = vmatprep.mubr.f32.mxu0 0.0
    %7428 = vmatmul.mubr.f32.gmra.mrb[0].mxu0 %v7138
    %v7429 = vpop.f32.mrb[0].mxu0
    %v7430 = vadd.f32 %v123, %v7429
    %v7431 = vpop.f32.mrb[0].mxu0
    %7432 = vmatprep.mubr.f32.mxu0 0.0
    %7433 = vmatmul.mubr.f32.gmra.mrb[0].mxu0 %v7141
    %v7434 = vpop.f32.mrb[0].mxu0
    %v7435 = vadd.f32 %v123, %v7434
    %v7436 = vpop.f32.mrb[0].mxu0
    %7437 = vmatprep.mubr.f32.mxu0 0.0
    %7438 = vmatmul.mubr.f32.gmra.mrb[0].mxu0 %v7144
    %v7439 = vpop.f32.mrb[0].mxu0
    %v7440 = vadd.f32 %v123, %v7439
    %v7441 = vpop.f32.mrb[0].mxu0
    %7442 = vmatprep.mubr.f32.mxu0 0.0
    %7443 = vmatmul.mubr.f32.gmra.mrb[0].mxu0 %v7147
    %v7444 = vpop.f32.mrb[0].mxu0
    %v7445 = vadd.f32 %v123, %v7444
    %v7446 = vpop.f32.mrb[0].mxu0
    %7447 = vmatprep.mubr.f32.mxu0 0.0
    %7448 = vmatmul.mubr.f32.gmra.mrb[0].mxu0 %v7150
    %v7449 = vpop.f32.mrb[0].mxu0
    %v7450 = vadd.f32 %v123, %v7449
    %v7451 = vpop.f32.mrb[0].mxu0
    %7452 = vmatprep.mubr.f32.mxu0 0.0
    %7453 = vmatmul.mubr.f32.gmra.mrb[0].mxu0 %v7153
    %v7454 = vpop.f32.mrb[0].mxu0
    %v7455 = vadd.f32 %v123, %v7454
    %v7456 = vpop.f32.mrb[0].mxu0
    %7457 = vmatprep.mubr.f32.mxu0 0.0
    %7458 = vmatmul.mubr.f32.gmra.mrb[0].mxu0 %v7156
    %v7459 = vpop.f32.mrb[0].mxu0
    %v7460 = vadd.f32 %v123, %v7459
    %v7461 = vpop.f32.mrb[0].mxu0
    %7462 = vmatprep.mubr.f32.mxu0 0.0
    %7463 = vmatmul.mubr.f32.gmra.mrb[0].mxu0 %v7159
    %v7464 = vpop.f32.mrb[0].mxu0
    %v7465 = vadd.f32 %v123, %v7464
    %v7466 = vpop.f32.mrb[0].mxu0
    %7467 = vmatprep.mubr.f32.mxu0 0.0
    %7468 = vmatmul.mubr.f32.gmra.mrb[0].mxu0 %v7162
    %v7469 = vpop.f32.mrb[0].mxu0
    %v7470 = vadd.f32 %v123, %v7469
    %v7471 = vpop.f32.mrb[0].mxu0
    %7472 = vmatprep.mubr.f32.mxu0 0.0
    %7473 = vmatmul.mubr.f32.gmra.mrb[0].mxu0 %v7165
    %v7474 = vpop.f32.mrb[0].mxu0
    %v7475 = vadd.f32 %v123, %v7474
    %v7476 = vpop.f32.mrb[0].mxu0
    %7477 = vmatprep.mubr.f32.mxu0 0.0
    %7478 = vmatmul.mubr.f32.gmra.mrb[0].mxu0 %v7168
    %v7479 = vpop.f32.mrb[0].mxu0
    %v7480 = vadd.f32 %v123, %v7479
    %v7481 = vpop.f32.mrb[0].mxu0
    %7482 = vmatprep.mubr.f32.mxu0 0.0
    %7483 = vmatmul.mubr.f32.gmra.mrb[0].mxu0 %v7171
    %v7484 = vpop.f32.mrb[0].mxu0
    %v7485 = vadd.f32 %v123, %v7484
    %v7486 = vpop.f32.mrb[0].mxu0
    %7487 = vmatprep.mubr.f32.mxu0 0.0
    %7488 = vmatmul.mubr.f32.gmra.mrb[0].mxu0 %v7174
    %v7489 = vpop.f32.mrb[0].mxu0
    %v7490 = vadd.f32 %v123, %v7489
    %v7491 = vpop.f32.mrb[0].mxu0
    %7492 = vmatprep.mubr.f32.mxu0 0.0
    %7493 = vmatmul.mubr.f32.gmra.mrb[0].mxu0 %v7177
    %v7494 = vpop.f32.mrb[0].mxu0
    %v7495 = vadd.f32 %v123, %v7494
    %v7496 = vpop.f32.mrb[0].mxu0
    %7497 = vmatprep.mubr.f32.mxu0 0.0
    %7498 = vmatmul.mubr.f32.gmra.mrb[0].mxu0 %v7180
    %v7499 = vpop.f32.mrb[0].mxu0
    %v7500 = vadd.f32 %v123, %v7499
    %v7501 = vpop.f32.mrb[0].mxu0
    %7502 = vmatprep.mubr.f32.mxu0 0.0
    %7503 = vmatmul.mubr.f32.gmra.mrb[0].mxu0 %v7183
    %v7504 = vpop.f32.mrb[0].mxu0
    %v7505 = vadd.f32 %v123, %v7504
    %v7506 = vpop.f32.mrb[0].mxu0
    %7507 = vmatprep.mubr.f32.mxu0 0.0
    %7508 = vmatmul.mubr.f32.gmra.mrb[0].mxu0 %v7186
    %v7509 = vpop.f32.mrb[0].mxu0
    %v7510 = vadd.f32 %v123, %v7509
    %v7511 = vpop.f32.mrb[0].mxu0
    %7512 = vmatprep.mubr.f32.mxu0 0.0
    %7513 = vmatmul.mubr.f32.gmra.mrb[0].mxu0 %v7189
    %v7514 = vpop.f32.mrb[0].mxu0
    %v7515 = vadd.f32 %v123, %v7514
    %v7516 = vpop.f32.mrb[0].mxu0
    %7517 = vmatprep.mubr.f32.mxu0 0.0
    %7518 = vmatmul.mubr.f32.gmra.mrb[0].mxu0 %v7192
    %v7519 = vpop.f32.mrb[0].mxu0
    %v7520 = vadd.f32 %v123, %v7519
    %v7521 = vpop.f32.mrb[0].mxu0
    %7522 = vmatprep.mubr.f32.mxu0 0.0
    %7523 = vmatmul.mubr.f32.gmra.mrb[0].mxu0 %v7195
    %v7524 = vpop.f32.mrb[0].mxu0
    %v7525 = vadd.f32 %v123, %v7524
    %v7526 = vpop.f32.mrb[0].mxu0
    %7527 = vmatprep.mubr.f32.mxu0 0.0
    %7528 = vmatmul.mubr.f32.gmra.mrb[0].mxu0 %v7198
    %v7529 = vpop.f32.mrb[0].mxu0
    %v7530 = vadd.f32 %v123, %v7529
    %v7531 = vpop.f32.mrb[0].mxu0
    %7532 = vmatprep.mubr.f32.mxu0 0.0
    %7533 = vmatmul.mubr.f32.gmra.mrb[0].mxu0 %v7201
    %v7534 = vpop.f32.mrb[0].mxu0
    %v7535 = vadd.f32 %v123, %v7534
    %v7536 = vpop.f32.mrb[0].mxu0
    %7537 = vmatprep.mubr.f32.mxu0 0.0
    %7538 = vmatmul.mubr.f32.gmra.mrb[0].mxu0 %v7204
    %v7539 = vpop.f32.mrb[0].mxu0
    %v7540 = vadd.f32 %v123, %v7539
    %v7541 = vpop.f32.mrb[0].mxu0
    %7542 = vmatprep.mubr.f32.mxu0 0.0
    %7543 = vmatmul.mubr.f32.gmra.mrb[0].mxu0 %v7207
    %v7544 = vpop.f32.mrb[0].mxu0
    %v7545 = vadd.f32 %v123, %v7544
    %v7546 = vpop.f32.mrb[0].mxu0
    %7547 = vmatprep.mubr.f32.mxu0 0.0
    %7548 = vmatmul.mubr.f32.gmra.mrb[0].mxu0 %v7210
    %v7549 = vpop.f32.mrb[0].mxu0
    %v7550 = vadd.f32 %v123, %v7549
    %v7551 = vpop.f32.mrb[0].mxu0
    %7552 = vmatprep.mubr.f32.mxu0 0.0
    %7553 = vmatmul.mubr.f32.gmra.mrb[0].mxu0 %v7213
    %v7554 = vpop.f32.mrb[0].mxu0
    %v7555 = vadd.f32 %v123, %v7554
    %v7556 = vpop.f32.mrb[0].mxu0
    %7557 = vmatprep.mubr.f32.mxu0 0.0
    %7558 = vmatmul.mubr.f32.gmra.mrb[0].mxu0 %v7216
    %v7559 = vpop.f32.mrb[0].mxu0
    %v7560 = vadd.f32 %v123, %v7559
    %v7561 = vpop.f32.mrb[0].mxu0
    %7562 = vmatprep.mubr.f32.mxu0 0.0
    %7563 = vmatmul.mubr.f32.gmra.mrb[0].mxu0 %v7219
    %v7564 = vpop.f32.mrb[0].mxu0
    %v7565 = vadd.f32 %v123, %v7564
    %v7566 = vpop.f32.mrb[0].mxu0
    %7567 = vmatprep.mubr.f32.mxu0 0.0
    %7568 = vmatmul.mubr.f32.gmra.mrb[0].mxu0 %v7222
    %v7569 = vpop.f32.mrb[0].mxu0
    %v7570 = vadd.f32 %v123, %v7569
    %v7571 = vpop.f32.mrb[0].mxu0
    %7572 = vmatprep.mubr.f32.mxu0 0.0
    %7573 = vmatmul.mubr.f32.gmra.mrb[0].mxu0 %v7225
    %v7574 = vpop.f32.mrb[0].mxu0
    %v7575 = vadd.f32 %v123, %v7574
    %v7576 = vpop.f32.mrb[0].mxu0
    %7577 = vmatprep.mubr.f32.mxu0 0.0
    %7578 = vmatmul.mubr.f32.gmra.mrb[0].mxu0 %v7228
    %v7579 = vpop.f32.mrb[0].mxu0
    %v7580 = vadd.f32 %v123, %v7579
    %v7581 = vpop.f32.mrb[0].mxu0
    %7582 = vmatprep.mubr.f32.mxu0 0.0
    %7583 = vmatmul.mubr.f32.gmra.mrb[0].mxu0 %v7231
    %v7584 = vpop.f32.mrb[0].mxu0
    %v7585 = vadd.f32 %v123, %v7584
    %v7586 = vpop.f32.mrb[0].mxu0
    %7587 = vmatprep.mubr.f32.mxu0 0.0
    %7588 = vmatmul.mubr.f32.gmra.mrb[0].mxu0 %v7234
    %v7589 = vpop.f32.mrb[0].mxu0
    %v7590 = vadd.f32 %v123, %v7589
    %v7591 = vpop.f32.mrb[0].mxu0
    %7592 = vmatprep.mubr.f32.mxu0 0.0
    %7593 = vmatmul.mubr.f32.gmra.mrb[0].mxu0 %v7237
    %v7594 = vpop.f32.mrb[0].mxu0
    %v7595 = vadd.f32 %v123, %v7594
    %v7596 = vpop.f32.mrb[0].mxu0
    %7597 = vmatprep.mubr.f32.mxu0 0.0
    %7598 = vmatmul.mubr.f32.gmra.mrb[0].mxu0 %v7240
    %v7599 = vpop.f32.mrb[0].mxu0
    %v7600 = vadd.f32 %v123, %v7599
    %v7601 = vpop.f32.mrb[0].mxu0
    %7602 = vmatprep.mubr.f32.mxu0 0.0
    %7603 = vmatmul.mubr.f32.gmra.mrb[0].mxu0 %v7243
    %v7604 = vpop.f32.mrb[0].mxu0
    %v7605 = vadd.f32 %v123, %v7604
    %v7606 = vpop.f32.mrb[0].mxu0
    %7607 = vmatprep.mubr.f32.mxu0 0.0
    %7608 = vmatmul.mubr.f32.gmra.mrb[0].mxu0 %v7246
    %v7609 = vpop.f32.mrb[0].mxu0
    %v7610 = vadd.f32 %v123, %v7609
    %v7611 = vpop.f32.mrb[0].mxu0
    %7612 = vmatprep.mubr.f32.mxu0 0.0
    %7613 = vmatmul.mubr.f32.gmra.mrb[0].mxu0 %v7249
    %v7614 = vpop.f32.mrb[0].mxu0
    %v7615 = vadd.f32 %v123, %v7614
    %v7616 = vpop.f32.mrb[0].mxu0
    %7617 = vmatprep.mubr.f32.mxu0 0.0
    %7618 = vmatmul.mubr.f32.gmra.mrb[0].mxu0 %v7252
    %v7619 = vpop.f32.mrb[0].mxu0
    %v7620 = vadd.f32 %v123, %v7619
    %v7621 = vpop.f32.mrb[0].mxu0
    %7622 = vmatprep.mubr.f32.mxu0 0.0
    %7623 = vmatmul.mubr.f32.gmra.mrb[0].mxu0 %v7255
    %v7624 = vpop.f32.mrb[0].mxu0
    %v7625 = vadd.f32 %v123, %v7624
    %v7626 = vpop.f32.mrb[0].mxu0
    %7627 = vmatprep.mubr.f32.mxu0 0.0
    %7628 = vmatmul.mubr.f32.gmra.mrb[0].mxu0 %v7258
    %v7629 = vpop.f32.mrb[0].mxu0
    %v7630 = vadd.f32 %v123, %v7629
    %v7631 = vpop.f32.mrb[0].mxu0
    %7632 = vmatprep.mubr.f32.mxu0 0.0
    %7633 = vmatmul.mubr.f32.gmra.mrb[0].mxu0 %v7261
    %v7634 = vpop.f32.mrb[0].mxu0
    %v7635 = vadd.f32 %v123, %v7634
    %v7636 = vpop.f32.mrb[0].mxu0
    %7637 = vmatprep.mubr.f32.mxu0 0.0
    %7638 = vmatmul.mubr.f32.gmra.mrb[0].mxu0 %v7264
    %v7639 = vpop.f32.mrb[0].mxu0
    %v7640 = vadd.f32 %v123, %v7639
    %v7641 = vpop.f32.mrb[0].mxu0
    %7642 = vmatprep.mubr.f32.mxu0 0.0
    %7643 = vmatmul.mubr.f32.gmra.mrb[0].mxu0 %v7267
    %v7644 = vpop.f32.mrb[0].mxu0
    %v7645 = vadd.f32 %v123, %v7644
    %v7646 = vpop.f32.mrb[0].mxu0
    %7647 = vmatprep.mubr.f32.mxu0 0.0
    %7648 = vmatmul.mubr.f32.gmra.mrb[0].mxu0 %v7270
    %v7649 = vpop.f32.mrb[0].mxu0
    %v7650 = vadd.f32 %v123, %v7649
    %v7651 = vpop.f32.mrb[0].mxu0
    %7652 = vmatprep.mubr.f32.mxu0 0.0
    %7653 = vmatmul.mubr.f32.gmra.mrb[0].mxu0 %v7273
    %v7654 = vpop.f32.mrb[0].mxu0
    %v7655 = vadd.f32 %v123, %v7654
    %v7656 = vpop.f32.mrb[0].mxu0
    %7657 = vmatprep.mubr.f32.mxu0 0.0
    %7658 = vmatmul.mubr.f32.gmra.mrb[0].mxu0 %v7276
    %v7659 = vpop.f32.mrb[0].mxu0
    %v7660 = vadd.f32 %v123, %v7659
    %v7661 = vpop.f32.mrb[0].mxu0
    %7662 = vdwg.mxu0
    %v7663 = vmax.f32 %v7345, 0.0
    %v7664 = vmax.f32 %v7350, 0.0
    %v7665 = vmax.f32 %v7355, 0.0
    %v7666 = vmax.f32 %v7360, 0.0
    %v7667 = vmax.f32 %v7365, 0.0
    %v7668 = vmax.f32 %v7370, 0.0
    %v7669 = vmax.f32 %v7375, 0.0
    %v7670 = vmax.f32 %v7380, 0.0
    %v7671 = vmax.f32 %v7385, 0.0
    %v7672 = vmax.f32 %v7390, 0.0
    %v7673 = vmax.f32 %v7395, 0.0
    %v7674 = vmax.f32 %v7400, 0.0
    %v7675 = vmax.f32 %v7405, 0.0
    %v7676 = vmax.f32 %v7410, 0.0
    %v7677 = vmax.f32 %v7415, 0.0
    %v7678 = vmax.f32 %v7420, 0.0
    %v7679 = vmax.f32 %v7425, 0.0
    %v7680 = vmax.f32 %v7430, 0.0
    %v7681 = vmax.f32 %v7435, 0.0
    %v7682 = vmax.f32 %v7440, 0.0
    %v7683 = vmax.f32 %v7445, 0.0
    %v7684 = vmax.f32 %v7450, 0.0
    %v7685 = vmax.f32 %v7455, 0.0
    %v7686 = vmax.f32 %v7460, 0.0
    %v7687 = vmax.f32 %v7465, 0.0
    %v7688 = vmax.f32 %v7470, 0.0
    %v7689 = vmax.f32 %v7475, 0.0
    %v7690 = vmax.f32 %v7480, 0.0
    %v7691 = vmax.f32 %v7485, 0.0
    %v7692 = vmax.f32 %v7490, 0.0
    %v7693 = vmax.f32 %v7495, 0.0
    %v7694 = vmax.f32 %v7500, 0.0
    %v7695 = vmax.f32 %v7505, 0.0
    %v7696 = vmax.f32 %v7510, 0.0
    %v7697 = vmax.f32 %v7515, 0.0
    %v7698 = vmax.f32 %v7520, 0.0
    %v7699 = vmax.f32 %v7525, 0.0
    %v7700 = vmax.f32 %v7530, 0.0
    %v7701 = vmax.f32 %v7535, 0.0
    %v7702 = vmax.f32 %v7540, 0.0
    %v7703 = vmax.f32 %v7545, 0.0
    %v7704 = vmax.f32 %v7550, 0.0
    %v7705 = vmax.f32 %v7555, 0.0
    %v7706 = vmax.f32 %v7560, 0.0
    %v7707 = vmax.f32 %v7565, 0.0
    %v7708 = vmax.f32 %v7570, 0.0
    %v7709 = vmax.f32 %v7575, 0.0
    %v7710 = vmax.f32 %v7580, 0.0
    %v7711 = vmax.f32 %v7585, 0.0
    %v7712 = vmax.f32 %v7590, 0.0
    %v7713 = vmax.f32 %v7595, 0.0
    %v7714 = vmax.f32 %v7600, 0.0
    %v7715 = vmax.f32 %v7605, 0.0
    %v7716 = vmax.f32 %v7610, 0.0
    %v7717 = vmax.f32 %v7615, 0.0
    %v7718 = vmax.f32 %v7620, 0.0
    %v7719 = vmax.f32 %v7625, 0.0
    %v7720 = vmax.f32 %v7630, 0.0
    %v7721 = vmax.f32 %v7635, 0.0
    %v7722 = vmax.f32 %v7640, 0.0
    %v7723 = vmax.f32 %v7645, 0.0
    %v7724 = vmax.f32 %v7650, 0.0
    %v7725 = vmax.f32 %v7655, 0.0
    %v7726 = vmax.f32 %v7660, 0.0
    %7727 = vmatprep.subr.mxu0 0.0
    %7728 = vmatpush1.msra.mxu0 %v7663
    %7729 = vmatprep.subr.mxu0 0.0
    %7730 = vmatpush1.msra.mxu0 %v7664
    %7731 = vmatprep.subr.mxu0 0.0
    %7732 = vmatpush1.msra.mxu0 %v7665
    %7733 = vmatprep.subr.mxu0 0.0
    %7734 = vmatpush1.msra.mxu0 %v7666
    %7735 = vmatprep.subr.mxu0 0.0
    %7736 = vmatpush1.msra.mxu0 %v7667
    %7737 = vmatprep.subr.mxu0 0.0
    %7738 = vmatpush1.msra.mxu0 %v7668
    %7739 = vmatprep.subr.mxu0 0.0
    %7740 = vmatpush1.msra.mxu0 %v7669
    %7741 = vmatprep.subr.mxu0 0.0
    %7742 = vmatpush1.msra.mxu0 %v7670
    %7743 = vmatprep.subr.mxu0 0.0
    %7744 = vmatpush1.msra.mxu0 %v7671
    %7745 = vmatprep.subr.mxu0 0.0
    %7746 = vmatpush1.msra.mxu0 %v7672
    %7747 = vmatprep.subr.mxu0 0.0
    %7748 = vmatpush1.msra.mxu0 %v7673
    %7749 = vmatprep.subr.mxu0 0.0
    %7750 = vmatpush1.msra.mxu0 %v7674
    %7751 = vmatprep.subr.mxu0 0.0
    %7752 = vmatpush1.msra.mxu0 %v7675
    %7753 = vmatprep.subr.mxu0 0.0
    %7754 = vmatpush1.msra.mxu0 %v7676
    %7755 = vmatprep.subr.mxu0 0.0
    %7756 = vmatpush1.msra.mxu0 %v7677
    %7757 = vmatprep.subr.mxu0 0.0
    %7758 = vmatpush1.msra.mxu0 %v7678
    %7759 = vmatprep.subr.mxu0 0.0
    %7760 = vmatpush1.msra.mxu0 %v7679
    %7761 = vmatprep.subr.mxu0 0.0
    %7762 = vmatpush1.msra.mxu0 %v7680
    %7763 = vmatprep.subr.mxu0 0.0
    %7764 = vmatpush1.msra.mxu0 %v7681
    %7765 = vmatprep.subr.mxu0 0.0
    %7766 = vmatpush1.msra.mxu0 %v7682
    %7767 = vmatprep.subr.mxu0 0.0
    %7768 = vmatpush1.msra.mxu0 %v7683
    %7769 = vmatprep.subr.mxu0 0.0
    %7770 = vmatpush1.msra.mxu0 %v7684
    %7771 = vmatprep.subr.mxu0 0.0
    %7772 = vmatpush1.msra.mxu0 %v7685
    %7773 = vmatprep.subr.mxu0 0.0
    %7774 = vmatpush1.msra.mxu0 %v7686
    %7775 = vmatprep.subr.mxu0 0.0
    %7776 = vmatpush1.msra.mxu0 %v7687
    %7777 = vmatprep.subr.mxu0 0.0
    %7778 = vmatpush1.msra.mxu0 %v7688
    %7779 = vmatprep.subr.mxu0 0.0
    %7780 = vmatpush1.msra.mxu0 %v7689
    %7781 = vmatprep.subr.mxu0 0.0
    %7782 = vmatpush1.msra.mxu0 %v7690
    %7783 = vmatprep.subr.mxu0 0.0
    %7784 = vmatpush1.msra.mxu0 %v7691
    %7785 = vmatprep.subr.mxu0 0.0
    %7786 = vmatpush1.msra.mxu0 %v7692
    %7787 = vmatprep.subr.mxu0 0.0
    %7788 = vmatpush1.msra.mxu0 %v7693
    %7789 = vmatprep.subr.mxu0 0.0
    %7790 = vmatpush1.msra.mxu0 %v7694
    %7791 = vmatprep.mubr.f32.mxu0 %v53
    %7792 = vmatmul.mubr.f32.gmra.mrb[0].mxu0 %v52
    %v7793 = vpop.f32.mrb[0].mxu0
    %v7794 = vadd.f32 0.0, %v7793
    %v7795 = vpop.f32.mrb[0].mxu0
    %7796 = vdwg.mxu0
    %7797 = vmatprep.subr.mxu0 0.0
    %7798 = vmatpush1.msra.mxu0 %v7695
    %7799 = vmatprep.subr.mxu0 0.0
    %7800 = vmatpush1.msra.mxu0 %v7696
    %7801 = vmatprep.subr.mxu0 0.0
    %7802 = vmatpush1.msra.mxu0 %v7697
    %7803 = vmatprep.subr.mxu0 0.0
    %7804 = vmatpush1.msra.mxu0 %v7698
    %7805 = vmatprep.subr.mxu0 0.0
    %7806 = vmatpush1.msra.mxu0 %v7699
    %7807 = vmatprep.subr.mxu0 0.0
    %7808 = vmatpush1.msra.mxu0 %v7700
    %7809 = vmatprep.subr.mxu0 0.0
    %7810 = vmatpush1.msra.mxu0 %v7701
    %7811 = vmatprep.subr.mxu0 0.0
    %7812 = vmatpush1.msra.mxu0 %v7702
    %7813 = vmatprep.subr.mxu0 0.0
    %7814 = vmatpush1.msra.mxu0 %v7703
    %7815 = vmatprep.subr.mxu0 0.0
    %7816 = vmatpush1.msra.mxu0 %v7704
    %7817 = vmatprep.subr.mxu0 0.0
    %7818 = vmatpush1.msra.mxu0 %v7705
    %7819 = vmatprep.subr.mxu0 0.0
    %7820 = vmatpush1.msra.mxu0 %v7706
    %7821 = vmatprep.subr.mxu0 0.0
    %7822 = vmatpush1.msra.mxu0 %v7707
    %7823 = vmatprep.subr.mxu0 0.0
    %7824 = vmatpush1.msra.mxu0 %v7708
    %7825 = vmatprep.subr.mxu0 0.0
    %7826 = vmatpush1.msra.mxu0 %v7709
    %7827 = vmatprep.subr.mxu0 0.0
    %7828 = vmatpush1.msra.mxu0 %v7710
    %7829 = vmatprep.subr.mxu0 0.0
    %7830 = vmatpush1.msra.mxu0 %v7711
    %7831 = vmatprep.subr.mxu0 0.0
    %7832 = vmatpush1.msra.mxu0 %v7712
    %7833 = vmatprep.subr.mxu0 0.0
    %7834 = vmatpush1.msra.mxu0 %v7713
    %7835 = vmatprep.subr.mxu0 0.0
    %7836 = vmatpush1.msra.mxu0 %v7714
    %7837 = vmatprep.subr.mxu0 0.0
    %7838 = vmatpush1.msra.mxu0 %v7715
    %7839 = vmatprep.subr.mxu0 0.0
    %7840 = vmatpush1.msra.mxu0 %v7716
    %7841 = vmatprep.subr.mxu0 0.0
    %7842 = vmatpush1.msra.mxu0 %v7717
    %7843 = vmatprep.subr.mxu0 0.0
    %7844 = vmatpush1.msra.mxu0 %v7718
    %7845 = vmatprep.subr.mxu0 0.0
    %7846 = vmatpush1.msra.mxu0 %v7719
    %7847 = vmatprep.subr.mxu0 0.0
    %7848 = vmatpush1.msra.mxu0 %v7720
    %7849 = vmatprep.subr.mxu0 0.0
    %7850 = vmatpush1.msra.mxu0 %v7721
    %7851 = vmatprep.subr.mxu0 0.0
    %7852 = vmatpush1.msra.mxu0 %v7722
    %7853 = vmatprep.subr.mxu0 0.0
    %7854 = vmatpush1.msra.mxu0 %v7723
    %7855 = vmatprep.subr.mxu0 0.0
    %7856 = vmatpush1.msra.mxu0 %v7724
    %7857 = vmatprep.subr.mxu0 0.0
    %7858 = vmatpush1.msra.mxu0 %v7725
    %7859 = vmatprep.subr.mxu0 0.0
    %7860 = vmatpush1.msra.mxu0 %v7726
    %7861 = vmatprep.mubr.f32.mxu0 %v55
    %7862 = vmatmul.mubr.f32.gmra.mrb[0].mxu0 %v54
    %v7863 = vpop.f32.mrb[0].mxu0
    %v7864 = vadd.f32 %v7794, %v7863
    %v7865 = vpop.f32.mrb[0].mxu0
    %7866 = vdwg.mxu0
    %v7868 = vsel %vm914, %v7864, 0
    %7870 = vmatprep.subr.mxu0 0.0
    %7871 = vmatpush1.msra.mxu0 %v18
    %7872 = vmatprep.subr.mxu0 0.0
    %7873 = vmatpush1.msra.mxu0 %v19
    %7874 = vmatprep.subr.mxu0 0.0
    %7875 = vmatpush1.msra.mxu0 0.0
    %7876 = vmatprep.subr.mxu0 0.0
    %7877 = vmatpush1.msra.mxu0 0.0
    %7878 = vmatprep.subr.mxu0 0.0
    %7879 = vmatpush1.msra.mxu0 0.0
    %7880 = vmatprep.subr.mxu0 0.0
    %7881 = vmatpush1.msra.mxu0 0.0
    %7882 = vmatprep.subr.mxu0 0.0
    %7883 = vmatpush1.msra.mxu0 0.0
    %7884 = vmatprep.subr.mxu0 0.0
    %7885 = vmatpush1.msra.mxu0 0.0
    %7886 = vmatprep.subr.mxu0 0.0
    %7887 = vmatpush1.msra.mxu0 0.0
    %7888 = vmatprep.subr.mxu0 0.0
    %7889 = vmatpush1.msra.mxu0 0.0
    %7890 = vmatprep.subr.mxu0 0.0
    %7891 = vmatpush1.msra.mxu0 0.0
    %7892 = vmatprep.subr.mxu0 0.0
    %7893 = vmatpush1.msra.mxu0 0.0
    %7894 = vmatprep.subr.mxu0 0.0
    %7895 = vmatpush1.msra.mxu0 0.0
    %7896 = vmatprep.subr.mxu0 0.0
    %7897 = vmatpush1.msra.mxu0 0.0
    %7898 = vmatprep.subr.mxu0 0.0
    %7899 = vmatpush1.msra.mxu0 0.0
    %7900 = vmatprep.subr.mxu0 0.0
    %7901 = vmatpush1.msra.mxu0 0.0
    %7902 = vmatprep.subr.mxu0 0.0
    %7903 = vmatpush1.msra.mxu0 0.0
    %7904 = vmatprep.subr.mxu0 0.0
    %7905 = vmatpush1.msra.mxu0 0.0
    %7906 = vmatprep.subr.mxu0 0.0
    %7907 = vmatpush1.msra.mxu0 0.0
    %7908 = vmatprep.subr.mxu0 0.0
    %7909 = vmatpush1.msra.mxu0 0.0
    %7910 = vmatprep.subr.mxu0 0.0
    %7911 = vmatpush1.msra.mxu0 0.0
    %7912 = vmatprep.subr.mxu0 0.0
    %7913 = vmatpush1.msra.mxu0 0.0
    %7914 = vmatprep.subr.mxu0 0.0
    %7915 = vmatpush1.msra.mxu0 0.0
    %7916 = vmatprep.subr.mxu0 0.0
    %7917 = vmatpush1.msra.mxu0 0.0
    %7918 = vmatprep.subr.mxu0 0.0
    %7919 = vmatpush1.msra.mxu0 0.0
    %7920 = vmatprep.subr.mxu0 0.0
    %7921 = vmatpush1.msra.mxu0 0.0
    %7922 = vmatprep.subr.mxu0 0.0
    %7923 = vmatpush1.msra.mxu0 0.0
    %7924 = vmatprep.subr.mxu0 0.0
    %7925 = vmatpush1.msra.mxu0 0.0
    %7926 = vmatprep.subr.mxu0 0.0
    %7927 = vmatpush1.msra.mxu0 0.0
    %7928 = vmatprep.subr.mxu0 0.0
    %7929 = vmatpush1.msra.mxu0 0.0
    %7930 = vmatprep.subr.mxu0 0.0
    %7931 = vmatpush1.msra.mxu0 0.0
    %7932 = vmatprep.subr.mxu0 0.0
    %7933 = vmatpush1.msra.mxu0 0.0
    %7934 = vmatprep.mubr.f32.mxu0 0.0
    %7935 = vmatmul.mubr.f32.gmra.mrb[0].mxu0 %v7868
    %v7936 = vpop.f32.mrb[0].mxu0
    %v7937 = vadd.f32 %v913, %v7936
    %v7938 = vpop.f32.mrb[0].mxu0
    %7939 = vdwg.mxu0
    %v7941 = vsel %vm988, %v7021, 0
    %7943 = vmatprep.subr.mxu0 0.0
    %7944 = vmatpush1.msra.mxu0 %v20
    %7945 = vmatprep.subr.mxu0 0.0
    %7946 = vmatpush1.msra.mxu0 %v21
    %7947 = vmatprep.subr.mxu0 0.0
    %7948 = vmatpush1.msra.mxu0 %v22
    %7949 = vmatprep.subr.mxu0 0.0
    %7950 = vmatpush1.msra.mxu0 %v23
    %7951 = vmatprep.subr.mxu0 0.0
    %7952 = vmatpush1.msra.mxu0 0.0
    %7953 = vmatprep.subr.mxu0 0.0
    %7954 = vmatpush1.msra.mxu0 0.0
    %7955 = vmatprep.subr.mxu0 0.0
    %7956 = vmatpush1.msra.mxu0 0.0
    %7957 = vmatprep.subr.mxu0 0.0
    %7958 = vmatpush1.msra.mxu0 0.0
    %7959 = vmatprep.subr.mxu0 0.0
    %7960 = vmatpush1.msra.mxu0 0.0
    %7961 = vmatprep.subr.mxu0 0.0
    %7962 = vmatpush1.msra.mxu0 0.0
    %7963 = vmatprep.subr.mxu0 0.0
    %7964 = vmatpush1.msra.mxu0 0.0
    %7965 = vmatprep.subr.mxu0 0.0
    %7966 = vmatpush1.msra.mxu0 0.0
    %7967 = vmatprep.subr.mxu0 0.0
    %7968 = vmatpush1.msra.mxu0 0.0
    %7969 = vmatprep.subr.mxu0 0.0
    %7970 = vmatpush1.msra.mxu0 0.0
    %7971 = vmatprep.subr.mxu0 0.0
    %7972 = vmatpush1.msra.mxu0 0.0
    %7973 = vmatprep.subr.mxu0 0.0
    %7974 = vmatpush1.msra.mxu0 0.0
    %7975 = vmatprep.subr.mxu0 0.0
    %7976 = vmatpush1.msra.mxu0 0.0
    %7977 = vmatprep.subr.mxu0 0.0
    %7978 = vmatpush1.msra.mxu0 0.0
    %7979 = vmatprep.subr.mxu0 0.0
    %7980 = vmatpush1.msra.mxu0 0.0
    %7981 = vmatprep.subr.mxu0 0.0
    %7982 = vmatpush1.msra.mxu0 0.0
    %7983 = vmatprep.subr.mxu0 0.0
    %7984 = vmatpush1.msra.mxu0 0.0
    %7985 = vmatprep.subr.mxu0 0.0
    %7986 = vmatpush1.msra.mxu0 0.0
    %7987 = vmatprep.subr.mxu0 0.0
    %7988 = vmatpush1.msra.mxu0 0.0
    %7989 = vmatprep.subr.mxu0 0.0
    %7990 = vmatpush1.msra.mxu0 0.0
    %7991 = vmatprep.subr.mxu0 0.0
    %7992 = vmatpush1.msra.mxu0 0.0
    %7993 = vmatprep.subr.mxu0 0.0
    %7994 = vmatpush1.msra.mxu0 0.0
    %7995 = vmatprep.subr.mxu0 0.0
    %7996 = vmatpush1.msra.mxu0 0.0
    %7997 = vmatprep.subr.mxu0 0.0
    %7998 = vmatpush1.msra.mxu0 0.0
    %7999 = vmatprep.subr.mxu0 0.0
    %8000 = vmatpush1.msra.mxu0 0.0
    %8001 = vmatprep.subr.mxu0 0.0
    %8002 = vmatpush1.msra.mxu0 0.0
    %8003 = vmatprep.subr.mxu0 0.0
    %8004 = vmatpush1.msra.mxu0 0.0
    %8005 = vmatprep.subr.mxu0 0.0
    %8006 = vmatpush1.msra.mxu0 0.0
    %8007 = vmatprep.mubr.f32.mxu0 0.0
    %8008 = vmatmul.mubr.f32.gmra.mrb[0].mxu0 %v7941
    %v8009 = vpop.f32.mrb[0].mxu0
    %v8010 = vadd.f32 0.0, %v8009
    %v8011 = vpop.f32.mrb[0].mxu0
    %8012 = vdwg.mxu0
    %v8013 = vadd.f32 %v7937, %v8010
    %v8014 = vtanh.pop %v8013
    %v8015 = vlaneseq
    %v8016 = vshrl.u32 %v8015, 7
    %v8017 = vsub.s32 0, %v8016
    %v8018 = vrot.slane %v29, %v8017
    %v8020 = vsel %vm988, %v8014, 0
    %8022 = vmatprep.subr.mxu0 0.0
    %8023 = vmatpush1.msra.mxu0 %v25
    %8024 = vmatprep.subr.mxu0 0.0
    %8025 = vmatpush1.msra.mxu0 %v26
    %8026 = vmatprep.subr.mxu0 0.0
    %8027 = vmatpush1.msra.mxu0 %v27
    %8028 = vmatprep.subr.mxu0 0.0
    %8029 = vmatpush1.msra.mxu0 %v28
    %8030 = vmatprep.subr.mxu0 0.0
    %8031 = vmatpush1.msra.mxu0 0.0
    %8032 = vmatprep.subr.mxu0 0.0
    %8033 = vmatpush1.msra.mxu0 0.0
    %8034 = vmatprep.subr.mxu0 0.0
    %8035 = vmatpush1.msra.mxu0 0.0
    %8036 = vmatprep.subr.mxu0 0.0
    %8037 = vmatpush1.msra.mxu0 0.0
    %8038 = vmatprep.subr.mxu0 0.0
    %8039 = vmatpush1.msra.mxu0 0.0
    %8040 = vmatprep.subr.mxu0 0.0
    %8041 = vmatpush1.msra.mxu0 0.0
    %8042 = vmatprep.subr.mxu0 0.0
    %8043 = vmatpush1.msra.mxu0 0.0
    %8044 = vmatprep.subr.mxu0 0.0
    %8045 = vmatpush1.msra.mxu0 0.0
    %8046 = vmatprep.subr.mxu0 0.0
    %8047 = vmatpush1.msra.mxu0 0.0
    %8048 = vmatprep.subr.mxu0 0.0
    %8049 = vmatpush1.msra.mxu0 0.0
    %8050 = vmatprep.subr.mxu0 0.0
    %8051 = vmatpush1.msra.mxu0 0.0
    %8052 = vmatprep.subr.mxu0 0.0
    %8053 = vmatpush1.msra.mxu0 0.0
    %8054 = vmatprep.subr.mxu0 0.0
    %8055 = vmatpush1.msra.mxu0 0.0
    %8056 = vmatprep.subr.mxu0 0.0
    %8057 = vmatpush1.msra.mxu0 0.0
    %8058 = vmatprep.subr.mxu0 0.0
    %8059 = vmatpush1.msra.mxu0 0.0
    %8060 = vmatprep.subr.mxu0 0.0
    %8061 = vmatpush1.msra.mxu0 0.0
    %8062 = vmatprep.subr.mxu0 0.0
    %8063 = vmatpush1.msra.mxu0 0.0
    %8064 = vmatprep.subr.mxu0 0.0
    %8065 = vmatpush1.msra.mxu0 0.0
    %8066 = vmatprep.subr.mxu0 0.0
    %8067 = vmatpush1.msra.mxu0 0.0
    %8068 = vmatprep.subr.mxu0 0.0
    %8069 = vmatpush1.msra.mxu0 0.0
    %8070 = vmatprep.subr.mxu0 0.0
    %8071 = vmatpush1.msra.mxu0 0.0
    %8072 = vmatprep.subr.mxu0 0.0
    %8073 = vmatpush1.msra.mxu0 0.0
    %8074 = vmatprep.subr.mxu0 0.0
    %8075 = vmatpush1.msra.mxu0 0.0
    %8076 = vmatprep.subr.mxu0 0.0
    %8077 = vmatpush1.msra.mxu0 0.0
    %8078 = vmatprep.subr.mxu0 0.0
    %8079 = vmatpush1.msra.mxu0 0.0
    %8080 = vmatprep.subr.mxu0 0.0
    %8081 = vmatpush1.msra.mxu0 0.0
    %8082 = vmatprep.subr.mxu0 0.0
    %8083 = vmatpush1.msra.mxu0 0.0
    %8084 = vmatprep.subr.mxu0 0.0
    %8085 = vmatpush1.msra.mxu0 0.0
    %8086 = vmatprep.mubr.f32.mxu0 0.0
    %8087 = vmatmul.mubr.f32.gmra.mrb[0].mxu0 %v8020
    %v8088 = vpop.f32.mrb[0].mxu0
    %v8089 = vadd.f32 %v8018, %v8088
    %v8090 = vpop.f32.mrb[0].mxu0
    %8091 = vdwg.mxu0
    %vm8092 = vcmask 74752
    %8093 = vst.msk [vmem:[#allocation2] sm:$0x3] %vm8092, %v8089
    // Predicated region
    $region10: #{tpu_custom_call.1} parent=1 // pred_check
      _
    $region11: #{tpu_custom_call.1} parent=1 // pred_check_branch
      %8095 = sbr.rel (0) target = $region13
    $region12: #{tpu_custom_call.1} parent=1 // pred_region
      %s8097 = ssub.s32 32, 32
      %8098 = vsyncadd [#allocation3], %s8097
      %s8100 = sshll.u32 [#allocation2], 4
      %s8101 = int_to_ptr.vmem [resolvable:$true] %s8100
      %8103 = dma.vmem_to_hbm [thread:$0]  %s8101, 32, %s2, [#allocation3]
    $region13: #{tpu_custom_call.1} parent=1 // pred_fallthru
      _
    // Predicated region
    $region14: #{tpu_custom_call.1} parent=1 // pred_check
      _
    $region15: #{tpu_custom_call.1} parent=1 // pred_check_branch
      %8105 = sbr.rel (0) target = $region17
    $region16: #{tpu_custom_call.1} parent=1 // pred_region
      %8106 = dma.done [#allocation3], 32
    $region17: #{tpu_custom_call.1} parent=1 // pred_fallthru
      _
    %8107 = vsyncpa [#allocation3], 1

</llo_original>
